<compile_context>
chip_gen: v7x
topology: tpu7x:2x2x1
jax: 0.10.0
libtpu: 0.0.40
codegen_flags: <defaults>
</compile_context>

<pallas_src>
import functools

import jax
import jax.numpy as jnp
from jax.experimental import pallas as pl
from jax.experimental.pallas import tpu as pltpu

# ----- small synthetic "BERT" config (real checkpoint is 768 hidden / 12 layers / 12 heads) -----
VOCAB = 128
MAX_POS = 64
HIDDEN = 32
NUM_HEADS = 4
HEAD_DIM = HIDDEN // NUM_HEADS
INTERMEDIATE = 64
NUM_LAYERS = 2
LN_EPS = 1e-12


# --------------------------------------------------------------------------------------
# Fused BERT encoder layer kernel
#   - optionally applies the embedding LayerNorm on entry (layer 0)
#   - optionally emits the BiLSTM input projection gx = y @ [W_ih_f | W_ih_b] + b
#     instead of the hidden states (last layer; gx is the only downstream consumer)
# --------------------------------------------------------------------------------------
def _encoder_layer_kernel(B, S, NH, fold_input_ln, emit_gx, *refs):
    refs = list(refs)
    x_ref = refs.pop(0)
    mask_ref = refs.pop(0)
    if fold_input_ln:
        in_g_ref = refs.pop(0)
        in_b_ref = refs.pop(0)
    (wqkv_ref, bqkv_ref, wo_ref, bo_ref, ln1_g_ref, ln1_b_ref,
     wi_ref, bi_ref, wo2_ref, bo2_ref, ln2_g_ref, ln2_b_ref) = refs[:12]
    refs = refs[12:]
    if emit_gx:
        wih_ref = refs.pop(0)
        bih_ref = refs.pop(0)
    o_ref = refs.pop(0)

    M, H = x_ref.shape
    Dh = H // NH
    scale = 1.0 / float(Dh) ** 0.5

    def ln(v, g, b):
        mu = jnp.mean(v, axis=-1, keepdims=True)
        var = jnp.mean(jnp.square(v - mu), axis=-1, keepdims=True)
        return (v - mu) * jax.lax.rsqrt(var + LN_EPS) * g + b

    x = x_ref[...]                                                   # (M, H)
    if fold_input_ln:
        x = ln(x, in_g_ref[...], in_b_ref[...])                      # embedding LayerNorm

    # fused QKV projection: one lane-dense (M, 3H) matmul on the MXU
    qkv = jnp.dot(x, wqkv_ref[...], preferred_element_type=jnp.float32) + bqkv_ref[...]
    qkv = qkv.reshape(B, S, 3 * H)

    # additive attention bias built in-kernel from the (B, S) mask: a broadcast is a free
    # layout op and avoids DMAing a materialized (B, S, S) bias per layer.
    bias = ((1.0 - mask_ref[...]) * -10000.0)[:, None, :]            # (B, 1, S)

    # Per-head scores/contexts as single-batch-dim 3-D einsums (heads statically unrolled,
    # NH=4).  Contexts are concatenated and ONE K=H output-projection matmul is issued
    # (instead of NH tiny K=Dh matmuls accumulated on the VPU).
    # TODO(synk): batching all heads as one 'bqhd,bkhd->bhqk' einsum needs a multi-batch-dim
    # dot_general / mid-axis relayout; kept per-head (Dh=8) for lowering robustness.
    ctx_heads = []
    for h in range(NH):
        q_h = qkv[:, :, h * Dh:(h + 1) * Dh]                         # (B, S, Dh)
        k_h = qkv[:, :, H + h * Dh:H + (h + 1) * Dh]
        v_h = qkv[:, :, 2 * H + h * Dh:2 * H + (h + 1) * Dh]
        s = jnp.einsum("bqd,bkd->bqk", q_h, k_h,
                       preferred_element_type=jnp.float32) * scale + bias
        s = s - jnp.max(s, axis=-1, keepdims=True)
        p = jnp.exp(s)
        p = p * pl.reciprocal(jnp.sum(p, axis=-1, keepdims=True), approx=True)
        ctx_heads.append(jnp.einsum("bqk,bkd->bqd", p, v_h,
                                    preferred_element_type=jnp.float32))
    ctx = jnp.concatenate(ctx_heads, axis=-1).reshape(M, H)          # (M, H)
    attn_out = jnp.dot(ctx, wo_ref[...], preferred_element_type=jnp.float32) + bo_ref[...]

    x1 = ln(attn_out + x, ln1_g_ref[...], ln1_b_ref[...])

    ffn = jnp.dot(x1, wi_ref[...], preferred_element_type=jnp.float32) + bi_ref[...]
    ffn = jax.nn.gelu(ffn, approximate=True)
    ffn = jnp.dot(ffn, wo2_ref[...], preferred_element_type=jnp.float32) + bo2_ref[...]
    y = ln(ffn + x1, ln2_g_ref[...], ln2_b_ref[...])

    if emit_gx:
        # fused BiLSTM input projection: lane-dense (M, 8H) output riding the resident y.
        o_ref[...] = (jnp.dot(y, wih_ref[...], preferred_element_type=jnp.float32)
                      + bih_ref[...]).astype(o_ref.dtype)
    else:
        o_ref[...] = y.astype(o_ref.dtype)


def encoder_layer(x2d, maskf, layer, *, input_ln=None, gx_proj=None):
    """One fused BERT encoder layer.  x2d: (B*S, H); maskf: (B, S) float validity mask.
    input_ln=(g, b) folds a LayerNorm on the input; gx_proj=(wih, b_ih) makes the kernel
    emit the (M, 8H) BiLSTM gate pre-activations instead of the hidden states."""
    M, H = x2d.shape
    B, S = maskf.shape
    I = layer["wi"].shape[1]
    z2 = lambda i: (0, 0)

    inputs = [x2d, maskf]
    if input_ln is not None:
        inputs += list(input_ln)
    inputs += [layer["wqkv"], layer["bqkv"], layer["wo"], layer["bo"],
               layer["ln1_g"], layer["ln1_b"], layer["wi"], layer["bi"],
               layer["wo2"], layer["bo2"], layer["ln2_g"], layer["ln2_b"]]
    if gx_proj is not None:
        inputs += list(gx_proj)
    out_n = gx_proj[0].shape[1] if gx_proj is not None else H

    # advisory cost estimate so XLA schedules surrounding glue around the custom call
    flops = (2 * M * H * 3 * H                                   # QKV
             + NUM_HEADS * 4 * B * S * S * HEAD_DIM              # scores + contexts
             + 2 * M * H * H                                     # output projection
             + 4 * M * H * I)                                    # FFN up + down
    if gx_proj is not None:
        flops += 2 * M * H * out_n
    transcendentals = B * NUM_HEADS * S * S + M * I              # softmax exp + gelu
    bytes_accessed = 4 * (sum(int(a.size) for a in inputs) + M * out_n)

    return pl.pallas_call(
        functools.partial(_encoder_layer_kernel, B, S, NUM_HEADS,
                          input_ln is not None, gx_proj is not None),
        out_shape=jax.ShapeDtypeStruct((M, out_n), jnp.float32),
        grid=(1,),
        in_specs=[pl.BlockSpec(a.shape, z2) for a in inputs],
        out_specs=pl.BlockSpec((M, out_n), z2),
        compiler_params=pltpu.CompilerParams(dimension_semantics=("arbitrary",)),
        cost_estimate=pl.CostEstimate(flops=flops, transcendentals=transcendentals,
                                      bytes_accessed=bytes_accessed),
    )(*inputs)


# --------------------------------------------------------------------------------------
# Fused bidirectional LSTM recurrence: ONE grid step, fully unrolled time loop
# --------------------------------------------------------------------------------------
def _bilstm_kernel(B, S, H, gx_ref, mask_ref, whhf_ref, whhb_ref, y_ref):
    """Entire bidirectional recurrence in a single grid step.  The (B, S, 8H) gate slab
    stays VMEM-resident and is read once; both directions run per unrolled step
    (forward at t, backward at S-1-t); states are threaded through vregs; the output is
    assembled and written as ONE dense (B, S, 2H) store (fwd lanes 0:H, bwd H:2H).
    Gate layout is i|f|o|g so sigmoid runs on a 3H slice (g's sigmoid never computed).
    At production T, switch to lax.fori_loop(..., unroll=k) / a grid=(T,) pipeline."""
    gx = gx_ref[...]                    # (B, S, 8H): fwd gates 0:4H, bwd gates 4H:8H
    mask = mask_ref[...]                # (B, S)
    whh_f = whhf_ref[...]               # (H, 4H)
    whh_b = whhb_ref[...]

    def cell(gx_t, m, h_prev, c_prev, whh):
        gates = gx_t + jnp.dot(h_prev, whh, preferred_element_type=jnp.float32)  # (B, 4H)
        sig = jax.nn.sigmoid(gates[:, 0:3 * H])          # i | f | o (g quarter skipped)
        i_g = sig[:, 0:H]
        f_g = sig[:, H:2 * H]
        o_g = sig[:, 2 * H:3 * H]
        g_g = jnp.tanh(gates[:, 3 * H:4 * H])
        c_new = f_g * c_prev + i_g * g_g
        h_new = o_g * jnp.tanh(c_new)
        # packed-sequence semantics: state only advances inside the valid length and
        # padded positions emit zeros (pad_packed_sequence zero-fills).
        return (m * h_new + (1.0 - m) * h_prev,
                m * c_new + (1.0 - m) * c_prev,
                m * h_new)

    zeros = jnp.zeros((B, H), jnp.float32)
    h_f = c_f = h_b = c_b = zeros
    ys_f = [None] * S
    ys_b = [None] * S
    for t in range(S):                  # static unroll: all indices/slices are static
        tr = S - 1 - t
        m_f = mask[:, t:t + 1]          # (B, 1)
        m_b = mask[:, tr:tr + 1]
        h_f, c_f, y_ft = cell(gx[:, t, 0:4 * H], m_f, h_f, c_f, whh_f)
        h_b, c_b, y_bt = cell(gx[:, tr, 4 * H:8 * H], m_b, h_b, c_b, whh_b)
        ys_f[t] = y_ft
        ys_b[tr] = y_bt

    y_fwd = jnp.stack(ys_f, axis=1)                              # (B, S, H)
    y_bwd = jnp.stack(ys_b, axis=1)                              # (B, S, H)
    y_ref[...] = jnp.concatenate([y_fwd, y_bwd], axis=-1).astype(y_ref.dtype)


def bilstm(gx_bsg, maskf, whh_f, whh_b):
    """gx_bsg: (B, S, 8H) precomputed x @ [W_ih_f | W_ih_b] + biases (batch-major, no
    host-side transpose).  maskf: (B, S) validity mask.  Returns (B, S, 2H) = [fwd | bwd]."""
    B, S, G8 = gx_bsg.shape
    H = G8 // 8
    z2 = lambda i: (0, 0)
    z3 = lambda i: (0, 0, 0)

    flops = S * 2 * (2 * B * H * 4 * H + 12 * B * H)
    transcendentals = S * 2 * B * 5 * H                          # 3H sigmoid + 2H tanh
    bytes_accessed = 4 * (int(gx_bsg.size) + int(maskf.size)
                          + int(whh_f.size) + int(whh_b.size) + B * S * 2 * H)

    return pl.pallas_call(
        functools.partial(_bilstm_kernel, B, S, H),
        out_shape=jax.ShapeDtypeStruct((B, S, 2 * H), jnp.float32),
        grid=(1,),
        in_specs=[pl.BlockSpec((B, S, G8), z3),
                  pl.BlockSpec((B, S), z2),
                  pl.BlockSpec((H, 4 * H), z2),
                  pl.BlockSpec((H, 4 * H), z2)],
        out_specs=pl.BlockSpec((B, S, 2 * H), z3),
        compiler_params=pltpu.CompilerParams(dimension_semantics=("arbitrary",)),
        cost_estimate=pl.CostEstimate(flops=flops, transcendentals=transcendentals,
                                      bytes_accessed=bytes_accessed),
    )(gx_bsg, maskf, whh_f, whh_b)


# --------------------------------------------------------------------------------------
# Parameters (deterministic synthetic init; projection weights stored pre-fused)
# --------------------------------------------------------------------------------------
def init_params(key):
    keys = iter(jax.random.split(key, 64))

    def nrm(shape):
        return 0.02 * jax.random.normal(next(keys), shape, jnp.float32)

    params = {
        "word_emb": nrm((VOCAB, HIDDEN)),
        "pos_emb": nrm((MAX_POS, HIDDEN)),
        "type_emb": nrm((2, HIDDEN)),
        "emb_ln_g": jnp.ones((1, HIDDEN), jnp.float32),
        "emb_ln_b": jnp.zeros((1, HIDDEN), jnp.float32),
        "layers": [],
    }
    for _ in range(NUM_LAYERS):
        params["layers"].append({
            # Wq|Wk|Wv fused into a single (H, 3H) weight
            "wqkv": nrm((HIDDEN, 3 * HIDDEN)), "bqkv": jnp.zeros((1, 3 * HIDDEN), jnp.float32),
            "wo": nrm((HIDDEN, HIDDEN)), "bo": jnp.zeros((1, HIDDEN), jnp.float32),
            "ln1_g": jnp.ones((1, HIDDEN), jnp.float32), "ln1_b": jnp.zeros((1, HIDDEN), jnp.float32),
            "wi": nrm((HIDDEN, INTERMEDIATE)), "bi": jnp.zeros((1, INTERMEDIATE), jnp.float32),
            "wo2": nrm((INTERMEDIATE, HIDDEN)), "bo2": jnp.zeros((1, HIDDEN), jnp.float32),
            "ln2_g": jnp.ones((1, HIDDEN), jnp.float32), "ln2_b": jnp.zeros((1, HIDDEN), jnp.float32),
        })
    params["lstm"] = {
        # pre-transposed, direction-fused: x @ [W_ih_fwd | W_ih_bwd]   (H, 8H)
        # gate column layout per direction: i | f | o | g (g last -> 3H-wide sigmoid)
        "wih": nrm((HIDDEN, 8 * HIDDEN)),
        "b_ih": jnp.zeros((1, 8 * HIDDEN), jnp.float32),   # = (b_ih + b_hh) per direction
        "whh_f": nrm((HIDDEN, 4 * HIDDEN)),
        "whh_b": nrm((HIDDEN, 4 * HIDDEN)),
    }
    params["fc_w"] = nrm((2 * HIDDEN, 1))
    params["fc_b"] = jnp.zeros((1,), jnp.float32)
    return params


# --------------------------------------------------------------------------------------
# Forward pass: 3 pallas_calls (encoder layer 0 + emb LN, encoder layer 1 + gx proj,
# fused BiLSTM), glue (embedding gathers, final fc) in plain JAX.
# --------------------------------------------------------------------------------------
def nerbert_forward(params, X, att_mask):
    B, S = X.shape
    H = HIDDEN
    maskf = att_mask.astype(jnp.float32)

    # ---- BERT embeddings (gathers are glue); embedding LayerNorm folded into layer 0 ----
    x = (params["word_emb"][X]
         + params["pos_emb"][:S][None, :, :]
         + params["type_emb"][0][None, None, :])
    h = x.reshape(B * S, H)

    # ---- BERT encoder: one fused Pallas kernel per layer ----
    lst = params["lstm"]
    layers = params["layers"]
    for li, layer in enumerate(layers):
        input_ln = (params["emb_ln_g"], params["emb_ln_b"]) if li == 0 else None
        gx_proj = (lst["wih"], lst["b_ih"]) if li == len(layers) - 1 else None
        h = encoder_layer(h, maskf, layer, input_ln=input_ln, gx_proj=gx_proj)
    gx = h                                                   # (B*S, 8H) from the last layer

    # ---- BiLSTM over packed sequences (sort/pack/unsort == masked recurrence) ----
    lengths = att_mask.sum(axis=-1)
    gx_bsg = gx.reshape(B, S, 8 * H)                         # free reshape, stays batch-major
    y = bilstm(gx_bsg, maskf, lst["whh_f"], lst["whh_b"])    # (B, S, 2H) = [fwd | bwd]

    # dropout: inference-mode identity (see TODO above).  fc has an N=1 output, so it is
    # done in plain JAX rather than a fully-masked 1-lane Pallas store.
    logits = y @ params["fc_w"] + params["fc_b"]             # (B, S, 1)
    return logits, lengths


# --------------------------------------------------------------------------------------
if __name__ == "__main__":
    params = init_params(jax.random.PRNGKey(42))

    B, S = 2, 8
    key = jax.random.PRNGKey(0)
    X = jax.random.randint(key, (B, S), 0, VOCAB, dtype=jnp.int32)
    seq_lengths = jnp.array([8, 5], dtype=jnp.int32)
    att_mask = (jnp.arange(S)[None, :] < seq_lengths[:, None]).astype(jnp.int32)

    fwd = jax.jit(nerbert_forward)
    logits, lengths = fwd(params, X, att_mask)
    # pad_packed_sequence(batch_first=True) truncates the time axis to max(lengths)
    t_out = int(jax.device_get(lengths).max())
    out = jax.block_until_ready(logits[:, :t_out, :])

    assert out.shape == (B, t_out, 1)
    assert bool(jnp.all(jnp.isfinite(out)))
    print("KERNEL_OK")
</pallas_src>

<mosaic_0001>
module attributes {stable_mosaic.version = 11 : i64} {
  func.func @_encoder_layer_kernel(%arg0: i32, %arg1: memref<16x32xf32, #tpu.memory_space<vmem>>, %arg2: memref<2x8xf32, #tpu.memory_space<vmem>>, %arg3: memref<1x32xf32, #tpu.memory_space<vmem>>, %arg4: memref<1x32xf32, #tpu.memory_space<vmem>>, %arg5: memref<32x96xf32, #tpu.memory_space<vmem>>, %arg6: memref<1x96xf32, #tpu.memory_space<vmem>>, %arg7: memref<32x32xf32, #tpu.memory_space<vmem>>, %arg8: memref<1x32xf32, #tpu.memory_space<vmem>>, %arg9: memref<1x32xf32, #tpu.memory_space<vmem>>, %arg10: memref<1x32xf32, #tpu.memory_space<vmem>>, %arg11: memref<32x64xf32, #tpu.memory_space<vmem>>, %arg12: memref<1x64xf32, #tpu.memory_space<vmem>>, %arg13: memref<64x32xf32, #tpu.memory_space<vmem>>, %arg14: memref<1x32xf32, #tpu.memory_space<vmem>>, %arg15: memref<1x32xf32, #tpu.memory_space<vmem>>, %arg16: memref<1x32xf32, #tpu.memory_space<vmem>>, %arg17: memref<16x32xf32, #tpu.memory_space<vmem>>) attributes {dimension_semantics = [#tpu.dimension_semantics<arbitrary>], iteration_bounds = array<i64: 1>, scalar_prefetch = 0 : i64, scratch_operands = 0 : i64, tpu.core_type = #tpu.core_type<tc>, window_params = [{pipeline_mode = #tpu.pipeline_mode<synchronous>, transform_indices = @transform_0, window_bounds = array<i64: 16, 32>}, {pipeline_mode = #tpu.pipeline_mode<synchronous>, transform_indices = @transform_1, window_bounds = array<i64: 2, 8>}, {pipeline_mode = #tpu.pipeline_mode<synchronous>, transform_indices = @transform_2, window_bounds = array<i64: 1, 32>}, {pipeline_mode = #tpu.pipeline_mode<synchronous>, transform_indices = @transform_3, window_bounds = array<i64: 1, 32>}, {pipeline_mode = #tpu.pipeline_mode<synchronous>, transform_indices = @transform_4, window_bounds = array<i64: 32, 96>}, {pipeline_mode = #tpu.pipeline_mode<synchronous>, transform_indices = @transform_5, window_bounds = array<i64: 1, 96>}, {pipeline_mode = #tpu.pipeline_mode<synchronous>, transform_indices = @transform_6, window_bounds = array<i64: 32, 32>}, {pipeline_mode = #tpu.pipeline_mode<synchronous>, transform_indices = @transform_7, window_bounds = array<i64: 1, 32>}, {pipeline_mode = #tpu.pipeline_mode<synchronous>, transform_indices = @transform_8, window_bounds = array<i64: 1, 32>}, {pipeline_mode = #tpu.pipeline_mode<synchronous>, transform_indices = @transform_9, window_bounds = array<i64: 1, 32>}, {pipeline_mode = #tpu.pipeline_mode<synchronous>, transform_indices = @transform_10, window_bounds = array<i64: 32, 64>}, {pipeline_mode = #tpu.pipeline_mode<synchronous>, transform_indices = @transform_11, window_bounds = array<i64: 1, 64>}, {pipeline_mode = #tpu.pipeline_mode<synchronous>, transform_indices = @transform_12, window_bounds = array<i64: 64, 32>}, {pipeline_mode = #tpu.pipeline_mode<synchronous>, transform_indices = @transform_13, window_bounds = array<i64: 1, 32>}, {pipeline_mode = #tpu.pipeline_mode<synchronous>, transform_indices = @transform_14, window_bounds = array<i64: 1, 32>}, {pipeline_mode = #tpu.pipeline_mode<synchronous>, transform_indices = @transform_15, window_bounds = array<i64: 1, 32>}, {pipeline_mode = #tpu.pipeline_mode<synchronous>, transform_indices = @transform_16, window_bounds = array<i64: 16, 32>}]} {
    %c0 = arith.constant 0 : index
    %c0_0 = arith.constant 0 : index
    %0 = vector.load %arg1[%c0, %c0_0] : memref<16x32xf32, #tpu.memory_space<vmem>>, vector<16x32xf32>
    %c0_1 = arith.constant 0 : index
    %c0_2 = arith.constant 0 : index
    %1 = vector.load %arg3[%c0_1, %c0_2] : memref<1x32xf32, #tpu.memory_space<vmem>>, vector<1x32xf32>
    %c0_3 = arith.constant 0 : index
    %c0_4 = arith.constant 0 : index
    %2 = vector.load %arg4[%c0_3, %c0_4] : memref<1x32xf32, #tpu.memory_space<vmem>>, vector<1x32xf32>
    %cst = arith.constant dense<0.000000e+00> : vector<16xf32>
    %3 = vector.multi_reduction <add>, %0, %cst [1] : vector<16x32xf32> to vector<16xf32>
    %4 = vector.shape_cast %3 : vector<16xf32> to vector<16x1xf32>
    %cst_5 = arith.constant 3.200000e+01 : f32
    %5 = vector.broadcast %cst_5 : f32 to vector<16x1xf32>
    %6 = arith.divf %4, %5 : vector<16x1xf32>
    %7 = vector.broadcast %6 : vector<16x1xf32> to vector<16x32xf32>
    %8 = arith.subf %0, %7 : vector<16x32xf32>
    %9 = arith.mulf %8, %8 : vector<16x32xf32>
    %cst_6 = arith.constant dense<0.000000e+00> : vector<16xf32>
    %10 = vector.multi_reduction <add>, %9, %cst_6 [1] : vector<16x32xf32> to vector<16xf32>
    %11 = vector.shape_cast %10 : vector<16xf32> to vector<16x1xf32>
    %cst_7 = arith.constant 3.200000e+01 : f32
    %12 = vector.broadcast %cst_7 : f32 to vector<16x1xf32>
    %13 = arith.divf %11, %12 : vector<16x1xf32>
    %14 = vector.broadcast %6 : vector<16x1xf32> to vector<16x32xf32>
    %15 = arith.subf %0, %14 : vector<16x32xf32>
    %cst_8 = arith.constant 9.99999996E-13 : f32
    %16 = vector.broadcast %cst_8 : f32 to vector<16x1xf32>
    %17 = arith.addf %13, %16 : vector<16x1xf32>
    %18 = math.rsqrt %17 : vector<16x1xf32>
    %19 = vector.broadcast %18 : vector<16x1xf32> to vector<16x32xf32>
    %20 = arith.mulf %15, %19 : vector<16x32xf32>
    %21 = vector.broadcast %1 : vector<1x32xf32> to vector<16x32xf32>
    %22 = arith.mulf %20, %21 : vector<16x32xf32>
    %23 = vector.broadcast %2 : vector<1x32xf32> to vector<16x32xf32>
    %24 = arith.addf %22, %23 : vector<16x32xf32>
    %c0_9 = arith.constant 0 : index
    %c0_10 = arith.constant 0 : index
    %25 = vector.load %arg5[%c0_9, %c0_10] : memref<32x96xf32, #tpu.memory_space<vmem>>, vector<32x96xf32>
    %cst_11 = arith.constant dense<0.000000e+00> : vector<16x96xf32>
    %26 = tpu.matmul %24, %25, %cst_11 {dimension_numbers = #tpu.dot_dimension_numbers<[1], [0], [0], [1], [0, 0, 1, 1], [], []>} : vector<16x32xf32>, vector<32x96xf32>, vector<16x96xf32> -> vector<16x96xf32>
    %c0_12 = arith.constant 0 : index
    %c0_13 = arith.constant 0 : index
    %27 = vector.load %arg6[%c0_12, %c0_13] : memref<1x96xf32, #tpu.memory_space<vmem>>, vector<1x96xf32>
    %28 = vector.broadcast %27 : vector<1x96xf32> to vector<16x96xf32>
    %29 = arith.addf %26, %28 : vector<16x96xf32>
    %30 = vector.shape_cast %29 : vector<16x96xf32> to vector<2x8x96xf32>
    %c0_14 = arith.constant 0 : index
    %c0_15 = arith.constant 0 : index
    %31 = vector.load %arg2[%c0_14, %c0_15] : memref<2x8xf32, #tpu.memory_space<vmem>>, vector<2x8xf32>
    %cst_16 = arith.constant 1.000000e+00 : f32
    %32 = vector.broadcast %cst_16 : f32 to vector<2x8xf32>
    %33 = arith.subf %32, %31 : vector<2x8xf32>
    %cst_17 = arith.constant -1.000000e+04 : f32
    %34 = vector.broadcast %cst_17 : f32 to vector<2x8xf32>
    %35 = arith.mulf %33, %34 : vector<2x8xf32>
    %36 = vector.shape_cast %35 : vector<2x8xf32> to vector<2x1x8xf32>
    %37 = vector.extract_strided_slice %30 {offsets = [0, 0, 0], sizes = [2, 8, 8], strides = [1, 1, 1]} : vector<2x8x96xf32> to vector<2x8x8xf32>
    %38 = vector.extract_strided_slice %30 {offsets = [0, 0, 32], sizes = [2, 8, 8], strides = [1, 1, 1]} : vector<2x8x96xf32> to vector<2x8x8xf32>
    %39 = vector.extract_strided_slice %30 {offsets = [0, 0, 64], sizes = [2, 8, 8], strides = [1, 1, 1]} : vector<2x8x96xf32> to vector<2x8x8xf32>
    "tpu.trace_start"() <{level = 10 : i32, message = "bqd,bkd->bqk"}> : () -> ()
    %cst_18 = arith.constant dense<0.000000e+00> : vector<2x8x8xf32>
    %40 = tpu.matmul %37, %38, %cst_18 {dimension_numbers = #tpu.dot_dimension_numbers<[2], [2], [1], [1], [0, 0, 0, 1, 1, 1], [0], [0]>} : vector<2x8x8xf32>, vector<2x8x8xf32>, vector<2x8x8xf32> -> vector<2x8x8xf32>
    "tpu.trace_stop"() : () -> ()
    %cst_19 = arith.constant 0.353553385 : f32
    %41 = vector.broadcast %cst_19 : f32 to vector<2x8x8xf32>
    %42 = arith.mulf %40, %41 : vector<2x8x8xf32>
    %43 = vector.broadcast %36 : vector<2x1x8xf32> to vector<2x8x8xf32>
    %44 = arith.addf %42, %43 : vector<2x8x8xf32>
    %cst_20 = arith.constant dense<0xFF800000> : vector<2x8xf32>
    %45 = vector.multi_reduction <maximumf>, %44, %cst_20 [2] : vector<2x8x8xf32> to vector<2x8xf32>
    %46 = vector.shape_cast %45 : vector<2x8xf32> to vector<2x8x1xf32>
    %47 = vector.broadcast %46 : vector<2x8x1xf32> to vector<2x8x8xf32>
    %48 = arith.subf %44, %47 : vector<2x8x8xf32>
    %49 = math.exp %48 : vector<2x8x8xf32>
    %cst_21 = arith.constant dense<0.000000e+00> : vector<2x8xf32>
    %50 = vector.multi_reduction <add>, %49, %cst_21 [2] : vector<2x8x8xf32> to vector<2x8xf32>
    %51 = vector.shape_cast %50 : vector<2x8xf32> to vector<2x8x1xf32>
    %52 = tpu.reciprocal %51 {approx = true} : vector<2x8x1xf32> -> vector<2x8x1xf32>
    %53 = vector.broadcast %52 : vector<2x8x1xf32> to vector<2x8x8xf32>
    %54 = arith.mulf %49, %53 : vector<2x8x8xf32>
    "tpu.trace_start"() <{level = 10 : i32, message = "bqk,bkd->bqd"}> : () -> ()
    %cst_22 = arith.constant dense<0.000000e+00> : vector<2x8x8xf32>
    %55 = tpu.matmul %54, %39, %cst_22 {dimension_numbers = #tpu.dot_dimension_numbers<[2], [1], [1], [2], [0, 0, 0, 1, 1, 2], [0], [0]>} : vector<2x8x8xf32>, vector<2x8x8xf32>, vector<2x8x8xf32> -> vector<2x8x8xf32>
    "tpu.trace_stop"() : () -> ()
    %56 = vector.extract_strided_slice %30 {offsets = [0, 0, 8], sizes = [2, 8, 8], strides = [1, 1, 1]} : vector<2x8x96xf32> to vector<2x8x8xf32>
    %57 = vector.extract_strided_slice %30 {offsets = [0, 0, 40], sizes = [2, 8, 8], strides = [1, 1, 1]} : vector<2x8x96xf32> to vector<2x8x8xf32>
    %58 = vector.extract_strided_slice %30 {offsets = [0, 0, 72], sizes = [2, 8, 8], strides = [1, 1, 1]} : vector<2x8x96xf32> to vector<2x8x8xf32>
    "tpu.trace_start"() <{level = 10 : i32, message = "bqd,bkd->bqk"}> : () -> ()
    %cst_23 = arith.constant dense<0.000000e+00> : vector<2x8x8xf32>
    %59 = tpu.matmul %56, %57, %cst_23 {dimension_numbers = #tpu.dot_dimension_numbers<[2], [2], [1], [1], [0, 0, 0, 1, 1, 1], [0], [0]>} : vector<2x8x8xf32>, vector<2x8x8xf32>, vector<2x8x8xf32> -> vector<2x8x8xf32>
    "tpu.trace_stop"() : () -> ()
    %cst_24 = arith.constant 0.353553385 : f32
    %60 = vector.broadcast %cst_24 : f32 to vector<2x8x8xf32>
    %61 = arith.mulf %59, %60 : vector<2x8x8xf32>
    %62 = vector.broadcast %36 : vector<2x1x8xf32> to vector<2x8x8xf32>
    %63 = arith.addf %61, %62 : vector<2x8x8xf32>
    %cst_25 = arith.constant dense<0xFF800000> : vector<2x8xf32>
    %64 = vector.multi_reduction <maximumf>, %63, %cst_25 [2] : vector<2x8x8xf32> to vector<2x8xf32>
    %65 = vector.shape_cast %64 : vector<2x8xf32> to vector<2x8x1xf32>
    %66 = vector.broadcast %65 : vector<2x8x1xf32> to vector<2x8x8xf32>
    %67 = arith.subf %63, %66 : vector<2x8x8xf32>
    %68 = math.exp %67 : vector<2x8x8xf32>
    %cst_26 = arith.constant dense<0.000000e+00> : vector<2x8xf32>
    %69 = vector.multi_reduction <add>, %68, %cst_26 [2] : vector<2x8x8xf32> to vector<2x8xf32>
    %70 = vector.shape_cast %69 : vector<2x8xf32> to vector<2x8x1xf32>
    %71 = tpu.reciprocal %70 {approx = true} : vector<2x8x1xf32> -> vector<2x8x1xf32>
    %72 = vector.broadcast %71 : vector<2x8x1xf32> to vector<2x8x8xf32>
    %73 = arith.mulf %68, %72 : vector<2x8x8xf32>
    "tpu.trace_start"() <{level = 10 : i32, message = "bqk,bkd->bqd"}> : () -> ()
    %cst_27 = arith.constant dense<0.000000e+00> : vector<2x8x8xf32>
    %74 = tpu.matmul %73, %58, %cst_27 {dimension_numbers = #tpu.dot_dimension_numbers<[2], [1], [1], [2], [0, 0, 0, 1, 1, 2], [0], [0]>} : vector<2x8x8xf32>, vector<2x8x8xf32>, vector<2x8x8xf32> -> vector<2x8x8xf32>
    "tpu.trace_stop"() : () -> ()
    %75 = vector.extract_strided_slice %30 {offsets = [0, 0, 16], sizes = [2, 8, 8], strides = [1, 1, 1]} : vector<2x8x96xf32> to vector<2x8x8xf32>
    %76 = vector.extract_strided_slice %30 {offsets = [0, 0, 48], sizes = [2, 8, 8], strides = [1, 1, 1]} : vector<2x8x96xf32> to vector<2x8x8xf32>
    %77 = vector.extract_strided_slice %30 {offsets = [0, 0, 80], sizes = [2, 8, 8], strides = [1, 1, 1]} : vector<2x8x96xf32> to vector<2x8x8xf32>
    "tpu.trace_start"() <{level = 10 : i32, message = "bqd,bkd->bqk"}> : () -> ()
    %cst_28 = arith.constant dense<0.000000e+00> : vector<2x8x8xf32>
    %78 = tpu.matmul %75, %76, %cst_28 {dimension_numbers = #tpu.dot_dimension_numbers<[2], [2], [1], [1], [0, 0, 0, 1, 1, 1], [0], [0]>} : vector<2x8x8xf32>, vector<2x8x8xf32>, vector<2x8x8xf32> -> vector<2x8x8xf32>
    "tpu.trace_stop"() : () -> ()
    %cst_29 = arith.constant 0.353553385 : f32
    %79 = vector.broadcast %cst_29 : f32 to vector<2x8x8xf32>
    %80 = arith.mulf %78, %79 : vector<2x8x8xf32>
    %81 = vector.broadcast %36 : vector<2x1x8xf32> to vector<2x8x8xf32>
    %82 = arith.addf %80, %81 : vector<2x8x8xf32>
    %cst_30 = arith.constant dense<0xFF800000> : vector<2x8xf32>
    %83 = vector.multi_reduction <maximumf>, %82, %cst_30 [2] : vector<2x8x8xf32> to vector<2x8xf32>
    %84 = vector.shape_cast %83 : vector<2x8xf32> to vector<2x8x1xf32>
    %85 = vector.broadcast %84 : vector<2x8x1xf32> to vector<2x8x8xf32>
    %86 = arith.subf %82, %85 : vector<2x8x8xf32>
    %87 = math.exp %86 : vector<2x8x8xf32>
    %cst_31 = arith.constant dense<0.000000e+00> : vector<2x8xf32>
    %88 = vector.multi_reduction <add>, %87, %cst_31 [2] : vector<2x8x8xf32> to vector<2x8xf32>
    %89 = vector.shape_cast %88 : vector<2x8xf32> to vector<2x8x1xf32>
    %90 = tpu.reciprocal %89 {approx = true} : vector<2x8x1xf32> -> vector<2x8x1xf32>
    %91 = vector.broadcast %90 : vector<2x8x1xf32> to vector<2x8x8xf32>
    %92 = arith.mulf %87, %91 : vector<2x8x8xf32>
    "tpu.trace_start"() <{level = 10 : i32, message = "bqk,bkd->bqd"}> : () -> ()
    %cst_32 = arith.constant dense<0.000000e+00> : vector<2x8x8xf32>
    %93 = tpu.matmul %92, %77, %cst_32 {dimension_numbers = #tpu.dot_dimension_numbers<[2], [1], [1], [2], [0, 0, 0, 1, 1, 2], [0], [0]>} : vector<2x8x8xf32>, vector<2x8x8xf32>, vector<2x8x8xf32> -> vector<2x8x8xf32>
    "tpu.trace_stop"() : () -> ()
    %94 = vector.extract_strided_slice %30 {offsets = [0, 0, 24], sizes = [2, 8, 8], strides = [1, 1, 1]} : vector<2x8x96xf32> to vector<2x8x8xf32>
    %95 = vector.extract_strided_slice %30 {offsets = [0, 0, 56], sizes = [2, 8, 8], strides = [1, 1, 1]} : vector<2x8x96xf32> to vector<2x8x8xf32>
    %96 = vector.extract_strided_slice %30 {offsets = [0, 0, 88], sizes = [2, 8, 8], strides = [1, 1, 1]} : vector<2x8x96xf32> to vector<2x8x8xf32>
    "tpu.trace_start"() <{level = 10 : i32, message = "bqd,bkd->bqk"}> : () -> ()
    %cst_33 = arith.constant dense<0.000000e+00> : vector<2x8x8xf32>
    %97 = tpu.matmul %94, %95, %cst_33 {dimension_numbers = #tpu.dot_dimension_numbers<[2], [2], [1], [1], [0, 0, 0, 1, 1, 1], [0], [0]>} : vector<2x8x8xf32>, vector<2x8x8xf32>, vector<2x8x8xf32> -> vector<2x8x8xf32>
    "tpu.trace_stop"() : () -> ()
    %cst_34 = arith.constant 0.353553385 : f32
    %98 = vector.broadcast %cst_34 : f32 to vector<2x8x8xf32>
    %99 = arith.mulf %97, %98 : vector<2x8x8xf32>
    %100 = vector.broadcast %36 : vector<2x1x8xf32> to vector<2x8x8xf32>
    %101 = arith.addf %99, %100 : vector<2x8x8xf32>
    %cst_35 = arith.constant dense<0xFF800000> : vector<2x8xf32>
    %102 = vector.multi_reduction <maximumf>, %101, %cst_35 [2] : vector<2x8x8xf32> to vector<2x8xf32>
    %103 = vector.shape_cast %102 : vector<2x8xf32> to vector<2x8x1xf32>
    %104 = vector.broadcast %103 : vector<2x8x1xf32> to vector<2x8x8xf32>
    %105 = arith.subf %101, %104 : vector<2x8x8xf32>
    %106 = math.exp %105 : vector<2x8x8xf32>
    %cst_36 = arith.constant dense<0.000000e+00> : vector<2x8xf32>
    %107 = vector.multi_reduction <add>, %106, %cst_36 [2] : vector<2x8x8xf32> to vector<2x8xf32>
    %108 = vector.shape_cast %107 : vector<2x8xf32> to vector<2x8x1xf32>
    %109 = tpu.reciprocal %108 {approx = true} : vector<2x8x1xf32> -> vector<2x8x1xf32>
    %110 = vector.broadcast %109 : vector<2x8x1xf32> to vector<2x8x8xf32>
    %111 = arith.mulf %106, %110 : vector<2x8x8xf32>
    "tpu.trace_start"() <{level = 10 : i32, message = "bqk,bkd->bqd"}> : () -> ()
    %cst_37 = arith.constant dense<0.000000e+00> : vector<2x8x8xf32>
    %112 = tpu.matmul %111, %96, %cst_37 {dimension_numbers = #tpu.dot_dimension_numbers<[2], [1], [1], [2], [0, 0, 0, 1, 1, 2], [0], [0]>} : vector<2x8x8xf32>, vector<2x8x8xf32>, vector<2x8x8xf32> -> vector<2x8x8xf32>
    "tpu.trace_stop"() : () -> ()
    %113 = tpu.concatenate %55, %74, %93, %112 in 2 : vector<2x8x8xf32>, vector<2x8x8xf32>, vector<2x8x8xf32>, vector<2x8x8xf32> -> vector<2x8x32xf32>
    %114 = vector.shape_cast %113 : vector<2x8x32xf32> to vector<16x32xf32>
    %c0_38 = arith.constant 0 : index
    %c0_39 = arith.constant 0 : index
    %115 = vector.load %arg7[%c0_38, %c0_39] : memref<32x32xf32, #tpu.memory_space<vmem>>, vector<32x32xf32>
    %cst_40 = arith.constant dense<0.000000e+00> : vector<16x32xf32>
    %116 = tpu.matmul %114, %115, %cst_40 {dimension_numbers = #tpu.dot_dimension_numbers<[1], [0], [0], [1], [0, 0, 1, 1], [], []>} : vector<16x32xf32>, vector<32x32xf32>, vector<16x32xf32> -> vector<16x32xf32>
    %c0_41 = arith.constant 0 : index
    %c0_42 = arith.constant 0 : index
    %117 = vector.load %arg8[%c0_41, %c0_42] : memref<1x32xf32, #tpu.memory_space<vmem>>, vector<1x32xf32>
    %118 = vector.broadcast %117 : vector<1x32xf32> to vector<16x32xf32>
    %119 = arith.addf %116, %118 : vector<16x32xf32>
    %120 = arith.addf %119, %24 : vector<16x32xf32>
    %c0_43 = arith.constant 0 : index
    %c0_44 = arith.constant 0 : index
    %121 = vector.load %arg9[%c0_43, %c0_44] : memref<1x32xf32, #tpu.memory_space<vmem>>, vector<1x32xf32>
    %c0_45 = arith.constant 0 : index
    %c0_46 = arith.constant 0 : index
    %122 = vector.load %arg10[%c0_45, %c0_46] : memref<1x32xf32, #tpu.memory_space<vmem>>, vector<1x32xf32>
    %cst_47 = arith.constant dense<0.000000e+00> : vector<16xf32>
    %123 = vector.multi_reduction <add>, %120, %cst_47 [1] : vector<16x32xf32> to vector<16xf32>
    %124 = vector.shape_cast %123 : vector<16xf32> to vector<16x1xf32>
    %cst_48 = arith.constant 3.200000e+01 : f32
    %125 = vector.broadcast %cst_48 : f32 to vector<16x1xf32>
    %126 = arith.divf %124, %125 : vector<16x1xf32>
    %127 = vector.broadcast %126 : vector<16x1xf32> to vector<16x32xf32>
    %128 = arith.subf %120, %127 : vector<16x32xf32>
    %129 = arith.mulf %128, %128 : vector<16x32xf32>
    %cst_49 = arith.constant dense<0.000000e+00> : vector<16xf32>
    %130 = vector.multi_reduction <add>, %129, %cst_49 [1] : vector<16x32xf32> to vector<16xf32>
    %131 = vector.shape_cast %130 : vector<16xf32> to vector<16x1xf32>
    %cst_50 = arith.constant 3.200000e+01 : f32
    %132 = vector.broadcast %cst_50 : f32 to vector<16x1xf32>
    %133 = arith.divf %131, %132 : vector<16x1xf32>
    %134 = vector.broadcast %126 : vector<16x1xf32> to vector<16x32xf32>
    %135 = arith.subf %120, %134 : vector<16x32xf32>
    %cst_51 = arith.constant 9.99999996E-13 : f32
    %136 = vector.broadcast %cst_51 : f32 to vector<16x1xf32>
    %137 = arith.addf %133, %136 : vector<16x1xf32>
    %138 = math.rsqrt %137 : vector<16x1xf32>
    %139 = vector.broadcast %138 : vector<16x1xf32> to vector<16x32xf32>
    %140 = arith.mulf %135, %139 : vector<16x32xf32>
    %141 = vector.broadcast %121 : vector<1x32xf32> to vector<16x32xf32>
    %142 = arith.mulf %140, %141 : vector<16x32xf32>
    %143 = vector.broadcast %122 : vector<1x32xf32> to vector<16x32xf32>
    %144 = arith.addf %142, %143 : vector<16x32xf32>
    %c0_52 = arith.constant 0 : index
    %c0_53 = arith.constant 0 : index
    %145 = vector.load %arg11[%c0_52, %c0_53] : memref<32x64xf32, #tpu.memory_space<vmem>>, vector<32x64xf32>
    %cst_54 = arith.constant dense<0.000000e+00> : vector<16x64xf32>
    %146 = tpu.matmul %144, %145, %cst_54 {dimension_numbers = #tpu.dot_dimension_numbers<[1], [0], [0], [1], [0, 0, 1, 1], [], []>} : vector<16x32xf32>, vector<32x64xf32>, vector<16x64xf32> -> vector<16x64xf32>
    %c0_55 = arith.constant 0 : index
    %c0_56 = arith.constant 0 : index
    %147 = vector.load %arg12[%c0_55, %c0_56] : memref<1x64xf32, #tpu.memory_space<vmem>>, vector<1x64xf32>
    %148 = vector.broadcast %147 : vector<1x64xf32> to vector<16x64xf32>
    %149 = arith.addf %146, %148 : vector<16x64xf32>
    %150 = arith.mulf %149, %149 : vector<16x64xf32>
    %151 = arith.mulf %149, %150 : vector<16x64xf32>
    %cst_57 = arith.constant 4.471500e-02 : f32
    %152 = vector.broadcast %cst_57 : f32 to vector<16x64xf32>
    %153 = arith.mulf %152, %151 : vector<16x64xf32>
    %154 = arith.addf %149, %153 : vector<16x64xf32>
    %cst_58 = arith.constant 0.797884583 : f32
    %155 = vector.broadcast %cst_58 : f32 to vector<16x64xf32>
    %156 = arith.mulf %155, %154 : vector<16x64xf32>
    %157 = math.tanh %156 : vector<16x64xf32>
    %cst_59 = arith.constant 1.000000e+00 : f32
    %158 = vector.broadcast %cst_59 : f32 to vector<16x64xf32>
    %159 = arith.addf %158, %157 : vector<16x64xf32>
    %cst_60 = arith.constant 5.000000e-01 : f32
    %160 = vector.broadcast %cst_60 : f32 to vector<16x64xf32>
    %161 = arith.mulf %160, %159 : vector<16x64xf32>
    %162 = arith.mulf %149, %161 : vector<16x64xf32>
    %c0_61 = arith.constant 0 : index
    %c0_62 = arith.constant 0 : index
    %163 = vector.load %arg13[%c0_61, %c0_62] : memref<64x32xf32, #tpu.memory_space<vmem>>, vector<64x32xf32>
    %cst_63 = arith.constant dense<0.000000e+00> : vector<16x32xf32>
    %164 = tpu.matmul %162, %163, %cst_63 {dimension_numbers = #tpu.dot_dimension_numbers<[1], [0], [0], [1], [0, 0, 1, 1], [], []>} : vector<16x64xf32>, vector<64x32xf32>, vector<16x32xf32> -> vector<16x32xf32>
    %c0_64 = arith.constant 0 : index
    %c0_65 = arith.constant 0 : index
    %165 = vector.load %arg14[%c0_64, %c0_65] : memref<1x32xf32, #tpu.memory_space<vmem>>, vector<1x32xf32>
    %166 = vector.broadcast %165 : vector<1x32xf32> to vector<16x32xf32>
    %167 = arith.addf %164, %166 : vector<16x32xf32>
    %168 = arith.addf %167, %144 : vector<16x32xf32>
    %c0_66 = arith.constant 0 : index
    %c0_67 = arith.constant 0 : index
    %169 = vector.load %arg15[%c0_66, %c0_67] : memref<1x32xf32, #tpu.memory_space<vmem>>, vector<1x32xf32>
    %c0_68 = arith.constant 0 : index
    %c0_69 = arith.constant 0 : index
    %170 = vector.load %arg16[%c0_68, %c0_69] : memref<1x32xf32, #tpu.memory_space<vmem>>, vector<1x32xf32>
    %cst_70 = arith.constant dense<0.000000e+00> : vector<16xf32>
    %171 = vector.multi_reduction <add>, %168, %cst_70 [1] : vector<16x32xf32> to vector<16xf32>
    %172 = vector.shape_cast %171 : vector<16xf32> to vector<16x1xf32>
    %cst_71 = arith.constant 3.200000e+01 : f32
    %173 = vector.broadcast %cst_71 : f32 to vector<16x1xf32>
    %174 = arith.divf %172, %173 : vector<16x1xf32>
    %175 = vector.broadcast %174 : vector<16x1xf32> to vector<16x32xf32>
    %176 = arith.subf %168, %175 : vector<16x32xf32>
    %177 = arith.mulf %176, %176 : vector<16x32xf32>
    %cst_72 = arith.constant dense<0.000000e+00> : vector<16xf32>
    %178 = vector.multi_reduction <add>, %177, %cst_72 [1] : vector<16x32xf32> to vector<16xf32>
    %179 = vector.shape_cast %178 : vector<16xf32> to vector<16x1xf32>
    %cst_73 = arith.constant 3.200000e+01 : f32
    %180 = vector.broadcast %cst_73 : f32 to vector<16x1xf32>
    %181 = arith.divf %179, %180 : vector<16x1xf32>
    %182 = vector.broadcast %174 : vector<16x1xf32> to vector<16x32xf32>
    %183 = arith.subf %168, %182 : vector<16x32xf32>
    %cst_74 = arith.constant 9.99999996E-13 : f32
    %184 = vector.broadcast %cst_74 : f32 to vector<16x1xf32>
    %185 = arith.addf %181, %184 : vector<16x1xf32>
    %186 = math.rsqrt %185 : vector<16x1xf32>
    %187 = vector.broadcast %186 : vector<16x1xf32> to vector<16x32xf32>
    %188 = arith.mulf %183, %187 : vector<16x32xf32>
    %189 = vector.broadcast %169 : vector<1x32xf32> to vector<16x32xf32>
    %190 = arith.mulf %188, %189 : vector<16x32xf32>
    %191 = vector.broadcast %170 : vector<1x32xf32> to vector<16x32xf32>
    %192 = arith.addf %190, %191 : vector<16x32xf32>
    %c0_75 = arith.constant 0 : index
    %c0_76 = arith.constant 0 : index
    %193 = vector.load %arg17[%c0_75, %c0_76] : memref<16x32xf32, #tpu.memory_space<vmem>>, vector<16x32xf32>
    tpu.vector_store %arg17[%c0_75, %c0_76], %192 {strides = array<i32>} : memref<16x32xf32, #tpu.memory_space<vmem>>, vector<16x32xf32>,
    return
  }
  func.func @transform_0(%arg0: i32) -> (i32, i32) {
    %c0_i32 = arith.constant 0 : i32
    %c0_i32_0 = arith.constant 0 : i32
    %c0_i32_1 = arith.constant 0 : i32
    return %c0_i32, %c0_i32_0 : i32, i32
  }
  func.func @transform_1(%arg0: i32) -> (i32, i32) {
    %c0_i32 = arith.constant 0 : i32
    %c0_i32_0 = arith.constant 0 : i32
    %c0_i32_1 = arith.constant 0 : i32
    return %c0_i32, %c0_i32_0 : i32, i32
  }
  func.func @transform_2(%arg0: i32) -> (i32, i32) {
    %c0_i32 = arith.constant 0 : i32
    %c0_i32_0 = arith.constant 0 : i32
    %c0_i32_1 = arith.constant 0 : i32
    return %c0_i32, %c0_i32_0 : i32, i32
  }
  func.func @transform_3(%arg0: i32) -> (i32, i32) {
    %c0_i32 = arith.constant 0 : i32
    %c0_i32_0 = arith.constant 0 : i32
    %c0_i32_1 = arith.constant 0 : i32
    return %c0_i32, %c0_i32_0 : i32, i32
  }
  func.func @transform_4(%arg0: i32) -> (i32, i32) {
    %c0_i32 = arith.constant 0 : i32
    %c0_i32_0 = arith.constant 0 : i32
    %c0_i32_1 = arith.constant 0 : i32
    return %c0_i32, %c0_i32_0 : i32, i32
  }
  func.func @transform_5(%arg0: i32) -> (i32, i32) {
    %c0_i32 = arith.constant 0 : i32
    %c0_i32_0 = arith.constant 0 : i32
    %c0_i32_1 = arith.constant 0 : i32
    return %c0_i32, %c0_i32_0 : i32, i32
  }
  func.func @transform_6(%arg0: i32) -> (i32, i32) {
    %c0_i32 = arith.constant 0 : i32
    %c0_i32_0 = arith.constant 0 : i32
    %c0_i32_1 = arith.constant 0 : i32
    return %c0_i32, %c0_i32_0 : i32, i32
  }
  func.func @transform_7(%arg0: i32) -> (i32, i32) {
    %c0_i32 = arith.constant 0 : i32
    %c0_i32_0 = arith.constant 0 : i32
    %c0_i32_1 = arith.constant 0 : i32
    return %c0_i32, %c0_i32_0 : i32, i32
  }
  func.func @transform_8(%arg0: i32) -> (i32, i32) {
    %c0_i32 = arith.constant 0 : i32
    %c0_i32_0 = arith.constant 0 : i32
    %c0_i32_1 = arith.constant 0 : i32
    return %c0_i32, %c0_i32_0 : i32, i32
  }
  func.func @transform_9(%arg0: i32) -> (i32, i32) {
    %c0_i32 = arith.constant 0 : i32
    %c0_i32_0 = arith.constant 0 : i32
    %c0_i32_1 = arith.constant 0 : i32
    return %c0_i32, %c0_i32_0 : i32, i32
  }
  func.func @transform_10(%arg0: i32) -> (i32, i32) {
    %c0_i32 = arith.constant 0 : i32
    %c0_i32_0 = arith.constant 0 : i32
    %c0_i32_1 = arith.constant 0 : i32
    return %c0_i32, %c0_i32_0 : i32, i32
  }
  func.func @transform_11(%arg0: i32) -> (i32, i32) {
    %c0_i32 = arith.constant 0 : i32
    %c0_i32_0 = arith.constant 0 : i32
    %c0_i32_1 = arith.constant 0 : i32
    return %c0_i32, %c0_i32_0 : i32, i32
  }
  func.func @transform_12(%arg0: i32) -> (i32, i32) {
    %c0_i32 = arith.constant 0 : i32
    %c0_i32_0 = arith.constant 0 : i32
    %c0_i32_1 = arith.constant 0 : i32
    return %c0_i32, %c0_i32_0 : i32, i32
  }
  func.func @transform_13(%arg0: i32) -> (i32, i32) {
    %c0_i32 = arith.constant 0 : i32
    %c0_i32_0 = arith.constant 0 : i32
    %c0_i32_1 = arith.constant 0 : i32
    return %c0_i32, %c0_i32_0 : i32, i32
  }
  func.func @transform_14(%arg0: i32) -> (i32, i32) {
    %c0_i32 = arith.constant 0 : i32
    %c0_i32_0 = arith.constant 0 : i32
    %c0_i32_1 = arith.constant 0 : i32
    return %c0_i32, %c0_i32_0 : i32, i32
  }
  func.func @transform_15(%arg0: i32) -> (i32, i32) {
    %c0_i32 = arith.constant 0 : i32
    %c0_i32_0 = arith.constant 0 : i32
    %c0_i32_1 = arith.constant 0 : i32
    return %c0_i32, %c0_i32_0 : i32, i32
  }
  func.func @transform_16(%arg0: i32) -> (i32, i32) {
    %c0_i32 = arith.constant 0 : i32
    %c0_i32_0 = arith.constant 0 : i32
    %c0_i32_1 = arith.constant 0 : i32
    return %c0_i32, %c0_i32_0 : i32, i32
  }
}

module attributes {stable_mosaic.version = 11 : i64} {
  func.func @_bilstm_kernel(%arg0: i32, %arg1: memref<2x8x256xf32, #tpu.memory_space<vmem>>, %arg2: memref<2x8xf32, #tpu.memory_space<vmem>>, %arg3: memref<32x128xf32, #tpu.memory_space<vmem>>, %arg4: memref<32x128xf32, #tpu.memory_space<vmem>>, %arg5: memref<2x8x64xf32, #tpu.memory_space<vmem>>) attributes {dimension_semantics = [#tpu.dimension_semantics<arbitrary>], iteration_bounds = array<i64: 1>, scalar_prefetch = 0 : i64, scratch_operands = 0 : i64, tpu.core_type = #tpu.core_type<tc>, window_params = [{pipeline_mode = #tpu.pipeline_mode<synchronous>, transform_indices = @transform_0, window_bounds = array<i64: 2, 8, 256>}, {pipeline_mode = #tpu.pipeline_mode<synchronous>, transform_indices = @transform_1, window_bounds = array<i64: 2, 8>}, {pipeline_mode = #tpu.pipeline_mode<synchronous>, transform_indices = @transform_2, window_bounds = array<i64: 32, 128>}, {pipeline_mode = #tpu.pipeline_mode<synchronous>, transform_indices = @transform_3, window_bounds = array<i64: 32, 128>}, {pipeline_mode = #tpu.pipeline_mode<synchronous>, transform_indices = @transform_4, window_bounds = array<i64: 2, 8, 64>}]} {
    %c0 = arith.constant 0 : index
    %c0_0 = arith.constant 0 : index
    %c0_1 = arith.constant 0 : index
    %0 = vector.load %arg1[%c0, %c0_0, %c0_1] : memref<2x8x256xf32, #tpu.memory_space<vmem>>, vector<2x8x256xf32>
    %c0_2 = arith.constant 0 : index
    %c0_3 = arith.constant 0 : index
    %1 = vector.load %arg2[%c0_2, %c0_3] : memref<2x8xf32, #tpu.memory_space<vmem>>, vector<2x8xf32>
    %c0_4 = arith.constant 0 : index
    %c0_5 = arith.constant 0 : index
    %2 = vector.load %arg3[%c0_4, %c0_5] : memref<32x128xf32, #tpu.memory_space<vmem>>, vector<32x128xf32>
    %c0_6 = arith.constant 0 : index
    %c0_7 = arith.constant 0 : index
    %3 = vector.load %arg4[%c0_6, %c0_7] : memref<32x128xf32, #tpu.memory_space<vmem>>, vector<32x128xf32>
    %cst = arith.constant 0.000000e+00 : f32
    %4 = vector.broadcast %cst : f32 to vector<2x32xf32>
    %5 = vector.extract_strided_slice %1 {offsets = [0, 0], sizes = [2, 1], strides = [1, 1]} : vector<2x8xf32> to vector<2x1xf32>
    %6 = vector.extract_strided_slice %1 {offsets = [0, 7], sizes = [2, 1], strides = [1, 1]} : vector<2x8xf32> to vector<2x1xf32>
    %7 = vector.extract_strided_slice %0 {offsets = [0, 0, 0], sizes = [2, 1, 128], strides = [1, 1, 1]} : vector<2x8x256xf32> to vector<2x1x128xf32>
    %8 = vector.shape_cast %7 : vector<2x1x128xf32> to vector<2x128xf32>
    %cst_8 = arith.constant dense<0.000000e+00> : vector<2x128xf32>
    %9 = tpu.matmul %4, %2, %cst_8 {dimension_numbers = #tpu.dot_dimension_numbers<[1], [0], [0], [1], [0, 0, 1, 1], [], []>} : vector<2x32xf32>, vector<32x128xf32>, vector<2x128xf32> -> vector<2x128xf32>
    %10 = arith.addf %8, %9 : vector<2x128xf32>
    %11 = vector.extract_strided_slice %10 {offsets = [0, 0], sizes = [2, 96], strides = [1, 1]} : vector<2x128xf32> to vector<2x96xf32>
    %12 = arith.negf %11 : vector<2x96xf32>
    %13 = math.exp %12 : vector<2x96xf32>
    %cst_9 = arith.constant 1.000000e+00 : f32
    %14 = vector.broadcast %cst_9 : f32 to vector<2x96xf32>
    %15 = arith.addf %14, %13 : vector<2x96xf32>
    %16 = arith.divf %14, %15 : vector<2x96xf32>
    %17 = vector.extract_strided_slice %16 {offsets = [0, 0], sizes = [2, 32], strides = [1, 1]} : vector<2x96xf32> to vector<2x32xf32>
    %18 = vector.extract_strided_slice %16 {offsets = [0, 32], sizes = [2, 32], strides = [1, 1]} : vector<2x96xf32> to vector<2x32xf32>
    %19 = vector.extract_strided_slice %16 {offsets = [0, 64], sizes = [2, 32], strides = [1, 1]} : vector<2x96xf32> to vector<2x32xf32>
    %20 = vector.extract_strided_slice %10 {offsets = [0, 96], sizes = [2, 32], strides = [1, 1]} : vector<2x128xf32> to vector<2x32xf32>
    %21 = math.tanh %20 : vector<2x32xf32>
    %22 = arith.mulf %18, %4 : vector<2x32xf32>
    %23 = arith.mulf %17, %21 : vector<2x32xf32>
    %24 = arith.addf %22, %23 : vector<2x32xf32>
    %25 = math.tanh %24 : vector<2x32xf32>
    %26 = arith.mulf %19, %25 : vector<2x32xf32>
    %27 = vector.broadcast %5 : vector<2x1xf32> to vector<2x32xf32>
    %28 = arith.mulf %27, %26 : vector<2x32xf32>
    %cst_10 = arith.constant 1.000000e+00 : f32
    %29 = vector.broadcast %cst_10 : f32 to vector<2x1xf32>
    %30 = arith.subf %29, %5 : vector<2x1xf32>
    %31 = vector.broadcast %30 : vector<2x1xf32> to vector<2x32xf32>
    %32 = arith.mulf %31, %4 : vector<2x32xf32>
    %33 = arith.addf %28, %32 : vector<2x32xf32>
    %34 = vector.broadcast %5 : vector<2x1xf32> to vector<2x32xf32>
    %35 = arith.mulf %34, %24 : vector<2x32xf32>
    %cst_11 = arith.constant 1.000000e+00 : f32
    %36 = vector.broadcast %cst_11 : f32 to vector<2x1xf32>
    %37 = arith.subf %36, %5 : vector<2x1xf32>
    %38 = vector.broadcast %37 : vector<2x1xf32> to vector<2x32xf32>
    %39 = arith.mulf %38, %4 : vector<2x32xf32>
    %40 = arith.addf %35, %39 : vector<2x32xf32>
    %41 = vector.broadcast %5 : vector<2x1xf32> to vector<2x32xf32>
    %42 = arith.mulf %41, %26 : vector<2x32xf32>
    %43 = vector.extract_strided_slice %0 {offsets = [0, 7, 128], sizes = [2, 1, 128], strides = [1, 1, 1]} : vector<2x8x256xf32> to vector<2x1x128xf32>
    %44 = vector.shape_cast %43 : vector<2x1x128xf32> to vector<2x128xf32>
    %cst_12 = arith.constant dense<0.000000e+00> : vector<2x128xf32>
    %45 = tpu.matmul %4, %3, %cst_12 {dimension_numbers = #tpu.dot_dimension_numbers<[1], [0], [0], [1], [0, 0, 1, 1], [], []>} : vector<2x32xf32>, vector<32x128xf32>, vector<2x128xf32> -> vector<2x128xf32>
    %46 = arith.addf %44, %45 : vector<2x128xf32>
    %47 = vector.extract_strided_slice %46 {offsets = [0, 0], sizes = [2, 96], strides = [1, 1]} : vector<2x128xf32> to vector<2x96xf32>
    %48 = arith.negf %47 : vector<2x96xf32>
    %49 = math.exp %48 : vector<2x96xf32>
    %cst_13 = arith.constant 1.000000e+00 : f32
    %50 = vector.broadcast %cst_13 : f32 to vector<2x96xf32>
    %51 = arith.addf %50, %49 : vector<2x96xf32>
    %52 = arith.divf %50, %51 : vector<2x96xf32>
    %53 = vector.extract_strided_slice %52 {offsets = [0, 0], sizes = [2, 32], strides = [1, 1]} : vector<2x96xf32> to vector<2x32xf32>
    %54 = vector.extract_strided_slice %52 {offsets = [0, 32], sizes = [2, 32], strides = [1, 1]} : vector<2x96xf32> to vector<2x32xf32>
    %55 = vector.extract_strided_slice %52 {offsets = [0, 64], sizes = [2, 32], strides = [1, 1]} : vector<2x96xf32> to vector<2x32xf32>
    %56 = vector.extract_strided_slice %46 {offsets = [0, 96], sizes = [2, 32], strides = [1, 1]} : vector<2x128xf32> to vector<2x32xf32>
    %57 = math.tanh %56 : vector<2x32xf32>
    %58 = arith.mulf %54, %4 : vector<2x32xf32>
    %59 = arith.mulf %53, %57 : vector<2x32xf32>
    %60 = arith.addf %58, %59 : vector<2x32xf32>
    %61 = math.tanh %60 : vector<2x32xf32>
    %62 = arith.mulf %55, %61 : vector<2x32xf32>
    %63 = vector.broadcast %6 : vector<2x1xf32> to vector<2x32xf32>
    %64 = arith.mulf %63, %62 : vector<2x32xf32>
    %cst_14 = arith.constant 1.000000e+00 : f32
    %65 = vector.broadcast %cst_14 : f32 to vector<2x1xf32>
    %66 = arith.subf %65, %6 : vector<2x1xf32>
    %67 = vector.broadcast %66 : vector<2x1xf32> to vector<2x32xf32>
    %68 = arith.mulf %67, %4 : vector<2x32xf32>
    %69 = arith.addf %64, %68 : vector<2x32xf32>
    %70 = vector.broadcast %6 : vector<2x1xf32> to vector<2x32xf32>
    %71 = arith.mulf %70, %60 : vector<2x32xf32>
    %cst_15 = arith.constant 1.000000e+00 : f32
    %72 = vector.broadcast %cst_15 : f32 to vector<2x1xf32>
    %73 = arith.subf %72, %6 : vector<2x1xf32>
    %74 = vector.broadcast %73 : vector<2x1xf32> to vector<2x32xf32>
    %75 = arith.mulf %74, %4 : vector<2x32xf32>
    %76 = arith.addf %71, %75 : vector<2x32xf32>
    %77 = vector.broadcast %6 : vector<2x1xf32> to vector<2x32xf32>
    %78 = arith.mulf %77, %62 : vector<2x32xf32>
    %79 = vector.extract_strided_slice %1 {offsets = [0, 1], sizes = [2, 1], strides = [1, 1]} : vector<2x8xf32> to vector<2x1xf32>
    %80 = vector.extract_strided_slice %1 {offsets = [0, 6], sizes = [2, 1], strides = [1, 1]} : vector<2x8xf32> to vector<2x1xf32>
    %81 = vector.extract_strided_slice %0 {offsets = [0, 1, 0], sizes = [2, 1, 128], strides = [1, 1, 1]} : vector<2x8x256xf32> to vector<2x1x128xf32>
    %82 = vector.shape_cast %81 : vector<2x1x128xf32> to vector<2x128xf32>
    %cst_16 = arith.constant dense<0.000000e+00> : vector<2x128xf32>
    %83 = tpu.matmul %33, %2, %cst_16 {dimension_numbers = #tpu.dot_dimension_numbers<[1], [0], [0], [1], [0, 0, 1, 1], [], []>} : vector<2x32xf32>, vector<32x128xf32>, vector<2x128xf32> -> vector<2x128xf32>
    %84 = arith.addf %82, %83 : vector<2x128xf32>
    %85 = vector.extract_strided_slice %84 {offsets = [0, 0], sizes = [2, 96], strides = [1, 1]} : vector<2x128xf32> to vector<2x96xf32>
    %86 = arith.negf %85 : vector<2x96xf32>
    %87 = math.exp %86 : vector<2x96xf32>
    %cst_17 = arith.constant 1.000000e+00 : f32
    %88 = vector.broadcast %cst_17 : f32 to vector<2x96xf32>
    %89 = arith.addf %88, %87 : vector<2x96xf32>
    %90 = arith.divf %88, %89 : vector<2x96xf32>
    %91 = vector.extract_strided_slice %90 {offsets = [0, 0], sizes = [2, 32], strides = [1, 1]} : vector<2x96xf32> to vector<2x32xf32>
    %92 = vector.extract_strided_slice %90 {offsets = [0, 32], sizes = [2, 32], strides = [1, 1]} : vector<2x96xf32> to vector<2x32xf32>
    %93 = vector.extract_strided_slice %90 {offsets = [0, 64], sizes = [2, 32], strides = [1, 1]} : vector<2x96xf32> to vector<2x32xf32>
    %94 = vector.extract_strided_slice %84 {offsets = [0, 96], sizes = [2, 32], strides = [1, 1]} : vector<2x128xf32> to vector<2x32xf32>
    %95 = math.tanh %94 : vector<2x32xf32>
    %96 = arith.mulf %92, %40 : vector<2x32xf32>
    %97 = arith.mulf %91, %95 : vector<2x32xf32>
    %98 = arith.addf %96, %97 : vector<2x32xf32>
    %99 = math.tanh %98 : vector<2x32xf32>
    %100 = arith.mulf %93, %99 : vector<2x32xf32>
    %101 = vector.broadcast %79 : vector<2x1xf32> to vector<2x32xf32>
    %102 = arith.mulf %101, %100 : vector<2x32xf32>
    %cst_18 = arith.constant 1.000000e+00 : f32
    %103 = vector.broadcast %cst_18 : f32 to vector<2x1xf32>
    %104 = arith.subf %103, %79 : vector<2x1xf32>
    %105 = vector.broadcast %104 : vector<2x1xf32> to vector<2x32xf32>
    %106 = arith.mulf %105, %33 : vector<2x32xf32>
    %107 = arith.addf %102, %106 : vector<2x32xf32>
    %108 = vector.broadcast %79 : vector<2x1xf32> to vector<2x32xf32>
    %109 = arith.mulf %108, %98 : vector<2x32xf32>
    %cst_19 = arith.constant 1.000000e+00 : f32
    %110 = vector.broadcast %cst_19 : f32 to vector<2x1xf32>
    %111 = arith.subf %110, %79 : vector<2x1xf32>
    %112 = vector.broadcast %111 : vector<2x1xf32> to vector<2x32xf32>
    %113 = arith.mulf %112, %40 : vector<2x32xf32>
    %114 = arith.addf %109, %113 : vector<2x32xf32>
    %115 = vector.broadcast %79 : vector<2x1xf32> to vector<2x32xf32>
    %116 = arith.mulf %115, %100 : vector<2x32xf32>
    %117 = vector.extract_strided_slice %0 {offsets = [0, 6, 128], sizes = [2, 1, 128], strides = [1, 1, 1]} : vector<2x8x256xf32> to vector<2x1x128xf32>
    %118 = vector.shape_cast %117 : vector<2x1x128xf32> to vector<2x128xf32>
    %cst_20 = arith.constant dense<0.000000e+00> : vector<2x128xf32>
    %119 = tpu.matmul %69, %3, %cst_20 {dimension_numbers = #tpu.dot_dimension_numbers<[1], [0], [0], [1], [0, 0, 1, 1], [], []>} : vector<2x32xf32>, vector<32x128xf32>, vector<2x128xf32> -> vector<2x128xf32>
    %120 = arith.addf %118, %119 : vector<2x128xf32>
    %121 = vector.extract_strided_slice %120 {offsets = [0, 0], sizes = [2, 96], strides = [1, 1]} : vector<2x128xf32> to vector<2x96xf32>
    %122 = arith.negf %121 : vector<2x96xf32>
    %123 = math.exp %122 : vector<2x96xf32>
    %cst_21 = arith.constant 1.000000e+00 : f32
    %124 = vector.broadcast %cst_21 : f32 to vector<2x96xf32>
    %125 = arith.addf %124, %123 : vector<2x96xf32>
    %126 = arith.divf %124, %125 : vector<2x96xf32>
    %127 = vector.extract_strided_slice %126 {offsets = [0, 0], sizes = [2, 32], strides = [1, 1]} : vector<2x96xf32> to vector<2x32xf32>
    %128 = vector.extract_strided_slice %126 {offsets = [0, 32], sizes = [2, 32], strides = [1, 1]} : vector<2x96xf32> to vector<2x32xf32>
    %129 = vector.extract_strided_slice %126 {offsets = [0, 64], sizes = [2, 32], strides = [1, 1]} : vector<2x96xf32> to vector<2x32xf32>
    %130 = vector.extract_strided_slice %120 {offsets = [0, 96], sizes = [2, 32], strides = [1, 1]} : vector<2x128xf32> to vector<2x32xf32>
    %131 = math.tanh %130 : vector<2x32xf32>
    %132 = arith.mulf %128, %76 : vector<2x32xf32>
    %133 = arith.mulf %127, %131 : vector<2x32xf32>
    %134 = arith.addf %132, %133 : vector<2x32xf32>
    %135 = math.tanh %134 : vector<2x32xf32>
    %136 = arith.mulf %129, %135 : vector<2x32xf32>
    %137 = vector.broadcast %80 : vector<2x1xf32> to vector<2x32xf32>
    %138 = arith.mulf %137, %136 : vector<2x32xf32>
    %cst_22 = arith.constant 1.000000e+00 : f32
    %139 = vector.broadcast %cst_22 : f32 to vector<2x1xf32>
    %140 = arith.subf %139, %80 : vector<2x1xf32>
    %141 = vector.broadcast %140 : vector<2x1xf32> to vector<2x32xf32>
    %142 = arith.mulf %141, %69 : vector<2x32xf32>
    %143 = arith.addf %138, %142 : vector<2x32xf32>
    %144 = vector.broadcast %80 : vector<2x1xf32> to vector<2x32xf32>
    %145 = arith.mulf %144, %134 : vector<2x32xf32>
    %cst_23 = arith.constant 1.000000e+00 : f32
    %146 = vector.broadcast %cst_23 : f32 to vector<2x1xf32>
    %147 = arith.subf %146, %80 : vector<2x1xf32>
    %148 = vector.broadcast %147 : vector<2x1xf32> to vector<2x32xf32>
    %149 = arith.mulf %148, %76 : vector<2x32xf32>
    %150 = arith.addf %145, %149 : vector<2x32xf32>
    %151 = vector.broadcast %80 : vector<2x1xf32> to vector<2x32xf32>
    %152 = arith.mulf %151, %136 : vector<2x32xf32>
    %153 = vector.extract_strided_slice %1 {offsets = [0, 2], sizes = [2, 1], strides = [1, 1]} : vector<2x8xf32> to vector<2x1xf32>
    %154 = vector.extract_strided_slice %1 {offsets = [0, 5], sizes = [2, 1], strides = [1, 1]} : vector<2x8xf32> to vector<2x1xf32>
    %155 = vector.extract_strided_slice %0 {offsets = [0, 2, 0], sizes = [2, 1, 128], strides = [1, 1, 1]} : vector<2x8x256xf32> to vector<2x1x128xf32>
    %156 = vector.shape_cast %155 : vector<2x1x128xf32> to vector<2x128xf32>
    %cst_24 = arith.constant dense<0.000000e+00> : vector<2x128xf32>
    %157 = tpu.matmul %107, %2, %cst_24 {dimension_numbers = #tpu.dot_dimension_numbers<[1], [0], [0], [1], [0, 0, 1, 1], [], []>} : vector<2x32xf32>, vector<32x128xf32>, vector<2x128xf32> -> vector<2x128xf32>
    %158 = arith.addf %156, %157 : vector<2x128xf32>
    %159 = vector.extract_strided_slice %158 {offsets = [0, 0], sizes = [2, 96], strides = [1, 1]} : vector<2x128xf32> to vector<2x96xf32>
    %160 = arith.negf %159 : vector<2x96xf32>
    %161 = math.exp %160 : vector<2x96xf32>
    %cst_25 = arith.constant 1.000000e+00 : f32
    %162 = vector.broadcast %cst_25 : f32 to vector<2x96xf32>
    %163 = arith.addf %162, %161 : vector<2x96xf32>
    %164 = arith.divf %162, %163 : vector<2x96xf32>
    %165 = vector.extract_strided_slice %164 {offsets = [0, 0], sizes = [2, 32], strides = [1, 1]} : vector<2x96xf32> to vector<2x32xf32>
    %166 = vector.extract_strided_slice %164 {offsets = [0, 32], sizes = [2, 32], strides = [1, 1]} : vector<2x96xf32> to vector<2x32xf32>
    %167 = vector.extract_strided_slice %164 {offsets = [0, 64], sizes = [2, 32], strides = [1, 1]} : vector<2x96xf32> to vector<2x32xf32>
    %168 = vector.extract_strided_slice %158 {offsets = [0, 96], sizes = [2, 32], strides = [1, 1]} : vector<2x128xf32> to vector<2x32xf32>
    %169 = math.tanh %168 : vector<2x32xf32>
    %170 = arith.mulf %166, %114 : vector<2x32xf32>
    %171 = arith.mulf %165, %169 : vector<2x32xf32>
    %172 = arith.addf %170, %171 : vector<2x32xf32>
    %173 = math.tanh %172 : vector<2x32xf32>
    %174 = arith.mulf %167, %173 : vector<2x32xf32>
    %175 = vector.broadcast %153 : vector<2x1xf32> to vector<2x32xf32>
    %176 = arith.mulf %175, %174 : vector<2x32xf32>
    %cst_26 = arith.constant 1.000000e+00 : f32
    %177 = vector.broadcast %cst_26 : f32 to vector<2x1xf32>
    %178 = arith.subf %177, %153 : vector<2x1xf32>
    %179 = vector.broadcast %178 : vector<2x1xf32> to vector<2x32xf32>
    %180 = arith.mulf %179, %107 : vector<2x32xf32>
    %181 = arith.addf %176, %180 : vector<2x32xf32>
    %182 = vector.broadcast %153 : vector<2x1xf32> to vector<2x32xf32>
    %183 = arith.mulf %182, %172 : vector<2x32xf32>
    %cst_27 = arith.constant 1.000000e+00 : f32
    %184 = vector.broadcast %cst_27 : f32 to vector<2x1xf32>
    %185 = arith.subf %184, %153 : vector<2x1xf32>
    %186 = vector.broadcast %185 : vector<2x1xf32> to vector<2x32xf32>
    %187 = arith.mulf %186, %114 : vector<2x32xf32>
    %188 = arith.addf %183, %187 : vector<2x32xf32>
    %189 = vector.broadcast %153 : vector<2x1xf32> to vector<2x32xf32>
    %190 = arith.mulf %189, %174 : vector<2x32xf32>
    %191 = vector.extract_strided_slice %0 {offsets = [0, 5, 128], sizes = [2, 1, 128], strides = [1, 1, 1]} : vector<2x8x256xf32> to vector<2x1x128xf32>
    %192 = vector.shape_cast %191 : vector<2x1x128xf32> to vector<2x128xf32>
    %cst_28 = arith.constant dense<0.000000e+00> : vector<2x128xf32>
    %193 = tpu.matmul %143, %3, %cst_28 {dimension_numbers = #tpu.dot_dimension_numbers<[1], [0], [0], [1], [0, 0, 1, 1], [], []>} : vector<2x32xf32>, vector<32x128xf32>, vector<2x128xf32> -> vector<2x128xf32>
    %194 = arith.addf %192, %193 : vector<2x128xf32>
    %195 = vector.extract_strided_slice %194 {offsets = [0, 0], sizes = [2, 96], strides = [1, 1]} : vector<2x128xf32> to vector<2x96xf32>
    %196 = arith.negf %195 : vector<2x96xf32>
    %197 = math.exp %196 : vector<2x96xf32>
    %cst_29 = arith.constant 1.000000e+00 : f32
    %198 = vector.broadcast %cst_29 : f32 to vector<2x96xf32>
    %199 = arith.addf %198, %197 : vector<2x96xf32>
    %200 = arith.divf %198, %199 : vector<2x96xf32>
    %201 = vector.extract_strided_slice %200 {offsets = [0, 0], sizes = [2, 32], strides = [1, 1]} : vector<2x96xf32> to vector<2x32xf32>
    %202 = vector.extract_strided_slice %200 {offsets = [0, 32], sizes = [2, 32], strides = [1, 1]} : vector<2x96xf32> to vector<2x32xf32>
    %203 = vector.extract_strided_slice %200 {offsets = [0, 64], sizes = [2, 32], strides = [1, 1]} : vector<2x96xf32> to vector<2x32xf32>
    %204 = vector.extract_strided_slice %194 {offsets = [0, 96], sizes = [2, 32], strides = [1, 1]} : vector<2x128xf32> to vector<2x32xf32>
    %205 = math.tanh %204 : vector<2x32xf32>
    %206 = arith.mulf %202, %150 : vector<2x32xf32>
    %207 = arith.mulf %201, %205 : vector<2x32xf32>
    %208 = arith.addf %206, %207 : vector<2x32xf32>
    %209 = math.tanh %208 : vector<2x32xf32>
    %210 = arith.mulf %203, %209 : vector<2x32xf32>
    %211 = vector.broadcast %154 : vector<2x1xf32> to vector<2x32xf32>
    %212 = arith.mulf %211, %210 : vector<2x32xf32>
    %cst_30 = arith.constant 1.000000e+00 : f32
    %213 = vector.broadcast %cst_30 : f32 to vector<2x1xf32>
    %214 = arith.subf %213, %154 : vector<2x1xf32>
    %215 = vector.broadcast %214 : vector<2x1xf32> to vector<2x32xf32>
    %216 = arith.mulf %215, %143 : vector<2x32xf32>
    %217 = arith.addf %212, %216 : vector<2x32xf32>
    %218 = vector.broadcast %154 : vector<2x1xf32> to vector<2x32xf32>
    %219 = arith.mulf %218, %208 : vector<2x32xf32>
    %cst_31 = arith.constant 1.000000e+00 : f32
    %220 = vector.broadcast %cst_31 : f32 to vector<2x1xf32>
    %221 = arith.subf %220, %154 : vector<2x1xf32>
    %222 = vector.broadcast %221 : vector<2x1xf32> to vector<2x32xf32>
    %223 = arith.mulf %222, %150 : vector<2x32xf32>
    %224 = arith.addf %219, %223 : vector<2x32xf32>
    %225 = vector.broadcast %154 : vector<2x1xf32> to vector<2x32xf32>
    %226 = arith.mulf %225, %210 : vector<2x32xf32>
    %227 = vector.extract_strided_slice %1 {offsets = [0, 3], sizes = [2, 1], strides = [1, 1]} : vector<2x8xf32> to vector<2x1xf32>
    %228 = vector.extract_strided_slice %1 {offsets = [0, 4], sizes = [2, 1], strides = [1, 1]} : vector<2x8xf32> to vector<2x1xf32>
    %229 = vector.extract_strided_slice %0 {offsets = [0, 3, 0], sizes = [2, 1, 128], strides = [1, 1, 1]} : vector<2x8x256xf32> to vector<2x1x128xf32>
    %230 = vector.shape_cast %229 : vector<2x1x128xf32> to vector<2x128xf32>
    %cst_32 = arith.constant dense<0.000000e+00> : vector<2x128xf32>
    %231 = tpu.matmul %181, %2, %cst_32 {dimension_numbers = #tpu.dot_dimension_numbers<[1], [0], [0], [1], [0, 0, 1, 1], [], []>} : vector<2x32xf32>, vector<32x128xf32>, vector<2x128xf32> -> vector<2x128xf32>
    %232 = arith.addf %230, %231 : vector<2x128xf32>
    %233 = vector.extract_strided_slice %232 {offsets = [0, 0], sizes = [2, 96], strides = [1, 1]} : vector<2x128xf32> to vector<2x96xf32>
    %234 = arith.negf %233 : vector<2x96xf32>
    %235 = math.exp %234 : vector<2x96xf32>
    %cst_33 = arith.constant 1.000000e+00 : f32
    %236 = vector.broadcast %cst_33 : f32 to vector<2x96xf32>
    %237 = arith.addf %236, %235 : vector<2x96xf32>
    %238 = arith.divf %236, %237 : vector<2x96xf32>
    %239 = vector.extract_strided_slice %238 {offsets = [0, 0], sizes = [2, 32], strides = [1, 1]} : vector<2x96xf32> to vector<2x32xf32>
    %240 = vector.extract_strided_slice %238 {offsets = [0, 32], sizes = [2, 32], strides = [1, 1]} : vector<2x96xf32> to vector<2x32xf32>
    %241 = vector.extract_strided_slice %238 {offsets = [0, 64], sizes = [2, 32], strides = [1, 1]} : vector<2x96xf32> to vector<2x32xf32>
    %242 = vector.extract_strided_slice %232 {offsets = [0, 96], sizes = [2, 32], strides = [1, 1]} : vector<2x128xf32> to vector<2x32xf32>
    %243 = math.tanh %242 : vector<2x32xf32>
    %244 = arith.mulf %240, %188 : vector<2x32xf32>
    %245 = arith.mulf %239, %243 : vector<2x32xf32>
    %246 = arith.addf %244, %245 : vector<2x32xf32>
    %247 = math.tanh %246 : vector<2x32xf32>
    %248 = arith.mulf %241, %247 : vector<2x32xf32>
    %249 = vector.broadcast %227 : vector<2x1xf32> to vector<2x32xf32>
    %250 = arith.mulf %249, %248 : vector<2x32xf32>
    %cst_34 = arith.constant 1.000000e+00 : f32
    %251 = vector.broadcast %cst_34 : f32 to vector<2x1xf32>
    %252 = arith.subf %251, %227 : vector<2x1xf32>
    %253 = vector.broadcast %252 : vector<2x1xf32> to vector<2x32xf32>
    %254 = arith.mulf %253, %181 : vector<2x32xf32>
    %255 = arith.addf %250, %254 : vector<2x32xf32>
    %256 = vector.broadcast %227 : vector<2x1xf32> to vector<2x32xf32>
    %257 = arith.mulf %256, %246 : vector<2x32xf32>
    %cst_35 = arith.constant 1.000000e+00 : f32
    %258 = vector.broadcast %cst_35 : f32 to vector<2x1xf32>
    %259 = arith.subf %258, %227 : vector<2x1xf32>
    %260 = vector.broadcast %259 : vector<2x1xf32> to vector<2x32xf32>
    %261 = arith.mulf %260, %188 : vector<2x32xf32>
    %262 = arith.addf %257, %261 : vector<2x32xf32>
    %263 = vector.broadcast %227 : vector<2x1xf32> to vector<2x32xf32>
    %264 = arith.mulf %263, %248 : vector<2x32xf32>
    %265 = vector.extract_strided_slice %0 {offsets = [0, 4, 128], sizes = [2, 1, 128], strides = [1, 1, 1]} : vector<2x8x256xf32> to vector<2x1x128xf32>
    %266 = vector.shape_cast %265 : vector<2x1x128xf32> to vector<2x128xf32>
    %cst_36 = arith.constant dense<0.000000e+00> : vector<2x128xf32>
    %267 = tpu.matmul %217, %3, %cst_36 {dimension_numbers = #tpu.dot_dimension_numbers<[1], [0], [0], [1], [0, 0, 1, 1], [], []>} : vector<2x32xf32>, vector<32x128xf32>, vector<2x128xf32> -> vector<2x128xf32>
    %268 = arith.addf %266, %267 : vector<2x128xf32>
    %269 = vector.extract_strided_slice %268 {offsets = [0, 0], sizes = [2, 96], strides = [1, 1]} : vector<2x128xf32> to vector<2x96xf32>
    %270 = arith.negf %269 : vector<2x96xf32>
    %271 = math.exp %270 : vector<2x96xf32>
    %cst_37 = arith.constant 1.000000e+00 : f32
    %272 = vector.broadcast %cst_37 : f32 to vector<2x96xf32>
    %273 = arith.addf %272, %271 : vector<2x96xf32>
    %274 = arith.divf %272, %273 : vector<2x96xf32>
    %275 = vector.extract_strided_slice %274 {offsets = [0, 0], sizes = [2, 32], strides = [1, 1]} : vector<2x96xf32> to vector<2x32xf32>
    %276 = vector.extract_strided_slice %274 {offsets = [0, 32], sizes = [2, 32], strides = [1, 1]} : vector<2x96xf32> to vector<2x32xf32>
    %277 = vector.extract_strided_slice %274 {offsets = [0, 64], sizes = [2, 32], strides = [1, 1]} : vector<2x96xf32> to vector<2x32xf32>
    %278 = vector.extract_strided_slice %268 {offsets = [0, 96], sizes = [2, 32], strides = [1, 1]} : vector<2x128xf32> to vector<2x32xf32>
    %279 = math.tanh %278 : vector<2x32xf32>
    %280 = arith.mulf %276, %224 : vector<2x32xf32>
    %281 = arith.mulf %275, %279 : vector<2x32xf32>
    %282 = arith.addf %280, %281 : vector<2x32xf32>
    %283 = math.tanh %282 : vector<2x32xf32>
    %284 = arith.mulf %277, %283 : vector<2x32xf32>
    %285 = vector.broadcast %228 : vector<2x1xf32> to vector<2x32xf32>
    %286 = arith.mulf %285, %284 : vector<2x32xf32>
    %cst_38 = arith.constant 1.000000e+00 : f32
    %287 = vector.broadcast %cst_38 : f32 to vector<2x1xf32>
    %288 = arith.subf %287, %228 : vector<2x1xf32>
    %289 = vector.broadcast %288 : vector<2x1xf32> to vector<2x32xf32>
    %290 = arith.mulf %289, %217 : vector<2x32xf32>
    %291 = arith.addf %286, %290 : vector<2x32xf32>
    %292 = vector.broadcast %228 : vector<2x1xf32> to vector<2x32xf32>
    %293 = arith.mulf %292, %282 : vector<2x32xf32>
    %cst_39 = arith.constant 1.000000e+00 : f32
    %294 = vector.broadcast %cst_39 : f32 to vector<2x1xf32>
    %295 = arith.subf %294, %228 : vector<2x1xf32>
    %296 = vector.broadcast %295 : vector<2x1xf32> to vector<2x32xf32>
    %297 = arith.mulf %296, %224 : vector<2x32xf32>
    %298 = arith.addf %293, %297 : vector<2x32xf32>
    %299 = vector.broadcast %228 : vector<2x1xf32> to vector<2x32xf32>
    %300 = arith.mulf %299, %284 : vector<2x32xf32>
    %301 = vector.extract_strided_slice %1 {offsets = [0, 4], sizes = [2, 1], strides = [1, 1]} : vector<2x8xf32> to vector<2x1xf32>
    %302 = vector.extract_strided_slice %1 {offsets = [0, 3], sizes = [2, 1], strides = [1, 1]} : vector<2x8xf32> to vector<2x1xf32>
    %303 = vector.extract_strided_slice %0 {offsets = [0, 4, 0], sizes = [2, 1, 128], strides = [1, 1, 1]} : vector<2x8x256xf32> to vector<2x1x128xf32>
    %304 = vector.shape_cast %303 : vector<2x1x128xf32> to vector<2x128xf32>
    %cst_40 = arith.constant dense<0.000000e+00> : vector<2x128xf32>
    %305 = tpu.matmul %255, %2, %cst_40 {dimension_numbers = #tpu.dot_dimension_numbers<[1], [0], [0], [1], [0, 0, 1, 1], [], []>} : vector<2x32xf32>, vector<32x128xf32>, vector<2x128xf32> -> vector<2x128xf32>
    %306 = arith.addf %304, %305 : vector<2x128xf32>
    %307 = vector.extract_strided_slice %306 {offsets = [0, 0], sizes = [2, 96], strides = [1, 1]} : vector<2x128xf32> to vector<2x96xf32>
    %308 = arith.negf %307 : vector<2x96xf32>
    %309 = math.exp %308 : vector<2x96xf32>
    %cst_41 = arith.constant 1.000000e+00 : f32
    %310 = vector.broadcast %cst_41 : f32 to vector<2x96xf32>
    %311 = arith.addf %310, %309 : vector<2x96xf32>
    %312 = arith.divf %310, %311 : vector<2x96xf32>
    %313 = vector.extract_strided_slice %312 {offsets = [0, 0], sizes = [2, 32], strides = [1, 1]} : vector<2x96xf32> to vector<2x32xf32>
    %314 = vector.extract_strided_slice %312 {offsets = [0, 32], sizes = [2, 32], strides = [1, 1]} : vector<2x96xf32> to vector<2x32xf32>
    %315 = vector.extract_strided_slice %312 {offsets = [0, 64], sizes = [2, 32], strides = [1, 1]} : vector<2x96xf32> to vector<2x32xf32>
    %316 = vector.extract_strided_slice %306 {offsets = [0, 96], sizes = [2, 32], strides = [1, 1]} : vector<2x128xf32> to vector<2x32xf32>
    %317 = math.tanh %316 : vector<2x32xf32>
    %318 = arith.mulf %314, %262 : vector<2x32xf32>
    %319 = arith.mulf %313, %317 : vector<2x32xf32>
    %320 = arith.addf %318, %319 : vector<2x32xf32>
    %321 = math.tanh %320 : vector<2x32xf32>
    %322 = arith.mulf %315, %321 : vector<2x32xf32>
    %323 = vector.broadcast %301 : vector<2x1xf32> to vector<2x32xf32>
    %324 = arith.mulf %323, %322 : vector<2x32xf32>
    %cst_42 = arith.constant 1.000000e+00 : f32
    %325 = vector.broadcast %cst_42 : f32 to vector<2x1xf32>
    %326 = arith.subf %325, %301 : vector<2x1xf32>
    %327 = vector.broadcast %326 : vector<2x1xf32> to vector<2x32xf32>
    %328 = arith.mulf %327, %255 : vector<2x32xf32>
    %329 = arith.addf %324, %328 : vector<2x32xf32>
    %330 = vector.broadcast %301 : vector<2x1xf32> to vector<2x32xf32>
    %331 = arith.mulf %330, %320 : vector<2x32xf32>
    %cst_43 = arith.constant 1.000000e+00 : f32
    %332 = vector.broadcast %cst_43 : f32 to vector<2x1xf32>
    %333 = arith.subf %332, %301 : vector<2x1xf32>
    %334 = vector.broadcast %333 : vector<2x1xf32> to vector<2x32xf32>
    %335 = arith.mulf %334, %262 : vector<2x32xf32>
    %336 = arith.addf %331, %335 : vector<2x32xf32>
    %337 = vector.broadcast %301 : vector<2x1xf32> to vector<2x32xf32>
    %338 = arith.mulf %337, %322 : vector<2x32xf32>
    %339 = vector.extract_strided_slice %0 {offsets = [0, 3, 128], sizes = [2, 1, 128], strides = [1, 1, 1]} : vector<2x8x256xf32> to vector<2x1x128xf32>
    %340 = vector.shape_cast %339 : vector<2x1x128xf32> to vector<2x128xf32>
    %cst_44 = arith.constant dense<0.000000e+00> : vector<2x128xf32>
    %341 = tpu.matmul %291, %3, %cst_44 {dimension_numbers = #tpu.dot_dimension_numbers<[1], [0], [0], [1], [0, 0, 1, 1], [], []>} : vector<2x32xf32>, vector<32x128xf32>, vector<2x128xf32> -> vector<2x128xf32>
    %342 = arith.addf %340, %341 : vector<2x128xf32>
    %343 = vector.extract_strided_slice %342 {offsets = [0, 0], sizes = [2, 96], strides = [1, 1]} : vector<2x128xf32> to vector<2x96xf32>
    %344 = arith.negf %343 : vector<2x96xf32>
    %345 = math.exp %344 : vector<2x96xf32>
    %cst_45 = arith.constant 1.000000e+00 : f32
    %346 = vector.broadcast %cst_45 : f32 to vector<2x96xf32>
    %347 = arith.addf %346, %345 : vector<2x96xf32>
    %348 = arith.divf %346, %347 : vector<2x96xf32>
    %349 = vector.extract_strided_slice %348 {offsets = [0, 0], sizes = [2, 32], strides = [1, 1]} : vector<2x96xf32> to vector<2x32xf32>
    %350 = vector.extract_strided_slice %348 {offsets = [0, 32], sizes = [2, 32], strides = [1, 1]} : vector<2x96xf32> to vector<2x32xf32>
    %351 = vector.extract_strided_slice %348 {offsets = [0, 64], sizes = [2, 32], strides = [1, 1]} : vector<2x96xf32> to vector<2x32xf32>
    %352 = vector.extract_strided_slice %342 {offsets = [0, 96], sizes = [2, 32], strides = [1, 1]} : vector<2x128xf32> to vector<2x32xf32>
    %353 = math.tanh %352 : vector<2x32xf32>
    %354 = arith.mulf %350, %298 : vector<2x32xf32>
    %355 = arith.mulf %349, %353 : vector<2x32xf32>
    %356 = arith.addf %354, %355 : vector<2x32xf32>
    %357 = math.tanh %356 : vector<2x32xf32>
    %358 = arith.mulf %351, %357 : vector<2x32xf32>
    %359 = vector.broadcast %302 : vector<2x1xf32> to vector<2x32xf32>
    %360 = arith.mulf %359, %358 : vector<2x32xf32>
    %cst_46 = arith.constant 1.000000e+00 : f32
    %361 = vector.broadcast %cst_46 : f32 to vector<2x1xf32>
    %362 = arith.subf %361, %302 : vector<2x1xf32>
    %363 = vector.broadcast %362 : vector<2x1xf32> to vector<2x32xf32>
    %364 = arith.mulf %363, %291 : vector<2x32xf32>
    %365 = arith.addf %360, %364 : vector<2x32xf32>
    %366 = vector.broadcast %302 : vector<2x1xf32> to vector<2x32xf32>
    %367 = arith.mulf %366, %356 : vector<2x32xf32>
    %cst_47 = arith.constant 1.000000e+00 : f32
    %368 = vector.broadcast %cst_47 : f32 to vector<2x1xf32>
    %369 = arith.subf %368, %302 : vector<2x1xf32>
    %370 = vector.broadcast %369 : vector<2x1xf32> to vector<2x32xf32>
    %371 = arith.mulf %370, %298 : vector<2x32xf32>
    %372 = arith.addf %367, %371 : vector<2x32xf32>
    %373 = vector.broadcast %302 : vector<2x1xf32> to vector<2x32xf32>
    %374 = arith.mulf %373, %358 : vector<2x32xf32>
    %375 = vector.extract_strided_slice %1 {offsets = [0, 5], sizes = [2, 1], strides = [1, 1]} : vector<2x8xf32> to vector<2x1xf32>
    %376 = vector.extract_strided_slice %1 {offsets = [0, 2], sizes = [2, 1], strides = [1, 1]} : vector<2x8xf32> to vector<2x1xf32>
    %377 = vector.extract_strided_slice %0 {offsets = [0, 5, 0], sizes = [2, 1, 128], strides = [1, 1, 1]} : vector<2x8x256xf32> to vector<2x1x128xf32>
    %378 = vector.shape_cast %377 : vector<2x1x128xf32> to vector<2x128xf32>
    %cst_48 = arith.constant dense<0.000000e+00> : vector<2x128xf32>
    %379 = tpu.matmul %329, %2, %cst_48 {dimension_numbers = #tpu.dot_dimension_numbers<[1], [0], [0], [1], [0, 0, 1, 1], [], []>} : vector<2x32xf32>, vector<32x128xf32>, vector<2x128xf32> -> vector<2x128xf32>
    %380 = arith.addf %378, %379 : vector<2x128xf32>
    %381 = vector.extract_strided_slice %380 {offsets = [0, 0], sizes = [2, 96], strides = [1, 1]} : vector<2x128xf32> to vector<2x96xf32>
    %382 = arith.negf %381 : vector<2x96xf32>
    %383 = math.exp %382 : vector<2x96xf32>
    %cst_49 = arith.constant 1.000000e+00 : f32
    %384 = vector.broadcast %cst_49 : f32 to vector<2x96xf32>
    %385 = arith.addf %384, %383 : vector<2x96xf32>
    %386 = arith.divf %384, %385 : vector<2x96xf32>
    %387 = vector.extract_strided_slice %386 {offsets = [0, 0], sizes = [2, 32], strides = [1, 1]} : vector<2x96xf32> to vector<2x32xf32>
    %388 = vector.extract_strided_slice %386 {offsets = [0, 32], sizes = [2, 32], strides = [1, 1]} : vector<2x96xf32> to vector<2x32xf32>
    %389 = vector.extract_strided_slice %386 {offsets = [0, 64], sizes = [2, 32], strides = [1, 1]} : vector<2x96xf32> to vector<2x32xf32>
    %390 = vector.extract_strided_slice %380 {offsets = [0, 96], sizes = [2, 32], strides = [1, 1]} : vector<2x128xf32> to vector<2x32xf32>
    %391 = math.tanh %390 : vector<2x32xf32>
    %392 = arith.mulf %388, %336 : vector<2x32xf32>
    %393 = arith.mulf %387, %391 : vector<2x32xf32>
    %394 = arith.addf %392, %393 : vector<2x32xf32>
    %395 = math.tanh %394 : vector<2x32xf32>
    %396 = arith.mulf %389, %395 : vector<2x32xf32>
    %397 = vector.broadcast %375 : vector<2x1xf32> to vector<2x32xf32>
    %398 = arith.mulf %397, %396 : vector<2x32xf32>
    %cst_50 = arith.constant 1.000000e+00 : f32
    %399 = vector.broadcast %cst_50 : f32 to vector<2x1xf32>
    %400 = arith.subf %399, %375 : vector<2x1xf32>
    %401 = vector.broadcast %400 : vector<2x1xf32> to vector<2x32xf32>
    %402 = arith.mulf %401, %329 : vector<2x32xf32>
    %403 = arith.addf %398, %402 : vector<2x32xf32>
    %404 = vector.broadcast %375 : vector<2x1xf32> to vector<2x32xf32>
    %405 = arith.mulf %404, %394 : vector<2x32xf32>
    %cst_51 = arith.constant 1.000000e+00 : f32
    %406 = vector.broadcast %cst_51 : f32 to vector<2x1xf32>
    %407 = arith.subf %406, %375 : vector<2x1xf32>
    %408 = vector.broadcast %407 : vector<2x1xf32> to vector<2x32xf32>
    %409 = arith.mulf %408, %336 : vector<2x32xf32>
    %410 = arith.addf %405, %409 : vector<2x32xf32>
    %411 = vector.broadcast %375 : vector<2x1xf32> to vector<2x32xf32>
    %412 = arith.mulf %411, %396 : vector<2x32xf32>
    %413 = vector.extract_strided_slice %0 {offsets = [0, 2, 128], sizes = [2, 1, 128], strides = [1, 1, 1]} : vector<2x8x256xf32> to vector<2x1x128xf32>
    %414 = vector.shape_cast %413 : vector<2x1x128xf32> to vector<2x128xf32>
    %cst_52 = arith.constant dense<0.000000e+00> : vector<2x128xf32>
    %415 = tpu.matmul %365, %3, %cst_52 {dimension_numbers = #tpu.dot_dimension_numbers<[1], [0], [0], [1], [0, 0, 1, 1], [], []>} : vector<2x32xf32>, vector<32x128xf32>, vector<2x128xf32> -> vector<2x128xf32>
    %416 = arith.addf %414, %415 : vector<2x128xf32>
    %417 = vector.extract_strided_slice %416 {offsets = [0, 0], sizes = [2, 96], strides = [1, 1]} : vector<2x128xf32> to vector<2x96xf32>
    %418 = arith.negf %417 : vector<2x96xf32>
    %419 = math.exp %418 : vector<2x96xf32>
    %cst_53 = arith.constant 1.000000e+00 : f32
    %420 = vector.broadcast %cst_53 : f32 to vector<2x96xf32>
    %421 = arith.addf %420, %419 : vector<2x96xf32>
    %422 = arith.divf %420, %421 : vector<2x96xf32>
    %423 = vector.extract_strided_slice %422 {offsets = [0, 0], sizes = [2, 32], strides = [1, 1]} : vector<2x96xf32> to vector<2x32xf32>
    %424 = vector.extract_strided_slice %422 {offsets = [0, 32], sizes = [2, 32], strides = [1, 1]} : vector<2x96xf32> to vector<2x32xf32>
    %425 = vector.extract_strided_slice %422 {offsets = [0, 64], sizes = [2, 32], strides = [1, 1]} : vector<2x96xf32> to vector<2x32xf32>
    %426 = vector.extract_strided_slice %416 {offsets = [0, 96], sizes = [2, 32], strides = [1, 1]} : vector<2x128xf32> to vector<2x32xf32>
    %427 = math.tanh %426 : vector<2x32xf32>
    %428 = arith.mulf %424, %372 : vector<2x32xf32>
    %429 = arith.mulf %423, %427 : vector<2x32xf32>
    %430 = arith.addf %428, %429 : vector<2x32xf32>
    %431 = math.tanh %430 : vector<2x32xf32>
    %432 = arith.mulf %425, %431 : vector<2x32xf32>
    %433 = vector.broadcast %376 : vector<2x1xf32> to vector<2x32xf32>
    %434 = arith.mulf %433, %432 : vector<2x32xf32>
    %cst_54 = arith.constant 1.000000e+00 : f32
    %435 = vector.broadcast %cst_54 : f32 to vector<2x1xf32>
    %436 = arith.subf %435, %376 : vector<2x1xf32>
    %437 = vector.broadcast %436 : vector<2x1xf32> to vector<2x32xf32>
    %438 = arith.mulf %437, %365 : vector<2x32xf32>
    %439 = arith.addf %434, %438 : vector<2x32xf32>
    %440 = vector.broadcast %376 : vector<2x1xf32> to vector<2x32xf32>
    %441 = arith.mulf %440, %430 : vector<2x32xf32>
    %cst_55 = arith.constant 1.000000e+00 : f32
    %442 = vector.broadcast %cst_55 : f32 to vector<2x1xf32>
    %443 = arith.subf %442, %376 : vector<2x1xf32>
    %444 = vector.broadcast %443 : vector<2x1xf32> to vector<2x32xf32>
    %445 = arith.mulf %444, %372 : vector<2x32xf32>
    %446 = arith.addf %441, %445 : vector<2x32xf32>
    %447 = vector.broadcast %376 : vector<2x1xf32> to vector<2x32xf32>
    %448 = arith.mulf %447, %432 : vector<2x32xf32>
    %449 = vector.extract_strided_slice %1 {offsets = [0, 6], sizes = [2, 1], strides = [1, 1]} : vector<2x8xf32> to vector<2x1xf32>
    %450 = vector.extract_strided_slice %1 {offsets = [0, 1], sizes = [2, 1], strides = [1, 1]} : vector<2x8xf32> to vector<2x1xf32>
    %451 = vector.extract_strided_slice %0 {offsets = [0, 6, 0], sizes = [2, 1, 128], strides = [1, 1, 1]} : vector<2x8x256xf32> to vector<2x1x128xf32>
    %452 = vector.shape_cast %451 : vector<2x1x128xf32> to vector<2x128xf32>
    %cst_56 = arith.constant dense<0.000000e+00> : vector<2x128xf32>
    %453 = tpu.matmul %403, %2, %cst_56 {dimension_numbers = #tpu.dot_dimension_numbers<[1], [0], [0], [1], [0, 0, 1, 1], [], []>} : vector<2x32xf32>, vector<32x128xf32>, vector<2x128xf32> -> vector<2x128xf32>
    %454 = arith.addf %452, %453 : vector<2x128xf32>
    %455 = vector.extract_strided_slice %454 {offsets = [0, 0], sizes = [2, 96], strides = [1, 1]} : vector<2x128xf32> to vector<2x96xf32>
    %456 = arith.negf %455 : vector<2x96xf32>
    %457 = math.exp %456 : vector<2x96xf32>
    %cst_57 = arith.constant 1.000000e+00 : f32
    %458 = vector.broadcast %cst_57 : f32 to vector<2x96xf32>
    %459 = arith.addf %458, %457 : vector<2x96xf32>
    %460 = arith.divf %458, %459 : vector<2x96xf32>
    %461 = vector.extract_strided_slice %460 {offsets = [0, 0], sizes = [2, 32], strides = [1, 1]} : vector<2x96xf32> to vector<2x32xf32>
    %462 = vector.extract_strided_slice %460 {offsets = [0, 32], sizes = [2, 32], strides = [1, 1]} : vector<2x96xf32> to vector<2x32xf32>
    %463 = vector.extract_strided_slice %460 {offsets = [0, 64], sizes = [2, 32], strides = [1, 1]} : vector<2x96xf32> to vector<2x32xf32>
    %464 = vector.extract_strided_slice %454 {offsets = [0, 96], sizes = [2, 32], strides = [1, 1]} : vector<2x128xf32> to vector<2x32xf32>
    %465 = math.tanh %464 : vector<2x32xf32>
    %466 = arith.mulf %462, %410 : vector<2x32xf32>
    %467 = arith.mulf %461, %465 : vector<2x32xf32>
    %468 = arith.addf %466, %467 : vector<2x32xf32>
    %469 = math.tanh %468 : vector<2x32xf32>
    %470 = arith.mulf %463, %469 : vector<2x32xf32>
    %471 = vector.broadcast %449 : vector<2x1xf32> to vector<2x32xf32>
    %472 = arith.mulf %471, %470 : vector<2x32xf32>
    %cst_58 = arith.constant 1.000000e+00 : f32
    %473 = vector.broadcast %cst_58 : f32 to vector<2x1xf32>
    %474 = arith.subf %473, %449 : vector<2x1xf32>
    %475 = vector.broadcast %474 : vector<2x1xf32> to vector<2x32xf32>
    %476 = arith.mulf %475, %403 : vector<2x32xf32>
    %477 = arith.addf %472, %476 : vector<2x32xf32>
    %478 = vector.broadcast %449 : vector<2x1xf32> to vector<2x32xf32>
    %479 = arith.mulf %478, %468 : vector<2x32xf32>
    %cst_59 = arith.constant 1.000000e+00 : f32
    %480 = vector.broadcast %cst_59 : f32 to vector<2x1xf32>
    %481 = arith.subf %480, %449 : vector<2x1xf32>
    %482 = vector.broadcast %481 : vector<2x1xf32> to vector<2x32xf32>
    %483 = arith.mulf %482, %410 : vector<2x32xf32>
    %484 = arith.addf %479, %483 : vector<2x32xf32>
    %485 = vector.broadcast %449 : vector<2x1xf32> to vector<2x32xf32>
    %486 = arith.mulf %485, %470 : vector<2x32xf32>
    %487 = vector.extract_strided_slice %0 {offsets = [0, 1, 128], sizes = [2, 1, 128], strides = [1, 1, 1]} : vector<2x8x256xf32> to vector<2x1x128xf32>
    %488 = vector.shape_cast %487 : vector<2x1x128xf32> to vector<2x128xf32>
    %cst_60 = arith.constant dense<0.000000e+00> : vector<2x128xf32>
    %489 = tpu.matmul %439, %3, %cst_60 {dimension_numbers = #tpu.dot_dimension_numbers<[1], [0], [0], [1], [0, 0, 1, 1], [], []>} : vector<2x32xf32>, vector<32x128xf32>, vector<2x128xf32> -> vector<2x128xf32>
    %490 = arith.addf %488, %489 : vector<2x128xf32>
    %491 = vector.extract_strided_slice %490 {offsets = [0, 0], sizes = [2, 96], strides = [1, 1]} : vector<2x128xf32> to vector<2x96xf32>
    %492 = arith.negf %491 : vector<2x96xf32>
    %493 = math.exp %492 : vector<2x96xf32>
    %cst_61 = arith.constant 1.000000e+00 : f32
    %494 = vector.broadcast %cst_61 : f32 to vector<2x96xf32>
    %495 = arith.addf %494, %493 : vector<2x96xf32>
    %496 = arith.divf %494, %495 : vector<2x96xf32>
    %497 = vector.extract_strided_slice %496 {offsets = [0, 0], sizes = [2, 32], strides = [1, 1]} : vector<2x96xf32> to vector<2x32xf32>
    %498 = vector.extract_strided_slice %496 {offsets = [0, 32], sizes = [2, 32], strides = [1, 1]} : vector<2x96xf32> to vector<2x32xf32>
    %499 = vector.extract_strided_slice %496 {offsets = [0, 64], sizes = [2, 32], strides = [1, 1]} : vector<2x96xf32> to vector<2x32xf32>
    %500 = vector.extract_strided_slice %490 {offsets = [0, 96], sizes = [2, 32], strides = [1, 1]} : vector<2x128xf32> to vector<2x32xf32>
    %501 = math.tanh %500 : vector<2x32xf32>
    %502 = arith.mulf %498, %446 : vector<2x32xf32>
    %503 = arith.mulf %497, %501 : vector<2x32xf32>
    %504 = arith.addf %502, %503 : vector<2x32xf32>
    %505 = math.tanh %504 : vector<2x32xf32>
    %506 = arith.mulf %499, %505 : vector<2x32xf32>
    %507 = vector.broadcast %450 : vector<2x1xf32> to vector<2x32xf32>
    %508 = arith.mulf %507, %506 : vector<2x32xf32>
    %cst_62 = arith.constant 1.000000e+00 : f32
    %509 = vector.broadcast %cst_62 : f32 to vector<2x1xf32>
    %510 = arith.subf %509, %450 : vector<2x1xf32>
    %511 = vector.broadcast %510 : vector<2x1xf32> to vector<2x32xf32>
    %512 = arith.mulf %511, %439 : vector<2x32xf32>
    %513 = arith.addf %508, %512 : vector<2x32xf32>
    %514 = vector.broadcast %450 : vector<2x1xf32> to vector<2x32xf32>
    %515 = arith.mulf %514, %504 : vector<2x32xf32>
    %cst_63 = arith.constant 1.000000e+00 : f32
    %516 = vector.broadcast %cst_63 : f32 to vector<2x1xf32>
    %517 = arith.subf %516, %450 : vector<2x1xf32>
    %518 = vector.broadcast %517 : vector<2x1xf32> to vector<2x32xf32>
    %519 = arith.mulf %518, %446 : vector<2x32xf32>
    %520 = arith.addf %515, %519 : vector<2x32xf32>
    %521 = vector.broadcast %450 : vector<2x1xf32> to vector<2x32xf32>
    %522 = arith.mulf %521, %506 : vector<2x32xf32>
    %523 = vector.extract_strided_slice %1 {offsets = [0, 7], sizes = [2, 1], strides = [1, 1]} : vector<2x8xf32> to vector<2x1xf32>
    %524 = vector.extract_strided_slice %1 {offsets = [0, 0], sizes = [2, 1], strides = [1, 1]} : vector<2x8xf32> to vector<2x1xf32>
    %525 = vector.extract_strided_slice %0 {offsets = [0, 7, 0], sizes = [2, 1, 128], strides = [1, 1, 1]} : vector<2x8x256xf32> to vector<2x1x128xf32>
    %526 = vector.shape_cast %525 : vector<2x1x128xf32> to vector<2x128xf32>
    %cst_64 = arith.constant dense<0.000000e+00> : vector<2x128xf32>
    %527 = tpu.matmul %477, %2, %cst_64 {dimension_numbers = #tpu.dot_dimension_numbers<[1], [0], [0], [1], [0, 0, 1, 1], [], []>} : vector<2x32xf32>, vector<32x128xf32>, vector<2x128xf32> -> vector<2x128xf32>
    %528 = arith.addf %526, %527 : vector<2x128xf32>
    %529 = vector.extract_strided_slice %528 {offsets = [0, 0], sizes = [2, 96], strides = [1, 1]} : vector<2x128xf32> to vector<2x96xf32>
    %530 = arith.negf %529 : vector<2x96xf32>
    %531 = math.exp %530 : vector<2x96xf32>
    %cst_65 = arith.constant 1.000000e+00 : f32
    %532 = vector.broadcast %cst_65 : f32 to vector<2x96xf32>
    %533 = arith.addf %532, %531 : vector<2x96xf32>
    %534 = arith.divf %532, %533 : vector<2x96xf32>
    %535 = vector.extract_strided_slice %534 {offsets = [0, 0], sizes = [2, 32], strides = [1, 1]} : vector<2x96xf32> to vector<2x32xf32>
    %536 = vector.extract_strided_slice %534 {offsets = [0, 32], sizes = [2, 32], strides = [1, 1]} : vector<2x96xf32> to vector<2x32xf32>
    %537 = vector.extract_strided_slice %534 {offsets = [0, 64], sizes = [2, 32], strides = [1, 1]} : vector<2x96xf32> to vector<2x32xf32>
    %538 = vector.extract_strided_slice %528 {offsets = [0, 96], sizes = [2, 32], strides = [1, 1]} : vector<2x128xf32> to vector<2x32xf32>
    %539 = math.tanh %538 : vector<2x32xf32>
    %540 = arith.mulf %536, %484 : vector<2x32xf32>
    %541 = arith.mulf %535, %539 : vector<2x32xf32>
    %542 = arith.addf %540, %541 : vector<2x32xf32>
    %543 = math.tanh %542 : vector<2x32xf32>
    %544 = arith.mulf %537, %543 : vector<2x32xf32>
    %545 = vector.broadcast %523 : vector<2x1xf32> to vector<2x32xf32>
    %546 = arith.mulf %545, %544 : vector<2x32xf32>
    %547 = vector.extract_strided_slice %0 {offsets = [0, 0, 128], sizes = [2, 1, 128], strides = [1, 1, 1]} : vector<2x8x256xf32> to vector<2x1x128xf32>
    %548 = vector.shape_cast %547 : vector<2x1x128xf32> to vector<2x128xf32>
    %cst_66 = arith.constant dense<0.000000e+00> : vector<2x128xf32>
    %549 = tpu.matmul %513, %3, %cst_66 {dimension_numbers = #tpu.dot_dimension_numbers<[1], [0], [0], [1], [0, 0, 1, 1], [], []>} : vector<2x32xf32>, vector<32x128xf32>, vector<2x128xf32> -> vector<2x128xf32>
    %550 = arith.addf %548, %549 : vector<2x128xf32>
    %551 = vector.extract_strided_slice %550 {offsets = [0, 0], sizes = [2, 96], strides = [1, 1]} : vector<2x128xf32> to vector<2x96xf32>
    %552 = arith.negf %551 : vector<2x96xf32>
    %553 = math.exp %552 : vector<2x96xf32>
    %cst_67 = arith.constant 1.000000e+00 : f32
    %554 = vector.broadcast %cst_67 : f32 to vector<2x96xf32>
    %555 = arith.addf %554, %553 : vector<2x96xf32>
    %556 = arith.divf %554, %555 : vector<2x96xf32>
    %557 = vector.extract_strided_slice %556 {offsets = [0, 0], sizes = [2, 32], strides = [1, 1]} : vector<2x96xf32> to vector<2x32xf32>
    %558 = vector.extract_strided_slice %556 {offsets = [0, 32], sizes = [2, 32], strides = [1, 1]} : vector<2x96xf32> to vector<2x32xf32>
    %559 = vector.extract_strided_slice %556 {offsets = [0, 64], sizes = [2, 32], strides = [1, 1]} : vector<2x96xf32> to vector<2x32xf32>
    %560 = vector.extract_strided_slice %550 {offsets = [0, 96], sizes = [2, 32], strides = [1, 1]} : vector<2x128xf32> to vector<2x32xf32>
    %561 = math.tanh %560 : vector<2x32xf32>
    %562 = arith.mulf %558, %520 : vector<2x32xf32>
    %563 = arith.mulf %557, %561 : vector<2x32xf32>
    %564 = arith.addf %562, %563 : vector<2x32xf32>
    %565 = math.tanh %564 : vector<2x32xf32>
    %566 = arith.mulf %559, %565 : vector<2x32xf32>
    %567 = vector.broadcast %524 : vector<2x1xf32> to vector<2x32xf32>
    %568 = arith.mulf %567, %566 : vector<2x32xf32>
    %569 = vector.shape_cast %42 : vector<2x32xf32> to vector<2x1x32xf32>
    %570 = vector.shape_cast %116 : vector<2x32xf32> to vector<2x1x32xf32>
    %571 = vector.shape_cast %190 : vector<2x32xf32> to vector<2x1x32xf32>
    %572 = vector.shape_cast %264 : vector<2x32xf32> to vector<2x1x32xf32>
    %573 = vector.shape_cast %338 : vector<2x32xf32> to vector<2x1x32xf32>
    %574 = vector.shape_cast %412 : vector<2x32xf32> to vector<2x1x32xf32>
    %575 = vector.shape_cast %486 : vector<2x32xf32> to vector<2x1x32xf32>
    %576 = vector.shape_cast %546 : vector<2x32xf32> to vector<2x1x32xf32>
    %577 = tpu.concatenate %569, %570, %571, %572, %573, %574, %575, %576 in 1 : vector<2x1x32xf32>, vector<2x1x32xf32>, vector<2x1x32xf32>, vector<2x1x32xf32>, vector<2x1x32xf32>, vector<2x1x32xf32>, vector<2x1x32xf32>, vector<2x1x32xf32> -> vector<2x8x32xf32>
    %578 = vector.shape_cast %568 : vector<2x32xf32> to vector<2x1x32xf32>
    %579 = vector.shape_cast %522 : vector<2x32xf32> to vector<2x1x32xf32>
    %580 = vector.shape_cast %448 : vector<2x32xf32> to vector<2x1x32xf32>
    %581 = vector.shape_cast %374 : vector<2x32xf32> to vector<2x1x32xf32>
    %582 = vector.shape_cast %300 : vector<2x32xf32> to vector<2x1x32xf32>
    %583 = vector.shape_cast %226 : vector<2x32xf32> to vector<2x1x32xf32>
    %584 = vector.shape_cast %152 : vector<2x32xf32> to vector<2x1x32xf32>
    %585 = vector.shape_cast %78 : vector<2x32xf32> to vector<2x1x32xf32>
    %586 = tpu.concatenate %578, %579, %580, %581, %582, %583, %584, %585 in 1 : vector<2x1x32xf32>, vector<2x1x32xf32>, vector<2x1x32xf32>, vector<2x1x32xf32>, vector<2x1x32xf32>, vector<2x1x32xf32>, vector<2x1x32xf32>, vector<2x1x32xf32> -> vector<2x8x32xf32>
    %587 = tpu.concatenate %577, %586 in 2 : vector<2x8x32xf32>, vector<2x8x32xf32> -> vector<2x8x64xf32>
    %c0_68 = arith.constant 0 : index
    %c0_69 = arith.constant 0 : index
    %c0_70 = arith.constant 0 : index
    %588 = vector.load %arg5[%c0_68, %c0_69, %c0_70] : memref<2x8x64xf32, #tpu.memory_space<vmem>>, vector<2x8x64xf32>
    tpu.vector_store %arg5[%c0_68, %c0_69, %c0_70], %587 {strides = array<i32>} : memref<2x8x64xf32, #tpu.memory_space<vmem>>, vector<2x8x64xf32>,
    return
  }
  func.func @transform_0(%arg0: i32) -> (i32, i32, i32) {
    %c0_i32 = arith.constant 0 : i32
    %c0_i32_0 = arith.constant 0 : i32
    %c0_i32_1 = arith.constant 0 : i32
    %c0_i32_2 = arith.constant 0 : i32
    return %c0_i32, %c0_i32_0, %c0_i32_1 : i32, i32, i32
  }
  func.func @transform_1(%arg0: i32) -> (i32, i32) {
    %c0_i32 = arith.constant 0 : i32
    %c0_i32_0 = arith.constant 0 : i32
    %c0_i32_1 = arith.constant 0 : i32
    return %c0_i32, %c0_i32_0 : i32, i32
  }
  func.func @transform_2(%arg0: i32) -> (i32, i32) {
    %c0_i32 = arith.constant 0 : i32
    %c0_i32_0 = arith.constant 0 : i32
    %c0_i32_1 = arith.constant 0 : i32
    return %c0_i32, %c0_i32_0 : i32, i32
  }
  func.func @transform_3(%arg0: i32) -> (i32, i32) {
    %c0_i32 = arith.constant 0 : i32
    %c0_i32_0 = arith.constant 0 : i32
    %c0_i32_1 = arith.constant 0 : i32
    return %c0_i32, %c0_i32_0 : i32, i32
  }
  func.func @transform_4(%arg0: i32) -> (i32, i32, i32) {
    %c0_i32 = arith.constant 0 : i32
    %c0_i32_0 = arith.constant 0 : i32
    %c0_i32_1 = arith.constant 0 : i32
    %c0_i32_2 = arith.constant 0 : i32
    return %c0_i32, %c0_i32_0, %c0_i32_1 : i32, i32, i32
  }
}

module attributes {stable_mosaic.version = 11 : i64} {
  func.func @_encoder_layer_kernel(%arg0: i32, %arg1: memref<16x32xf32, #tpu.memory_space<vmem>>, %arg2: memref<2x8xf32, #tpu.memory_space<vmem>>, %arg3: memref<32x96xf32, #tpu.memory_space<vmem>>, %arg4: memref<1x96xf32, #tpu.memory_space<vmem>>, %arg5: memref<32x32xf32, #tpu.memory_space<vmem>>, %arg6: memref<1x32xf32, #tpu.memory_space<vmem>>, %arg7: memref<1x32xf32, #tpu.memory_space<vmem>>, %arg8: memref<1x32xf32, #tpu.memory_space<vmem>>, %arg9: memref<32x64xf32, #tpu.memory_space<vmem>>, %arg10: memref<1x64xf32, #tpu.memory_space<vmem>>, %arg11: memref<64x32xf32, #tpu.memory_space<vmem>>, %arg12: memref<1x32xf32, #tpu.memory_space<vmem>>, %arg13: memref<1x32xf32, #tpu.memory_space<vmem>>, %arg14: memref<1x32xf32, #tpu.memory_space<vmem>>, %arg15: memref<32x256xf32, #tpu.memory_space<vmem>>, %arg16: memref<1x256xf32, #tpu.memory_space<vmem>>, %arg17: memref<16x256xf32, #tpu.memory_space<vmem>>) attributes {dimension_semantics = [#tpu.dimension_semantics<arbitrary>], iteration_bounds = array<i64: 1>, scalar_prefetch = 0 : i64, scratch_operands = 0 : i64, tpu.core_type = #tpu.core_type<tc>, window_params = [{pipeline_mode = #tpu.pipeline_mode<synchronous>, transform_indices = @transform_0, window_bounds = array<i64: 16, 32>}, {pipeline_mode = #tpu.pipeline_mode<synchronous>, transform_indices = @transform_1, window_bounds = array<i64: 2, 8>}, {pipeline_mode = #tpu.pipeline_mode<synchronous>, transform_indices = @transform_2, window_bounds = array<i64: 32, 96>}, {pipeline_mode = #tpu.pipeline_mode<synchronous>, transform_indices = @transform_3, window_bounds = array<i64: 1, 96>}, {pipeline_mode = #tpu.pipeline_mode<synchronous>, transform_indices = @transform_4, window_bounds = array<i64: 32, 32>}, {pipeline_mode = #tpu.pipeline_mode<synchronous>, transform_indices = @transform_5, window_bounds = array<i64: 1, 32>}, {pipeline_mode = #tpu.pipeline_mode<synchronous>, transform_indices = @transform_6, window_bounds = array<i64: 1, 32>}, {pipeline_mode = #tpu.pipeline_mode<synchronous>, transform_indices = @transform_7, window_bounds = array<i64: 1, 32>}, {pipeline_mode = #tpu.pipeline_mode<synchronous>, transform_indices = @transform_8, window_bounds = array<i64: 32, 64>}, {pipeline_mode = #tpu.pipeline_mode<synchronous>, transform_indices = @transform_9, window_bounds = array<i64: 1, 64>}, {pipeline_mode = #tpu.pipeline_mode<synchronous>, transform_indices = @transform_10, window_bounds = array<i64: 64, 32>}, {pipeline_mode = #tpu.pipeline_mode<synchronous>, transform_indices = @transform_11, window_bounds = array<i64: 1, 32>}, {pipeline_mode = #tpu.pipeline_mode<synchronous>, transform_indices = @transform_12, window_bounds = array<i64: 1, 32>}, {pipeline_mode = #tpu.pipeline_mode<synchronous>, transform_indices = @transform_13, window_bounds = array<i64: 1, 32>}, {pipeline_mode = #tpu.pipeline_mode<synchronous>, transform_indices = @transform_14, window_bounds = array<i64: 32, 256>}, {pipeline_mode = #tpu.pipeline_mode<synchronous>, transform_indices = @transform_15, window_bounds = array<i64: 1, 256>}, {pipeline_mode = #tpu.pipeline_mode<synchronous>, transform_indices = @transform_16, window_bounds = array<i64: 16, 256>}]} {
    %c0 = arith.constant 0 : index
    %c0_0 = arith.constant 0 : index
    %0 = vector.load %arg1[%c0, %c0_0] : memref<16x32xf32, #tpu.memory_space<vmem>>, vector<16x32xf32>
    %c0_1 = arith.constant 0 : index
    %c0_2 = arith.constant 0 : index
    %1 = vector.load %arg3[%c0_1, %c0_2] : memref<32x96xf32, #tpu.memory_space<vmem>>, vector<32x96xf32>
    %cst = arith.constant dense<0.000000e+00> : vector<16x96xf32>
    %2 = tpu.matmul %0, %1, %cst {dimension_numbers = #tpu.dot_dimension_numbers<[1], [0], [0], [1], [0, 0, 1, 1], [], []>} : vector<16x32xf32>, vector<32x96xf32>, vector<16x96xf32> -> vector<16x96xf32>
    %c0_3 = arith.constant 0 : index
    %c0_4 = arith.constant 0 : index
    %3 = vector.load %arg4[%c0_3, %c0_4] : memref<1x96xf32, #tpu.memory_space<vmem>>, vector<1x96xf32>
    %4 = vector.broadcast %3 : vector<1x96xf32> to vector<16x96xf32>
    %5 = arith.addf %2, %4 : vector<16x96xf32>
    %6 = vector.shape_cast %5 : vector<16x96xf32> to vector<2x8x96xf32>
    %c0_5 = arith.constant 0 : index
    %c0_6 = arith.constant 0 : index
    %7 = vector.load %arg2[%c0_5, %c0_6] : memref<2x8xf32, #tpu.memory_space<vmem>>, vector<2x8xf32>
    %cst_7 = arith.constant 1.000000e+00 : f32
    %8 = vector.broadcast %cst_7 : f32 to vector<2x8xf32>
    %9 = arith.subf %8, %7 : vector<2x8xf32>
    %cst_8 = arith.constant -1.000000e+04 : f32
    %10 = vector.broadcast %cst_8 : f32 to vector<2x8xf32>
    %11 = arith.mulf %9, %10 : vector<2x8xf32>
    %12 = vector.shape_cast %11 : vector<2x8xf32> to vector<2x1x8xf32>
    %13 = vector.extract_strided_slice %6 {offsets = [0, 0, 0], sizes = [2, 8, 8], strides = [1, 1, 1]} : vector<2x8x96xf32> to vector<2x8x8xf32>
    %14 = vector.extract_strided_slice %6 {offsets = [0, 0, 32], sizes = [2, 8, 8], strides = [1, 1, 1]} : vector<2x8x96xf32> to vector<2x8x8xf32>
    %15 = vector.extract_strided_slice %6 {offsets = [0, 0, 64], sizes = [2, 8, 8], strides = [1, 1, 1]} : vector<2x8x96xf32> to vector<2x8x8xf32>
    "tpu.trace_start"() <{level = 10 : i32, message = "bqd,bkd->bqk"}> : () -> ()
    %cst_9 = arith.constant dense<0.000000e+00> : vector<2x8x8xf32>
    %16 = tpu.matmul %13, %14, %cst_9 {dimension_numbers = #tpu.dot_dimension_numbers<[2], [2], [1], [1], [0, 0, 0, 1, 1, 1], [0], [0]>} : vector<2x8x8xf32>, vector<2x8x8xf32>, vector<2x8x8xf32> -> vector<2x8x8xf32>
    "tpu.trace_stop"() : () -> ()
    %cst_10 = arith.constant 0.353553385 : f32
    %17 = vector.broadcast %cst_10 : f32 to vector<2x8x8xf32>
    %18 = arith.mulf %16, %17 : vector<2x8x8xf32>
    %19 = vector.broadcast %12 : vector<2x1x8xf32> to vector<2x8x8xf32>
    %20 = arith.addf %18, %19 : vector<2x8x8xf32>
    %cst_11 = arith.constant dense<0xFF800000> : vector<2x8xf32>
    %21 = vector.multi_reduction <maximumf>, %20, %cst_11 [2] : vector<2x8x8xf32> to vector<2x8xf32>
    %22 = vector.shape_cast %21 : vector<2x8xf32> to vector<2x8x1xf32>
    %23 = vector.broadcast %22 : vector<2x8x1xf32> to vector<2x8x8xf32>
    %24 = arith.subf %20, %23 : vector<2x8x8xf32>
    %25 = math.exp %24 : vector<2x8x8xf32>
    %cst_12 = arith.constant dense<0.000000e+00> : vector<2x8xf32>
    %26 = vector.multi_reduction <add>, %25, %cst_12 [2] : vector<2x8x8xf32> to vector<2x8xf32>
    %27 = vector.shape_cast %26 : vector<2x8xf32> to vector<2x8x1xf32>
    %28 = tpu.reciprocal %27 {approx = true} : vector<2x8x1xf32> -> vector<2x8x1xf32>
    %29 = vector.broadcast %28 : vector<2x8x1xf32> to vector<2x8x8xf32>
    %30 = arith.mulf %25, %29 : vector<2x8x8xf32>
    "tpu.trace_start"() <{level = 10 : i32, message = "bqk,bkd->bqd"}> : () -> ()
    %cst_13 = arith.constant dense<0.000000e+00> : vector<2x8x8xf32>
    %31 = tpu.matmul %30, %15, %cst_13 {dimension_numbers = #tpu.dot_dimension_numbers<[2], [1], [1], [2], [0, 0, 0, 1, 1, 2], [0], [0]>} : vector<2x8x8xf32>, vector<2x8x8xf32>, vector<2x8x8xf32> -> vector<2x8x8xf32>
    "tpu.trace_stop"() : () -> ()
    %32 = vector.extract_strided_slice %6 {offsets = [0, 0, 8], sizes = [2, 8, 8], strides = [1, 1, 1]} : vector<2x8x96xf32> to vector<2x8x8xf32>
    %33 = vector.extract_strided_slice %6 {offsets = [0, 0, 40], sizes = [2, 8, 8], strides = [1, 1, 1]} : vector<2x8x96xf32> to vector<2x8x8xf32>
    %34 = vector.extract_strided_slice %6 {offsets = [0, 0, 72], sizes = [2, 8, 8], strides = [1, 1, 1]} : vector<2x8x96xf32> to vector<2x8x8xf32>
    "tpu.trace_start"() <{level = 10 : i32, message = "bqd,bkd->bqk"}> : () -> ()
    %cst_14 = arith.constant dense<0.000000e+00> : vector<2x8x8xf32>
    %35 = tpu.matmul %32, %33, %cst_14 {dimension_numbers = #tpu.dot_dimension_numbers<[2], [2], [1], [1], [0, 0, 0, 1, 1, 1], [0], [0]>} : vector<2x8x8xf32>, vector<2x8x8xf32>, vector<2x8x8xf32> -> vector<2x8x8xf32>
    "tpu.trace_stop"() : () -> ()
    %cst_15 = arith.constant 0.353553385 : f32
    %36 = vector.broadcast %cst_15 : f32 to vector<2x8x8xf32>
    %37 = arith.mulf %35, %36 : vector<2x8x8xf32>
    %38 = vector.broadcast %12 : vector<2x1x8xf32> to vector<2x8x8xf32>
    %39 = arith.addf %37, %38 : vector<2x8x8xf32>
    %cst_16 = arith.constant dense<0xFF800000> : vector<2x8xf32>
    %40 = vector.multi_reduction <maximumf>, %39, %cst_16 [2] : vector<2x8x8xf32> to vector<2x8xf32>
    %41 = vector.shape_cast %40 : vector<2x8xf32> to vector<2x8x1xf32>
    %42 = vector.broadcast %41 : vector<2x8x1xf32> to vector<2x8x8xf32>
    %43 = arith.subf %39, %42 : vector<2x8x8xf32>
    %44 = math.exp %43 : vector<2x8x8xf32>
    %cst_17 = arith.constant dense<0.000000e+00> : vector<2x8xf32>
    %45 = vector.multi_reduction <add>, %44, %cst_17 [2] : vector<2x8x8xf32> to vector<2x8xf32>
    %46 = vector.shape_cast %45 : vector<2x8xf32> to vector<2x8x1xf32>
    %47 = tpu.reciprocal %46 {approx = true} : vector<2x8x1xf32> -> vector<2x8x1xf32>
    %48 = vector.broadcast %47 : vector<2x8x1xf32> to vector<2x8x8xf32>
    %49 = arith.mulf %44, %48 : vector<2x8x8xf32>
    "tpu.trace_start"() <{level = 10 : i32, message = "bqk,bkd->bqd"}> : () -> ()
    %cst_18 = arith.constant dense<0.000000e+00> : vector<2x8x8xf32>
    %50 = tpu.matmul %49, %34, %cst_18 {dimension_numbers = #tpu.dot_dimension_numbers<[2], [1], [1], [2], [0, 0, 0, 1, 1, 2], [0], [0]>} : vector<2x8x8xf32>, vector<2x8x8xf32>, vector<2x8x8xf32> -> vector<2x8x8xf32>
    "tpu.trace_stop"() : () -> ()
    %51 = vector.extract_strided_slice %6 {offsets = [0, 0, 16], sizes = [2, 8, 8], strides = [1, 1, 1]} : vector<2x8x96xf32> to vector<2x8x8xf32>
    %52 = vector.extract_strided_slice %6 {offsets = [0, 0, 48], sizes = [2, 8, 8], strides = [1, 1, 1]} : vector<2x8x96xf32> to vector<2x8x8xf32>
    %53 = vector.extract_strided_slice %6 {offsets = [0, 0, 80], sizes = [2, 8, 8], strides = [1, 1, 1]} : vector<2x8x96xf32> to vector<2x8x8xf32>
    "tpu.trace_start"() <{level = 10 : i32, message = "bqd,bkd->bqk"}> : () -> ()
    %cst_19 = arith.constant dense<0.000000e+00> : vector<2x8x8xf32>
    %54 = tpu.matmul %51, %52, %cst_19 {dimension_numbers = #tpu.dot_dimension_numbers<[2], [2], [1], [1], [0, 0, 0, 1, 1, 1], [0], [0]>} : vector<2x8x8xf32>, vector<2x8x8xf32>, vector<2x8x8xf32> -> vector<2x8x8xf32>
    "tpu.trace_stop"() : () -> ()
    %cst_20 = arith.constant 0.353553385 : f32
    %55 = vector.broadcast %cst_20 : f32 to vector<2x8x8xf32>
    %56 = arith.mulf %54, %55 : vector<2x8x8xf32>
    %57 = vector.broadcast %12 : vector<2x1x8xf32> to vector<2x8x8xf32>
    %58 = arith.addf %56, %57 : vector<2x8x8xf32>
    %cst_21 = arith.constant dense<0xFF800000> : vector<2x8xf32>
    %59 = vector.multi_reduction <maximumf>, %58, %cst_21 [2] : vector<2x8x8xf32> to vector<2x8xf32>
    %60 = vector.shape_cast %59 : vector<2x8xf32> to vector<2x8x1xf32>
    %61 = vector.broadcast %60 : vector<2x8x1xf32> to vector<2x8x8xf32>
    %62 = arith.subf %58, %61 : vector<2x8x8xf32>
    %63 = math.exp %62 : vector<2x8x8xf32>
    %cst_22 = arith.constant dense<0.000000e+00> : vector<2x8xf32>
    %64 = vector.multi_reduction <add>, %63, %cst_22 [2] : vector<2x8x8xf32> to vector<2x8xf32>
    %65 = vector.shape_cast %64 : vector<2x8xf32> to vector<2x8x1xf32>
    %66 = tpu.reciprocal %65 {approx = true} : vector<2x8x1xf32> -> vector<2x8x1xf32>
    %67 = vector.broadcast %66 : vector<2x8x1xf32> to vector<2x8x8xf32>
    %68 = arith.mulf %63, %67 : vector<2x8x8xf32>
    "tpu.trace_start"() <{level = 10 : i32, message = "bqk,bkd->bqd"}> : () -> ()
    %cst_23 = arith.constant dense<0.000000e+00> : vector<2x8x8xf32>
    %69 = tpu.matmul %68, %53, %cst_23 {dimension_numbers = #tpu.dot_dimension_numbers<[2], [1], [1], [2], [0, 0, 0, 1, 1, 2], [0], [0]>} : vector<2x8x8xf32>, vector<2x8x8xf32>, vector<2x8x8xf32> -> vector<2x8x8xf32>
    "tpu.trace_stop"() : () -> ()
    %70 = vector.extract_strided_slice %6 {offsets = [0, 0, 24], sizes = [2, 8, 8], strides = [1, 1, 1]} : vector<2x8x96xf32> to vector<2x8x8xf32>
    %71 = vector.extract_strided_slice %6 {offsets = [0, 0, 56], sizes = [2, 8, 8], strides = [1, 1, 1]} : vector<2x8x96xf32> to vector<2x8x8xf32>
    %72 = vector.extract_strided_slice %6 {offsets = [0, 0, 88], sizes = [2, 8, 8], strides = [1, 1, 1]} : vector<2x8x96xf32> to vector<2x8x8xf32>
    "tpu.trace_start"() <{level = 10 : i32, message = "bqd,bkd->bqk"}> : () -> ()
    %cst_24 = arith.constant dense<0.000000e+00> : vector<2x8x8xf32>
    %73 = tpu.matmul %70, %71, %cst_24 {dimension_numbers = #tpu.dot_dimension_numbers<[2], [2], [1], [1], [0, 0, 0, 1, 1, 1], [0], [0]>} : vector<2x8x8xf32>, vector<2x8x8xf32>, vector<2x8x8xf32> -> vector<2x8x8xf32>
    "tpu.trace_stop"() : () -> ()
    %cst_25 = arith.constant 0.353553385 : f32
    %74 = vector.broadcast %cst_25 : f32 to vector<2x8x8xf32>
    %75 = arith.mulf %73, %74 : vector<2x8x8xf32>
    %76 = vector.broadcast %12 : vector<2x1x8xf32> to vector<2x8x8xf32>
    %77 = arith.addf %75, %76 : vector<2x8x8xf32>
    %cst_26 = arith.constant dense<0xFF800000> : vector<2x8xf32>
    %78 = vector.multi_reduction <maximumf>, %77, %cst_26 [2] : vector<2x8x8xf32> to vector<2x8xf32>
    %79 = vector.shape_cast %78 : vector<2x8xf32> to vector<2x8x1xf32>
    %80 = vector.broadcast %79 : vector<2x8x1xf32> to vector<2x8x8xf32>
    %81 = arith.subf %77, %80 : vector<2x8x8xf32>
    %82 = math.exp %81 : vector<2x8x8xf32>
    %cst_27 = arith.constant dense<0.000000e+00> : vector<2x8xf32>
    %83 = vector.multi_reduction <add>, %82, %cst_27 [2] : vector<2x8x8xf32> to vector<2x8xf32>
    %84 = vector.shape_cast %83 : vector<2x8xf32> to vector<2x8x1xf32>
    %85 = tpu.reciprocal %84 {approx = true} : vector<2x8x1xf32> -> vector<2x8x1xf32>
    %86 = vector.broadcast %85 : vector<2x8x1xf32> to vector<2x8x8xf32>
    %87 = arith.mulf %82, %86 : vector<2x8x8xf32>
    "tpu.trace_start"() <{level = 10 : i32, message = "bqk,bkd->bqd"}> : () -> ()
    %cst_28 = arith.constant dense<0.000000e+00> : vector<2x8x8xf32>
    %88 = tpu.matmul %87, %72, %cst_28 {dimension_numbers = #tpu.dot_dimension_numbers<[2], [1], [1], [2], [0, 0, 0, 1, 1, 2], [0], [0]>} : vector<2x8x8xf32>, vector<2x8x8xf32>, vector<2x8x8xf32> -> vector<2x8x8xf32>
    "tpu.trace_stop"() : () -> ()
    %89 = tpu.concatenate %31, %50, %69, %88 in 2 : vector<2x8x8xf32>, vector<2x8x8xf32>, vector<2x8x8xf32>, vector<2x8x8xf32> -> vector<2x8x32xf32>
    %90 = vector.shape_cast %89 : vector<2x8x32xf32> to vector<16x32xf32>
    %c0_29 = arith.constant 0 : index
    %c0_30 = arith.constant 0 : index
    %91 = vector.load %arg5[%c0_29, %c0_30] : memref<32x32xf32, #tpu.memory_space<vmem>>, vector<32x32xf32>
    %cst_31 = arith.constant dense<0.000000e+00> : vector<16x32xf32>
    %92 = tpu.matmul %90, %91, %cst_31 {dimension_numbers = #tpu.dot_dimension_numbers<[1], [0], [0], [1], [0, 0, 1, 1], [], []>} : vector<16x32xf32>, vector<32x32xf32>, vector<16x32xf32> -> vector<16x32xf32>
    %c0_32 = arith.constant 0 : index
    %c0_33 = arith.constant 0 : index
    %93 = vector.load %arg6[%c0_32, %c0_33] : memref<1x32xf32, #tpu.memory_space<vmem>>, vector<1x32xf32>
    %94 = vector.broadcast %93 : vector<1x32xf32> to vector<16x32xf32>
    %95 = arith.addf %92, %94 : vector<16x32xf32>
    %96 = arith.addf %95, %0 : vector<16x32xf32>
    %c0_34 = arith.constant 0 : index
    %c0_35 = arith.constant 0 : index
    %97 = vector.load %arg7[%c0_34, %c0_35] : memref<1x32xf32, #tpu.memory_space<vmem>>, vector<1x32xf32>
    %c0_36 = arith.constant 0 : index
    %c0_37 = arith.constant 0 : index
    %98 = vector.load %arg8[%c0_36, %c0_37] : memref<1x32xf32, #tpu.memory_space<vmem>>, vector<1x32xf32>
    %cst_38 = arith.constant dense<0.000000e+00> : vector<16xf32>
    %99 = vector.multi_reduction <add>, %96, %cst_38 [1] : vector<16x32xf32> to vector<16xf32>
    %100 = vector.shape_cast %99 : vector<16xf32> to vector<16x1xf32>
    %cst_39 = arith.constant 3.200000e+01 : f32
    %101 = vector.broadcast %cst_39 : f32 to vector<16x1xf32>
    %102 = arith.divf %100, %101 : vector<16x1xf32>
    %103 = vector.broadcast %102 : vector<16x1xf32> to vector<16x32xf32>
    %104 = arith.subf %96, %103 : vector<16x32xf32>
    %105 = arith.mulf %104, %104 : vector<16x32xf32>
    %cst_40 = arith.constant dense<0.000000e+00> : vector<16xf32>
    %106 = vector.multi_reduction <add>, %105, %cst_40 [1] : vector<16x32xf32> to vector<16xf32>
    %107 = vector.shape_cast %106 : vector<16xf32> to vector<16x1xf32>
    %cst_41 = arith.constant 3.200000e+01 : f32
    %108 = vector.broadcast %cst_41 : f32 to vector<16x1xf32>
    %109 = arith.divf %107, %108 : vector<16x1xf32>
    %110 = vector.broadcast %102 : vector<16x1xf32> to vector<16x32xf32>
    %111 = arith.subf %96, %110 : vector<16x32xf32>
    %cst_42 = arith.constant 9.99999996E-13 : f32
    %112 = vector.broadcast %cst_42 : f32 to vector<16x1xf32>
    %113 = arith.addf %109, %112 : vector<16x1xf32>
    %114 = math.rsqrt %113 : vector<16x1xf32>
    %115 = vector.broadcast %114 : vector<16x1xf32> to vector<16x32xf32>
    %116 = arith.mulf %111, %115 : vector<16x32xf32>
    %117 = vector.broadcast %97 : vector<1x32xf32> to vector<16x32xf32>
    %118 = arith.mulf %116, %117 : vector<16x32xf32>
    %119 = vector.broadcast %98 : vector<1x32xf32> to vector<16x32xf32>
    %120 = arith.addf %118, %119 : vector<16x32xf32>
    %c0_43 = arith.constant 0 : index
    %c0_44 = arith.constant 0 : index
    %121 = vector.load %arg9[%c0_43, %c0_44] : memref<32x64xf32, #tpu.memory_space<vmem>>, vector<32x64xf32>
    %cst_45 = arith.constant dense<0.000000e+00> : vector<16x64xf32>
    %122 = tpu.matmul %120, %121, %cst_45 {dimension_numbers = #tpu.dot_dimension_numbers<[1], [0], [0], [1], [0, 0, 1, 1], [], []>} : vector<16x32xf32>, vector<32x64xf32>, vector<16x64xf32> -> vector<16x64xf32>
    %c0_46 = arith.constant 0 : index
    %c0_47 = arith.constant 0 : index
    %123 = vector.load %arg10[%c0_46, %c0_47] : memref<1x64xf32, #tpu.memory_space<vmem>>, vector<1x64xf32>
    %124 = vector.broadcast %123 : vector<1x64xf32> to vector<16x64xf32>
    %125 = arith.addf %122, %124 : vector<16x64xf32>
    %126 = arith.mulf %125, %125 : vector<16x64xf32>
    %127 = arith.mulf %125, %126 : vector<16x64xf32>
    %cst_48 = arith.constant 4.471500e-02 : f32
    %128 = vector.broadcast %cst_48 : f32 to vector<16x64xf32>
    %129 = arith.mulf %128, %127 : vector<16x64xf32>
    %130 = arith.addf %125, %129 : vector<16x64xf32>
    %cst_49 = arith.constant 0.797884583 : f32
    %131 = vector.broadcast %cst_49 : f32 to vector<16x64xf32>
    %132 = arith.mulf %131, %130 : vector<16x64xf32>
    %133 = math.tanh %132 : vector<16x64xf32>
    %cst_50 = arith.constant 1.000000e+00 : f32
    %134 = vector.broadcast %cst_50 : f32 to vector<16x64xf32>
    %135 = arith.addf %134, %133 : vector<16x64xf32>
    %cst_51 = arith.constant 5.000000e-01 : f32
    %136 = vector.broadcast %cst_51 : f32 to vector<16x64xf32>
    %137 = arith.mulf %136, %135 : vector<16x64xf32>
    %138 = arith.mulf %125, %137 : vector<16x64xf32>
    %c0_52 = arith.constant 0 : index
    %c0_53 = arith.constant 0 : index
    %139 = vector.load %arg11[%c0_52, %c0_53] : memref<64x32xf32, #tpu.memory_space<vmem>>, vector<64x32xf32>
    %cst_54 = arith.constant dense<0.000000e+00> : vector<16x32xf32>
    %140 = tpu.matmul %138, %139, %cst_54 {dimension_numbers = #tpu.dot_dimension_numbers<[1], [0], [0], [1], [0, 0, 1, 1], [], []>} : vector<16x64xf32>, vector<64x32xf32>, vector<16x32xf32> -> vector<16x32xf32>
    %c0_55 = arith.constant 0 : index
    %c0_56 = arith.constant 0 : index
    %141 = vector.load %arg12[%c0_55, %c0_56] : memref<1x32xf32, #tpu.memory_space<vmem>>, vector<1x32xf32>
    %142 = vector.broadcast %141 : vector<1x32xf32> to vector<16x32xf32>
    %143 = arith.addf %140, %142 : vector<16x32xf32>
    %144 = arith.addf %143, %120 : vector<16x32xf32>
    %c0_57 = arith.constant 0 : index
    %c0_58 = arith.constant 0 : index
    %145 = vector.load %arg13[%c0_57, %c0_58] : memref<1x32xf32, #tpu.memory_space<vmem>>, vector<1x32xf32>
    %c0_59 = arith.constant 0 : index
    %c0_60 = arith.constant 0 : index
    %146 = vector.load %arg14[%c0_59, %c0_60] : memref<1x32xf32, #tpu.memory_space<vmem>>, vector<1x32xf32>
    %cst_61 = arith.constant dense<0.000000e+00> : vector<16xf32>
    %147 = vector.multi_reduction <add>, %144, %cst_61 [1] : vector<16x32xf32> to vector<16xf32>
    %148 = vector.shape_cast %147 : vector<16xf32> to vector<16x1xf32>
    %cst_62 = arith.constant 3.200000e+01 : f32
    %149 = vector.broadcast %cst_62 : f32 to vector<16x1xf32>
    %150 = arith.divf %148, %149 : vector<16x1xf32>
    %151 = vector.broadcast %150 : vector<16x1xf32> to vector<16x32xf32>
    %152 = arith.subf %144, %151 : vector<16x32xf32>
    %153 = arith.mulf %152, %152 : vector<16x32xf32>
    %cst_63 = arith.constant dense<0.000000e+00> : vector<16xf32>
    %154 = vector.multi_reduction <add>, %153, %cst_63 [1] : vector<16x32xf32> to vector<16xf32>
    %155 = vector.shape_cast %154 : vector<16xf32> to vector<16x1xf32>
    %cst_64 = arith.constant 3.200000e+01 : f32
    %156 = vector.broadcast %cst_64 : f32 to vector<16x1xf32>
    %157 = arith.divf %155, %156 : vector<16x1xf32>
    %158 = vector.broadcast %150 : vector<16x1xf32> to vector<16x32xf32>
    %159 = arith.subf %144, %158 : vector<16x32xf32>
    %cst_65 = arith.constant 9.99999996E-13 : f32
    %160 = vector.broadcast %cst_65 : f32 to vector<16x1xf32>
    %161 = arith.addf %157, %160 : vector<16x1xf32>
    %162 = math.rsqrt %161 : vector<16x1xf32>
    %163 = vector.broadcast %162 : vector<16x1xf32> to vector<16x32xf32>
    %164 = arith.mulf %159, %163 : vector<16x32xf32>
    %165 = vector.broadcast %145 : vector<1x32xf32> to vector<16x32xf32>
    %166 = arith.mulf %164, %165 : vector<16x32xf32>
    %167 = vector.broadcast %146 : vector<1x32xf32> to vector<16x32xf32>
    %168 = arith.addf %166, %167 : vector<16x32xf32>
    %c0_66 = arith.constant 0 : index
    %c0_67 = arith.constant 0 : index
    %169 = vector.load %arg15[%c0_66, %c0_67] : memref<32x256xf32, #tpu.memory_space<vmem>>, vector<32x256xf32>
    %cst_68 = arith.constant dense<0.000000e+00> : vector<16x256xf32>
    %170 = tpu.matmul %168, %169, %cst_68 {dimension_numbers = #tpu.dot_dimension_numbers<[1], [0], [0], [1], [0, 0, 1, 1], [], []>} : vector<16x32xf32>, vector<32x256xf32>, vector<16x256xf32> -> vector<16x256xf32>
    %c0_69 = arith.constant 0 : index
    %c0_70 = arith.constant 0 : index
    %171 = vector.load %arg16[%c0_69, %c0_70] : memref<1x256xf32, #tpu.memory_space<vmem>>, vector<1x256xf32>
    %172 = vector.broadcast %171 : vector<1x256xf32> to vector<16x256xf32>
    %173 = arith.addf %170, %172 : vector<16x256xf32>
    %c0_71 = arith.constant 0 : index
    %c0_72 = arith.constant 0 : index
    %174 = vector.load %arg17[%c0_71, %c0_72] : memref<16x256xf32, #tpu.memory_space<vmem>>, vector<16x256xf32>
    tpu.vector_store %arg17[%c0_71, %c0_72], %173 {strides = array<i32>} : memref<16x256xf32, #tpu.memory_space<vmem>>, vector<16x256xf32>,
    return
  }
  func.func @transform_0(%arg0: i32) -> (i32, i32) {
    %c0_i32 = arith.constant 0 : i32
    %c0_i32_0 = arith.constant 0 : i32
    %c0_i32_1 = arith.constant 0 : i32
    return %c0_i32, %c0_i32_0 : i32, i32
  }
  func.func @transform_1(%arg0: i32) -> (i32, i32) {
    %c0_i32 = arith.constant 0 : i32
    %c0_i32_0 = arith.constant 0 : i32
    %c0_i32_1 = arith.constant 0 : i32
    return %c0_i32, %c0_i32_0 : i32, i32
  }
  func.func @transform_2(%arg0: i32) -> (i32, i32) {
    %c0_i32 = arith.constant 0 : i32
    %c0_i32_0 = arith.constant 0 : i32
    %c0_i32_1 = arith.constant 0 : i32
    return %c0_i32, %c0_i32_0 : i32, i32
  }
  func.func @transform_3(%arg0: i32) -> (i32, i32) {
    %c0_i32 = arith.constant 0 : i32
    %c0_i32_0 = arith.constant 0 : i32
    %c0_i32_1 = arith.constant 0 : i32
    return %c0_i32, %c0_i32_0 : i32, i32
  }
  func.func @transform_4(%arg0: i32) -> (i32, i32) {
    %c0_i32 = arith.constant 0 : i32
    %c0_i32_0 = arith.constant 0 : i32
    %c0_i32_1 = arith.constant 0 : i32
    return %c0_i32, %c0_i32_0 : i32, i32
  }
  func.func @transform_5(%arg0: i32) -> (i32, i32) {
    %c0_i32 = arith.constant 0 : i32
    %c0_i32_0 = arith.constant 0 : i32
    %c0_i32_1 = arith.constant 0 : i32
    return %c0_i32, %c0_i32_0 : i32, i32
  }
  func.func @transform_6(%arg0: i32) -> (i32, i32) {
    %c0_i32 = arith.constant 0 : i32
    %c0_i32_0 = arith.constant 0 : i32
    %c0_i32_1 = arith.constant 0 : i32
    return %c0_i32, %c0_i32_0 : i32, i32
  }
  func.func @transform_7(%arg0: i32) -> (i32, i32) {
    %c0_i32 = arith.constant 0 : i32
    %c0_i32_0 = arith.constant 0 : i32
    %c0_i32_1 = arith.constant 0 : i32
    return %c0_i32, %c0_i32_0 : i32, i32
  }
  func.func @transform_8(%arg0: i32) -> (i32, i32) {
    %c0_i32 = arith.constant 0 : i32
    %c0_i32_0 = arith.constant 0 : i32
    %c0_i32_1 = arith.constant 0 : i32
    return %c0_i32, %c0_i32_0 : i32, i32
  }
  func.func @transform_9(%arg0: i32) -> (i32, i32) {
    %c0_i32 = arith.constant 0 : i32
    %c0_i32_0 = arith.constant 0 : i32
    %c0_i32_1 = arith.constant 0 : i32
    return %c0_i32, %c0_i32_0 : i32, i32
  }
  func.func @transform_10(%arg0: i32) -> (i32, i32) {
    %c0_i32 = arith.constant 0 : i32
    %c0_i32_0 = arith.constant 0 : i32
    %c0_i32_1 = arith.constant 0 : i32
    return %c0_i32, %c0_i32_0 : i32, i32
  }
  func.func @transform_11(%arg0: i32) -> (i32, i32) {
    %c0_i32 = arith.constant 0 : i32
    %c0_i32_0 = arith.constant 0 : i32
    %c0_i32_1 = arith.constant 0 : i32
    return %c0_i32, %c0_i32_0 : i32, i32
  }
  func.func @transform_12(%arg0: i32) -> (i32, i32) {
    %c0_i32 = arith.constant 0 : i32
    %c0_i32_0 = arith.constant 0 : i32
    %c0_i32_1 = arith.constant 0 : i32
    return %c0_i32, %c0_i32_0 : i32, i32
  }
  func.func @transform_13(%arg0: i32) -> (i32, i32) {
    %c0_i32 = arith.constant 0 : i32
    %c0_i32_0 = arith.constant 0 : i32
    %c0_i32_1 = arith.constant 0 : i32
    return %c0_i32, %c0_i32_0 : i32, i32
  }
  func.func @transform_14(%arg0: i32) -> (i32, i32) {
    %c0_i32 = arith.constant 0 : i32
    %c0_i32_0 = arith.constant 0 : i32
    %c0_i32_1 = arith.constant 0 : i32
    return %c0_i32, %c0_i32_0 : i32, i32
  }
  func.func @transform_15(%arg0: i32) -> (i32, i32) {
    %c0_i32 = arith.constant 0 : i32
    %c0_i32_0 = arith.constant 0 : i32
    %c0_i32_1 = arith.constant 0 : i32
    return %c0_i32, %c0_i32_0 : i32, i32
  }
  func.func @transform_16(%arg0: i32) -> (i32, i32) {
    %c0_i32 = arith.constant 0 : i32
    %c0_i32_0 = arith.constant 0 : i32
    %c0_i32_1 = arith.constant 0 : i32
    return %c0_i32, %c0_i32_0 : i32, i32
  }
}

</mosaic_0001>

<llo_original>
// kernel: nerbert_forward.3
$region0: #{nerbert_forward.3}
  #allocation0 [shape = 'u32[]', space=smem, size = 0x4, offset = 0x4, fixed_abs, tag = 'smem constant byte address 0x4 - core index']
  #allocation1 [shape = 'u32[144,128]{1,0:T(1,128)}', space=vmem, size = 0x12000, scoped, tag = 'internal scratch']
  %s0 = inlined_call_operand.vmem [shape: f32[16,32], index: 0, kind: input, shape index: {}]
  %s1 = inlined_call_operand.vmem [shape: f32[2,8], index: 1, kind: input, shape index: {}]
  %s2 = inlined_call_operand.vmem [shape: f32[1,32], index: 2, kind: input, shape index: {}]
  %s3 = inlined_call_operand.vmem [shape: f32[1,32], index: 3, kind: input, shape index: {}]
  %s4 = inlined_call_operand.vmem [shape: f32[32,96], index: 4, kind: input, shape index: {}]
  %s5 = inlined_call_operand.vmem [shape: f32[1,96], index: 5, kind: input, shape index: {}]
  %s6 = inlined_call_operand.vmem [shape: f32[32,32], index: 6, kind: input, shape index: {}]
  %s7 = inlined_call_operand.vmem [shape: f32[1,32], index: 7, kind: input, shape index: {}]
  %s8 = inlined_call_operand.vmem [shape: f32[1,32], index: 8, kind: input, shape index: {}]
  %s9 = inlined_call_operand.vmem [shape: f32[1,32], index: 9, kind: input, shape index: {}]
  %s10 = inlined_call_operand.vmem [shape: f32[32,64], index: 10, kind: input, shape index: {}]
  %s11 = inlined_call_operand.vmem [shape: f32[1,64], index: 11, kind: input, shape index: {}]
  %s12 = inlined_call_operand.vmem [shape: f32[64,32], index: 12, kind: input, shape index: {}]
  %s13 = inlined_call_operand.vmem [shape: f32[1,32], index: 13, kind: input, shape index: {}]
  %s14 = inlined_call_operand.vmem [shape: f32[1,32], index: 14, kind: input, shape index: {}]
  %s15 = inlined_call_operand.vmem [shape: f32[1,32], index: 15, kind: input, shape index: {}]
  %s16 = inlined_call_operand.vmem [shape: f32[16,32], index: 16, kind: output, shape index: {}]
  %s17 = sld [smem:[#allocation0]]
  $region74: #{nerbert_forward.3} parent=0
    _
  %s19 = ssub.s32 1, %s17
  %s20 = scalar_select 0, %s19, %s17
  // Predicated region
  $region2: #{nerbert_forward.3} parent=0 // pred_check
    _
  $region3: #{nerbert_forward.3} parent=0 // pred_check_branch
    %22 = sbr.rel (0) target = $region5
  $region4: #{nerbert_forward.3} parent=0 // pred_region
    _
  $region5: #{nerbert_forward.3} parent=0 // pred_fallthru
    _
  // Predicated region
  $region6: #{nerbert_forward.3} parent=0 // pred_check
    _
  $region7: #{nerbert_forward.3} parent=0 // pred_check_branch
    %24 = sbr.rel (0) target = $region9
  $region8: #{nerbert_forward.3} parent=0 // pred_region
    _
  $region9: #{nerbert_forward.3} parent=0 // pred_fallthru
    _
  // Predicated region
  $region10: #{nerbert_forward.3} parent=0 // pred_check
    _
  $region11: #{nerbert_forward.3} parent=0 // pred_check_branch
    %26 = sbr.rel (0) target = $region13
  $region12: #{nerbert_forward.3} parent=0 // pred_region
    _
  $region13: #{nerbert_forward.3} parent=0 // pred_fallthru
    _
  // Predicated region
  $region14: #{nerbert_forward.3} parent=0 // pred_check
    _
  $region15: #{nerbert_forward.3} parent=0 // pred_check_branch
    %28 = sbr.rel (0) target = $region17
  $region16: #{nerbert_forward.3} parent=0 // pred_region
    _
  $region17: #{nerbert_forward.3} parent=0 // pred_fallthru
    _
  // Predicated region
  $region18: #{nerbert_forward.3} parent=0 // pred_check
    _
  $region19: #{nerbert_forward.3} parent=0 // pred_check_branch
    %30 = sbr.rel (0) target = $region21
  $region20: #{nerbert_forward.3} parent=0 // pred_region
    _
  $region21: #{nerbert_forward.3} parent=0 // pred_fallthru
    _
  // Predicated region
  $region22: #{nerbert_forward.3} parent=0 // pred_check
    _
  $region23: #{nerbert_forward.3} parent=0 // pred_check_branch
    %32 = sbr.rel (0) target = $region25
  $region24: #{nerbert_forward.3} parent=0 // pred_region
    _
  $region25: #{nerbert_forward.3} parent=0 // pred_fallthru
    _
  // Predicated region
  $region26: #{nerbert_forward.3} parent=0 // pred_check
    _
  $region27: #{nerbert_forward.3} parent=0 // pred_check_branch
    %34 = sbr.rel (0) target = $region29
  $region28: #{nerbert_forward.3} parent=0 // pred_region
    _
  $region29: #{nerbert_forward.3} parent=0 // pred_fallthru
    _
  // Predicated region
  $region30: #{nerbert_forward.3} parent=0 // pred_check
    _
  $region31: #{nerbert_forward.3} parent=0 // pred_check_branch
    %36 = sbr.rel (0) target = $region33
  $region32: #{nerbert_forward.3} parent=0 // pred_region
    _
  $region33: #{nerbert_forward.3} parent=0 // pred_fallthru
    _
  // Predicated region
  $region34: #{nerbert_forward.3} parent=0 // pred_check
    _
  $region35: #{nerbert_forward.3} parent=0 // pred_check_branch
    %38 = sbr.rel (0) target = $region37
  $region36: #{nerbert_forward.3} parent=0 // pred_region
    _
  $region37: #{nerbert_forward.3} parent=0 // pred_fallthru
    _
  // Predicated region
  $region38: #{nerbert_forward.3} parent=0 // pred_check
    _
  $region39: #{nerbert_forward.3} parent=0 // pred_check_branch
    %40 = sbr.rel (0) target = $region41
  $region40: #{nerbert_forward.3} parent=0 // pred_region
    _
  $region41: #{nerbert_forward.3} parent=0 // pred_fallthru
    _
  // Predicated region
  $region42: #{nerbert_forward.3} parent=0 // pred_check
    _
  $region43: #{nerbert_forward.3} parent=0 // pred_check_branch
    %42 = sbr.rel (0) target = $region45
  $region44: #{nerbert_forward.3} parent=0 // pred_region
    _
  $region45: #{nerbert_forward.3} parent=0 // pred_fallthru
    _
  // Predicated region
  $region46: #{nerbert_forward.3} parent=0 // pred_check
    _
  $region47: #{nerbert_forward.3} parent=0 // pred_check_branch
    %44 = sbr.rel (0) target = $region49
  $region48: #{nerbert_forward.3} parent=0 // pred_region
    _
  $region49: #{nerbert_forward.3} parent=0 // pred_fallthru
    _
  // Predicated region
  $region50: #{nerbert_forward.3} parent=0 // pred_check
    _
  $region51: #{nerbert_forward.3} parent=0 // pred_check_branch
    %46 = sbr.rel (0) target = $region53
  $region52: #{nerbert_forward.3} parent=0 // pred_region
    _
  $region53: #{nerbert_forward.3} parent=0 // pred_fallthru
    _
  // Predicated region
  $region54: #{nerbert_forward.3} parent=0 // pred_check
    _
  $region55: #{nerbert_forward.3} parent=0 // pred_check_branch
    %48 = sbr.rel (0) target = $region57
  $region56: #{nerbert_forward.3} parent=0 // pred_region
    _
  $region57: #{nerbert_forward.3} parent=0 // pred_fallthru
    _
  // Predicated region
  $region58: #{nerbert_forward.3} parent=0 // pred_check
    _
  $region59: #{nerbert_forward.3} parent=0 // pred_check_branch
    %50 = sbr.rel (0) target = $region61
  $region60: #{nerbert_forward.3} parent=0 // pred_region
    _
  $region61: #{nerbert_forward.3} parent=0 // pred_fallthru
    _
  // Predicated region
  $region62: #{nerbert_forward.3} parent=0 // pred_check
    _
  $region63: #{nerbert_forward.3} parent=0 // pred_check_branch
    %52 = sbr.rel (0) target = $region65
  $region64: #{nerbert_forward.3} parent=0 // pred_region
    _
  $region65: #{nerbert_forward.3} parent=0 // pred_fallthru
    _
  %v53 = vld [vmem:[%s0] sm:$0xff]
  %v54 = vld [vmem:[%s0 + $0x8] sm:$0xff]
  %v55 = vld [vmem:[%s2] sm:$0x1]
  %v56 = vld [vmem:[%s3] sm:$0x1]
  %vm57 = vcmask 261120
  %v58 = vsel %vm57, %v53, 0.0
  %59 = vadd.xlane.f32.xlu0 %v58
  %v60 = vpop.xlane.xlu0 %59
  %v61 = vsel %vm57, %v54, 0.0
  %62 = vadd.xlane.f32.xlu0 %v61
  %v63 = vpop.xlane.xlu0 %62
  %v64 = vrcp.pop 32.0
  %v65 = vmul.f32 %v60, %v64
  %v66 = vmul.f32 %v63, %v64
  %v67 = vsub.f32 %v53, %v65
  %v68 = vsub.f32 %v54, %v66
  %v69 = vmul.f32 %v67, %v67
  %v70 = vmul.f32 %v68, %v68
  %v71 = vsel %vm57, %v69, 0.0
  %72 = vadd.xlane.f32.xlu0 %v71
  %v73 = vpop.xlane.xlu0 %72
  %v74 = vsel %vm57, %v70, 0.0
  %75 = vadd.xlane.f32.xlu0 %v74
  %v76 = vpop.xlane.xlu0 %75
  %v77 = vmul.f32 %v73, %v64
  %v78 = vmul.f32 %v76, %v64
  %v79 = vadd.f32 %v77, 1e-12
  %v80 = vadd.f32 %v78, 1e-12
  %v81 = vrsqrt.pop %v79
  %v82 = vrsqrt.pop %v80
  %v83 = vmul.f32 %v67, %v81
  %v84 = vmul.f32 %v68, %v82
  %v86 = vlaneseq
  %v87 = vshrl.u32 %v86, 7
  %v88 = vsub.s32 0, %v87
  %v89 = vrot.slane %v55, %v88
  %v91 = vmul.f32 %v83, %v89
  %v92 = vmul.f32 %v84, %v89
  %v94 = vlaneseq
  %v95 = vshrl.u32 %v94, 7
  %v96 = vsub.s32 0, %v95
  %v97 = vrot.slane %v56, %v96
  %v99 = vadd.f32 %v91, %v97
  %v100 = vadd.f32 %v92, %v97
  %v101 = vld [vmem:[%s4] sm:$0xff]
  %v102 = vld [vmem:[%s4 + $0x8] sm:$0xff]
  %v103 = vld [vmem:[%s4 + $0x10] sm:$0xff]
  %v104 = vld [vmem:[%s4 + $0x18] sm:$0xff]
  %v105 = vld [vmem:[%s5] sm:$0x1]
  %v107 = vlaneseq
  %v108 = vshrl.u32 %v107, 7
  %v109 = vsub.s32 0, %v108
  %v110 = vrot.slane %v105, %v109
  %v113 = vsel %vm57, %v99, 0
  %v116 = vsel %vm57, %v100, 0
  %118 = vmatprep.subr.mxu0 0.0
  %119 = vmatpush1.msra.mxu0 %v101
  %120 = vmatprep.subr.mxu0 0.0
  %121 = vmatpush1.msra.mxu0 %v102
  %122 = vmatprep.subr.mxu0 0.0
  %123 = vmatpush1.msra.mxu0 %v103
  %124 = vmatprep.subr.mxu0 0.0
  %125 = vmatpush1.msra.mxu0 %v104
  %126 = vmatprep.subr.mxu0 0.0
  %127 = vmatpush1.msra.mxu0 0.0
  %128 = vmatprep.subr.mxu0 0.0
  %129 = vmatpush1.msra.mxu0 0.0
  %130 = vmatprep.subr.mxu0 0.0
  %131 = vmatpush1.msra.mxu0 0.0
  %132 = vmatprep.subr.mxu0 0.0
  %133 = vmatpush1.msra.mxu0 0.0
  %134 = vmatprep.subr.mxu0 0.0
  %135 = vmatpush1.msra.mxu0 0.0
  %136 = vmatprep.subr.mxu0 0.0
  %137 = vmatpush1.msra.mxu0 0.0
  %138 = vmatprep.subr.mxu0 0.0
  %139 = vmatpush1.msra.mxu0 0.0
  %140 = vmatprep.subr.mxu0 0.0
  %141 = vmatpush1.msra.mxu0 0.0
  %142 = vmatprep.subr.mxu0 0.0
  %143 = vmatpush1.msra.mxu0 0.0
  %144 = vmatprep.subr.mxu0 0.0
  %145 = vmatpush1.msra.mxu0 0.0
  %146 = vmatprep.subr.mxu0 0.0
  %147 = vmatpush1.msra.mxu0 0.0
  %148 = vmatprep.subr.mxu0 0.0
  %149 = vmatpush1.msra.mxu0 0.0
  %150 = vmatprep.subr.mxu0 0.0
  %151 = vmatpush1.msra.mxu0 0.0
  %152 = vmatprep.subr.mxu0 0.0
  %153 = vmatpush1.msra.mxu0 0.0
  %154 = vmatprep.subr.mxu0 0.0
  %155 = vmatpush1.msra.mxu0 0.0
  %156 = vmatprep.subr.mxu0 0.0
  %157 = vmatpush1.msra.mxu0 0.0
  %158 = vmatprep.subr.mxu0 0.0
  %159 = vmatpush1.msra.mxu0 0.0
  %160 = vmatprep.subr.mxu0 0.0
  %161 = vmatpush1.msra.mxu0 0.0
  %162 = vmatprep.subr.mxu0 0.0
  %163 = vmatpush1.msra.mxu0 0.0
  %164 = vmatprep.subr.mxu0 0.0
  %165 = vmatpush1.msra.mxu0 0.0
  %166 = vmatprep.subr.mxu0 0.0
  %167 = vmatpush1.msra.mxu0 0.0
  %168 = vmatprep.subr.mxu0 0.0
  %169 = vmatpush1.msra.mxu0 0.0
  %170 = vmatprep.subr.mxu0 0.0
  %171 = vmatpush1.msra.mxu0 0.0
  %172 = vmatprep.subr.mxu0 0.0
  %173 = vmatpush1.msra.mxu0 0.0
  %174 = vmatprep.subr.mxu0 0.0
  %175 = vmatpush1.msra.mxu0 0.0
  %176 = vmatprep.subr.mxu0 0.0
  %177 = vmatpush1.msra.mxu0 0.0
  %178 = vmatprep.subr.mxu0 0.0
  %179 = vmatpush1.msra.mxu0 0.0
  %180 = vmatprep.subr.mxu0 0.0
  %181 = vmatpush1.msra.mxu0 0.0
  %182 = vmatprep.mubr.f32.mxu0 0.0
  %183 = vmatmul.mubr.f32.gmra.mrb[0].mxu0 %v113
  %v184 = vpop.f32.mrb[0].mxu0
  %v185 = vadd.f32 %v110, %v184
  %v186 = vpop.f32.mrb[0].mxu0
  %187 = vmatprep.mubr.f32.mxu0 0.0
  %188 = vmatmul.mubr.f32.gmra.mrb[0].mxu0 %v116
  %v189 = vpop.f32.mrb[0].mxu0
  %v190 = vadd.f32 %v110, %v189
  %v191 = vpop.f32.mrb[0].mxu0
  %192 = vdwg.mxu0
  %v193 = vld [vmem:[%s1] sm:$0x3]
  %v194 = vsub.f32 1.0, %v193
  %v195 = vmul.f32 %v194, -10000.0
  %v198 = vunpack.c.l.s4 1966171168
  %v199 = vunpack.c.0.s8 %v198
  %v200 = vlaneseq
  %v201 = vshrl.u32 %v200, 7
  %v202 = vsub.s32 %v199, %v201
  %v203 = vrot.slane %v195, %v202
  %v204 = vcombine.high %v203, %v203
  %v206 = vunpack.c.l.s4 1966171168
  %v207 = vunpack.c.0.s8 %v206
  %v208 = vlaneseq
  %v209 = vshrl.u32 %v208, 7
  %v210 = vsub.s32 %v207, %v209
  %v211 = vrot.slane %v203, %v210
  %v213 = vunpack.c.l.s4 1966171168
  %v214 = vunpack.c.0.s8 %v213
  %v215 = vlaneseq
  %v216 = vshrl.u32 %v215, 7
  %v217 = vsub.s32 %v214, %v216
  %v218 = vrot.slane %v204, %v217
  %220 = vrot.lane.b32.xlu0 %v185, 96
  %v221 = vpop.permute.xlu0 %220
  %vm222 = vcmask 64512
  %v223 = vsel %vm222, %v185, 0
  %v225 = vsel %vm222, %v221, 0
  %227 = vmatprep.subr.mxu0 0.0
  %228 = vmatpush1.xpose.msra.mxu0 %v225
  %229 = vmatprep.subr.mxu0 0.0
  %230 = vmatpush1.xpose.msra.mxu0 0.0
  %231 = vmatprep.subr.mxu0 0.0
  %232 = vmatpush1.xpose.msra.mxu0 0.0
  %233 = vmatprep.subr.mxu0 0.0
  %234 = vmatpush1.xpose.msra.mxu0 0.0
  %235 = vmatprep.subr.mxu0 0.0
  %236 = vmatpush1.xpose.msra.mxu0 0.0
  %237 = vmatprep.subr.mxu0 0.0
  %238 = vmatpush1.xpose.msra.mxu0 0.0
  %239 = vmatprep.subr.mxu0 0.0
  %240 = vmatpush1.xpose.msra.mxu0 0.0
  %241 = vmatprep.subr.mxu0 0.0
  %242 = vmatpush1.xpose.msra.mxu0 0.0
  %243 = vmatprep.subr.mxu0 0.0
  %244 = vmatpush1.xpose.msra.mxu0 0.0
  %245 = vmatprep.subr.mxu0 0.0
  %246 = vmatpush1.xpose.msra.mxu0 0.0
  %247 = vmatprep.subr.mxu0 0.0
  %248 = vmatpush1.xpose.msra.mxu0 0.0
  %249 = vmatprep.subr.mxu0 0.0
  %250 = vmatpush1.xpose.msra.mxu0 0.0
  %251 = vmatprep.subr.mxu0 0.0
  %252 = vmatpush1.xpose.msra.mxu0 0.0
  %253 = vmatprep.subr.mxu0 0.0
  %254 = vmatpush1.xpose.msra.mxu0 0.0
  %255 = vmatprep.subr.mxu0 0.0
  %256 = vmatpush1.xpose.msra.mxu0 0.0
  %257 = vmatprep.subr.mxu0 0.0
  %258 = vmatpush1.xpose.msra.mxu0 0.0
  %259 = vmatprep.subr.mxu0 0.0
  %260 = vmatpush1.xpose.msra.mxu0 0.0
  %261 = vmatprep.subr.mxu0 0.0
  %262 = vmatpush1.xpose.msra.mxu0 0.0
  %263 = vmatprep.subr.mxu0 0.0
  %264 = vmatpush1.xpose.msra.mxu0 0.0
  %265 = vmatprep.subr.mxu0 0.0
  %266 = vmatpush1.xpose.msra.mxu0 0.0
  %267 = vmatprep.subr.mxu0 0.0
  %268 = vmatpush1.xpose.msra.mxu0 0.0
  %269 = vmatprep.subr.mxu0 0.0
  %270 = vmatpush1.xpose.msra.mxu0 0.0
  %271 = vmatprep.subr.mxu0 0.0
  %272 = vmatpush1.xpose.msra.mxu0 0.0
  %273 = vmatprep.subr.mxu0 0.0
  %274 = vmatpush1.xpose.msra.mxu0 0.0
  %275 = vmatprep.subr.mxu0 0.0
  %276 = vmatpush1.xpose.msra.mxu0 0.0
  %277 = vmatprep.subr.mxu0 0.0
  %278 = vmatpush1.xpose.msra.mxu0 0.0
  %279 = vmatprep.subr.mxu0 0.0
  %280 = vmatpush1.xpose.msra.mxu0 0.0
  %281 = vmatprep.subr.mxu0 0.0
  %282 = vmatpush1.xpose.msra.mxu0 0.0
  %283 = vmatprep.subr.mxu0 0.0
  %284 = vmatpush1.xpose.msra.mxu0 0.0
  %285 = vmatprep.subr.mxu0 0.0
  %286 = vmatpush1.xpose.msra.mxu0 0.0
  %287 = vmatprep.subr.mxu0 0.0
  %288 = vmatpush1.xpose.msra.mxu0 0.0
  %289 = vmatprep.subr.mxu0 0.0
  %290 = vmatpush1.xpose.msra.mxu0 0.0
  %291 = vmatprep.mubr.f32.mxu0 0.0
  %292 = vmatmul.mubr.f32.gmra.mrb[0].mxu0 %v223
  %v293 = vpop.f32.mrb[0].mxu0
  %v294 = vadd.f32 0.0, %v293
  %v295 = vpop.f32.mrb[0].mxu0
  %296 = vdwg.mxu0
  %298 = vrot.lane.b32.xlu0 %v190, 96
  %v299 = vpop.permute.xlu0 %298
  %v300 = vsel %vm222, %v190, 0
  %v302 = vsel %vm222, %v299, 0
  %304 = vmatprep.subr.mxu0 0.0
  %305 = vmatpush1.xpose.msra.mxu0 %v302
  %306 = vmatprep.subr.mxu0 0.0
  %307 = vmatpush1.xpose.msra.mxu0 0.0
  %308 = vmatprep.subr.mxu0 0.0
  %309 = vmatpush1.xpose.msra.mxu0 0.0
  %310 = vmatprep.subr.mxu0 0.0
  %311 = vmatpush1.xpose.msra.mxu0 0.0
  %312 = vmatprep.subr.mxu0 0.0
  %313 = vmatpush1.xpose.msra.mxu0 0.0
  %314 = vmatprep.subr.mxu0 0.0
  %315 = vmatpush1.xpose.msra.mxu0 0.0
  %316 = vmatprep.subr.mxu0 0.0
  %317 = vmatpush1.xpose.msra.mxu0 0.0
  %318 = vmatprep.subr.mxu0 0.0
  %319 = vmatpush1.xpose.msra.mxu0 0.0
  %320 = vmatprep.subr.mxu0 0.0
  %321 = vmatpush1.xpose.msra.mxu0 0.0
  %322 = vmatprep.subr.mxu0 0.0
  %323 = vmatpush1.xpose.msra.mxu0 0.0
  %324 = vmatprep.subr.mxu0 0.0
  %325 = vmatpush1.xpose.msra.mxu0 0.0
  %326 = vmatprep.subr.mxu0 0.0
  %327 = vmatpush1.xpose.msra.mxu0 0.0
  %328 = vmatprep.subr.mxu0 0.0
  %329 = vmatpush1.xpose.msra.mxu0 0.0
  %330 = vmatprep.subr.mxu0 0.0
  %331 = vmatpush1.xpose.msra.mxu0 0.0
  %332 = vmatprep.subr.mxu0 0.0
  %333 = vmatpush1.xpose.msra.mxu0 0.0
  %334 = vmatprep.subr.mxu0 0.0
  %335 = vmatpush1.xpose.msra.mxu0 0.0
  %336 = vmatprep.subr.mxu0 0.0
  %337 = vmatpush1.xpose.msra.mxu0 0.0
  %338 = vmatprep.subr.mxu0 0.0
  %339 = vmatpush1.xpose.msra.mxu0 0.0
  %340 = vmatprep.subr.mxu0 0.0
  %341 = vmatpush1.xpose.msra.mxu0 0.0
  %342 = vmatprep.subr.mxu0 0.0
  %343 = vmatpush1.xpose.msra.mxu0 0.0
  %344 = vmatprep.subr.mxu0 0.0
  %345 = vmatpush1.xpose.msra.mxu0 0.0
  %346 = vmatprep.subr.mxu0 0.0
  %347 = vmatpush1.xpose.msra.mxu0 0.0
  %348 = vmatprep.subr.mxu0 0.0
  %349 = vmatpush1.xpose.msra.mxu0 0.0
  %350 = vmatprep.subr.mxu0 0.0
  %351 = vmatpush1.xpose.msra.mxu0 0.0
  %352 = vmatprep.subr.mxu0 0.0
  %353 = vmatpush1.xpose.msra.mxu0 0.0
  %354 = vmatprep.subr.mxu0 0.0
  %355 = vmatpush1.xpose.msra.mxu0 0.0
  %356 = vmatprep.subr.mxu0 0.0
  %357 = vmatpush1.xpose.msra.mxu0 0.0
  %358 = vmatprep.subr.mxu0 0.0
  %359 = vmatpush1.xpose.msra.mxu0 0.0
  %360 = vmatprep.subr.mxu0 0.0
  %361 = vmatpush1.xpose.msra.mxu0 0.0
  %362 = vmatprep.subr.mxu0 0.0
  %363 = vmatpush1.xpose.msra.mxu0 0.0
  %364 = vmatprep.subr.mxu0 0.0
  %365 = vmatpush1.xpose.msra.mxu0 0.0
  %366 = vmatprep.subr.mxu0 0.0
  %367 = vmatpush1.xpose.msra.mxu0 0.0
  %368 = vmatprep.mubr.f32.mxu0 0.0
  %369 = vmatmul.mubr.f32.gmra.mrb[0].mxu0 %v300
  %v370 = vpop.f32.mrb[0].mxu0
  %v371 = vadd.f32 0.0, %v370
  %v372 = vpop.f32.mrb[0].mxu0
  %373 = vdwg.mxu0
  %v374 = vmul.f32 %v294, 0.35355338
  %v375 = vmul.f32 %v371, 0.35355338
  %v376 = vlaneseq
  %v377 = vshrl.u32 %v376, 7
  %v378 = vsub.s32 0, %v377
  %v379 = vrot.slane %v211, %v378
  %v380 = vlaneseq
  %v381 = vshrl.u32 %v380, 7
  %v382 = vsub.s32 0, %v381
  %v383 = vrot.slane %v218, %v382
  %v386 = vadd.f32 %v374, %v379
  %v387 = vadd.f32 %v375, %v383
  %v388 = vsel %vm222, %v386, -inf
  %389 = vmax.xlane.f32.xlu0 %v388
  %v390 = vpop.xlane.xlu0 %389
  %v391 = vsel %vm222, %v387, -inf
  %392 = vmax.xlane.f32.xlu0 %v391
  %v393 = vpop.xlane.xlu0 %392
  %v394 = vsub.f32 %v386, %v390
  %v395 = vsub.f32 %v387, %v393
  %v396 = vmul.f32 %v394, 1.442695
  %v397 = vpow.pop %v396
  %v398 = vmul.f32 %v395, 1.442695
  %v399 = vpow.pop %v398
  %v400 = vsel %vm222, %v397, 0.0
  %401 = vadd.xlane.f32.xlu0 %v400
  %v402 = vpop.xlane.xlu0 %401
  %v403 = vsel %vm222, %v399, 0.0
  %404 = vadd.xlane.f32.xlu0 %v403
  %v405 = vpop.xlane.xlu0 %404
  %v406 = vrcp.pop %v402
  %v407 = vrcp.pop %v405
  %v408 = vmul.f32 %v397, %v406
  %v409 = vmul.f32 %v399, %v407
  %410 = vrot.lane.b32.xlu0 %v185, 64
  %v411 = vpop.permute.xlu0 %410
  %v414 = vsel %vm222, %v408, 0
  %416 = vmatprep.subr.mxu0 0.0
  %417 = vmatpush1.msra.mxu0 %v411
  %418 = vmatprep.subr.mxu0 0.0
  %419 = vmatpush1.msra.mxu0 0.0
  %420 = vmatprep.subr.mxu0 0.0
  %421 = vmatpush1.msra.mxu0 0.0
  %422 = vmatprep.subr.mxu0 0.0
  %423 = vmatpush1.msra.mxu0 0.0
  %424 = vmatprep.subr.mxu0 0.0
  %425 = vmatpush1.msra.mxu0 0.0
  %426 = vmatprep.subr.mxu0 0.0
  %427 = vmatpush1.msra.mxu0 0.0
  %428 = vmatprep.subr.mxu0 0.0
  %429 = vmatpush1.msra.mxu0 0.0
  %430 = vmatprep.subr.mxu0 0.0
  %431 = vmatpush1.msra.mxu0 0.0
  %432 = vmatprep.subr.mxu0 0.0
  %433 = vmatpush1.msra.mxu0 0.0
  %434 = vmatprep.subr.mxu0 0.0
  %435 = vmatpush1.msra.mxu0 0.0
  %436 = vmatprep.subr.mxu0 0.0
  %437 = vmatpush1.msra.mxu0 0.0
  %438 = vmatprep.subr.mxu0 0.0
  %439 = vmatpush1.msra.mxu0 0.0
  %440 = vmatprep.subr.mxu0 0.0
  %441 = vmatpush1.msra.mxu0 0.0
  %442 = vmatprep.subr.mxu0 0.0
  %443 = vmatpush1.msra.mxu0 0.0
  %444 = vmatprep.subr.mxu0 0.0
  %445 = vmatpush1.msra.mxu0 0.0
  %446 = vmatprep.subr.mxu0 0.0
  %447 = vmatpush1.msra.mxu0 0.0
  %448 = vmatprep.subr.mxu0 0.0
  %449 = vmatpush1.msra.mxu0 0.0
  %450 = vmatprep.subr.mxu0 0.0
  %451 = vmatpush1.msra.mxu0 0.0
  %452 = vmatprep.subr.mxu0 0.0
  %453 = vmatpush1.msra.mxu0 0.0
  %454 = vmatprep.subr.mxu0 0.0
  %455 = vmatpush1.msra.mxu0 0.0
  %456 = vmatprep.subr.mxu0 0.0
  %457 = vmatpush1.msra.mxu0 0.0
  %458 = vmatprep.subr.mxu0 0.0
  %459 = vmatpush1.msra.mxu0 0.0
  %460 = vmatprep.subr.mxu0 0.0
  %461 = vmatpush1.msra.mxu0 0.0
  %462 = vmatprep.subr.mxu0 0.0
  %463 = vmatpush1.msra.mxu0 0.0
  %464 = vmatprep.subr.mxu0 0.0
  %465 = vmatpush1.msra.mxu0 0.0
  %466 = vmatprep.subr.mxu0 0.0
  %467 = vmatpush1.msra.mxu0 0.0
  %468 = vmatprep.subr.mxu0 0.0
  %469 = vmatpush1.msra.mxu0 0.0
  %470 = vmatprep.subr.mxu0 0.0
  %471 = vmatpush1.msra.mxu0 0.0
  %472 = vmatprep.subr.mxu0 0.0
  %473 = vmatpush1.msra.mxu0 0.0
  %474 = vmatprep.subr.mxu0 0.0
  %475 = vmatpush1.msra.mxu0 0.0
  %476 = vmatprep.subr.mxu0 0.0
  %477 = vmatpush1.msra.mxu0 0.0
  %478 = vmatprep.subr.mxu0 0.0
  %479 = vmatpush1.msra.mxu0 0.0
  %480 = vmatprep.mubr.f32.mxu0 0.0
  %481 = vmatmul.mubr.f32.gmra.mrb[0].mxu0 %v414
  %v482 = vpop.f32.mrb[0].mxu0
  %v483 = vadd.f32 0.0, %v482
  %v484 = vpop.f32.mrb[0].mxu0
  %485 = vdwg.mxu0
  %486 = vrot.lane.b32.xlu0 %v190, 64
  %v487 = vpop.permute.xlu0 %486
  %v490 = vsel %vm222, %v409, 0
  %492 = vmatprep.subr.mxu0 0.0
  %493 = vmatpush1.msra.mxu0 %v487
  %494 = vmatprep.subr.mxu0 0.0
  %495 = vmatpush1.msra.mxu0 0.0
  %496 = vmatprep.subr.mxu0 0.0
  %497 = vmatpush1.msra.mxu0 0.0
  %498 = vmatprep.subr.mxu0 0.0
  %499 = vmatpush1.msra.mxu0 0.0
  %500 = vmatprep.subr.mxu0 0.0
  %501 = vmatpush1.msra.mxu0 0.0
  %502 = vmatprep.subr.mxu0 0.0
  %503 = vmatpush1.msra.mxu0 0.0
  %504 = vmatprep.subr.mxu0 0.0
  %505 = vmatpush1.msra.mxu0 0.0
  %506 = vmatprep.subr.mxu0 0.0
  %507 = vmatpush1.msra.mxu0 0.0
  %508 = vmatprep.subr.mxu0 0.0
  %509 = vmatpush1.msra.mxu0 0.0
  %510 = vmatprep.subr.mxu0 0.0
  %511 = vmatpush1.msra.mxu0 0.0
  %512 = vmatprep.subr.mxu0 0.0
  %513 = vmatpush1.msra.mxu0 0.0
  %514 = vmatprep.subr.mxu0 0.0
  %515 = vmatpush1.msra.mxu0 0.0
  %516 = vmatprep.subr.mxu0 0.0
  %517 = vmatpush1.msra.mxu0 0.0
  %518 = vmatprep.subr.mxu0 0.0
  %519 = vmatpush1.msra.mxu0 0.0
  %520 = vmatprep.subr.mxu0 0.0
  %521 = vmatpush1.msra.mxu0 0.0
  %522 = vmatprep.subr.mxu0 0.0
  %523 = vmatpush1.msra.mxu0 0.0
  %524 = vmatprep.subr.mxu0 0.0
  %525 = vmatpush1.msra.mxu0 0.0
  %526 = vmatprep.subr.mxu0 0.0
  %527 = vmatpush1.msra.mxu0 0.0
  %528 = vmatprep.subr.mxu0 0.0
  %529 = vmatpush1.msra.mxu0 0.0
  %530 = vmatprep.subr.mxu0 0.0
  %531 = vmatpush1.msra.mxu0 0.0
  %532 = vmatprep.subr.mxu0 0.0
  %533 = vmatpush1.msra.mxu0 0.0
  %534 = vmatprep.subr.mxu0 0.0
  %535 = vmatpush1.msra.mxu0 0.0
  %536 = vmatprep.subr.mxu0 0.0
  %537 = vmatpush1.msra.mxu0 0.0
  %538 = vmatprep.subr.mxu0 0.0
  %539 = vmatpush1.msra.mxu0 0.0
  %540 = vmatprep.subr.mxu0 0.0
  %541 = vmatpush1.msra.mxu0 0.0
  %542 = vmatprep.subr.mxu0 0.0
  %543 = vmatpush1.msra.mxu0 0.0
  %544 = vmatprep.subr.mxu0 0.0
  %545 = vmatpush1.msra.mxu0 0.0
  %546 = vmatprep.subr.mxu0 0.0
  %547 = vmatpush1.msra.mxu0 0.0
  %548 = vmatprep.subr.mxu0 0.0
  %549 = vmatpush1.msra.mxu0 0.0
  %550 = vmatprep.subr.mxu0 0.0
  %551 = vmatpush1.msra.mxu0 0.0
  %552 = vmatprep.subr.mxu0 0.0
  %553 = vmatpush1.msra.mxu0 0.0
  %554 = vmatprep.subr.mxu0 0.0
  %555 = vmatpush1.msra.mxu0 0.0
  %556 = vmatprep.mubr.f32.mxu0 0.0
  %557 = vmatmul.mubr.f32.gmra.mrb[0].mxu0 %v490
  %v558 = vpop.f32.mrb[0].mxu0
  %v559 = vadd.f32 0.0, %v558
  %v560 = vpop.f32.mrb[0].mxu0
  %561 = vdwg.mxu0
  %562 = vrot.lane.b32.xlu0 %v185, 120
  %v563 = vpop.permute.xlu0 %562
  %564 = vrot.lane.b32.xlu0 %v185, 88
  %v565 = vpop.permute.xlu0 %564
  %v566 = vsel %vm222, %v563, 0
  %v568 = vsel %vm222, %v565, 0
  %570 = vmatprep.subr.mxu0 0.0
  %571 = vmatpush1.xpose.msra.mxu0 %v568
  %572 = vmatprep.subr.mxu0 0.0
  %573 = vmatpush1.xpose.msra.mxu0 0.0
  %574 = vmatprep.subr.mxu0 0.0
  %575 = vmatpush1.xpose.msra.mxu0 0.0
  %576 = vmatprep.subr.mxu0 0.0
  %577 = vmatpush1.xpose.msra.mxu0 0.0
  %578 = vmatprep.subr.mxu0 0.0
  %579 = vmatpush1.xpose.msra.mxu0 0.0
  %580 = vmatprep.subr.mxu0 0.0
  %581 = vmatpush1.xpose.msra.mxu0 0.0
  %582 = vmatprep.subr.mxu0 0.0
  %583 = vmatpush1.xpose.msra.mxu0 0.0
  %584 = vmatprep.subr.mxu0 0.0
  %585 = vmatpush1.xpose.msra.mxu0 0.0
  %586 = vmatprep.subr.mxu0 0.0
  %587 = vmatpush1.xpose.msra.mxu0 0.0
  %588 = vmatprep.subr.mxu0 0.0
  %589 = vmatpush1.xpose.msra.mxu0 0.0
  %590 = vmatprep.subr.mxu0 0.0
  %591 = vmatpush1.xpose.msra.mxu0 0.0
  %592 = vmatprep.subr.mxu0 0.0
  %593 = vmatpush1.xpose.msra.mxu0 0.0
  %594 = vmatprep.subr.mxu0 0.0
  %595 = vmatpush1.xpose.msra.mxu0 0.0
  %596 = vmatprep.subr.mxu0 0.0
  %597 = vmatpush1.xpose.msra.mxu0 0.0
  %598 = vmatprep.subr.mxu0 0.0
  %599 = vmatpush1.xpose.msra.mxu0 0.0
  %600 = vmatprep.subr.mxu0 0.0
  %601 = vmatpush1.xpose.msra.mxu0 0.0
  %602 = vmatprep.subr.mxu0 0.0
  %603 = vmatpush1.xpose.msra.mxu0 0.0
  %604 = vmatprep.subr.mxu0 0.0
  %605 = vmatpush1.xpose.msra.mxu0 0.0
  %606 = vmatprep.subr.mxu0 0.0
  %607 = vmatpush1.xpose.msra.mxu0 0.0
  %608 = vmatprep.subr.mxu0 0.0
  %609 = vmatpush1.xpose.msra.mxu0 0.0
  %610 = vmatprep.subr.mxu0 0.0
  %611 = vmatpush1.xpose.msra.mxu0 0.0
  %612 = vmatprep.subr.mxu0 0.0
  %613 = vmatpush1.xpose.msra.mxu0 0.0
  %614 = vmatprep.subr.mxu0 0.0
  %615 = vmatpush1.xpose.msra.mxu0 0.0
  %616 = vmatprep.subr.mxu0 0.0
  %617 = vmatpush1.xpose.msra.mxu0 0.0
  %618 = vmatprep.subr.mxu0 0.0
  %619 = vmatpush1.xpose.msra.mxu0 0.0
  %620 = vmatprep.subr.mxu0 0.0
  %621 = vmatpush1.xpose.msra.mxu0 0.0
  %622 = vmatprep.subr.mxu0 0.0
  %623 = vmatpush1.xpose.msra.mxu0 0.0
  %624 = vmatprep.subr.mxu0 0.0
  %625 = vmatpush1.xpose.msra.mxu0 0.0
  %626 = vmatprep.subr.mxu0 0.0
  %627 = vmatpush1.xpose.msra.mxu0 0.0
  %628 = vmatprep.subr.mxu0 0.0
  %629 = vmatpush1.xpose.msra.mxu0 0.0
  %630 = vmatprep.subr.mxu0 0.0
  %631 = vmatpush1.xpose.msra.mxu0 0.0
  %632 = vmatprep.subr.mxu0 0.0
  %633 = vmatpush1.xpose.msra.mxu0 0.0
  %634 = vmatprep.mubr.f32.mxu0 0.0
  %635 = vmatmul.mubr.f32.gmra.mrb[0].mxu0 %v566
  %v636 = vpop.f32.mrb[0].mxu0
  %v637 = vadd.f32 0.0, %v636
  %v638 = vpop.f32.mrb[0].mxu0
  %639 = vdwg.mxu0
  %640 = vrot.lane.b32.xlu0 %v190, 120
  %v641 = vpop.permute.xlu0 %640
  %642 = vrot.lane.b32.xlu0 %v190, 88
  %v643 = vpop.permute.xlu0 %642
  %v644 = vsel %vm222, %v641, 0
  %v646 = vsel %vm222, %v643, 0
  %648 = vmatprep.subr.mxu0 0.0
  %649 = vmatpush1.xpose.msra.mxu0 %v646
  %650 = vmatprep.subr.mxu0 0.0
  %651 = vmatpush1.xpose.msra.mxu0 0.0
  %652 = vmatprep.subr.mxu0 0.0
  %653 = vmatpush1.xpose.msra.mxu0 0.0
  %654 = vmatprep.subr.mxu0 0.0
  %655 = vmatpush1.xpose.msra.mxu0 0.0
  %656 = vmatprep.subr.mxu0 0.0
  %657 = vmatpush1.xpose.msra.mxu0 0.0
  %658 = vmatprep.subr.mxu0 0.0
  %659 = vmatpush1.xpose.msra.mxu0 0.0
  %660 = vmatprep.subr.mxu0 0.0
  %661 = vmatpush1.xpose.msra.mxu0 0.0
  %662 = vmatprep.subr.mxu0 0.0
  %663 = vmatpush1.xpose.msra.mxu0 0.0
  %664 = vmatprep.subr.mxu0 0.0
  %665 = vmatpush1.xpose.msra.mxu0 0.0
  %666 = vmatprep.subr.mxu0 0.0
  %667 = vmatpush1.xpose.msra.mxu0 0.0
  %668 = vmatprep.subr.mxu0 0.0
  %669 = vmatpush1.xpose.msra.mxu0 0.0
  %670 = vmatprep.subr.mxu0 0.0
  %671 = vmatpush1.xpose.msra.mxu0 0.0
  %672 = vmatprep.subr.mxu0 0.0
  %673 = vmatpush1.xpose.msra.mxu0 0.0
  %674 = vmatprep.subr.mxu0 0.0
  %675 = vmatpush1.xpose.msra.mxu0 0.0
  %676 = vmatprep.subr.mxu0 0.0
  %677 = vmatpush1.xpose.msra.mxu0 0.0
  %678 = vmatprep.subr.mxu0 0.0
  %679 = vmatpush1.xpose.msra.mxu0 0.0
  %680 = vmatprep.subr.mxu0 0.0
  %681 = vmatpush1.xpose.msra.mxu0 0.0
  %682 = vmatprep.subr.mxu0 0.0
  %683 = vmatpush1.xpose.msra.mxu0 0.0
  %684 = vmatprep.subr.mxu0 0.0
  %685 = vmatpush1.xpose.msra.mxu0 0.0
  %686 = vmatprep.subr.mxu0 0.0
  %687 = vmatpush1.xpose.msra.mxu0 0.0
  %688 = vmatprep.subr.mxu0 0.0
  %689 = vmatpush1.xpose.msra.mxu0 0.0
  %690 = vmatprep.subr.mxu0 0.0
  %691 = vmatpush1.xpose.msra.mxu0 0.0
  %692 = vmatprep.subr.mxu0 0.0
  %693 = vmatpush1.xpose.msra.mxu0 0.0
  %694 = vmatprep.subr.mxu0 0.0
  %695 = vmatpush1.xpose.msra.mxu0 0.0
  %696 = vmatprep.subr.mxu0 0.0
  %697 = vmatpush1.xpose.msra.mxu0 0.0
  %698 = vmatprep.subr.mxu0 0.0
  %699 = vmatpush1.xpose.msra.mxu0 0.0
  %700 = vmatprep.subr.mxu0 0.0
  %701 = vmatpush1.xpose.msra.mxu0 0.0
  %702 = vmatprep.subr.mxu0 0.0
  %703 = vmatpush1.xpose.msra.mxu0 0.0
  %704 = vmatprep.subr.mxu0 0.0
  %705 = vmatpush1.xpose.msra.mxu0 0.0
  %706 = vmatprep.subr.mxu0 0.0
  %707 = vmatpush1.xpose.msra.mxu0 0.0
  %708 = vmatprep.subr.mxu0 0.0
  %709 = vmatpush1.xpose.msra.mxu0 0.0
  %710 = vmatprep.subr.mxu0 0.0
  %711 = vmatpush1.xpose.msra.mxu0 0.0
  %712 = vmatprep.mubr.f32.mxu0 0.0
  %713 = vmatmul.mubr.f32.gmra.mrb[0].mxu0 %v644
  %v714 = vpop.f32.mrb[0].mxu0
  %v715 = vadd.f32 0.0, %v714
  %v716 = vpop.f32.mrb[0].mxu0
  %717 = vdwg.mxu0
  %v718 = vmul.f32 %v637, 0.35355338
  %v719 = vmul.f32 %v715, 0.35355338
  %v720 = vadd.f32 %v718, %v379
  %v721 = vadd.f32 %v719, %v383
  %v722 = vsel %vm222, %v720, -inf
  %723 = vmax.xlane.f32.xlu0 %v722
  %v724 = vpop.xlane.xlu0 %723
  %v725 = vsel %vm222, %v721, -inf
  %726 = vmax.xlane.f32.xlu0 %v725
  %v727 = vpop.xlane.xlu0 %726
  %v728 = vsub.f32 %v720, %v724
  %v729 = vsub.f32 %v721, %v727
  %v730 = vmul.f32 %v728, 1.442695
  %v731 = vpow.pop %v730
  %v732 = vmul.f32 %v729, 1.442695
  %v733 = vpow.pop %v732
  %v734 = vsel %vm222, %v731, 0.0
  %735 = vadd.xlane.f32.xlu0 %v734
  %v736 = vpop.xlane.xlu0 %735
  %v737 = vsel %vm222, %v733, 0.0
  %738 = vadd.xlane.f32.xlu0 %v737
  %v739 = vpop.xlane.xlu0 %738
  %v740 = vrcp.pop %v736
  %v741 = vrcp.pop %v739
  %v742 = vmul.f32 %v731, %v740
  %v743 = vmul.f32 %v733, %v741
  %744 = vrot.lane.b32.xlu0 %v185, 56
  %v745 = vpop.permute.xlu0 %744
  %v748 = vsel %vm222, %v742, 0
  %750 = vmatprep.subr.mxu0 0.0
  %751 = vmatpush1.msra.mxu0 %v745
  %752 = vmatprep.subr.mxu0 0.0
  %753 = vmatpush1.msra.mxu0 0.0
  %754 = vmatprep.subr.mxu0 0.0
  %755 = vmatpush1.msra.mxu0 0.0
  %756 = vmatprep.subr.mxu0 0.0
  %757 = vmatpush1.msra.mxu0 0.0
  %758 = vmatprep.subr.mxu0 0.0
  %759 = vmatpush1.msra.mxu0 0.0
  %760 = vmatprep.subr.mxu0 0.0
  %761 = vmatpush1.msra.mxu0 0.0
  %762 = vmatprep.subr.mxu0 0.0
  %763 = vmatpush1.msra.mxu0 0.0
  %764 = vmatprep.subr.mxu0 0.0
  %765 = vmatpush1.msra.mxu0 0.0
  %766 = vmatprep.subr.mxu0 0.0
  %767 = vmatpush1.msra.mxu0 0.0
  %768 = vmatprep.subr.mxu0 0.0
  %769 = vmatpush1.msra.mxu0 0.0
  %770 = vmatprep.subr.mxu0 0.0
  %771 = vmatpush1.msra.mxu0 0.0
  %772 = vmatprep.subr.mxu0 0.0
  %773 = vmatpush1.msra.mxu0 0.0
  %774 = vmatprep.subr.mxu0 0.0
  %775 = vmatpush1.msra.mxu0 0.0
  %776 = vmatprep.subr.mxu0 0.0
  %777 = vmatpush1.msra.mxu0 0.0
  %778 = vmatprep.subr.mxu0 0.0
  %779 = vmatpush1.msra.mxu0 0.0
  %780 = vmatprep.subr.mxu0 0.0
  %781 = vmatpush1.msra.mxu0 0.0
  %782 = vmatprep.subr.mxu0 0.0
  %783 = vmatpush1.msra.mxu0 0.0
  %784 = vmatprep.subr.mxu0 0.0
  %785 = vmatpush1.msra.mxu0 0.0
  %786 = vmatprep.subr.mxu0 0.0
  %787 = vmatpush1.msra.mxu0 0.0
  %788 = vmatprep.subr.mxu0 0.0
  %789 = vmatpush1.msra.mxu0 0.0
  %790 = vmatprep.subr.mxu0 0.0
  %791 = vmatpush1.msra.mxu0 0.0
  %792 = vmatprep.subr.mxu0 0.0
  %793 = vmatpush1.msra.mxu0 0.0
  %794 = vmatprep.subr.mxu0 0.0
  %795 = vmatpush1.msra.mxu0 0.0
  %796 = vmatprep.subr.mxu0 0.0
  %797 = vmatpush1.msra.mxu0 0.0
  %798 = vmatprep.subr.mxu0 0.0
  %799 = vmatpush1.msra.mxu0 0.0
  %800 = vmatprep.subr.mxu0 0.0
  %801 = vmatpush1.msra.mxu0 0.0
  %802 = vmatprep.subr.mxu0 0.0
  %803 = vmatpush1.msra.mxu0 0.0
  %804 = vmatprep.subr.mxu0 0.0
  %805 = vmatpush1.msra.mxu0 0.0
  %806 = vmatprep.subr.mxu0 0.0
  %807 = vmatpush1.msra.mxu0 0.0
  %808 = vmatprep.subr.mxu0 0.0
  %809 = vmatpush1.msra.mxu0 0.0
  %810 = vmatprep.subr.mxu0 0.0
  %811 = vmatpush1.msra.mxu0 0.0
  %812 = vmatprep.subr.mxu0 0.0
  %813 = vmatpush1.msra.mxu0 0.0
  %814 = vmatprep.mubr.f32.mxu0 0.0
  %815 = vmatmul.mubr.f32.gmra.mrb[0].mxu0 %v748
  %v816 = vpop.f32.mrb[0].mxu0
  %v817 = vadd.f32 0.0, %v816
  %v818 = vpop.f32.mrb[0].mxu0
  %819 = vdwg.mxu0
  %820 = vrot.lane.b32.xlu0 %v190, 56
  %v821 = vpop.permute.xlu0 %820
  %v824 = vsel %vm222, %v743, 0
  %826 = vmatprep.subr.mxu0 0.0
  %827 = vmatpush1.msra.mxu0 %v821
  %828 = vmatprep.subr.mxu0 0.0
  %829 = vmatpush1.msra.mxu0 0.0
  %830 = vmatprep.subr.mxu0 0.0
  %831 = vmatpush1.msra.mxu0 0.0
  %832 = vmatprep.subr.mxu0 0.0
  %833 = vmatpush1.msra.mxu0 0.0
  %834 = vmatprep.subr.mxu0 0.0
  %835 = vmatpush1.msra.mxu0 0.0
  %836 = vmatprep.subr.mxu0 0.0
  %837 = vmatpush1.msra.mxu0 0.0
  %838 = vmatprep.subr.mxu0 0.0
  %839 = vmatpush1.msra.mxu0 0.0
  %840 = vmatprep.subr.mxu0 0.0
  %841 = vmatpush1.msra.mxu0 0.0
  %842 = vmatprep.subr.mxu0 0.0
  %843 = vmatpush1.msra.mxu0 0.0
  %844 = vmatprep.subr.mxu0 0.0
  %845 = vmatpush1.msra.mxu0 0.0
  %846 = vmatprep.subr.mxu0 0.0
  %847 = vmatpush1.msra.mxu0 0.0
  %848 = vmatprep.subr.mxu0 0.0
  %849 = vmatpush1.msra.mxu0 0.0
  %850 = vmatprep.subr.mxu0 0.0
  %851 = vmatpush1.msra.mxu0 0.0
  %852 = vmatprep.subr.mxu0 0.0
  %853 = vmatpush1.msra.mxu0 0.0
  %854 = vmatprep.subr.mxu0 0.0
  %855 = vmatpush1.msra.mxu0 0.0
  %856 = vmatprep.subr.mxu0 0.0
  %857 = vmatpush1.msra.mxu0 0.0
  %858 = vmatprep.subr.mxu0 0.0
  %859 = vmatpush1.msra.mxu0 0.0
  %860 = vmatprep.subr.mxu0 0.0
  %861 = vmatpush1.msra.mxu0 0.0
  %862 = vmatprep.subr.mxu0 0.0
  %863 = vmatpush1.msra.mxu0 0.0
  %864 = vmatprep.subr.mxu0 0.0
  %865 = vmatpush1.msra.mxu0 0.0
  %866 = vmatprep.subr.mxu0 0.0
  %867 = vmatpush1.msra.mxu0 0.0
  %868 = vmatprep.subr.mxu0 0.0
  %869 = vmatpush1.msra.mxu0 0.0
  %870 = vmatprep.subr.mxu0 0.0
  %871 = vmatpush1.msra.mxu0 0.0
  %872 = vmatprep.subr.mxu0 0.0
  %873 = vmatpush1.msra.mxu0 0.0
  %874 = vmatprep.subr.mxu0 0.0
  %875 = vmatpush1.msra.mxu0 0.0
  %876 = vmatprep.subr.mxu0 0.0
  %877 = vmatpush1.msra.mxu0 0.0
  %878 = vmatprep.subr.mxu0 0.0
  %879 = vmatpush1.msra.mxu0 0.0
  %880 = vmatprep.subr.mxu0 0.0
  %881 = vmatpush1.msra.mxu0 0.0
  %882 = vmatprep.subr.mxu0 0.0
  %883 = vmatpush1.msra.mxu0 0.0
  %884 = vmatprep.subr.mxu0 0.0
  %885 = vmatpush1.msra.mxu0 0.0
  %886 = vmatprep.subr.mxu0 0.0
  %887 = vmatpush1.msra.mxu0 0.0
  %888 = vmatprep.subr.mxu0 0.0
  %889 = vmatpush1.msra.mxu0 0.0
  %890 = vmatprep.mubr.f32.mxu0 0.0
  %891 = vmatmul.mubr.f32.gmra.mrb[0].mxu0 %v824
  %v892 = vpop.f32.mrb[0].mxu0
  %v893 = vadd.f32 0.0, %v892
  %v894 = vpop.f32.mrb[0].mxu0
  %895 = vdwg.mxu0
  %896 = vrot.lane.b32.xlu0 %v185, 112
  %v897 = vpop.permute.xlu0 %896
  %898 = vrot.lane.b32.xlu0 %v185, 80
  %v899 = vpop.permute.xlu0 %898
  %v900 = vsel %vm222, %v897, 0
  %v902 = vsel %vm222, %v899, 0
  %904 = vmatprep.subr.mxu0 0.0
  %905 = vmatpush1.xpose.msra.mxu0 %v902
  %906 = vmatprep.subr.mxu0 0.0
  %907 = vmatpush1.xpose.msra.mxu0 0.0
  %908 = vmatprep.subr.mxu0 0.0
  %909 = vmatpush1.xpose.msra.mxu0 0.0
  %910 = vmatprep.subr.mxu0 0.0
  %911 = vmatpush1.xpose.msra.mxu0 0.0
  %912 = vmatprep.subr.mxu0 0.0
  %913 = vmatpush1.xpose.msra.mxu0 0.0
  %914 = vmatprep.subr.mxu0 0.0
  %915 = vmatpush1.xpose.msra.mxu0 0.0
  %916 = vmatprep.subr.mxu0 0.0
  %917 = vmatpush1.xpose.msra.mxu0 0.0
  %918 = vmatprep.subr.mxu0 0.0
  %919 = vmatpush1.xpose.msra.mxu0 0.0
  %920 = vmatprep.subr.mxu0 0.0
  %921 = vmatpush1.xpose.msra.mxu0 0.0
  %922 = vmatprep.subr.mxu0 0.0
  %923 = vmatpush1.xpose.msra.mxu0 0.0
  %924 = vmatprep.subr.mxu0 0.0
  %925 = vmatpush1.xpose.msra.mxu0 0.0
  %926 = vmatprep.subr.mxu0 0.0
  %927 = vmatpush1.xpose.msra.mxu0 0.0
  %928 = vmatprep.subr.mxu0 0.0
  %929 = vmatpush1.xpose.msra.mxu0 0.0
  %930 = vmatprep.subr.mxu0 0.0
  %931 = vmatpush1.xpose.msra.mxu0 0.0
  %932 = vmatprep.subr.mxu0 0.0
  %933 = vmatpush1.xpose.msra.mxu0 0.0
  %934 = vmatprep.subr.mxu0 0.0
  %935 = vmatpush1.xpose.msra.mxu0 0.0
  %936 = vmatprep.subr.mxu0 0.0
  %937 = vmatpush1.xpose.msra.mxu0 0.0
  %938 = vmatprep.subr.mxu0 0.0
  %939 = vmatpush1.xpose.msra.mxu0 0.0
  %940 = vmatprep.subr.mxu0 0.0
  %941 = vmatpush1.xpose.msra.mxu0 0.0
  %942 = vmatprep.subr.mxu0 0.0
  %943 = vmatpush1.xpose.msra.mxu0 0.0
  %944 = vmatprep.subr.mxu0 0.0
  %945 = vmatpush1.xpose.msra.mxu0 0.0
  %946 = vmatprep.subr.mxu0 0.0
  %947 = vmatpush1.xpose.msra.mxu0 0.0
  %948 = vmatprep.subr.mxu0 0.0
  %949 = vmatpush1.xpose.msra.mxu0 0.0
  %950 = vmatprep.subr.mxu0 0.0
  %951 = vmatpush1.xpose.msra.mxu0 0.0
  %952 = vmatprep.subr.mxu0 0.0
  %953 = vmatpush1.xpose.msra.mxu0 0.0
  %954 = vmatprep.subr.mxu0 0.0
  %955 = vmatpush1.xpose.msra.mxu0 0.0
  %956 = vmatprep.subr.mxu0 0.0
  %957 = vmatpush1.xpose.msra.mxu0 0.0
  %958 = vmatprep.subr.mxu0 0.0
  %959 = vmatpush1.xpose.msra.mxu0 0.0
  %960 = vmatprep.subr.mxu0 0.0
  %961 = vmatpush1.xpose.msra.mxu0 0.0
  %962 = vmatprep.subr.mxu0 0.0
  %963 = vmatpush1.xpose.msra.mxu0 0.0
  %964 = vmatprep.subr.mxu0 0.0
  %965 = vmatpush1.xpose.msra.mxu0 0.0
  %966 = vmatprep.subr.mxu0 0.0
  %967 = vmatpush1.xpose.msra.mxu0 0.0
  %968 = vmatprep.mubr.f32.mxu0 0.0
  %969 = vmatmul.mubr.f32.gmra.mrb[0].mxu0 %v900
  %v970 = vpop.f32.mrb[0].mxu0
  %v971 = vadd.f32 0.0, %v970
  %v972 = vpop.f32.mrb[0].mxu0
  %973 = vdwg.mxu0
  %974 = vrot.lane.b32.xlu0 %v190, 112
  %v975 = vpop.permute.xlu0 %974
  %976 = vrot.lane.b32.xlu0 %v190, 80
  %v977 = vpop.permute.xlu0 %976
  %v978 = vsel %vm222, %v975, 0
  %v980 = vsel %vm222, %v977, 0
  %982 = vmatprep.subr.mxu0 0.0
  %983 = vmatpush1.xpose.msra.mxu0 %v980
  %984 = vmatprep.subr.mxu0 0.0
  %985 = vmatpush1.xpose.msra.mxu0 0.0
  %986 = vmatprep.subr.mxu0 0.0
  %987 = vmatpush1.xpose.msra.mxu0 0.0
  %988 = vmatprep.subr.mxu0 0.0
  %989 = vmatpush1.xpose.msra.mxu0 0.0
  %990 = vmatprep.subr.mxu0 0.0
  %991 = vmatpush1.xpose.msra.mxu0 0.0
  %992 = vmatprep.subr.mxu0 0.0
  %993 = vmatpush1.xpose.msra.mxu0 0.0
  %994 = vmatprep.subr.mxu0 0.0
  %995 = vmatpush1.xpose.msra.mxu0 0.0
  %996 = vmatprep.subr.mxu0 0.0
  %997 = vmatpush1.xpose.msra.mxu0 0.0
  %998 = vmatprep.subr.mxu0 0.0
  %999 = vmatpush1.xpose.msra.mxu0 0.0
  %1000 = vmatprep.subr.mxu0 0.0
  %1001 = vmatpush1.xpose.msra.mxu0 0.0
  %1002 = vmatprep.subr.mxu0 0.0
  %1003 = vmatpush1.xpose.msra.mxu0 0.0
  %1004 = vmatprep.subr.mxu0 0.0
  %1005 = vmatpush1.xpose.msra.mxu0 0.0
  %1006 = vmatprep.subr.mxu0 0.0
  %1007 = vmatpush1.xpose.msra.mxu0 0.0
  %1008 = vmatprep.subr.mxu0 0.0
  %1009 = vmatpush1.xpose.msra.mxu0 0.0
  %1010 = vmatprep.subr.mxu0 0.0
  %1011 = vmatpush1.xpose.msra.mxu0 0.0
  %1012 = vmatprep.subr.mxu0 0.0
  %1013 = vmatpush1.xpose.msra.mxu0 0.0
  %1014 = vmatprep.subr.mxu0 0.0
  %1015 = vmatpush1.xpose.msra.mxu0 0.0
  %1016 = vmatprep.subr.mxu0 0.0
  %1017 = vmatpush1.xpose.msra.mxu0 0.0
  %1018 = vmatprep.subr.mxu0 0.0
  %1019 = vmatpush1.xpose.msra.mxu0 0.0
  %1020 = vmatprep.subr.mxu0 0.0
  %1021 = vmatpush1.xpose.msra.mxu0 0.0
  %1022 = vmatprep.subr.mxu0 0.0
  %1023 = vmatpush1.xpose.msra.mxu0 0.0
  %1024 = vmatprep.subr.mxu0 0.0
  %1025 = vmatpush1.xpose.msra.mxu0 0.0
  %1026 = vmatprep.subr.mxu0 0.0
  %1027 = vmatpush1.xpose.msra.mxu0 0.0
  %1028 = vmatprep.subr.mxu0 0.0
  %1029 = vmatpush1.xpose.msra.mxu0 0.0
  %1030 = vmatprep.subr.mxu0 0.0
  %1031 = vmatpush1.xpose.msra.mxu0 0.0
  %1032 = vmatprep.subr.mxu0 0.0
  %1033 = vmatpush1.xpose.msra.mxu0 0.0
  %1034 = vmatprep.subr.mxu0 0.0
  %1035 = vmatpush1.xpose.msra.mxu0 0.0
  %1036 = vmatprep.subr.mxu0 0.0
  %1037 = vmatpush1.xpose.msra.mxu0 0.0
  %1038 = vmatprep.subr.mxu0 0.0
  %1039 = vmatpush1.xpose.msra.mxu0 0.0
  %1040 = vmatprep.subr.mxu0 0.0
  %1041 = vmatpush1.xpose.msra.mxu0 0.0
  %1042 = vmatprep.subr.mxu0 0.0
  %1043 = vmatpush1.xpose.msra.mxu0 0.0
  %1044 = vmatprep.subr.mxu0 0.0
  %1045 = vmatpush1.xpose.msra.mxu0 0.0
  %1046 = vmatprep.mubr.f32.mxu0 0.0
  %1047 = vmatmul.mubr.f32.gmra.mrb[0].mxu0 %v978
  %v1048 = vpop.f32.mrb[0].mxu0
  %v1049 = vadd.f32 0.0, %v1048
  %v1050 = vpop.f32.mrb[0].mxu0
  %1051 = vdwg.mxu0
  %v1052 = vmul.f32 %v971, 0.35355338
  %v1053 = vmul.f32 %v1049, 0.35355338
  %v1054 = vadd.f32 %v1052, %v379
  %v1055 = vadd.f32 %v1053, %v383
  %v1056 = vsel %vm222, %v1054, -inf
  %1057 = vmax.xlane.f32.xlu0 %v1056
  %v1058 = vpop.xlane.xlu0 %1057
  %v1059 = vsel %vm222, %v1055, -inf
  %1060 = vmax.xlane.f32.xlu0 %v1059
  %v1061 = vpop.xlane.xlu0 %1060
  %v1062 = vsub.f32 %v1054, %v1058
  %v1063 = vsub.f32 %v1055, %v1061
  %v1064 = vmul.f32 %v1062, 1.442695
  %v1065 = vpow.pop %v1064
  %v1066 = vmul.f32 %v1063, 1.442695
  %v1067 = vpow.pop %v1066
  %v1068 = vsel %vm222, %v1065, 0.0
  %1069 = vadd.xlane.f32.xlu0 %v1068
  %v1070 = vpop.xlane.xlu0 %1069
  %v1071 = vsel %vm222, %v1067, 0.0
  %1072 = vadd.xlane.f32.xlu0 %v1071
  %v1073 = vpop.xlane.xlu0 %1072
  %v1074 = vrcp.pop %v1070
  %v1075 = vrcp.pop %v1073
  %v1076 = vmul.f32 %v1065, %v1074
  %v1077 = vmul.f32 %v1067, %v1075
  %1078 = vrot.lane.b32.xlu0 %v185, 48
  %v1079 = vpop.permute.xlu0 %1078
  %v1082 = vsel %vm222, %v1076, 0
  %1084 = vmatprep.subr.mxu0 0.0
  %1085 = vmatpush1.msra.mxu0 %v1079
  %1086 = vmatprep.subr.mxu0 0.0
  %1087 = vmatpush1.msra.mxu0 0.0
  %1088 = vmatprep.subr.mxu0 0.0
  %1089 = vmatpush1.msra.mxu0 0.0
  %1090 = vmatprep.subr.mxu0 0.0
  %1091 = vmatpush1.msra.mxu0 0.0
  %1092 = vmatprep.subr.mxu0 0.0
  %1093 = vmatpush1.msra.mxu0 0.0
  %1094 = vmatprep.subr.mxu0 0.0
  %1095 = vmatpush1.msra.mxu0 0.0
  %1096 = vmatprep.subr.mxu0 0.0
  %1097 = vmatpush1.msra.mxu0 0.0
  %1098 = vmatprep.subr.mxu0 0.0
  %1099 = vmatpush1.msra.mxu0 0.0
  %1100 = vmatprep.subr.mxu0 0.0
  %1101 = vmatpush1.msra.mxu0 0.0
  %1102 = vmatprep.subr.mxu0 0.0
  %1103 = vmatpush1.msra.mxu0 0.0
  %1104 = vmatprep.subr.mxu0 0.0
  %1105 = vmatpush1.msra.mxu0 0.0
  %1106 = vmatprep.subr.mxu0 0.0
  %1107 = vmatpush1.msra.mxu0 0.0
  %1108 = vmatprep.subr.mxu0 0.0
  %1109 = vmatpush1.msra.mxu0 0.0
  %1110 = vmatprep.subr.mxu0 0.0
  %1111 = vmatpush1.msra.mxu0 0.0
  %1112 = vmatprep.subr.mxu0 0.0
  %1113 = vmatpush1.msra.mxu0 0.0
  %1114 = vmatprep.subr.mxu0 0.0
  %1115 = vmatpush1.msra.mxu0 0.0
  %1116 = vmatprep.subr.mxu0 0.0
  %1117 = vmatpush1.msra.mxu0 0.0
  %1118 = vmatprep.subr.mxu0 0.0
  %1119 = vmatpush1.msra.mxu0 0.0
  %1120 = vmatprep.subr.mxu0 0.0
  %1121 = vmatpush1.msra.mxu0 0.0
  %1122 = vmatprep.subr.mxu0 0.0
  %1123 = vmatpush1.msra.mxu0 0.0
  %1124 = vmatprep.subr.mxu0 0.0
  %1125 = vmatpush1.msra.mxu0 0.0
  %1126 = vmatprep.subr.mxu0 0.0
  %1127 = vmatpush1.msra.mxu0 0.0
  %1128 = vmatprep.subr.mxu0 0.0
  %1129 = vmatpush1.msra.mxu0 0.0
  %1130 = vmatprep.subr.mxu0 0.0
  %1131 = vmatpush1.msra.mxu0 0.0
  %1132 = vmatprep.subr.mxu0 0.0
  %1133 = vmatpush1.msra.mxu0 0.0
  %1134 = vmatprep.subr.mxu0 0.0
  %1135 = vmatpush1.msra.mxu0 0.0
  %1136 = vmatprep.subr.mxu0 0.0
  %1137 = vmatpush1.msra.mxu0 0.0
  %1138 = vmatprep.subr.mxu0 0.0
  %1139 = vmatpush1.msra.mxu0 0.0
  %1140 = vmatprep.subr.mxu0 0.0
  %1141 = vmatpush1.msra.mxu0 0.0
  %1142 = vmatprep.subr.mxu0 0.0
  %1143 = vmatpush1.msra.mxu0 0.0
  %1144 = vmatprep.subr.mxu0 0.0
  %1145 = vmatpush1.msra.mxu0 0.0
  %1146 = vmatprep.subr.mxu0 0.0
  %1147 = vmatpush1.msra.mxu0 0.0
  %1148 = vmatprep.mubr.f32.mxu0 0.0
  %1149 = vmatmul.mubr.f32.gmra.mrb[0].mxu0 %v1082
  %v1150 = vpop.f32.mrb[0].mxu0
  %v1151 = vadd.f32 0.0, %v1150
  %v1152 = vpop.f32.mrb[0].mxu0
  %1153 = vdwg.mxu0
  %1154 = vrot.lane.b32.xlu0 %v190, 48
  %v1155 = vpop.permute.xlu0 %1154
  %v1158 = vsel %vm222, %v1077, 0
  %1160 = vmatprep.subr.mxu0 0.0
  %1161 = vmatpush1.msra.mxu0 %v1155
  %1162 = vmatprep.subr.mxu0 0.0
  %1163 = vmatpush1.msra.mxu0 0.0
  %1164 = vmatprep.subr.mxu0 0.0
  %1165 = vmatpush1.msra.mxu0 0.0
  %1166 = vmatprep.subr.mxu0 0.0
  %1167 = vmatpush1.msra.mxu0 0.0
  %1168 = vmatprep.subr.mxu0 0.0
  %1169 = vmatpush1.msra.mxu0 0.0
  %1170 = vmatprep.subr.mxu0 0.0
  %1171 = vmatpush1.msra.mxu0 0.0
  %1172 = vmatprep.subr.mxu0 0.0
  %1173 = vmatpush1.msra.mxu0 0.0
  %1174 = vmatprep.subr.mxu0 0.0
  %1175 = vmatpush1.msra.mxu0 0.0
  %1176 = vmatprep.subr.mxu0 0.0
  %1177 = vmatpush1.msra.mxu0 0.0
  %1178 = vmatprep.subr.mxu0 0.0
  %1179 = vmatpush1.msra.mxu0 0.0
  %1180 = vmatprep.subr.mxu0 0.0
  %1181 = vmatpush1.msra.mxu0 0.0
  %1182 = vmatprep.subr.mxu0 0.0
  %1183 = vmatpush1.msra.mxu0 0.0
  %1184 = vmatprep.subr.mxu0 0.0
  %1185 = vmatpush1.msra.mxu0 0.0
  %1186 = vmatprep.subr.mxu0 0.0
  %1187 = vmatpush1.msra.mxu0 0.0
  %1188 = vmatprep.subr.mxu0 0.0
  %1189 = vmatpush1.msra.mxu0 0.0
  %1190 = vmatprep.subr.mxu0 0.0
  %1191 = vmatpush1.msra.mxu0 0.0
  %1192 = vmatprep.subr.mxu0 0.0
  %1193 = vmatpush1.msra.mxu0 0.0
  %1194 = vmatprep.subr.mxu0 0.0
  %1195 = vmatpush1.msra.mxu0 0.0
  %1196 = vmatprep.subr.mxu0 0.0
  %1197 = vmatpush1.msra.mxu0 0.0
  %1198 = vmatprep.subr.mxu0 0.0
  %1199 = vmatpush1.msra.mxu0 0.0
  %1200 = vmatprep.subr.mxu0 0.0
  %1201 = vmatpush1.msra.mxu0 0.0
  %1202 = vmatprep.subr.mxu0 0.0
  %1203 = vmatpush1.msra.mxu0 0.0
  %1204 = vmatprep.subr.mxu0 0.0
  %1205 = vmatpush1.msra.mxu0 0.0
  %1206 = vmatprep.subr.mxu0 0.0
  %1207 = vmatpush1.msra.mxu0 0.0
  %1208 = vmatprep.subr.mxu0 0.0
  %1209 = vmatpush1.msra.mxu0 0.0
  %1210 = vmatprep.subr.mxu0 0.0
  %1211 = vmatpush1.msra.mxu0 0.0
  %1212 = vmatprep.subr.mxu0 0.0
  %1213 = vmatpush1.msra.mxu0 0.0
  %1214 = vmatprep.subr.mxu0 0.0
  %1215 = vmatpush1.msra.mxu0 0.0
  %1216 = vmatprep.subr.mxu0 0.0
  %1217 = vmatpush1.msra.mxu0 0.0
  %1218 = vmatprep.subr.mxu0 0.0
  %1219 = vmatpush1.msra.mxu0 0.0
  %1220 = vmatprep.subr.mxu0 0.0
  %1221 = vmatpush1.msra.mxu0 0.0
  %1222 = vmatprep.subr.mxu0 0.0
  %1223 = vmatpush1.msra.mxu0 0.0
  %1224 = vmatprep.mubr.f32.mxu0 0.0
  %1225 = vmatmul.mubr.f32.gmra.mrb[0].mxu0 %v1158
  %v1226 = vpop.f32.mrb[0].mxu0
  %v1227 = vadd.f32 0.0, %v1226
  %v1228 = vpop.f32.mrb[0].mxu0
  %1229 = vdwg.mxu0
  %1230 = vrot.lane.b32.xlu0 %v185, 104
  %v1231 = vpop.permute.xlu0 %1230
  %1232 = vrot.lane.b32.xlu0 %v185, 72
  %v1233 = vpop.permute.xlu0 %1232
  %v1234 = vsel %vm222, %v1231, 0
  %v1236 = vsel %vm222, %v1233, 0
  %1238 = vmatprep.subr.mxu0 0.0
  %1239 = vmatpush1.xpose.msra.mxu0 %v1236
  %1240 = vmatprep.subr.mxu0 0.0
  %1241 = vmatpush1.xpose.msra.mxu0 0.0
  %1242 = vmatprep.subr.mxu0 0.0
  %1243 = vmatpush1.xpose.msra.mxu0 0.0
  %1244 = vmatprep.subr.mxu0 0.0
  %1245 = vmatpush1.xpose.msra.mxu0 0.0
  %1246 = vmatprep.subr.mxu0 0.0
  %1247 = vmatpush1.xpose.msra.mxu0 0.0
  %1248 = vmatprep.subr.mxu0 0.0
  %1249 = vmatpush1.xpose.msra.mxu0 0.0
  %1250 = vmatprep.subr.mxu0 0.0
  %1251 = vmatpush1.xpose.msra.mxu0 0.0
  %1252 = vmatprep.subr.mxu0 0.0
  %1253 = vmatpush1.xpose.msra.mxu0 0.0
  %1254 = vmatprep.subr.mxu0 0.0
  %1255 = vmatpush1.xpose.msra.mxu0 0.0
  %1256 = vmatprep.subr.mxu0 0.0
  %1257 = vmatpush1.xpose.msra.mxu0 0.0
  %1258 = vmatprep.subr.mxu0 0.0
  %1259 = vmatpush1.xpose.msra.mxu0 0.0
  %1260 = vmatprep.subr.mxu0 0.0
  %1261 = vmatpush1.xpose.msra.mxu0 0.0
  %1262 = vmatprep.subr.mxu0 0.0
  %1263 = vmatpush1.xpose.msra.mxu0 0.0
  %1264 = vmatprep.subr.mxu0 0.0
  %1265 = vmatpush1.xpose.msra.mxu0 0.0
  %1266 = vmatprep.subr.mxu0 0.0
  %1267 = vmatpush1.xpose.msra.mxu0 0.0
  %1268 = vmatprep.subr.mxu0 0.0
  %1269 = vmatpush1.xpose.msra.mxu0 0.0
  %1270 = vmatprep.subr.mxu0 0.0
  %1271 = vmatpush1.xpose.msra.mxu0 0.0
  %1272 = vmatprep.subr.mxu0 0.0
  %1273 = vmatpush1.xpose.msra.mxu0 0.0
  %1274 = vmatprep.subr.mxu0 0.0
  %1275 = vmatpush1.xpose.msra.mxu0 0.0
  %1276 = vmatprep.subr.mxu0 0.0
  %1277 = vmatpush1.xpose.msra.mxu0 0.0
  %1278 = vmatprep.subr.mxu0 0.0
  %1279 = vmatpush1.xpose.msra.mxu0 0.0
  %1280 = vmatprep.subr.mxu0 0.0
  %1281 = vmatpush1.xpose.msra.mxu0 0.0
  %1282 = vmatprep.subr.mxu0 0.0
  %1283 = vmatpush1.xpose.msra.mxu0 0.0
  %1284 = vmatprep.subr.mxu0 0.0
  %1285 = vmatpush1.xpose.msra.mxu0 0.0
  %1286 = vmatprep.subr.mxu0 0.0
  %1287 = vmatpush1.xpose.msra.mxu0 0.0
  %1288 = vmatprep.subr.mxu0 0.0
  %1289 = vmatpush1.xpose.msra.mxu0 0.0
  %1290 = vmatprep.subr.mxu0 0.0
  %1291 = vmatpush1.xpose.msra.mxu0 0.0
  %1292 = vmatprep.subr.mxu0 0.0
  %1293 = vmatpush1.xpose.msra.mxu0 0.0
  %1294 = vmatprep.subr.mxu0 0.0
  %1295 = vmatpush1.xpose.msra.mxu0 0.0
  %1296 = vmatprep.subr.mxu0 0.0
  %1297 = vmatpush1.xpose.msra.mxu0 0.0
  %1298 = vmatprep.subr.mxu0 0.0
  %1299 = vmatpush1.xpose.msra.mxu0 0.0
  %1300 = vmatprep.subr.mxu0 0.0
  %1301 = vmatpush1.xpose.msra.mxu0 0.0
  %1302 = vmatprep.mubr.f32.mxu0 0.0
  %1303 = vmatmul.mubr.f32.gmra.mrb[0].mxu0 %v1234
  %v1304 = vpop.f32.mrb[0].mxu0
  %v1305 = vadd.f32 0.0, %v1304
  %v1306 = vpop.f32.mrb[0].mxu0
  %1307 = vdwg.mxu0
  %1308 = vrot.lane.b32.xlu0 %v190, 104
  %v1309 = vpop.permute.xlu0 %1308
  %1310 = vrot.lane.b32.xlu0 %v190, 72
  %v1311 = vpop.permute.xlu0 %1310
  %v1312 = vsel %vm222, %v1309, 0
  %v1314 = vsel %vm222, %v1311, 0
  %1316 = vmatprep.subr.mxu0 0.0
  %1317 = vmatpush1.xpose.msra.mxu0 %v1314
  %1318 = vmatprep.subr.mxu0 0.0
  %1319 = vmatpush1.xpose.msra.mxu0 0.0
  %1320 = vmatprep.subr.mxu0 0.0
  %1321 = vmatpush1.xpose.msra.mxu0 0.0
  %1322 = vmatprep.subr.mxu0 0.0
  %1323 = vmatpush1.xpose.msra.mxu0 0.0
  %1324 = vmatprep.subr.mxu0 0.0
  %1325 = vmatpush1.xpose.msra.mxu0 0.0
  %1326 = vmatprep.subr.mxu0 0.0
  %1327 = vmatpush1.xpose.msra.mxu0 0.0
  %1328 = vmatprep.subr.mxu0 0.0
  %1329 = vmatpush1.xpose.msra.mxu0 0.0
  %1330 = vmatprep.subr.mxu0 0.0
  %1331 = vmatpush1.xpose.msra.mxu0 0.0
  %1332 = vmatprep.subr.mxu0 0.0
  %1333 = vmatpush1.xpose.msra.mxu0 0.0
  %1334 = vmatprep.subr.mxu0 0.0
  %1335 = vmatpush1.xpose.msra.mxu0 0.0
  %1336 = vmatprep.subr.mxu0 0.0
  %1337 = vmatpush1.xpose.msra.mxu0 0.0
  %1338 = vmatprep.subr.mxu0 0.0
  %1339 = vmatpush1.xpose.msra.mxu0 0.0
  %1340 = vmatprep.subr.mxu0 0.0
  %1341 = vmatpush1.xpose.msra.mxu0 0.0
  %1342 = vmatprep.subr.mxu0 0.0
  %1343 = vmatpush1.xpose.msra.mxu0 0.0
  %1344 = vmatprep.subr.mxu0 0.0
  %1345 = vmatpush1.xpose.msra.mxu0 0.0
  %1346 = vmatprep.subr.mxu0 0.0
  %1347 = vmatpush1.xpose.msra.mxu0 0.0
  %1348 = vmatprep.subr.mxu0 0.0
  %1349 = vmatpush1.xpose.msra.mxu0 0.0
  %1350 = vmatprep.subr.mxu0 0.0
  %1351 = vmatpush1.xpose.msra.mxu0 0.0
  %1352 = vmatprep.subr.mxu0 0.0
  %1353 = vmatpush1.xpose.msra.mxu0 0.0
  %1354 = vmatprep.subr.mxu0 0.0
  %1355 = vmatpush1.xpose.msra.mxu0 0.0
  %1356 = vmatprep.subr.mxu0 0.0
  %1357 = vmatpush1.xpose.msra.mxu0 0.0
  %1358 = vmatprep.subr.mxu0 0.0
  %1359 = vmatpush1.xpose.msra.mxu0 0.0
  %1360 = vmatprep.subr.mxu0 0.0
  %1361 = vmatpush1.xpose.msra.mxu0 0.0
  %1362 = vmatprep.subr.mxu0 0.0
  %1363 = vmatpush1.xpose.msra.mxu0 0.0
  %1364 = vmatprep.subr.mxu0 0.0
  %1365 = vmatpush1.xpose.msra.mxu0 0.0
  %1366 = vmatprep.subr.mxu0 0.0
  %1367 = vmatpush1.xpose.msra.mxu0 0.0
  %1368 = vmatprep.subr.mxu0 0.0
  %1369 = vmatpush1.xpose.msra.mxu0 0.0
  %1370 = vmatprep.subr.mxu0 0.0
  %1371 = vmatpush1.xpose.msra.mxu0 0.0
  %1372 = vmatprep.subr.mxu0 0.0
  %1373 = vmatpush1.xpose.msra.mxu0 0.0
  %1374 = vmatprep.subr.mxu0 0.0
  %1375 = vmatpush1.xpose.msra.mxu0 0.0
  %1376 = vmatprep.subr.mxu0 0.0
  %1377 = vmatpush1.xpose.msra.mxu0 0.0
  %1378 = vmatprep.subr.mxu0 0.0
  %1379 = vmatpush1.xpose.msra.mxu0 0.0
  %1380 = vmatprep.mubr.f32.mxu0 0.0
  %1381 = vmatmul.mubr.f32.gmra.mrb[0].mxu0 %v1312
  %v1382 = vpop.f32.mrb[0].mxu0
  %v1383 = vadd.f32 0.0, %v1382
  %v1384 = vpop.f32.mrb[0].mxu0
  %1385 = vdwg.mxu0
  %v1386 = vmul.f32 %v1305, 0.35355338
  %v1387 = vmul.f32 %v1383, 0.35355338
  %v1388 = vadd.f32 %v1386, %v379
  %v1389 = vadd.f32 %v1387, %v383
  %v1390 = vsel %vm222, %v1388, -inf
  %1391 = vmax.xlane.f32.xlu0 %v1390
  %v1392 = vpop.xlane.xlu0 %1391
  %v1393 = vsel %vm222, %v1389, -inf
  %1394 = vmax.xlane.f32.xlu0 %v1393
  %v1395 = vpop.xlane.xlu0 %1394
  %v1396 = vsub.f32 %v1388, %v1392
  %v1397 = vsub.f32 %v1389, %v1395
  %v1398 = vmul.f32 %v1396, 1.442695
  %v1399 = vpow.pop %v1398
  %v1400 = vmul.f32 %v1397, 1.442695
  %v1401 = vpow.pop %v1400
  %v1402 = vsel %vm222, %v1399, 0.0
  %1403 = vadd.xlane.f32.xlu0 %v1402
  %v1404 = vpop.xlane.xlu0 %1403
  %v1405 = vsel %vm222, %v1401, 0.0
  %1406 = vadd.xlane.f32.xlu0 %v1405
  %v1407 = vpop.xlane.xlu0 %1406
  %v1408 = vrcp.pop %v1404
  %v1409 = vrcp.pop %v1407
  %v1410 = vmul.f32 %v1399, %v1408
  %v1411 = vmul.f32 %v1401, %v1409
  %1412 = vrot.lane.b32.xlu0 %v185, 40
  %v1413 = vpop.permute.xlu0 %1412
  %v1416 = vsel %vm222, %v1410, 0
  %1418 = vmatprep.subr.mxu0 0.0
  %1419 = vmatpush1.msra.mxu0 %v1413
  %1420 = vmatprep.subr.mxu0 0.0
  %1421 = vmatpush1.msra.mxu0 0.0
  %1422 = vmatprep.subr.mxu0 0.0
  %1423 = vmatpush1.msra.mxu0 0.0
  %1424 = vmatprep.subr.mxu0 0.0
  %1425 = vmatpush1.msra.mxu0 0.0
  %1426 = vmatprep.subr.mxu0 0.0
  %1427 = vmatpush1.msra.mxu0 0.0
  %1428 = vmatprep.subr.mxu0 0.0
  %1429 = vmatpush1.msra.mxu0 0.0
  %1430 = vmatprep.subr.mxu0 0.0
  %1431 = vmatpush1.msra.mxu0 0.0
  %1432 = vmatprep.subr.mxu0 0.0
  %1433 = vmatpush1.msra.mxu0 0.0
  %1434 = vmatprep.subr.mxu0 0.0
  %1435 = vmatpush1.msra.mxu0 0.0
  %1436 = vmatprep.subr.mxu0 0.0
  %1437 = vmatpush1.msra.mxu0 0.0
  %1438 = vmatprep.subr.mxu0 0.0
  %1439 = vmatpush1.msra.mxu0 0.0
  %1440 = vmatprep.subr.mxu0 0.0
  %1441 = vmatpush1.msra.mxu0 0.0
  %1442 = vmatprep.subr.mxu0 0.0
  %1443 = vmatpush1.msra.mxu0 0.0
  %1444 = vmatprep.subr.mxu0 0.0
  %1445 = vmatpush1.msra.mxu0 0.0
  %1446 = vmatprep.subr.mxu0 0.0
  %1447 = vmatpush1.msra.mxu0 0.0
  %1448 = vmatprep.subr.mxu0 0.0
  %1449 = vmatpush1.msra.mxu0 0.0
  %1450 = vmatprep.subr.mxu0 0.0
  %1451 = vmatpush1.msra.mxu0 0.0
  %1452 = vmatprep.subr.mxu0 0.0
  %1453 = vmatpush1.msra.mxu0 0.0
  %1454 = vmatprep.subr.mxu0 0.0
  %1455 = vmatpush1.msra.mxu0 0.0
  %1456 = vmatprep.subr.mxu0 0.0
  %1457 = vmatpush1.msra.mxu0 0.0
  %1458 = vmatprep.subr.mxu0 0.0
  %1459 = vmatpush1.msra.mxu0 0.0
  %1460 = vmatprep.subr.mxu0 0.0
  %1461 = vmatpush1.msra.mxu0 0.0
  %1462 = vmatprep.subr.mxu0 0.0
  %1463 = vmatpush1.msra.mxu0 0.0
  %1464 = vmatprep.subr.mxu0 0.0
  %1465 = vmatpush1.msra.mxu0 0.0
  %1466 = vmatprep.subr.mxu0 0.0
  %1467 = vmatpush1.msra.mxu0 0.0
  %1468 = vmatprep.subr.mxu0 0.0
  %1469 = vmatpush1.msra.mxu0 0.0
  %1470 = vmatprep.subr.mxu0 0.0
  %1471 = vmatpush1.msra.mxu0 0.0
  %1472 = vmatprep.subr.mxu0 0.0
  %1473 = vmatpush1.msra.mxu0 0.0
  %1474 = vmatprep.subr.mxu0 0.0
  %1475 = vmatpush1.msra.mxu0 0.0
  %1476 = vmatprep.subr.mxu0 0.0
  %1477 = vmatpush1.msra.mxu0 0.0
  %1478 = vmatprep.subr.mxu0 0.0
  %1479 = vmatpush1.msra.mxu0 0.0
  %1480 = vmatprep.subr.mxu0 0.0
  %1481 = vmatpush1.msra.mxu0 0.0
  %1482 = vmatprep.mubr.f32.mxu0 0.0
  %1483 = vmatmul.mubr.f32.gmra.mrb[0].mxu0 %v1416
  %v1484 = vpop.f32.mrb[0].mxu0
  %v1485 = vadd.f32 0.0, %v1484
  %v1486 = vpop.f32.mrb[0].mxu0
  %1487 = vdwg.mxu0
  %1488 = vrot.lane.b32.xlu0 %v190, 40
  %v1489 = vpop.permute.xlu0 %1488
  %v1492 = vsel %vm222, %v1411, 0
  %1494 = vmatprep.subr.mxu0 0.0
  %1495 = vmatpush1.msra.mxu0 %v1489
  %1496 = vmatprep.subr.mxu0 0.0
  %1497 = vmatpush1.msra.mxu0 0.0
  %1498 = vmatprep.subr.mxu0 0.0
  %1499 = vmatpush1.msra.mxu0 0.0
  %1500 = vmatprep.subr.mxu0 0.0
  %1501 = vmatpush1.msra.mxu0 0.0
  %1502 = vmatprep.subr.mxu0 0.0
  %1503 = vmatpush1.msra.mxu0 0.0
  %1504 = vmatprep.subr.mxu0 0.0
  %1505 = vmatpush1.msra.mxu0 0.0
  %1506 = vmatprep.subr.mxu0 0.0
  %1507 = vmatpush1.msra.mxu0 0.0
  %1508 = vmatprep.subr.mxu0 0.0
  %1509 = vmatpush1.msra.mxu0 0.0
  %1510 = vmatprep.subr.mxu0 0.0
  %1511 = vmatpush1.msra.mxu0 0.0
  %1512 = vmatprep.subr.mxu0 0.0
  %1513 = vmatpush1.msra.mxu0 0.0
  %1514 = vmatprep.subr.mxu0 0.0
  %1515 = vmatpush1.msra.mxu0 0.0
  %1516 = vmatprep.subr.mxu0 0.0
  %1517 = vmatpush1.msra.mxu0 0.0
  %1518 = vmatprep.subr.mxu0 0.0
  %1519 = vmatpush1.msra.mxu0 0.0
  %1520 = vmatprep.subr.mxu0 0.0
  %1521 = vmatpush1.msra.mxu0 0.0
  %1522 = vmatprep.subr.mxu0 0.0
  %1523 = vmatpush1.msra.mxu0 0.0
  %1524 = vmatprep.subr.mxu0 0.0
  %1525 = vmatpush1.msra.mxu0 0.0
  %1526 = vmatprep.subr.mxu0 0.0
  %1527 = vmatpush1.msra.mxu0 0.0
  %1528 = vmatprep.subr.mxu0 0.0
  %1529 = vmatpush1.msra.mxu0 0.0
  %1530 = vmatprep.subr.mxu0 0.0
  %1531 = vmatpush1.msra.mxu0 0.0
  %1532 = vmatprep.subr.mxu0 0.0
  %1533 = vmatpush1.msra.mxu0 0.0
  %1534 = vmatprep.subr.mxu0 0.0
  %1535 = vmatpush1.msra.mxu0 0.0
  %1536 = vmatprep.subr.mxu0 0.0
  %1537 = vmatpush1.msra.mxu0 0.0
  %1538 = vmatprep.subr.mxu0 0.0
  %1539 = vmatpush1.msra.mxu0 0.0
  %1540 = vmatprep.subr.mxu0 0.0
  %1541 = vmatpush1.msra.mxu0 0.0
  %1542 = vmatprep.subr.mxu0 0.0
  %1543 = vmatpush1.msra.mxu0 0.0
  %1544 = vmatprep.subr.mxu0 0.0
  %1545 = vmatpush1.msra.mxu0 0.0
  %1546 = vmatprep.subr.mxu0 0.0
  %1547 = vmatpush1.msra.mxu0 0.0
  %1548 = vmatprep.subr.mxu0 0.0
  %1549 = vmatpush1.msra.mxu0 0.0
  %1550 = vmatprep.subr.mxu0 0.0
  %1551 = vmatpush1.msra.mxu0 0.0
  %1552 = vmatprep.subr.mxu0 0.0
  %1553 = vmatpush1.msra.mxu0 0.0
  %1554 = vmatprep.subr.mxu0 0.0
  %1555 = vmatpush1.msra.mxu0 0.0
  %1556 = vmatprep.subr.mxu0 0.0
  %1557 = vmatpush1.msra.mxu0 0.0
  %1558 = vmatprep.mubr.f32.mxu0 0.0
  %1559 = vmatmul.mubr.f32.gmra.mrb[0].mxu0 %v1492
  %v1560 = vpop.f32.mrb[0].mxu0
  %v1561 = vadd.f32 0.0, %v1560
  %v1562 = vpop.f32.mrb[0].mxu0
  %1563 = vdwg.mxu0
  %1566 = vrot.lane.b32.xlu0 %v817, 8
  %v1567 = vpop.permute.xlu0 %1566
  %1568 = vrot.lane.b32.xlu0 %v893, 8
  %v1569 = vpop.permute.xlu0 %1568
  %1574 = vrot.lane.b32.xlu0 %v1151, 16
  %v1575 = vpop.permute.xlu0 %1574
  %1576 = vrot.lane.b32.xlu0 %v1227, 16
  %v1577 = vpop.permute.xlu0 %1576
  %1582 = vrot.lane.b32.xlu0 %v1485, 24
  %v1583 = vpop.permute.xlu0 %1582
  %1584 = vrot.lane.b32.xlu0 %v1561, 24
  %v1585 = vpop.permute.xlu0 %1584
  %v1588 = vsel %vm222, %v483, %v1567
  %v1589 = vsel %vm222, %v559, %v1569
  %vm1590 = vcmask 130048
  %v1591 = vsel %vm1590, %v1588, %v1575
  %v1592 = vsel %vm1590, %v1589, %v1577
  %vm1593 = vcmask 195584
  %v1594 = vsel %vm1593, %v1591, %v1583
  %v1595 = vsel %vm1593, %v1592, %v1585
  %v1596 = vld [vmem:[%s6] sm:$0xff]
  %v1597 = vld [vmem:[%s6 + $0x8] sm:$0xff]
  %v1598 = vld [vmem:[%s6 + $0x10] sm:$0xff]
  %v1599 = vld [vmem:[%s6 + $0x18] sm:$0xff]
  %v1600 = vld [vmem:[%s7] sm:$0x1]
  %v1602 = vlaneseq
  %v1603 = vshrl.u32 %v1602, 7
  %v1604 = vsub.s32 0, %v1603
  %v1605 = vrot.slane %v1600, %v1604
  %v1608 = vsel %vm57, %v1594, 0
  %v1611 = vsel %vm57, %v1595, 0
  %1613 = vmatprep.subr.mxu0 0.0
  %1614 = vmatpush1.msra.mxu0 %v1596
  %1615 = vmatprep.subr.mxu0 0.0
  %1616 = vmatpush1.msra.mxu0 %v1597
  %1617 = vmatprep.subr.mxu0 0.0
  %1618 = vmatpush1.msra.mxu0 %v1598
  %1619 = vmatprep.subr.mxu0 0.0
  %1620 = vmatpush1.msra.mxu0 %v1599
  %1621 = vmatprep.subr.mxu0 0.0
  %1622 = vmatpush1.msra.mxu0 0.0
  %1623 = vmatprep.subr.mxu0 0.0
  %1624 = vmatpush1.msra.mxu0 0.0
  %1625 = vmatprep.subr.mxu0 0.0
  %1626 = vmatpush1.msra.mxu0 0.0
  %1627 = vmatprep.subr.mxu0 0.0
  %1628 = vmatpush1.msra.mxu0 0.0
  %1629 = vmatprep.subr.mxu0 0.0
  %1630 = vmatpush1.msra.mxu0 0.0
  %1631 = vmatprep.subr.mxu0 0.0
  %1632 = vmatpush1.msra.mxu0 0.0
  %1633 = vmatprep.subr.mxu0 0.0
  %1634 = vmatpush1.msra.mxu0 0.0
  %1635 = vmatprep.subr.mxu0 0.0
  %1636 = vmatpush1.msra.mxu0 0.0
  %1637 = vmatprep.subr.mxu0 0.0
  %1638 = vmatpush1.msra.mxu0 0.0
  %1639 = vmatprep.subr.mxu0 0.0
  %1640 = vmatpush1.msra.mxu0 0.0
  %1641 = vmatprep.subr.mxu0 0.0
  %1642 = vmatpush1.msra.mxu0 0.0
  %1643 = vmatprep.subr.mxu0 0.0
  %1644 = vmatpush1.msra.mxu0 0.0
  %1645 = vmatprep.subr.mxu0 0.0
  %1646 = vmatpush1.msra.mxu0 0.0
  %1647 = vmatprep.subr.mxu0 0.0
  %1648 = vmatpush1.msra.mxu0 0.0
  %1649 = vmatprep.subr.mxu0 0.0
  %1650 = vmatpush1.msra.mxu0 0.0
  %1651 = vmatprep.subr.mxu0 0.0
  %1652 = vmatpush1.msra.mxu0 0.0
  %1653 = vmatprep.subr.mxu0 0.0
  %1654 = vmatpush1.msra.mxu0 0.0
  %1655 = vmatprep.subr.mxu0 0.0
  %1656 = vmatpush1.msra.mxu0 0.0
  %1657 = vmatprep.subr.mxu0 0.0
  %1658 = vmatpush1.msra.mxu0 0.0
  %1659 = vmatprep.subr.mxu0 0.0
  %1660 = vmatpush1.msra.mxu0 0.0
  %1661 = vmatprep.subr.mxu0 0.0
  %1662 = vmatpush1.msra.mxu0 0.0
  %1663 = vmatprep.subr.mxu0 0.0
  %1664 = vmatpush1.msra.mxu0 0.0
  %1665 = vmatprep.subr.mxu0 0.0
  %1666 = vmatpush1.msra.mxu0 0.0
  %1667 = vmatprep.subr.mxu0 0.0
  %1668 = vmatpush1.msra.mxu0 0.0
  %1669 = vmatprep.subr.mxu0 0.0
  %1670 = vmatpush1.msra.mxu0 0.0
  %1671 = vmatprep.subr.mxu0 0.0
  %1672 = vmatpush1.msra.mxu0 0.0
  %1673 = vmatprep.subr.mxu0 0.0
  %1674 = vmatpush1.msra.mxu0 0.0
  %1675 = vmatprep.subr.mxu0 0.0
  %1676 = vmatpush1.msra.mxu0 0.0
  %1677 = vmatprep.mubr.f32.mxu0 0.0
  %1678 = vmatmul.mubr.f32.gmra.mrb[0].mxu0 %v1608
  %v1679 = vpop.f32.mrb[0].mxu0
  %v1680 = vadd.f32 %v1605, %v1679
  %v1681 = vpop.f32.mrb[0].mxu0
  %1682 = vmatprep.mubr.f32.mxu0 0.0
  %1683 = vmatmul.mubr.f32.gmra.mrb[0].mxu0 %v1611
  %v1684 = vpop.f32.mrb[0].mxu0
  %v1685 = vadd.f32 %v1605, %v1684
  %v1686 = vpop.f32.mrb[0].mxu0
  %1687 = vdwg.mxu0
  %v1688 = vadd.f32 %v1680, %v99
  %v1689 = vadd.f32 %v1685, %v100
  %v1690 = vld [vmem:[%s8] sm:$0x1]
  %v1691 = vld [vmem:[%s9] sm:$0x1]
  %v1692 = vsel %vm57, %v1688, 0.0
  %1693 = vadd.xlane.f32.xlu0 %v1692
  %v1694 = vpop.xlane.xlu0 %1693
  %v1695 = vsel %vm57, %v1689, 0.0
  %1696 = vadd.xlane.f32.xlu0 %v1695
  %v1697 = vpop.xlane.xlu0 %1696
  %v1698 = vmul.f32 %v1694, %v64
  %v1699 = vmul.f32 %v1697, %v64
  %v1700 = vsub.f32 %v1688, %v1698
  %v1701 = vsub.f32 %v1689, %v1699
  %v1702 = vmul.f32 %v1700, %v1700
  %v1703 = vmul.f32 %v1701, %v1701
  %v1704 = vsel %vm57, %v1702, 0.0
  %1705 = vadd.xlane.f32.xlu0 %v1704
  %v1706 = vpop.xlane.xlu0 %1705
  %v1707 = vsel %vm57, %v1703, 0.0
  %1708 = vadd.xlane.f32.xlu0 %v1707
  %v1709 = vpop.xlane.xlu0 %1708
  %v1710 = vmul.f32 %v1706, %v64
  %v1711 = vmul.f32 %v1709, %v64
  %v1712 = vadd.f32 %v1710, 1e-12
  %v1713 = vadd.f32 %v1711, 1e-12
  %v1714 = vrsqrt.pop %v1712
  %v1715 = vrsqrt.pop %v1713
  %v1716 = vmul.f32 %v1700, %v1714
  %v1717 = vmul.f32 %v1701, %v1715
  %v1719 = vlaneseq
  %v1720 = vshrl.u32 %v1719, 7
  %v1721 = vsub.s32 0, %v1720
  %v1722 = vrot.slane %v1690, %v1721
  %v1724 = vmul.f32 %v1716, %v1722
  %v1725 = vmul.f32 %v1717, %v1722
  %v1727 = vlaneseq
  %v1728 = vshrl.u32 %v1727, 7
  %v1729 = vsub.s32 0, %v1728
  %v1730 = vrot.slane %v1691, %v1729
  %v1732 = vadd.f32 %v1724, %v1730
  %v1733 = vadd.f32 %v1725, %v1730
  %v1734 = vld [vmem:[%s10] sm:$0xff]
  %v1735 = vld [vmem:[%s10 + $0x8] sm:$0xff]
  %v1736 = vld [vmem:[%s10 + $0x10] sm:$0xff]
  %v1737 = vld [vmem:[%s10 + $0x18] sm:$0xff]
  %v1738 = vld [vmem:[%s11] sm:$0x1]
  %v1740 = vlaneseq
  %v1741 = vshrl.u32 %v1740, 7
  %v1742 = vsub.s32 0, %v1741
  %v1743 = vrot.slane %v1738, %v1742
  %v1746 = vsel %vm57, %v1732, 0
  %v1749 = vsel %vm57, %v1733, 0
  %1751 = vmatprep.subr.mxu0 0.0
  %1752 = vmatpush1.msra.mxu0 %v1734
  %1753 = vmatprep.subr.mxu0 0.0
  %1754 = vmatpush1.msra.mxu0 %v1735
  %1755 = vmatprep.subr.mxu0 0.0
  %1756 = vmatpush1.msra.mxu0 %v1736
  %1757 = vmatprep.subr.mxu0 0.0
  %1758 = vmatpush1.msra.mxu0 %v1737
  %1759 = vmatprep.subr.mxu0 0.0
  %1760 = vmatpush1.msra.mxu0 0.0
  %1761 = vmatprep.subr.mxu0 0.0
  %1762 = vmatpush1.msra.mxu0 0.0
  %1763 = vmatprep.subr.mxu0 0.0
  %1764 = vmatpush1.msra.mxu0 0.0
  %1765 = vmatprep.subr.mxu0 0.0
  %1766 = vmatpush1.msra.mxu0 0.0
  %1767 = vmatprep.subr.mxu0 0.0
  %1768 = vmatpush1.msra.mxu0 0.0
  %1769 = vmatprep.subr.mxu0 0.0
  %1770 = vmatpush1.msra.mxu0 0.0
  %1771 = vmatprep.subr.mxu0 0.0
  %1772 = vmatpush1.msra.mxu0 0.0
  %1773 = vmatprep.subr.mxu0 0.0
  %1774 = vmatpush1.msra.mxu0 0.0
  %1775 = vmatprep.subr.mxu0 0.0
  %1776 = vmatpush1.msra.mxu0 0.0
  %1777 = vmatprep.subr.mxu0 0.0
  %1778 = vmatpush1.msra.mxu0 0.0
  %1779 = vmatprep.subr.mxu0 0.0
  %1780 = vmatpush1.msra.mxu0 0.0
  %1781 = vmatprep.subr.mxu0 0.0
  %1782 = vmatpush1.msra.mxu0 0.0
  %1783 = vmatprep.subr.mxu0 0.0
  %1784 = vmatpush1.msra.mxu0 0.0
  %1785 = vmatprep.subr.mxu0 0.0
  %1786 = vmatpush1.msra.mxu0 0.0
  %1787 = vmatprep.subr.mxu0 0.0
  %1788 = vmatpush1.msra.mxu0 0.0
  %1789 = vmatprep.subr.mxu0 0.0
  %1790 = vmatpush1.msra.mxu0 0.0
  %1791 = vmatprep.subr.mxu0 0.0
  %1792 = vmatpush1.msra.mxu0 0.0
  %1793 = vmatprep.subr.mxu0 0.0
  %1794 = vmatpush1.msra.mxu0 0.0
  %1795 = vmatprep.subr.mxu0 0.0
  %1796 = vmatpush1.msra.mxu0 0.0
  %1797 = vmatprep.subr.mxu0 0.0
  %1798 = vmatpush1.msra.mxu0 0.0
  %1799 = vmatprep.subr.mxu0 0.0
  %1800 = vmatpush1.msra.mxu0 0.0
  %1801 = vmatprep.subr.mxu0 0.0
  %1802 = vmatpush1.msra.mxu0 0.0
  %1803 = vmatprep.subr.mxu0 0.0
  %1804 = vmatpush1.msra.mxu0 0.0
  %1805 = vmatprep.subr.mxu0 0.0
  %1806 = vmatpush1.msra.mxu0 0.0
  %1807 = vmatprep.subr.mxu0 0.0
  %1808 = vmatpush1.msra.mxu0 0.0
  %1809 = vmatprep.subr.mxu0 0.0
  %1810 = vmatpush1.msra.mxu0 0.0
  %1811 = vmatprep.subr.mxu0 0.0
  %1812 = vmatpush1.msra.mxu0 0.0
  %1813 = vmatprep.subr.mxu0 0.0
  %1814 = vmatpush1.msra.mxu0 0.0
  %1815 = vmatprep.mubr.f32.mxu0 0.0
  %1816 = vmatmul.mubr.f32.gmra.mrb[0].mxu0 %v1746
  %v1817 = vpop.f32.mrb[0].mxu0
  %v1818 = vadd.f32 %v1743, %v1817
  %v1819 = vpop.f32.mrb[0].mxu0
  %1820 = vmatprep.mubr.f32.mxu0 0.0
  %1821 = vmatmul.mubr.f32.gmra.mrb[0].mxu0 %v1749
  %v1822 = vpop.f32.mrb[0].mxu0
  %v1823 = vadd.f32 %v1743, %v1822
  %v1824 = vpop.f32.mrb[0].mxu0
  %1825 = vdwg.mxu0
  %v1826 = vmul.f32 %v1818, %v1818
  %v1827 = vmul.f32 %v1823, %v1823
  %v1828 = vmul.f32 %v1818, %v1826
  %v1829 = vmul.f32 %v1823, %v1827
  %v1830 = vmul.f32 %v1828, 0.044715
  %v1831 = vmul.f32 %v1829, 0.044715
  %v1832 = vadd.f32 %v1818, %v1830
  %v1833 = vadd.f32 %v1823, %v1831
  %v1834 = vmul.f32 %v1832, 0.7978846
  %v1835 = vmul.f32 %v1833, 0.7978846
  %v1836 = vtanh.pop %v1834
  %v1837 = vtanh.pop %v1835
  %v1838 = vadd.f32 %v1836, 1.0
  %v1839 = vadd.f32 %v1837, 1.0
  %v1840 = vmul.f32 %v1838, 0.5
  %v1841 = vmul.f32 %v1839, 0.5
  %v1842 = vmul.f32 %v1818, %v1840
  %v1843 = vmul.f32 %v1823, %v1841
  %v1844 = vld [vmem:[%s12] sm:$0xff]
  %v1845 = vld [vmem:[%s12 + $0x8] sm:$0xff]
  %v1846 = vld [vmem:[%s12 + $0x10] sm:$0xff]
  %v1847 = vld [vmem:[%s12 + $0x18] sm:$0xff]
  %v1848 = vld [vmem:[%s12 + $0x20] sm:$0xff]
  %v1849 = vld [vmem:[%s12 + $0x28] sm:$0xff]
  %v1850 = vld [vmem:[%s12 + $0x30] sm:$0xff]
  %v1851 = vld [vmem:[%s12 + $0x38] sm:$0xff]
  %v1852 = vld [vmem:[%s13] sm:$0x1]
  %v1854 = vlaneseq
  %v1855 = vshrl.u32 %v1854, 7
  %v1856 = vsub.s32 0, %v1855
  %v1857 = vrot.slane %v1852, %v1856
  %vm1859 = vcmask 523264
  %v1861 = vsel %vm1859, %v1842, 0
  %v1864 = vsel %vm1859, %v1843, 0
  %1866 = vmatprep.subr.mxu0 0.0
  %1867 = vmatpush1.msra.mxu0 %v1844
  %1868 = vmatprep.subr.mxu0 0.0
  %1869 = vmatpush1.msra.mxu0 %v1845
  %1870 = vmatprep.subr.mxu0 0.0
  %1871 = vmatpush1.msra.mxu0 %v1846
  %1872 = vmatprep.subr.mxu0 0.0
  %1873 = vmatpush1.msra.mxu0 %v1847
  %1874 = vmatprep.subr.mxu0 0.0
  %1875 = vmatpush1.msra.mxu0 %v1848
  %1876 = vmatprep.subr.mxu0 0.0
  %1877 = vmatpush1.msra.mxu0 %v1849
  %1878 = vmatprep.subr.mxu0 0.0
  %1879 = vmatpush1.msra.mxu0 %v1850
  %1880 = vmatprep.subr.mxu0 0.0
  %1881 = vmatpush1.msra.mxu0 %v1851
  %1882 = vmatprep.subr.mxu0 0.0
  %1883 = vmatpush1.msra.mxu0 0.0
  %1884 = vmatprep.subr.mxu0 0.0
  %1885 = vmatpush1.msra.mxu0 0.0
  %1886 = vmatprep.subr.mxu0 0.0
  %1887 = vmatpush1.msra.mxu0 0.0
  %1888 = vmatprep.subr.mxu0 0.0
  %1889 = vmatpush1.msra.mxu0 0.0
  %1890 = vmatprep.subr.mxu0 0.0
  %1891 = vmatpush1.msra.mxu0 0.0
  %1892 = vmatprep.subr.mxu0 0.0
  %1893 = vmatpush1.msra.mxu0 0.0
  %1894 = vmatprep.subr.mxu0 0.0
  %1895 = vmatpush1.msra.mxu0 0.0
  %1896 = vmatprep.subr.mxu0 0.0
  %1897 = vmatpush1.msra.mxu0 0.0
  %1898 = vmatprep.subr.mxu0 0.0
  %1899 = vmatpush1.msra.mxu0 0.0
  %1900 = vmatprep.subr.mxu0 0.0
  %1901 = vmatpush1.msra.mxu0 0.0
  %1902 = vmatprep.subr.mxu0 0.0
  %1903 = vmatpush1.msra.mxu0 0.0
  %1904 = vmatprep.subr.mxu0 0.0
  %1905 = vmatpush1.msra.mxu0 0.0
  %1906 = vmatprep.subr.mxu0 0.0
  %1907 = vmatpush1.msra.mxu0 0.0
  %1908 = vmatprep.subr.mxu0 0.0
  %1909 = vmatpush1.msra.mxu0 0.0
  %1910 = vmatprep.subr.mxu0 0.0
  %1911 = vmatpush1.msra.mxu0 0.0
  %1912 = vmatprep.subr.mxu0 0.0
  %1913 = vmatpush1.msra.mxu0 0.0
  %1914 = vmatprep.subr.mxu0 0.0
  %1915 = vmatpush1.msra.mxu0 0.0
  %1916 = vmatprep.subr.mxu0 0.0
  %1917 = vmatpush1.msra.mxu0 0.0
  %1918 = vmatprep.subr.mxu0 0.0
  %1919 = vmatpush1.msra.mxu0 0.0
  %1920 = vmatprep.subr.mxu0 0.0
  %1921 = vmatpush1.msra.mxu0 0.0
  %1922 = vmatprep.subr.mxu0 0.0
  %1923 = vmatpush1.msra.mxu0 0.0
  %1924 = vmatprep.subr.mxu0 0.0
  %1925 = vmatpush1.msra.mxu0 0.0
  %1926 = vmatprep.subr.mxu0 0.0
  %1927 = vmatpush1.msra.mxu0 0.0
  %1928 = vmatprep.subr.mxu0 0.0
  %1929 = vmatpush1.msra.mxu0 0.0
  %1930 = vmatprep.mubr.f32.mxu0 0.0
  %1931 = vmatmul.mubr.f32.gmra.mrb[0].mxu0 %v1861
  %v1932 = vpop.f32.mrb[0].mxu0
  %v1933 = vadd.f32 %v1857, %v1932
  %v1934 = vpop.f32.mrb[0].mxu0
  %1935 = vmatprep.mubr.f32.mxu0 0.0
  %1936 = vmatmul.mubr.f32.gmra.mrb[0].mxu0 %v1864
  %v1937 = vpop.f32.mrb[0].mxu0
  %v1938 = vadd.f32 %v1857, %v1937
  %v1939 = vpop.f32.mrb[0].mxu0
  %1940 = vdwg.mxu0
  %v1941 = vadd.f32 %v1933, %v1732
  %v1942 = vadd.f32 %v1938, %v1733
  %v1943 = vld [vmem:[%s14] sm:$0x1]
  %v1944 = vld [vmem:[%s15] sm:$0x1]
  %v1945 = vsel %vm57, %v1941, 0.0
  %1946 = vadd.xlane.f32.xlu0 %v1945
  %v1947 = vpop.xlane.xlu0 %1946
  %v1948 = vsel %vm57, %v1942, 0.0
  %1949 = vadd.xlane.f32.xlu0 %v1948
  %v1950 = vpop.xlane.xlu0 %1949
  %v1951 = vmul.f32 %v1947, %v64
  %v1952 = vmul.f32 %v1950, %v64
  %v1953 = vsub.f32 %v1941, %v1951
  %v1954 = vsub.f32 %v1942, %v1952
  %v1955 = vmul.f32 %v1953, %v1953
  %v1956 = vmul.f32 %v1954, %v1954
  %v1957 = vsel %vm57, %v1955, 0.0
  %1958 = vadd.xlane.f32.xlu0 %v1957
  %v1959 = vpop.xlane.xlu0 %1958
  %v1960 = vsel %vm57, %v1956, 0.0
  %1961 = vadd.xlane.f32.xlu0 %v1960
  %v1962 = vpop.xlane.xlu0 %1961
  %v1963 = vmul.f32 %v1959, %v64
  %v1964 = vmul.f32 %v1962, %v64
  %v1965 = vadd.f32 %v1963, 1e-12
  %v1966 = vadd.f32 %v1964, 1e-12
  %v1967 = vrsqrt.pop %v1965
  %v1968 = vrsqrt.pop %v1966
  %v1969 = vmul.f32 %v1953, %v1967
  %v1970 = vmul.f32 %v1954, %v1968
  %v1972 = vlaneseq
  %v1973 = vshrl.u32 %v1972, 7
  %v1974 = vsub.s32 0, %v1973
  %v1975 = vrot.slane %v1943, %v1974
  %v1977 = vmul.f32 %v1969, %v1975
  %v1978 = vmul.f32 %v1970, %v1975
  %v1980 = vlaneseq
  %v1981 = vshrl.u32 %v1980, 7
  %v1982 = vsub.s32 0, %v1981
  %v1983 = vrot.slane %v1944, %v1982
  %v1985 = vadd.f32 %v1977, %v1983
  %v1986 = vadd.f32 %v1978, %v1983
  %1987 = vst.msk [vmem:[%s16] sm:$0xff] %vm57, %v1985
  %1988 = vst.msk [vmem:[%s16 + $0x8] sm:$0xff] %vm57, %v1986
  // Predicated region
  $region66: #{nerbert_forward.3} parent=0 // pred_check
    _
  $region67: #{nerbert_forward.3} parent=0 // pred_check_branch
    %1990 = sbr.rel (0) target = $region69
  $region68: #{nerbert_forward.3} parent=0 // pred_region
    _
  $region69: #{nerbert_forward.3} parent=0 // pred_fallthru
    _
  // Predicated region
  $region70: #{nerbert_forward.3} parent=0 // pred_check
    _
  $region71: #{nerbert_forward.3} parent=0 // pred_check_branch
    %1992 = sbr.rel (0) target = $region73
  $region72: #{nerbert_forward.3} parent=0 // pred_region
    _
  $region73: #{nerbert_forward.3} parent=0 // pred_fallthru
    _

// kernel: nerbert_forward.5
$region0: #{nerbert_forward.5}
  #allocation0 [shape = 'u32[]', space=smem, size = 0x4, offset = 0x4, fixed_abs, tag = 'smem constant byte address 0x4 - core index']
  #allocation1 [shape = 'u32[144,128]{1,0:T(1,128)}', space=vmem, size = 0x12000, scoped, tag = 'internal scratch']
  %s0 = inlined_call_operand.vmem [shape: f32[2,8,256], index: 0, kind: input, shape index: {}]
  %s1 = inlined_call_operand.vmem [shape: f32[2,8], index: 1, kind: input, shape index: {}]
  %s2 = inlined_call_operand.vmem [shape: f32[32,128], index: 2, kind: input, shape index: {}]
  %s3 = inlined_call_operand.vmem [shape: f32[32,128], index: 3, kind: input, shape index: {}]
  %s4 = inlined_call_operand.vmem [shape: f32[2,8,64], index: 4, kind: output, shape index: {}]
  %s5 = sld [smem:[#allocation0]]
  $region26: #{nerbert_forward.5} parent=0
    _
  %s7 = ssub.s32 1, %s5
  %s8 = scalar_select 0, %s7, %s5
  // Predicated region
  $region2: #{nerbert_forward.5} parent=0 // pred_check
    _
  $region3: #{nerbert_forward.5} parent=0 // pred_check_branch
    %10 = sbr.rel (0) target = $region5
  $region4: #{nerbert_forward.5} parent=0 // pred_region
    _
  $region5: #{nerbert_forward.5} parent=0 // pred_fallthru
    _
  // Predicated region
  $region6: #{nerbert_forward.5} parent=0 // pred_check
    _
  $region7: #{nerbert_forward.5} parent=0 // pred_check_branch
    %12 = sbr.rel (0) target = $region9
  $region8: #{nerbert_forward.5} parent=0 // pred_region
    _
  $region9: #{nerbert_forward.5} parent=0 // pred_fallthru
    _
  // Predicated region
  $region10: #{nerbert_forward.5} parent=0 // pred_check
    _
  $region11: #{nerbert_forward.5} parent=0 // pred_check_branch
    %14 = sbr.rel (0) target = $region13
  $region12: #{nerbert_forward.5} parent=0 // pred_region
    _
  $region13: #{nerbert_forward.5} parent=0 // pred_fallthru
    _
  // Predicated region
  $region14: #{nerbert_forward.5} parent=0 // pred_check
    _
  $region15: #{nerbert_forward.5} parent=0 // pred_check_branch
    %16 = sbr.rel (0) target = $region17
  $region16: #{nerbert_forward.5} parent=0 // pred_region
    _
  $region17: #{nerbert_forward.5} parent=0 // pred_fallthru
    _
  %v17 = vld [vmem:[%s0] sm:$0xff]
  %v18 = vld [vmem:[%s0 + $0x8] sm:$0xff]
  %v19 = vld [vmem:[%s0 + $0x10] sm:$0xff]
  %v20 = vld [vmem:[%s0 + $0x18] sm:$0xff]
  %v21 = vld [vmem:[%s1] sm:$0x3]
  %v22 = vld [vmem:[%s2] sm:$0xff]
  %v23 = vld [vmem:[%s2 + $0x8] sm:$0xff]
  %v24 = vld [vmem:[%s2 + $0x10] sm:$0xff]
  %v25 = vld [vmem:[%s2 + $0x18] sm:$0xff]
  %v26 = vld [vmem:[%s3] sm:$0xff]
  %v27 = vld [vmem:[%s3 + $0x8] sm:$0xff]
  %v28 = vld [vmem:[%s3 + $0x10] sm:$0xff]
  %v29 = vld [vmem:[%s3 + $0x18] sm:$0xff]
  %vm30 = vcmask 261120
  %v32 = vsel %vm30, 0.0, 0
  %34 = vmatprep.subr.mxu0 0.0
  %35 = vmatpush1.msra.mxu0 %v22
  %36 = vmatprep.subr.mxu0 0.0
  %37 = vmatpush1.msra.mxu0 %v23
  %38 = vmatprep.subr.mxu0 0.0
  %39 = vmatpush1.msra.mxu0 %v24
  %40 = vmatprep.subr.mxu0 0.0
  %41 = vmatpush1.msra.mxu0 %v25
  %42 = vmatprep.subr.mxu0 0.0
  %43 = vmatpush1.msra.mxu0 0.0
  %44 = vmatprep.subr.mxu0 0.0
  %45 = vmatpush1.msra.mxu0 0.0
  %46 = vmatprep.subr.mxu0 0.0
  %47 = vmatpush1.msra.mxu0 0.0
  %48 = vmatprep.subr.mxu0 0.0
  %49 = vmatpush1.msra.mxu0 0.0
  %50 = vmatprep.subr.mxu0 0.0
  %51 = vmatpush1.msra.mxu0 0.0
  %52 = vmatprep.subr.mxu0 0.0
  %53 = vmatpush1.msra.mxu0 0.0
  %54 = vmatprep.subr.mxu0 0.0
  %55 = vmatpush1.msra.mxu0 0.0
  %56 = vmatprep.subr.mxu0 0.0
  %57 = vmatpush1.msra.mxu0 0.0
  %58 = vmatprep.subr.mxu0 0.0
  %59 = vmatpush1.msra.mxu0 0.0
  %60 = vmatprep.subr.mxu0 0.0
  %61 = vmatpush1.msra.mxu0 0.0
  %62 = vmatprep.subr.mxu0 0.0
  %63 = vmatpush1.msra.mxu0 0.0
  %64 = vmatprep.subr.mxu0 0.0
  %65 = vmatpush1.msra.mxu0 0.0
  %66 = vmatprep.subr.mxu0 0.0
  %67 = vmatpush1.msra.mxu0 0.0
  %68 = vmatprep.subr.mxu0 0.0
  %69 = vmatpush1.msra.mxu0 0.0
  %70 = vmatprep.subr.mxu0 0.0
  %71 = vmatpush1.msra.mxu0 0.0
  %72 = vmatprep.subr.mxu0 0.0
  %73 = vmatpush1.msra.mxu0 0.0
  %74 = vmatprep.subr.mxu0 0.0
  %75 = vmatpush1.msra.mxu0 0.0
  %76 = vmatprep.subr.mxu0 0.0
  %77 = vmatpush1.msra.mxu0 0.0
  %78 = vmatprep.subr.mxu0 0.0
  %79 = vmatpush1.msra.mxu0 0.0
  %80 = vmatprep.subr.mxu0 0.0
  %81 = vmatpush1.msra.mxu0 0.0
  %82 = vmatprep.subr.mxu0 0.0
  %83 = vmatpush1.msra.mxu0 0.0
  %84 = vmatprep.subr.mxu0 0.0
  %85 = vmatpush1.msra.mxu0 0.0
  %86 = vmatprep.subr.mxu0 0.0
  %87 = vmatpush1.msra.mxu0 0.0
  %88 = vmatprep.subr.mxu0 0.0
  %89 = vmatpush1.msra.mxu0 0.0
  %90 = vmatprep.subr.mxu0 0.0
  %91 = vmatpush1.msra.mxu0 0.0
  %92 = vmatprep.subr.mxu0 0.0
  %93 = vmatpush1.msra.mxu0 0.0
  %94 = vmatprep.subr.mxu0 0.0
  %95 = vmatpush1.msra.mxu0 0.0
  %96 = vmatprep.subr.mxu0 0.0
  %97 = vmatpush1.msra.mxu0 0.0
  %98 = vmatprep.mubr.f32.mxu0 0.0
  %99 = vmatmul.mubr.f32.gmra.mrb[0].mxu0 %v32
  %v100 = vpop.f32.mrb[0].mxu0
  %v101 = vadd.f32 0.0, %v100
  %v102 = vpop.f32.mrb[0].mxu0
  %103 = vdwg.mxu0
  %v105 = vrot.slane %v101, 1
  %v108 = vadd.f32 %v17, %v101
  %v109 = vadd.f32 %v19, %v105
  %v110 = vxor.u32 %v108, 2147483648
  %v111 = vxor.u32 %v109, 2147483648
  %v112 = vmul.f32 %v110, 1.442695
  %v113 = vpow.pop %v112
  %v114 = vmul.f32 %v111, 1.442695
  %v115 = vpow.pop %v114
  %v116 = vadd.f32 %v113, 1.0
  %v117 = vadd.f32 %v115, 1.0
  %v118 = vrcp.pop %v116
  %v119 = vmul.f32 1.0, %v118
  %v120 = vrcp.pop %v117
  %v121 = vmul.f32 1.0, %v120
  %v122 = vtanh.pop %v108
  %v123 = vtanh.pop %v109
  %v124 = vmul.f32 %v119, 0.0
  %v125 = vmul.f32 %v121, 0.0
  %128 = vrot.lane.b32.xlu0 %v122, 32
  %v129 = vpop.permute.xlu0 %128
  %130 = vrot.lane.b32.xlu0 %v123, 32
  %v131 = vpop.permute.xlu0 %130
  %v134 = vmul.f32 %v119, %v129
  %v135 = vmul.f32 %v121, %v131
  %138 = vrot.lane.b32.xlu0 %v134, 32
  %v139 = vpop.permute.xlu0 %138
  %140 = vrot.lane.b32.xlu0 %v135, 32
  %v141 = vpop.permute.xlu0 %140
  %v144 = vadd.f32 %v124, %v139
  %v145 = vadd.f32 %v125, %v141
  %v146 = vtanh.pop %v144
  %v147 = vtanh.pop %v145
  %150 = vrot.lane.b32.xlu0 %v146, 32
  %v151 = vpop.permute.xlu0 %150
  %152 = vrot.lane.b32.xlu0 %v147, 32
  %v153 = vpop.permute.xlu0 %152
  %v156 = vmul.f32 %v119, %v151
  %v157 = vmul.f32 %v121, %v153
  %159 = vset.pattern.permute.xlu0 0
  %160 = vperm.xlu0 %159, %v21
  %v161 = vpop.permute.xlu0 %160
  %v165 = vrot.slane %v157, 7
  %vm166 = vcmask 1041409
  %v167 = vsel %vm166, %v165, %v156
  %168 = vrot.lane.b32.xlu0 %v167, 64
  %v169 = vpop.permute.xlu0 %168
  %v171 = vmul.f32 %v161, %v169
  %v172 = vsub.f32 1.0, %v21
  %174 = vset.pattern.permute.xlu0 0
  %175 = vperm.xlu0 %174, %v172
  %v176 = vpop.permute.xlu0 %175
  %v178 = vmul.f32 %v176, 0.0
  %v179 = vadd.f32 %v171, %v178
  %v182 = vrot.slane %v145, 7
  %v183 = vsel %vm166, %v182, %v144
  %184 = vrot.lane.b32.xlu0 %v183, 96
  %v185 = vpop.permute.xlu0 %184
  %v187 = vmul.f32 %v161, %v185
  %v188 = vadd.f32 %v187, %v178
  %189 = vmatprep.subr.mxu0 0.0
  %190 = vmatpush1.msra.mxu0 %v26
  %191 = vmatprep.subr.mxu0 0.0
  %192 = vmatpush1.msra.mxu0 %v27
  %193 = vmatprep.subr.mxu0 0.0
  %194 = vmatpush1.msra.mxu0 %v28
  %195 = vmatprep.subr.mxu0 0.0
  %196 = vmatpush1.msra.mxu0 %v29
  %197 = vmatprep.subr.mxu0 0.0
  %198 = vmatpush1.msra.mxu0 0.0
  %199 = vmatprep.subr.mxu0 0.0
  %200 = vmatpush1.msra.mxu0 0.0
  %201 = vmatprep.subr.mxu0 0.0
  %202 = vmatpush1.msra.mxu0 0.0
  %203 = vmatprep.subr.mxu0 0.0
  %204 = vmatpush1.msra.mxu0 0.0
  %205 = vmatprep.subr.mxu0 0.0
  %206 = vmatpush1.msra.mxu0 0.0
  %207 = vmatprep.subr.mxu0 0.0
  %208 = vmatpush1.msra.mxu0 0.0
  %209 = vmatprep.subr.mxu0 0.0
  %210 = vmatpush1.msra.mxu0 0.0
  %211 = vmatprep.subr.mxu0 0.0
  %212 = vmatpush1.msra.mxu0 0.0
  %213 = vmatprep.subr.mxu0 0.0
  %214 = vmatpush1.msra.mxu0 0.0
  %215 = vmatprep.subr.mxu0 0.0
  %216 = vmatpush1.msra.mxu0 0.0
  %217 = vmatprep.subr.mxu0 0.0
  %218 = vmatpush1.msra.mxu0 0.0
  %219 = vmatprep.subr.mxu0 0.0
  %220 = vmatpush1.msra.mxu0 0.0
  %221 = vmatprep.subr.mxu0 0.0
  %222 = vmatpush1.msra.mxu0 0.0
  %223 = vmatprep.subr.mxu0 0.0
  %224 = vmatpush1.msra.mxu0 0.0
  %225 = vmatprep.subr.mxu0 0.0
  %226 = vmatpush1.msra.mxu0 0.0
  %227 = vmatprep.subr.mxu0 0.0
  %228 = vmatpush1.msra.mxu0 0.0
  %229 = vmatprep.subr.mxu0 0.0
  %230 = vmatpush1.msra.mxu0 0.0
  %231 = vmatprep.subr.mxu0 0.0
  %232 = vmatpush1.msra.mxu0 0.0
  %233 = vmatprep.subr.mxu0 0.0
  %234 = vmatpush1.msra.mxu0 0.0
  %235 = vmatprep.subr.mxu0 0.0
  %236 = vmatpush1.msra.mxu0 0.0
  %237 = vmatprep.subr.mxu0 0.0
  %238 = vmatpush1.msra.mxu0 0.0
  %239 = vmatprep.subr.mxu0 0.0
  %240 = vmatpush1.msra.mxu0 0.0
  %241 = vmatprep.subr.mxu0 0.0
  %242 = vmatpush1.msra.mxu0 0.0
  %243 = vmatprep.subr.mxu0 0.0
  %244 = vmatpush1.msra.mxu0 0.0
  %245 = vmatprep.subr.mxu0 0.0
  %246 = vmatpush1.msra.mxu0 0.0
  %247 = vmatprep.subr.mxu0 0.0
  %248 = vmatpush1.msra.mxu0 0.0
  %249 = vmatprep.subr.mxu0 0.0
  %250 = vmatpush1.msra.mxu0 0.0
  %251 = vmatprep.subr.mxu0 0.0
  %252 = vmatpush1.msra.mxu0 0.0
  %253 = vmatprep.mubr.f32.mxu0 0.0
  %254 = vmatmul.mubr.f32.gmra.mrb[0].mxu0 %v32
  %v255 = vpop.f32.mrb[0].mxu0
  %v256 = vadd.f32 0.0, %v255
  %v257 = vpop.f32.mrb[0].mxu0
  %258 = vdwg.mxu0
  %v260 = vrot.slane %v256, 1
  %v261 = vrot.slane %v256, 2
  %v264 = vadd.f32 %v18, %v260
  %v265 = vadd.f32 %v20, %v261
  %v266 = vxor.u32 %v264, 2147483648
  %v267 = vxor.u32 %v265, 2147483648
  %v268 = vmul.f32 %v266, 1.442695
  %v269 = vpow.pop %v268
  %v270 = vmul.f32 %v267, 1.442695
  %v271 = vpow.pop %v270
  %v272 = vadd.f32 %v269, 1.0
  %v273 = vadd.f32 %v271, 1.0
  %v274 = vrcp.pop %v272
  %v275 = vmul.f32 1.0, %v274
  %v276 = vrcp.pop %v273
  %v277 = vmul.f32 1.0, %v276
  %v278 = vtanh.pop %v264
  %v279 = vtanh.pop %v265
  %v280 = vmul.f32 %v275, 0.0
  %v281 = vmul.f32 %v277, 0.0
  %284 = vrot.lane.b32.xlu0 %v278, 32
  %v285 = vpop.permute.xlu0 %284
  %286 = vrot.lane.b32.xlu0 %v279, 32
  %v287 = vpop.permute.xlu0 %286
  %v290 = vmul.f32 %v275, %v285
  %v291 = vmul.f32 %v277, %v287
  %294 = vrot.lane.b32.xlu0 %v290, 32
  %v295 = vpop.permute.xlu0 %294
  %296 = vrot.lane.b32.xlu0 %v291, 32
  %v297 = vpop.permute.xlu0 %296
  %v300 = vadd.f32 %v280, %v295
  %v301 = vadd.f32 %v281, %v297
  %v302 = vtanh.pop %v300
  %v303 = vtanh.pop %v301
  %306 = vrot.lane.b32.xlu0 %v302, 32
  %v307 = vpop.permute.xlu0 %306
  %308 = vrot.lane.b32.xlu0 %v303, 32
  %v309 = vpop.permute.xlu0 %308
  %v312 = vmul.f32 %v275, %v307
  %v313 = vmul.f32 %v277, %v309
  %314 = vset.pattern.permute.xlu0 7
  %315 = vperm.xlu0 %314, %v21
  %v316 = vpop.permute.xlu0 %315
  %v320 = vrot.slane %v312, 7
  %v321 = vrot.slane %v313, 6
  %v322 = vsel %vm166, %v321, %v320
  %323 = vrot.lane.b32.xlu0 %v322, 64
  %v324 = vpop.permute.xlu0 %323
  %v326 = vmul.f32 %v316, %v324
  %327 = vset.pattern.permute.xlu0 7
  %328 = vperm.xlu0 %327, %v172
  %v329 = vpop.permute.xlu0 %328
  %v331 = vmul.f32 %v329, 0.0
  %v332 = vadd.f32 %v326, %v331
  %v335 = vrot.slane %v300, 7
  %v336 = vrot.slane %v301, 6
  %v337 = vsel %vm166, %v336, %v335
  %338 = vrot.lane.b32.xlu0 %v337, 96
  %v339 = vpop.permute.xlu0 %338
  %v341 = vmul.f32 %v316, %v339
  %v342 = vadd.f32 %v341, %v331
  %v344 = vsel %vm30, %v179, 0
  %346 = vmatprep.subr.mxu0 0.0
  %347 = vmatpush1.msra.mxu0 %v22
  %348 = vmatprep.subr.mxu0 0.0
  %349 = vmatpush1.msra.mxu0 %v23
  %350 = vmatprep.subr.mxu0 0.0
  %351 = vmatpush1.msra.mxu0 %v24
  %352 = vmatprep.subr.mxu0 0.0
  %353 = vmatpush1.msra.mxu0 %v25
  %354 = vmatprep.subr.mxu0 0.0
  %355 = vmatpush1.msra.mxu0 0.0
  %356 = vmatprep.subr.mxu0 0.0
  %357 = vmatpush1.msra.mxu0 0.0
  %358 = vmatprep.subr.mxu0 0.0
  %359 = vmatpush1.msra.mxu0 0.0
  %360 = vmatprep.subr.mxu0 0.0
  %361 = vmatpush1.msra.mxu0 0.0
  %362 = vmatprep.subr.mxu0 0.0
  %363 = vmatpush1.msra.mxu0 0.0
  %364 = vmatprep.subr.mxu0 0.0
  %365 = vmatpush1.msra.mxu0 0.0
  %366 = vmatprep.subr.mxu0 0.0
  %367 = vmatpush1.msra.mxu0 0.0
  %368 = vmatprep.subr.mxu0 0.0
  %369 = vmatpush1.msra.mxu0 0.0
  %370 = vmatprep.subr.mxu0 0.0
  %371 = vmatpush1.msra.mxu0 0.0
  %372 = vmatprep.subr.mxu0 0.0
  %373 = vmatpush1.msra.mxu0 0.0
  %374 = vmatprep.subr.mxu0 0.0
  %375 = vmatpush1.msra.mxu0 0.0
  %376 = vmatprep.subr.mxu0 0.0
  %377 = vmatpush1.msra.mxu0 0.0
  %378 = vmatprep.subr.mxu0 0.0
  %379 = vmatpush1.msra.mxu0 0.0
  %380 = vmatprep.subr.mxu0 0.0
  %381 = vmatpush1.msra.mxu0 0.0
  %382 = vmatprep.subr.mxu0 0.0
  %383 = vmatpush1.msra.mxu0 0.0
  %384 = vmatprep.subr.mxu0 0.0
  %385 = vmatpush1.msra.mxu0 0.0
  %386 = vmatprep.subr.mxu0 0.0
  %387 = vmatpush1.msra.mxu0 0.0
  %388 = vmatprep.subr.mxu0 0.0
  %389 = vmatpush1.msra.mxu0 0.0
  %390 = vmatprep.subr.mxu0 0.0
  %391 = vmatpush1.msra.mxu0 0.0
  %392 = vmatprep.subr.mxu0 0.0
  %393 = vmatpush1.msra.mxu0 0.0
  %394 = vmatprep.subr.mxu0 0.0
  %395 = vmatpush1.msra.mxu0 0.0
  %396 = vmatprep.subr.mxu0 0.0
  %397 = vmatpush1.msra.mxu0 0.0
  %398 = vmatprep.subr.mxu0 0.0
  %399 = vmatpush1.msra.mxu0 0.0
  %400 = vmatprep.subr.mxu0 0.0
  %401 = vmatpush1.msra.mxu0 0.0
  %402 = vmatprep.subr.mxu0 0.0
  %403 = vmatpush1.msra.mxu0 0.0
  %404 = vmatprep.subr.mxu0 0.0
  %405 = vmatpush1.msra.mxu0 0.0
  %406 = vmatprep.subr.mxu0 0.0
  %407 = vmatpush1.msra.mxu0 0.0
  %408 = vmatprep.subr.mxu0 0.0
  %409 = vmatpush1.msra.mxu0 0.0
  %410 = vmatprep.mubr.f32.mxu0 0.0
  %411 = vmatmul.mubr.f32.gmra.mrb[0].mxu0 %v344
  %v412 = vpop.f32.mrb[0].mxu0
  %v413 = vadd.f32 0.0, %v412
  %v414 = vpop.f32.mrb[0].mxu0
  %415 = vdwg.mxu0
  %v417 = vrot.slane %v413, 7
  %v420 = vadd.f32 %v17, %v417
  %v421 = vadd.f32 %v19, %v413
  %v422 = vxor.u32 %v420, 2147483648
  %v423 = vxor.u32 %v421, 2147483648
  %v424 = vmul.f32 %v422, 1.442695
  %v425 = vpow.pop %v424
  %v426 = vmul.f32 %v423, 1.442695
  %v427 = vpow.pop %v426
  %v428 = vadd.f32 %v425, 1.0
  %v429 = vadd.f32 %v427, 1.0
  %v430 = vrcp.pop %v428
  %v431 = vmul.f32 1.0, %v430
  %v432 = vrcp.pop %v429
  %v433 = vmul.f32 1.0, %v432
  %v434 = vtanh.pop %v420
  %v435 = vtanh.pop %v421
  %v437 = vrot.slane %v188, 7
  %438 = vrot.lane.b32.xlu0 %v437, 32
  %v439 = vpop.permute.xlu0 %438
  %440 = vrot.lane.b32.xlu0 %v188, 32
  %v441 = vpop.permute.xlu0 %440
  %v444 = vmul.f32 %v431, %v439
  %v445 = vmul.f32 %v433, %v441
  %448 = vrot.lane.b32.xlu0 %v434, 32
  %v449 = vpop.permute.xlu0 %448
  %450 = vrot.lane.b32.xlu0 %v435, 32
  %v451 = vpop.permute.xlu0 %450
  %v454 = vmul.f32 %v431, %v449
  %v455 = vmul.f32 %v433, %v451
  %458 = vrot.lane.b32.xlu0 %v454, 32
  %v459 = vpop.permute.xlu0 %458
  %460 = vrot.lane.b32.xlu0 %v455, 32
  %v461 = vpop.permute.xlu0 %460
  %v464 = vadd.f32 %v444, %v459
  %v465 = vadd.f32 %v445, %v461
  %v466 = vtanh.pop %v464
  %v467 = vtanh.pop %v465
  %470 = vrot.lane.b32.xlu0 %v466, 32
  %v471 = vpop.permute.xlu0 %470
  %472 = vrot.lane.b32.xlu0 %v467, 32
  %v473 = vpop.permute.xlu0 %472
  %v476 = vmul.f32 %v431, %v471
  %v477 = vmul.f32 %v433, %v473
  %478 = vset.pattern.permute.xlu0 1
  %479 = vperm.xlu0 %478, %v21
  %v480 = vpop.permute.xlu0 %479
  %v484 = vrot.slane %v476, 1
  %v485 = vsel %vm166, %v477, %v484
  %486 = vrot.lane.b32.xlu0 %v485, 64
  %v487 = vpop.permute.xlu0 %486
  %v489 = vmul.f32 %v480, %v487
  %490 = vset.pattern.permute.xlu0 1
  %491 = vperm.xlu0 %490, %v172
  %v492 = vpop.permute.xlu0 %491
  %v494 = vmul.f32 %v492, %v179
  %v495 = vadd.f32 %v489, %v494
  %v498 = vrot.slane %v464, 1
  %v499 = vsel %vm166, %v465, %v498
  %500 = vrot.lane.b32.xlu0 %v499, 96
  %v501 = vpop.permute.xlu0 %500
  %v503 = vmul.f32 %v480, %v501
  %v504 = vmul.f32 %v492, %v188
  %v505 = vadd.f32 %v503, %v504
  %v507 = vsel %vm30, %v332, 0
  %509 = vmatprep.subr.mxu0 0.0
  %510 = vmatpush1.msra.mxu0 %v26
  %511 = vmatprep.subr.mxu0 0.0
  %512 = vmatpush1.msra.mxu0 %v27
  %513 = vmatprep.subr.mxu0 0.0
  %514 = vmatpush1.msra.mxu0 %v28
  %515 = vmatprep.subr.mxu0 0.0
  %516 = vmatpush1.msra.mxu0 %v29
  %517 = vmatprep.subr.mxu0 0.0
  %518 = vmatpush1.msra.mxu0 0.0
  %519 = vmatprep.subr.mxu0 0.0
  %520 = vmatpush1.msra.mxu0 0.0
  %521 = vmatprep.subr.mxu0 0.0
  %522 = vmatpush1.msra.mxu0 0.0
  %523 = vmatprep.subr.mxu0 0.0
  %524 = vmatpush1.msra.mxu0 0.0
  %525 = vmatprep.subr.mxu0 0.0
  %526 = vmatpush1.msra.mxu0 0.0
  %527 = vmatprep.subr.mxu0 0.0
  %528 = vmatpush1.msra.mxu0 0.0
  %529 = vmatprep.subr.mxu0 0.0
  %530 = vmatpush1.msra.mxu0 0.0
  %531 = vmatprep.subr.mxu0 0.0
  %532 = vmatpush1.msra.mxu0 0.0
  %533 = vmatprep.subr.mxu0 0.0
  %534 = vmatpush1.msra.mxu0 0.0
  %535 = vmatprep.subr.mxu0 0.0
  %536 = vmatpush1.msra.mxu0 0.0
  %537 = vmatprep.subr.mxu0 0.0
  %538 = vmatpush1.msra.mxu0 0.0
  %539 = vmatprep.subr.mxu0 0.0
  %540 = vmatpush1.msra.mxu0 0.0
  %541 = vmatprep.subr.mxu0 0.0
  %542 = vmatpush1.msra.mxu0 0.0
  %543 = vmatprep.subr.mxu0 0.0
  %544 = vmatpush1.msra.mxu0 0.0
  %545 = vmatprep.subr.mxu0 0.0
  %546 = vmatpush1.msra.mxu0 0.0
  %547 = vmatprep.subr.mxu0 0.0
  %548 = vmatpush1.msra.mxu0 0.0
  %549 = vmatprep.subr.mxu0 0.0
  %550 = vmatpush1.msra.mxu0 0.0
  %551 = vmatprep.subr.mxu0 0.0
  %552 = vmatpush1.msra.mxu0 0.0
  %553 = vmatprep.subr.mxu0 0.0
  %554 = vmatpush1.msra.mxu0 0.0
  %555 = vmatprep.subr.mxu0 0.0
  %556 = vmatpush1.msra.mxu0 0.0
  %557 = vmatprep.subr.mxu0 0.0
  %558 = vmatpush1.msra.mxu0 0.0
  %559 = vmatprep.subr.mxu0 0.0
  %560 = vmatpush1.msra.mxu0 0.0
  %561 = vmatprep.subr.mxu0 0.0
  %562 = vmatpush1.msra.mxu0 0.0
  %563 = vmatprep.subr.mxu0 0.0
  %564 = vmatpush1.msra.mxu0 0.0
  %565 = vmatprep.subr.mxu0 0.0
  %566 = vmatpush1.msra.mxu0 0.0
  %567 = vmatprep.subr.mxu0 0.0
  %568 = vmatpush1.msra.mxu0 0.0
  %569 = vmatprep.subr.mxu0 0.0
  %570 = vmatpush1.msra.mxu0 0.0
  %571 = vmatprep.subr.mxu0 0.0
  %572 = vmatpush1.msra.mxu0 0.0
  %573 = vmatprep.mubr.f32.mxu0 0.0
  %574 = vmatmul.mubr.f32.gmra.mrb[0].mxu0 %v507
  %v575 = vpop.f32.mrb[0].mxu0
  %v576 = vadd.f32 0.0, %v575
  %v577 = vpop.f32.mrb[0].mxu0
  %578 = vdwg.mxu0
  %v580 = vrot.slane %v576, 2
  %v581 = vrot.slane %v576, 3
  %v584 = vadd.f32 %v18, %v580
  %v585 = vadd.f32 %v20, %v581
  %v586 = vxor.u32 %v584, 2147483648
  %v587 = vxor.u32 %v585, 2147483648
  %v588 = vmul.f32 %v586, 1.442695
  %v589 = vpow.pop %v588
  %v590 = vmul.f32 %v587, 1.442695
  %v591 = vpow.pop %v590
  %v592 = vadd.f32 %v589, 1.0
  %v593 = vadd.f32 %v591, 1.0
  %v594 = vrcp.pop %v592
  %v595 = vmul.f32 1.0, %v594
  %v596 = vrcp.pop %v593
  %v597 = vmul.f32 1.0, %v596
  %v598 = vtanh.pop %v584
  %v599 = vtanh.pop %v585
  %v601 = vrot.slane %v342, 2
  %v602 = vrot.slane %v342, 3
  %603 = vrot.lane.b32.xlu0 %v601, 32
  %v604 = vpop.permute.xlu0 %603
  %605 = vrot.lane.b32.xlu0 %v602, 32
  %v606 = vpop.permute.xlu0 %605
  %v609 = vmul.f32 %v595, %v604
  %v610 = vmul.f32 %v597, %v606
  %613 = vrot.lane.b32.xlu0 %v598, 32
  %v614 = vpop.permute.xlu0 %613
  %615 = vrot.lane.b32.xlu0 %v599, 32
  %v616 = vpop.permute.xlu0 %615
  %v619 = vmul.f32 %v595, %v614
  %v620 = vmul.f32 %v597, %v616
  %623 = vrot.lane.b32.xlu0 %v619, 32
  %v624 = vpop.permute.xlu0 %623
  %625 = vrot.lane.b32.xlu0 %v620, 32
  %v626 = vpop.permute.xlu0 %625
  %v629 = vadd.f32 %v609, %v624
  %v630 = vadd.f32 %v610, %v626
  %v631 = vtanh.pop %v629
  %v632 = vtanh.pop %v630
  %635 = vrot.lane.b32.xlu0 %v631, 32
  %v636 = vpop.permute.xlu0 %635
  %637 = vrot.lane.b32.xlu0 %v632, 32
  %v638 = vpop.permute.xlu0 %637
  %v641 = vmul.f32 %v595, %v636
  %v642 = vmul.f32 %v597, %v638
  %643 = vset.pattern.permute.xlu0 6
  %644 = vperm.xlu0 %643, %v21
  %v645 = vpop.permute.xlu0 %644
  %v649 = vrot.slane %v641, 6
  %v650 = vrot.slane %v642, 5
  %v651 = vsel %vm166, %v650, %v649
  %652 = vrot.lane.b32.xlu0 %v651, 64
  %v653 = vpop.permute.xlu0 %652
  %v655 = vmul.f32 %v645, %v653
  %656 = vset.pattern.permute.xlu0 6
  %657 = vperm.xlu0 %656, %v172
  %v658 = vpop.permute.xlu0 %657
  %v660 = vmul.f32 %v658, %v332
  %v661 = vadd.f32 %v655, %v660
  %v664 = vrot.slane %v629, 6
  %v665 = vrot.slane %v630, 5
  %v666 = vsel %vm166, %v665, %v664
  %667 = vrot.lane.b32.xlu0 %v666, 96
  %v668 = vpop.permute.xlu0 %667
  %v670 = vmul.f32 %v645, %v668
  %v671 = vmul.f32 %v658, %v342
  %v672 = vadd.f32 %v670, %v671
  %v674 = vsel %vm30, %v495, 0
  %676 = vmatprep.subr.mxu0 0.0
  %677 = vmatpush1.msra.mxu0 %v22
  %678 = vmatprep.subr.mxu0 0.0
  %679 = vmatpush1.msra.mxu0 %v23
  %680 = vmatprep.subr.mxu0 0.0
  %681 = vmatpush1.msra.mxu0 %v24
  %682 = vmatprep.subr.mxu0 0.0
  %683 = vmatpush1.msra.mxu0 %v25
  %684 = vmatprep.subr.mxu0 0.0
  %685 = vmatpush1.msra.mxu0 0.0
  %686 = vmatprep.subr.mxu0 0.0
  %687 = vmatpush1.msra.mxu0 0.0
  %688 = vmatprep.subr.mxu0 0.0
  %689 = vmatpush1.msra.mxu0 0.0
  %690 = vmatprep.subr.mxu0 0.0
  %691 = vmatpush1.msra.mxu0 0.0
  %692 = vmatprep.subr.mxu0 0.0
  %693 = vmatpush1.msra.mxu0 0.0
  %694 = vmatprep.subr.mxu0 0.0
  %695 = vmatpush1.msra.mxu0 0.0
  %696 = vmatprep.subr.mxu0 0.0
  %697 = vmatpush1.msra.mxu0 0.0
  %698 = vmatprep.subr.mxu0 0.0
  %699 = vmatpush1.msra.mxu0 0.0
  %700 = vmatprep.subr.mxu0 0.0
  %701 = vmatpush1.msra.mxu0 0.0
  %702 = vmatprep.subr.mxu0 0.0
  %703 = vmatpush1.msra.mxu0 0.0
  %704 = vmatprep.subr.mxu0 0.0
  %705 = vmatpush1.msra.mxu0 0.0
  %706 = vmatprep.subr.mxu0 0.0
  %707 = vmatpush1.msra.mxu0 0.0
  %708 = vmatprep.subr.mxu0 0.0
  %709 = vmatpush1.msra.mxu0 0.0
  %710 = vmatprep.subr.mxu0 0.0
  %711 = vmatpush1.msra.mxu0 0.0
  %712 = vmatprep.subr.mxu0 0.0
  %713 = vmatpush1.msra.mxu0 0.0
  %714 = vmatprep.subr.mxu0 0.0
  %715 = vmatpush1.msra.mxu0 0.0
  %716 = vmatprep.subr.mxu0 0.0
  %717 = vmatpush1.msra.mxu0 0.0
  %718 = vmatprep.subr.mxu0 0.0
  %719 = vmatpush1.msra.mxu0 0.0
  %720 = vmatprep.subr.mxu0 0.0
  %721 = vmatpush1.msra.mxu0 0.0
  %722 = vmatprep.subr.mxu0 0.0
  %723 = vmatpush1.msra.mxu0 0.0
  %724 = vmatprep.subr.mxu0 0.0
  %725 = vmatpush1.msra.mxu0 0.0
  %726 = vmatprep.subr.mxu0 0.0
  %727 = vmatpush1.msra.mxu0 0.0
  %728 = vmatprep.subr.mxu0 0.0
  %729 = vmatpush1.msra.mxu0 0.0
  %730 = vmatprep.subr.mxu0 0.0
  %731 = vmatpush1.msra.mxu0 0.0
  %732 = vmatprep.subr.mxu0 0.0
  %733 = vmatpush1.msra.mxu0 0.0
  %734 = vmatprep.subr.mxu0 0.0
  %735 = vmatpush1.msra.mxu0 0.0
  %736 = vmatprep.subr.mxu0 0.0
  %737 = vmatpush1.msra.mxu0 0.0
  %738 = vmatprep.subr.mxu0 0.0
  %739 = vmatpush1.msra.mxu0 0.0
  %740 = vmatprep.mubr.f32.mxu0 0.0
  %741 = vmatmul.mubr.f32.gmra.mrb[0].mxu0 %v674
  %v742 = vpop.f32.mrb[0].mxu0
  %v743 = vadd.f32 0.0, %v742
  %v744 = vpop.f32.mrb[0].mxu0
  %745 = vdwg.mxu0
  %v747 = vrot.slane %v743, 6
  %v748 = vrot.slane %v743, 7
  %v751 = vadd.f32 %v17, %v747
  %v752 = vadd.f32 %v19, %v748
  %v753 = vxor.u32 %v751, 2147483648
  %v754 = vxor.u32 %v752, 2147483648
  %v755 = vmul.f32 %v753, 1.442695
  %v756 = vpow.pop %v755
  %v757 = vmul.f32 %v754, 1.442695
  %v758 = vpow.pop %v757
  %v759 = vadd.f32 %v756, 1.0
  %v760 = vadd.f32 %v758, 1.0
  %v761 = vrcp.pop %v759
  %v762 = vmul.f32 1.0, %v761
  %v763 = vrcp.pop %v760
  %v764 = vmul.f32 1.0, %v763
  %v765 = vtanh.pop %v751
  %v766 = vtanh.pop %v752
  %v768 = vrot.slane %v505, 6
  %v769 = vrot.slane %v505, 7
  %770 = vrot.lane.b32.xlu0 %v768, 32
  %v771 = vpop.permute.xlu0 %770
  %772 = vrot.lane.b32.xlu0 %v769, 32
  %v773 = vpop.permute.xlu0 %772
  %v776 = vmul.f32 %v762, %v771
  %v777 = vmul.f32 %v764, %v773
  %780 = vrot.lane.b32.xlu0 %v765, 32
  %v781 = vpop.permute.xlu0 %780
  %782 = vrot.lane.b32.xlu0 %v766, 32
  %v783 = vpop.permute.xlu0 %782
  %v786 = vmul.f32 %v762, %v781
  %v787 = vmul.f32 %v764, %v783
  %790 = vrot.lane.b32.xlu0 %v786, 32
  %v791 = vpop.permute.xlu0 %790
  %792 = vrot.lane.b32.xlu0 %v787, 32
  %v793 = vpop.permute.xlu0 %792
  %v796 = vadd.f32 %v776, %v791
  %v797 = vadd.f32 %v777, %v793
  %v798 = vtanh.pop %v796
  %v799 = vtanh.pop %v797
  %802 = vrot.lane.b32.xlu0 %v798, 32
  %v803 = vpop.permute.xlu0 %802
  %804 = vrot.lane.b32.xlu0 %v799, 32
  %v805 = vpop.permute.xlu0 %804
  %v808 = vmul.f32 %v762, %v803
  %v809 = vmul.f32 %v764, %v805
  %810 = vset.pattern.permute.xlu0 2
  %811 = vperm.xlu0 %810, %v21
  %v812 = vpop.permute.xlu0 %811
  %v816 = vrot.slane %v808, 2
  %v817 = vrot.slane %v809, 1
  %v818 = vsel %vm166, %v817, %v816
  %819 = vrot.lane.b32.xlu0 %v818, 64
  %v820 = vpop.permute.xlu0 %819
  %v822 = vmul.f32 %v812, %v820
  %823 = vset.pattern.permute.xlu0 2
  %824 = vperm.xlu0 %823, %v172
  %v825 = vpop.permute.xlu0 %824
  %v827 = vmul.f32 %v825, %v495
  %v828 = vadd.f32 %v822, %v827
  %v831 = vrot.slane %v796, 2
  %v832 = vrot.slane %v797, 1
  %v833 = vsel %vm166, %v832, %v831
  %834 = vrot.lane.b32.xlu0 %v833, 96
  %v835 = vpop.permute.xlu0 %834
  %v837 = vmul.f32 %v812, %v835
  %v838 = vmul.f32 %v825, %v505
  %v839 = vadd.f32 %v837, %v838
  %v841 = vsel %vm30, %v661, 0
  %843 = vmatprep.subr.mxu0 0.0
  %844 = vmatpush1.msra.mxu0 %v26
  %845 = vmatprep.subr.mxu0 0.0
  %846 = vmatpush1.msra.mxu0 %v27
  %847 = vmatprep.subr.mxu0 0.0
  %848 = vmatpush1.msra.mxu0 %v28
  %849 = vmatprep.subr.mxu0 0.0
  %850 = vmatpush1.msra.mxu0 %v29
  %851 = vmatprep.subr.mxu0 0.0
  %852 = vmatpush1.msra.mxu0 0.0
  %853 = vmatprep.subr.mxu0 0.0
  %854 = vmatpush1.msra.mxu0 0.0
  %855 = vmatprep.subr.mxu0 0.0
  %856 = vmatpush1.msra.mxu0 0.0
  %857 = vmatprep.subr.mxu0 0.0
  %858 = vmatpush1.msra.mxu0 0.0
  %859 = vmatprep.subr.mxu0 0.0
  %860 = vmatpush1.msra.mxu0 0.0
  %861 = vmatprep.subr.mxu0 0.0
  %862 = vmatpush1.msra.mxu0 0.0
  %863 = vmatprep.subr.mxu0 0.0
  %864 = vmatpush1.msra.mxu0 0.0
  %865 = vmatprep.subr.mxu0 0.0
  %866 = vmatpush1.msra.mxu0 0.0
  %867 = vmatprep.subr.mxu0 0.0
  %868 = vmatpush1.msra.mxu0 0.0
  %869 = vmatprep.subr.mxu0 0.0
  %870 = vmatpush1.msra.mxu0 0.0
  %871 = vmatprep.subr.mxu0 0.0
  %872 = vmatpush1.msra.mxu0 0.0
  %873 = vmatprep.subr.mxu0 0.0
  %874 = vmatpush1.msra.mxu0 0.0
  %875 = vmatprep.subr.mxu0 0.0
  %876 = vmatpush1.msra.mxu0 0.0
  %877 = vmatprep.subr.mxu0 0.0
  %878 = vmatpush1.msra.mxu0 0.0
  %879 = vmatprep.subr.mxu0 0.0
  %880 = vmatpush1.msra.mxu0 0.0
  %881 = vmatprep.subr.mxu0 0.0
  %882 = vmatpush1.msra.mxu0 0.0
  %883 = vmatprep.subr.mxu0 0.0
  %884 = vmatpush1.msra.mxu0 0.0
  %885 = vmatprep.subr.mxu0 0.0
  %886 = vmatpush1.msra.mxu0 0.0
  %887 = vmatprep.subr.mxu0 0.0
  %888 = vmatpush1.msra.mxu0 0.0
  %889 = vmatprep.subr.mxu0 0.0
  %890 = vmatpush1.msra.mxu0 0.0
  %891 = vmatprep.subr.mxu0 0.0
  %892 = vmatpush1.msra.mxu0 0.0
  %893 = vmatprep.subr.mxu0 0.0
  %894 = vmatpush1.msra.mxu0 0.0
  %895 = vmatprep.subr.mxu0 0.0
  %896 = vmatpush1.msra.mxu0 0.0
  %897 = vmatprep.subr.mxu0 0.0
  %898 = vmatpush1.msra.mxu0 0.0
  %899 = vmatprep.subr.mxu0 0.0
  %900 = vmatpush1.msra.mxu0 0.0
  %901 = vmatprep.subr.mxu0 0.0
  %902 = vmatpush1.msra.mxu0 0.0
  %903 = vmatprep.subr.mxu0 0.0
  %904 = vmatpush1.msra.mxu0 0.0
  %905 = vmatprep.subr.mxu0 0.0
  %906 = vmatpush1.msra.mxu0 0.0
  %907 = vmatprep.mubr.f32.mxu0 0.0
  %908 = vmatmul.mubr.f32.gmra.mrb[0].mxu0 %v841
  %v909 = vpop.f32.mrb[0].mxu0
  %v910 = vadd.f32 0.0, %v909
  %v911 = vpop.f32.mrb[0].mxu0
  %912 = vdwg.mxu0
  %v914 = vrot.slane %v910, 3
  %v915 = vrot.slane %v910, 4
  %v918 = vadd.f32 %v18, %v914
  %v919 = vadd.f32 %v20, %v915
  %v920 = vxor.u32 %v918, 2147483648
  %v921 = vxor.u32 %v919, 2147483648
  %v922 = vmul.f32 %v920, 1.442695
  %v923 = vpow.pop %v922
  %v924 = vmul.f32 %v921, 1.442695
  %v925 = vpow.pop %v924
  %v926 = vadd.f32 %v923, 1.0
  %v927 = vadd.f32 %v925, 1.0
  %v928 = vrcp.pop %v926
  %v929 = vmul.f32 1.0, %v928
  %v930 = vrcp.pop %v927
  %v931 = vmul.f32 1.0, %v930
  %v932 = vtanh.pop %v918
  %v933 = vtanh.pop %v919
  %v935 = vrot.slane %v672, 3
  %v936 = vrot.slane %v672, 4
  %937 = vrot.lane.b32.xlu0 %v935, 32
  %v938 = vpop.permute.xlu0 %937
  %939 = vrot.lane.b32.xlu0 %v936, 32
  %v940 = vpop.permute.xlu0 %939
  %v943 = vmul.f32 %v929, %v938
  %v944 = vmul.f32 %v931, %v940
  %947 = vrot.lane.b32.xlu0 %v932, 32
  %v948 = vpop.permute.xlu0 %947
  %949 = vrot.lane.b32.xlu0 %v933, 32
  %v950 = vpop.permute.xlu0 %949
  %v953 = vmul.f32 %v929, %v948
  %v954 = vmul.f32 %v931, %v950
  %957 = vrot.lane.b32.xlu0 %v953, 32
  %v958 = vpop.permute.xlu0 %957
  %959 = vrot.lane.b32.xlu0 %v954, 32
  %v960 = vpop.permute.xlu0 %959
  %v963 = vadd.f32 %v943, %v958
  %v964 = vadd.f32 %v944, %v960
  %v965 = vtanh.pop %v963
  %v966 = vtanh.pop %v964
  %969 = vrot.lane.b32.xlu0 %v965, 32
  %v970 = vpop.permute.xlu0 %969
  %971 = vrot.lane.b32.xlu0 %v966, 32
  %v972 = vpop.permute.xlu0 %971
  %v975 = vmul.f32 %v929, %v970
  %v976 = vmul.f32 %v931, %v972
  %977 = vset.pattern.permute.xlu0 5
  %978 = vperm.xlu0 %977, %v21
  %v979 = vpop.permute.xlu0 %978
  %v983 = vrot.slane %v975, 5
  %v984 = vrot.slane %v976, 4
  %v985 = vsel %vm166, %v984, %v983
  %986 = vrot.lane.b32.xlu0 %v985, 64
  %v987 = vpop.permute.xlu0 %986
  %v989 = vmul.f32 %v979, %v987
  %990 = vset.pattern.permute.xlu0 5
  %991 = vperm.xlu0 %990, %v172
  %v992 = vpop.permute.xlu0 %991
  %v994 = vmul.f32 %v992, %v661
  %v995 = vadd.f32 %v989, %v994
  %v998 = vrot.slane %v963, 5
  %v999 = vrot.slane %v964, 4
  %v1000 = vsel %vm166, %v999, %v998
  %1001 = vrot.lane.b32.xlu0 %v1000, 96
  %v1002 = vpop.permute.xlu0 %1001
  %v1004 = vmul.f32 %v979, %v1002
  %v1005 = vmul.f32 %v992, %v672
  %v1006 = vadd.f32 %v1004, %v1005
  %v1008 = vsel %vm30, %v828, 0
  %1010 = vmatprep.subr.mxu0 0.0
  %1011 = vmatpush1.msra.mxu0 %v22
  %1012 = vmatprep.subr.mxu0 0.0
  %1013 = vmatpush1.msra.mxu0 %v23
  %1014 = vmatprep.subr.mxu0 0.0
  %1015 = vmatpush1.msra.mxu0 %v24
  %1016 = vmatprep.subr.mxu0 0.0
  %1017 = vmatpush1.msra.mxu0 %v25
  %1018 = vmatprep.subr.mxu0 0.0
  %1019 = vmatpush1.msra.mxu0 0.0
  %1020 = vmatprep.subr.mxu0 0.0
  %1021 = vmatpush1.msra.mxu0 0.0
  %1022 = vmatprep.subr.mxu0 0.0
  %1023 = vmatpush1.msra.mxu0 0.0
  %1024 = vmatprep.subr.mxu0 0.0
  %1025 = vmatpush1.msra.mxu0 0.0
  %1026 = vmatprep.subr.mxu0 0.0
  %1027 = vmatpush1.msra.mxu0 0.0
  %1028 = vmatprep.subr.mxu0 0.0
  %1029 = vmatpush1.msra.mxu0 0.0
  %1030 = vmatprep.subr.mxu0 0.0
  %1031 = vmatpush1.msra.mxu0 0.0
  %1032 = vmatprep.subr.mxu0 0.0
  %1033 = vmatpush1.msra.mxu0 0.0
  %1034 = vmatprep.subr.mxu0 0.0
  %1035 = vmatpush1.msra.mxu0 0.0
  %1036 = vmatprep.subr.mxu0 0.0
  %1037 = vmatpush1.msra.mxu0 0.0
  %1038 = vmatprep.subr.mxu0 0.0
  %1039 = vmatpush1.msra.mxu0 0.0
  %1040 = vmatprep.subr.mxu0 0.0
  %1041 = vmatpush1.msra.mxu0 0.0
  %1042 = vmatprep.subr.mxu0 0.0
  %1043 = vmatpush1.msra.mxu0 0.0
  %1044 = vmatprep.subr.mxu0 0.0
  %1045 = vmatpush1.msra.mxu0 0.0
  %1046 = vmatprep.subr.mxu0 0.0
  %1047 = vmatpush1.msra.mxu0 0.0
  %1048 = vmatprep.subr.mxu0 0.0
  %1049 = vmatpush1.msra.mxu0 0.0
  %1050 = vmatprep.subr.mxu0 0.0
  %1051 = vmatpush1.msra.mxu0 0.0
  %1052 = vmatprep.subr.mxu0 0.0
  %1053 = vmatpush1.msra.mxu0 0.0
  %1054 = vmatprep.subr.mxu0 0.0
  %1055 = vmatpush1.msra.mxu0 0.0
  %1056 = vmatprep.subr.mxu0 0.0
  %1057 = vmatpush1.msra.mxu0 0.0
  %1058 = vmatprep.subr.mxu0 0.0
  %1059 = vmatpush1.msra.mxu0 0.0
  %1060 = vmatprep.subr.mxu0 0.0
  %1061 = vmatpush1.msra.mxu0 0.0
  %1062 = vmatprep.subr.mxu0 0.0
  %1063 = vmatpush1.msra.mxu0 0.0
  %1064 = vmatprep.subr.mxu0 0.0
  %1065 = vmatpush1.msra.mxu0 0.0
  %1066 = vmatprep.subr.mxu0 0.0
  %1067 = vmatpush1.msra.mxu0 0.0
  %1068 = vmatprep.subr.mxu0 0.0
  %1069 = vmatpush1.msra.mxu0 0.0
  %1070 = vmatprep.subr.mxu0 0.0
  %1071 = vmatpush1.msra.mxu0 0.0
  %1072 = vmatprep.subr.mxu0 0.0
  %1073 = vmatpush1.msra.mxu0 0.0
  %1074 = vmatprep.mubr.f32.mxu0 0.0
  %1075 = vmatmul.mubr.f32.gmra.mrb[0].mxu0 %v1008
  %v1076 = vpop.f32.mrb[0].mxu0
  %v1077 = vadd.f32 0.0, %v1076
  %v1078 = vpop.f32.mrb[0].mxu0
  %1079 = vdwg.mxu0
  %v1081 = vrot.slane %v1077, 5
  %v1082 = vrot.slane %v1077, 6
  %v1085 = vadd.f32 %v17, %v1081
  %v1086 = vadd.f32 %v19, %v1082
  %v1087 = vxor.u32 %v1085, 2147483648
  %v1088 = vxor.u32 %v1086, 2147483648
  %v1089 = vmul.f32 %v1087, 1.442695
  %v1090 = vpow.pop %v1089
  %v1091 = vmul.f32 %v1088, 1.442695
  %v1092 = vpow.pop %v1091
  %v1093 = vadd.f32 %v1090, 1.0
  %v1094 = vadd.f32 %v1092, 1.0
  %v1095 = vrcp.pop %v1093
  %v1096 = vmul.f32 1.0, %v1095
  %v1097 = vrcp.pop %v1094
  %v1098 = vmul.f32 1.0, %v1097
  %v1099 = vtanh.pop %v1085
  %v1100 = vtanh.pop %v1086
  %v1102 = vrot.slane %v839, 5
  %v1103 = vrot.slane %v839, 6
  %1104 = vrot.lane.b32.xlu0 %v1102, 32
  %v1105 = vpop.permute.xlu0 %1104
  %1106 = vrot.lane.b32.xlu0 %v1103, 32
  %v1107 = vpop.permute.xlu0 %1106
  %v1110 = vmul.f32 %v1096, %v1105
  %v1111 = vmul.f32 %v1098, %v1107
  %1114 = vrot.lane.b32.xlu0 %v1099, 32
  %v1115 = vpop.permute.xlu0 %1114
  %1116 = vrot.lane.b32.xlu0 %v1100, 32
  %v1117 = vpop.permute.xlu0 %1116
  %v1120 = vmul.f32 %v1096, %v1115
  %v1121 = vmul.f32 %v1098, %v1117
  %1124 = vrot.lane.b32.xlu0 %v1120, 32
  %v1125 = vpop.permute.xlu0 %1124
  %1126 = vrot.lane.b32.xlu0 %v1121, 32
  %v1127 = vpop.permute.xlu0 %1126
  %v1130 = vadd.f32 %v1110, %v1125
  %v1131 = vadd.f32 %v1111, %v1127
  %v1132 = vtanh.pop %v1130
  %v1133 = vtanh.pop %v1131
  %1136 = vrot.lane.b32.xlu0 %v1132, 32
  %v1137 = vpop.permute.xlu0 %1136
  %1138 = vrot.lane.b32.xlu0 %v1133, 32
  %v1139 = vpop.permute.xlu0 %1138
  %v1142 = vmul.f32 %v1096, %v1137
  %v1143 = vmul.f32 %v1098, %v1139
  %1144 = vset.pattern.permute.xlu0 3
  %1145 = vperm.xlu0 %1144, %v21
  %v1146 = vpop.permute.xlu0 %1145
  %v1150 = vrot.slane %v1142, 3
  %v1151 = vrot.slane %v1143, 2
  %v1152 = vsel %vm166, %v1151, %v1150
  %1153 = vrot.lane.b32.xlu0 %v1152, 64
  %v1154 = vpop.permute.xlu0 %1153
  %v1156 = vmul.f32 %v1146, %v1154
  %1157 = vset.pattern.permute.xlu0 3
  %1158 = vperm.xlu0 %1157, %v172
  %v1159 = vpop.permute.xlu0 %1158
  %v1161 = vmul.f32 %v1159, %v828
  %v1162 = vadd.f32 %v1156, %v1161
  %v1165 = vrot.slane %v1130, 3
  %v1166 = vrot.slane %v1131, 2
  %v1167 = vsel %vm166, %v1166, %v1165
  %1168 = vrot.lane.b32.xlu0 %v1167, 96
  %v1169 = vpop.permute.xlu0 %1168
  %v1171 = vmul.f32 %v1146, %v1169
  %v1172 = vmul.f32 %v1159, %v839
  %v1173 = vadd.f32 %v1171, %v1172
  %v1175 = vsel %vm30, %v995, 0
  %1177 = vmatprep.subr.mxu0 0.0
  %1178 = vmatpush1.msra.mxu0 %v26
  %1179 = vmatprep.subr.mxu0 0.0
  %1180 = vmatpush1.msra.mxu0 %v27
  %1181 = vmatprep.subr.mxu0 0.0
  %1182 = vmatpush1.msra.mxu0 %v28
  %1183 = vmatprep.subr.mxu0 0.0
  %1184 = vmatpush1.msra.mxu0 %v29
  %1185 = vmatprep.subr.mxu0 0.0
  %1186 = vmatpush1.msra.mxu0 0.0
  %1187 = vmatprep.subr.mxu0 0.0
  %1188 = vmatpush1.msra.mxu0 0.0
  %1189 = vmatprep.subr.mxu0 0.0
  %1190 = vmatpush1.msra.mxu0 0.0
  %1191 = vmatprep.subr.mxu0 0.0
  %1192 = vmatpush1.msra.mxu0 0.0
  %1193 = vmatprep.subr.mxu0 0.0
  %1194 = vmatpush1.msra.mxu0 0.0
  %1195 = vmatprep.subr.mxu0 0.0
  %1196 = vmatpush1.msra.mxu0 0.0
  %1197 = vmatprep.subr.mxu0 0.0
  %1198 = vmatpush1.msra.mxu0 0.0
  %1199 = vmatprep.subr.mxu0 0.0
  %1200 = vmatpush1.msra.mxu0 0.0
  %1201 = vmatprep.subr.mxu0 0.0
  %1202 = vmatpush1.msra.mxu0 0.0
  %1203 = vmatprep.subr.mxu0 0.0
  %1204 = vmatpush1.msra.mxu0 0.0
  %1205 = vmatprep.subr.mxu0 0.0
  %1206 = vmatpush1.msra.mxu0 0.0
  %1207 = vmatprep.subr.mxu0 0.0
  %1208 = vmatpush1.msra.mxu0 0.0
  %1209 = vmatprep.subr.mxu0 0.0
  %1210 = vmatpush1.msra.mxu0 0.0
  %1211 = vmatprep.subr.mxu0 0.0
  %1212 = vmatpush1.msra.mxu0 0.0
  %1213 = vmatprep.subr.mxu0 0.0
  %1214 = vmatpush1.msra.mxu0 0.0
  %1215 = vmatprep.subr.mxu0 0.0
  %1216 = vmatpush1.msra.mxu0 0.0
  %1217 = vmatprep.subr.mxu0 0.0
  %1218 = vmatpush1.msra.mxu0 0.0
  %1219 = vmatprep.subr.mxu0 0.0
  %1220 = vmatpush1.msra.mxu0 0.0
  %1221 = vmatprep.subr.mxu0 0.0
  %1222 = vmatpush1.msra.mxu0 0.0
  %1223 = vmatprep.subr.mxu0 0.0
  %1224 = vmatpush1.msra.mxu0 0.0
  %1225 = vmatprep.subr.mxu0 0.0
  %1226 = vmatpush1.msra.mxu0 0.0
  %1227 = vmatprep.subr.mxu0 0.0
  %1228 = vmatpush1.msra.mxu0 0.0
  %1229 = vmatprep.subr.mxu0 0.0
  %1230 = vmatpush1.msra.mxu0 0.0
  %1231 = vmatprep.subr.mxu0 0.0
  %1232 = vmatpush1.msra.mxu0 0.0
  %1233 = vmatprep.subr.mxu0 0.0
  %1234 = vmatpush1.msra.mxu0 0.0
  %1235 = vmatprep.subr.mxu0 0.0
  %1236 = vmatpush1.msra.mxu0 0.0
  %1237 = vmatprep.subr.mxu0 0.0
  %1238 = vmatpush1.msra.mxu0 0.0
  %1239 = vmatprep.subr.mxu0 0.0
  %1240 = vmatpush1.msra.mxu0 0.0
  %1241 = vmatprep.mubr.f32.mxu0 0.0
  %1242 = vmatmul.mubr.f32.gmra.mrb[0].mxu0 %v1175
  %v1243 = vpop.f32.mrb[0].mxu0
  %v1244 = vadd.f32 0.0, %v1243
  %v1245 = vpop.f32.mrb[0].mxu0
  %1246 = vdwg.mxu0
  %v1248 = vrot.slane %v1244, 4
  %v1249 = vrot.slane %v1244, 5
  %v1252 = vadd.f32 %v18, %v1248
  %v1253 = vadd.f32 %v20, %v1249
  %v1254 = vxor.u32 %v1252, 2147483648
  %v1255 = vxor.u32 %v1253, 2147483648
  %v1256 = vmul.f32 %v1254, 1.442695
  %v1257 = vpow.pop %v1256
  %v1258 = vmul.f32 %v1255, 1.442695
  %v1259 = vpow.pop %v1258
  %v1260 = vadd.f32 %v1257, 1.0
  %v1261 = vadd.f32 %v1259, 1.0
  %v1262 = vrcp.pop %v1260
  %v1263 = vmul.f32 1.0, %v1262
  %v1264 = vrcp.pop %v1261
  %v1265 = vmul.f32 1.0, %v1264
  %v1266 = vtanh.pop %v1252
  %v1267 = vtanh.pop %v1253
  %v1269 = vrot.slane %v1006, 4
  %v1270 = vrot.slane %v1006, 5
  %1271 = vrot.lane.b32.xlu0 %v1269, 32
  %v1272 = vpop.permute.xlu0 %1271
  %1273 = vrot.lane.b32.xlu0 %v1270, 32
  %v1274 = vpop.permute.xlu0 %1273
  %v1277 = vmul.f32 %v1263, %v1272
  %v1278 = vmul.f32 %v1265, %v1274
  %1281 = vrot.lane.b32.xlu0 %v1266, 32
  %v1282 = vpop.permute.xlu0 %1281
  %1283 = vrot.lane.b32.xlu0 %v1267, 32
  %v1284 = vpop.permute.xlu0 %1283
  %v1287 = vmul.f32 %v1263, %v1282
  %v1288 = vmul.f32 %v1265, %v1284
  %1291 = vrot.lane.b32.xlu0 %v1287, 32
  %v1292 = vpop.permute.xlu0 %1291
  %1293 = vrot.lane.b32.xlu0 %v1288, 32
  %v1294 = vpop.permute.xlu0 %1293
  %v1297 = vadd.f32 %v1277, %v1292
  %v1298 = vadd.f32 %v1278, %v1294
  %v1299 = vtanh.pop %v1297
  %v1300 = vtanh.pop %v1298
  %1303 = vrot.lane.b32.xlu0 %v1299, 32
  %v1304 = vpop.permute.xlu0 %1303
  %1305 = vrot.lane.b32.xlu0 %v1300, 32
  %v1306 = vpop.permute.xlu0 %1305
  %v1309 = vmul.f32 %v1263, %v1304
  %v1310 = vmul.f32 %v1265, %v1306
  %1311 = vset.pattern.permute.xlu0 4
  %1312 = vperm.xlu0 %1311, %v21
  %v1313 = vpop.permute.xlu0 %1312
  %v1317 = vrot.slane %v1309, 4
  %v1318 = vrot.slane %v1310, 3
  %v1319 = vsel %vm166, %v1318, %v1317
  %1320 = vrot.lane.b32.xlu0 %v1319, 64
  %v1321 = vpop.permute.xlu0 %1320
  %v1323 = vmul.f32 %v1313, %v1321
  %1324 = vset.pattern.permute.xlu0 4
  %1325 = vperm.xlu0 %1324, %v172
  %v1326 = vpop.permute.xlu0 %1325
  %v1328 = vmul.f32 %v1326, %v995
  %v1329 = vadd.f32 %v1323, %v1328
  %v1332 = vrot.slane %v1297, 4
  %v1333 = vrot.slane %v1298, 3
  %v1334 = vsel %vm166, %v1333, %v1332
  %1335 = vrot.lane.b32.xlu0 %v1334, 96
  %v1336 = vpop.permute.xlu0 %1335
  %v1338 = vmul.f32 %v1313, %v1336
  %v1339 = vmul.f32 %v1326, %v1006
  %v1340 = vadd.f32 %v1338, %v1339
  %v1342 = vsel %vm30, %v1162, 0
  %1344 = vmatprep.subr.mxu0 0.0
  %1345 = vmatpush1.msra.mxu0 %v22
  %1346 = vmatprep.subr.mxu0 0.0
  %1347 = vmatpush1.msra.mxu0 %v23
  %1348 = vmatprep.subr.mxu0 0.0
  %1349 = vmatpush1.msra.mxu0 %v24
  %1350 = vmatprep.subr.mxu0 0.0
  %1351 = vmatpush1.msra.mxu0 %v25
  %1352 = vmatprep.subr.mxu0 0.0
  %1353 = vmatpush1.msra.mxu0 0.0
  %1354 = vmatprep.subr.mxu0 0.0
  %1355 = vmatpush1.msra.mxu0 0.0
  %1356 = vmatprep.subr.mxu0 0.0
  %1357 = vmatpush1.msra.mxu0 0.0
  %1358 = vmatprep.subr.mxu0 0.0
  %1359 = vmatpush1.msra.mxu0 0.0
  %1360 = vmatprep.subr.mxu0 0.0
  %1361 = vmatpush1.msra.mxu0 0.0
  %1362 = vmatprep.subr.mxu0 0.0
  %1363 = vmatpush1.msra.mxu0 0.0
  %1364 = vmatprep.subr.mxu0 0.0
  %1365 = vmatpush1.msra.mxu0 0.0
  %1366 = vmatprep.subr.mxu0 0.0
  %1367 = vmatpush1.msra.mxu0 0.0
  %1368 = vmatprep.subr.mxu0 0.0
  %1369 = vmatpush1.msra.mxu0 0.0
  %1370 = vmatprep.subr.mxu0 0.0
  %1371 = vmatpush1.msra.mxu0 0.0
  %1372 = vmatprep.subr.mxu0 0.0
  %1373 = vmatpush1.msra.mxu0 0.0
  %1374 = vmatprep.subr.mxu0 0.0
  %1375 = vmatpush1.msra.mxu0 0.0
  %1376 = vmatprep.subr.mxu0 0.0
  %1377 = vmatpush1.msra.mxu0 0.0
  %1378 = vmatprep.subr.mxu0 0.0
  %1379 = vmatpush1.msra.mxu0 0.0
  %1380 = vmatprep.subr.mxu0 0.0
  %1381 = vmatpush1.msra.mxu0 0.0
  %1382 = vmatprep.subr.mxu0 0.0
  %1383 = vmatpush1.msra.mxu0 0.0
  %1384 = vmatprep.subr.mxu0 0.0
  %1385 = vmatpush1.msra.mxu0 0.0
  %1386 = vmatprep.subr.mxu0 0.0
  %1387 = vmatpush1.msra.mxu0 0.0
  %1388 = vmatprep.subr.mxu0 0.0
  %1389 = vmatpush1.msra.mxu0 0.0
  %1390 = vmatprep.subr.mxu0 0.0
  %1391 = vmatpush1.msra.mxu0 0.0
  %1392 = vmatprep.subr.mxu0 0.0
  %1393 = vmatpush1.msra.mxu0 0.0
  %1394 = vmatprep.subr.mxu0 0.0
  %1395 = vmatpush1.msra.mxu0 0.0
  %1396 = vmatprep.subr.mxu0 0.0
  %1397 = vmatpush1.msra.mxu0 0.0
  %1398 = vmatprep.subr.mxu0 0.0
  %1399 = vmatpush1.msra.mxu0 0.0
  %1400 = vmatprep.subr.mxu0 0.0
  %1401 = vmatpush1.msra.mxu0 0.0
  %1402 = vmatprep.subr.mxu0 0.0
  %1403 = vmatpush1.msra.mxu0 0.0
  %1404 = vmatprep.subr.mxu0 0.0
  %1405 = vmatpush1.msra.mxu0 0.0
  %1406 = vmatprep.subr.mxu0 0.0
  %1407 = vmatpush1.msra.mxu0 0.0
  %1408 = vmatprep.mubr.f32.mxu0 0.0
  %1409 = vmatmul.mubr.f32.gmra.mrb[0].mxu0 %v1342
  %v1410 = vpop.f32.mrb[0].mxu0
  %v1411 = vadd.f32 0.0, %v1410
  %v1412 = vpop.f32.mrb[0].mxu0
  %1413 = vdwg.mxu0
  %v1415 = vrot.slane %v1411, 4
  %v1416 = vrot.slane %v1411, 5
  %v1419 = vadd.f32 %v17, %v1415
  %v1420 = vadd.f32 %v19, %v1416
  %v1421 = vxor.u32 %v1419, 2147483648
  %v1422 = vxor.u32 %v1420, 2147483648
  %v1423 = vmul.f32 %v1421, 1.442695
  %v1424 = vpow.pop %v1423
  %v1425 = vmul.f32 %v1422, 1.442695
  %v1426 = vpow.pop %v1425
  %v1427 = vadd.f32 %v1424, 1.0
  %v1428 = vadd.f32 %v1426, 1.0
  %v1429 = vrcp.pop %v1427
  %v1430 = vmul.f32 1.0, %v1429
  %v1431 = vrcp.pop %v1428
  %v1432 = vmul.f32 1.0, %v1431
  %v1433 = vtanh.pop %v1419
  %v1434 = vtanh.pop %v1420
  %v1436 = vrot.slane %v1173, 4
  %v1437 = vrot.slane %v1173, 5
  %1438 = vrot.lane.b32.xlu0 %v1436, 32
  %v1439 = vpop.permute.xlu0 %1438
  %1440 = vrot.lane.b32.xlu0 %v1437, 32
  %v1441 = vpop.permute.xlu0 %1440
  %v1444 = vmul.f32 %v1430, %v1439
  %v1445 = vmul.f32 %v1432, %v1441
  %1448 = vrot.lane.b32.xlu0 %v1433, 32
  %v1449 = vpop.permute.xlu0 %1448
  %1450 = vrot.lane.b32.xlu0 %v1434, 32
  %v1451 = vpop.permute.xlu0 %1450
  %v1454 = vmul.f32 %v1430, %v1449
  %v1455 = vmul.f32 %v1432, %v1451
  %1458 = vrot.lane.b32.xlu0 %v1454, 32
  %v1459 = vpop.permute.xlu0 %1458
  %1460 = vrot.lane.b32.xlu0 %v1455, 32
  %v1461 = vpop.permute.xlu0 %1460
  %v1464 = vadd.f32 %v1444, %v1459
  %v1465 = vadd.f32 %v1445, %v1461
  %v1466 = vtanh.pop %v1464
  %v1467 = vtanh.pop %v1465
  %1470 = vrot.lane.b32.xlu0 %v1466, 32
  %v1471 = vpop.permute.xlu0 %1470
  %1472 = vrot.lane.b32.xlu0 %v1467, 32
  %v1473 = vpop.permute.xlu0 %1472
  %v1476 = vmul.f32 %v1430, %v1471
  %v1477 = vmul.f32 %v1432, %v1473
  %v1480 = vrot.slane %v1476, 4
  %v1481 = vrot.slane %v1477, 3
  %v1482 = vsel %vm166, %v1481, %v1480
  %1483 = vrot.lane.b32.xlu0 %v1482, 64
  %v1484 = vpop.permute.xlu0 %1483
  %v1486 = vmul.f32 %v1313, %v1484
  %v1487 = vmul.f32 %v1326, %v1162
  %v1488 = vadd.f32 %v1486, %v1487
  %v1491 = vrot.slane %v1464, 4
  %v1492 = vrot.slane %v1465, 3
  %v1493 = vsel %vm166, %v1492, %v1491
  %1494 = vrot.lane.b32.xlu0 %v1493, 96
  %v1495 = vpop.permute.xlu0 %1494
  %v1497 = vmul.f32 %v1313, %v1495
  %v1498 = vmul.f32 %v1326, %v1173
  %v1499 = vadd.f32 %v1497, %v1498
  %v1501 = vsel %vm30, %v1329, 0
  %1503 = vmatprep.subr.mxu0 0.0
  %1504 = vmatpush1.msra.mxu0 %v26
  %1505 = vmatprep.subr.mxu0 0.0
  %1506 = vmatpush1.msra.mxu0 %v27
  %1507 = vmatprep.subr.mxu0 0.0
  %1508 = vmatpush1.msra.mxu0 %v28
  %1509 = vmatprep.subr.mxu0 0.0
  %1510 = vmatpush1.msra.mxu0 %v29
  %1511 = vmatprep.subr.mxu0 0.0
  %1512 = vmatpush1.msra.mxu0 0.0
  %1513 = vmatprep.subr.mxu0 0.0
  %1514 = vmatpush1.msra.mxu0 0.0
  %1515 = vmatprep.subr.mxu0 0.0
  %1516 = vmatpush1.msra.mxu0 0.0
  %1517 = vmatprep.subr.mxu0 0.0
  %1518 = vmatpush1.msra.mxu0 0.0
  %1519 = vmatprep.subr.mxu0 0.0
  %1520 = vmatpush1.msra.mxu0 0.0
  %1521 = vmatprep.subr.mxu0 0.0
  %1522 = vmatpush1.msra.mxu0 0.0
  %1523 = vmatprep.subr.mxu0 0.0
  %1524 = vmatpush1.msra.mxu0 0.0
  %1525 = vmatprep.subr.mxu0 0.0
  %1526 = vmatpush1.msra.mxu0 0.0
  %1527 = vmatprep.subr.mxu0 0.0
  %1528 = vmatpush1.msra.mxu0 0.0
  %1529 = vmatprep.subr.mxu0 0.0
  %1530 = vmatpush1.msra.mxu0 0.0
  %1531 = vmatprep.subr.mxu0 0.0
  %1532 = vmatpush1.msra.mxu0 0.0
  %1533 = vmatprep.subr.mxu0 0.0
  %1534 = vmatpush1.msra.mxu0 0.0
  %1535 = vmatprep.subr.mxu0 0.0
  %1536 = vmatpush1.msra.mxu0 0.0
  %1537 = vmatprep.subr.mxu0 0.0
  %1538 = vmatpush1.msra.mxu0 0.0
  %1539 = vmatprep.subr.mxu0 0.0
  %1540 = vmatpush1.msra.mxu0 0.0
  %1541 = vmatprep.subr.mxu0 0.0
  %1542 = vmatpush1.msra.mxu0 0.0
  %1543 = vmatprep.subr.mxu0 0.0
  %1544 = vmatpush1.msra.mxu0 0.0
  %1545 = vmatprep.subr.mxu0 0.0
  %1546 = vmatpush1.msra.mxu0 0.0
  %1547 = vmatprep.subr.mxu0 0.0
  %1548 = vmatpush1.msra.mxu0 0.0
  %1549 = vmatprep.subr.mxu0 0.0
  %1550 = vmatpush1.msra.mxu0 0.0
  %1551 = vmatprep.subr.mxu0 0.0
  %1552 = vmatpush1.msra.mxu0 0.0
  %1553 = vmatprep.subr.mxu0 0.0
  %1554 = vmatpush1.msra.mxu0 0.0
  %1555 = vmatprep.subr.mxu0 0.0
  %1556 = vmatpush1.msra.mxu0 0.0
  %1557 = vmatprep.subr.mxu0 0.0
  %1558 = vmatpush1.msra.mxu0 0.0
  %1559 = vmatprep.subr.mxu0 0.0
  %1560 = vmatpush1.msra.mxu0 0.0
  %1561 = vmatprep.subr.mxu0 0.0
  %1562 = vmatpush1.msra.mxu0 0.0
  %1563 = vmatprep.subr.mxu0 0.0
  %1564 = vmatpush1.msra.mxu0 0.0
  %1565 = vmatprep.subr.mxu0 0.0
  %1566 = vmatpush1.msra.mxu0 0.0
  %1567 = vmatprep.mubr.f32.mxu0 0.0
  %1568 = vmatmul.mubr.f32.gmra.mrb[0].mxu0 %v1501
  %v1569 = vpop.f32.mrb[0].mxu0
  %v1570 = vadd.f32 0.0, %v1569
  %v1571 = vpop.f32.mrb[0].mxu0
  %1572 = vdwg.mxu0
  %v1574 = vrot.slane %v1570, 5
  %v1575 = vrot.slane %v1570, 6
  %v1578 = vadd.f32 %v18, %v1574
  %v1579 = vadd.f32 %v20, %v1575
  %v1580 = vxor.u32 %v1578, 2147483648
  %v1581 = vxor.u32 %v1579, 2147483648
  %v1582 = vmul.f32 %v1580, 1.442695
  %v1583 = vpow.pop %v1582
  %v1584 = vmul.f32 %v1581, 1.442695
  %v1585 = vpow.pop %v1584
  %v1586 = vadd.f32 %v1583, 1.0
  %v1587 = vadd.f32 %v1585, 1.0
  %v1588 = vrcp.pop %v1586
  %v1589 = vmul.f32 1.0, %v1588
  %v1590 = vrcp.pop %v1587
  %v1591 = vmul.f32 1.0, %v1590
  %v1592 = vtanh.pop %v1578
  %v1593 = vtanh.pop %v1579
  %v1595 = vrot.slane %v1340, 5
  %v1596 = vrot.slane %v1340, 6
  %1597 = vrot.lane.b32.xlu0 %v1595, 32
  %v1598 = vpop.permute.xlu0 %1597
  %1599 = vrot.lane.b32.xlu0 %v1596, 32
  %v1600 = vpop.permute.xlu0 %1599
  %v1603 = vmul.f32 %v1589, %v1598
  %v1604 = vmul.f32 %v1591, %v1600
  %1607 = vrot.lane.b32.xlu0 %v1592, 32
  %v1608 = vpop.permute.xlu0 %1607
  %1609 = vrot.lane.b32.xlu0 %v1593, 32
  %v1610 = vpop.permute.xlu0 %1609
  %v1613 = vmul.f32 %v1589, %v1608
  %v1614 = vmul.f32 %v1591, %v1610
  %1617 = vrot.lane.b32.xlu0 %v1613, 32
  %v1618 = vpop.permute.xlu0 %1617
  %1619 = vrot.lane.b32.xlu0 %v1614, 32
  %v1620 = vpop.permute.xlu0 %1619
  %v1623 = vadd.f32 %v1603, %v1618
  %v1624 = vadd.f32 %v1604, %v1620
  %v1625 = vtanh.pop %v1623
  %v1626 = vtanh.pop %v1624
  %1629 = vrot.lane.b32.xlu0 %v1625, 32
  %v1630 = vpop.permute.xlu0 %1629
  %1631 = vrot.lane.b32.xlu0 %v1626, 32
  %v1632 = vpop.permute.xlu0 %1631
  %v1635 = vmul.f32 %v1589, %v1630
  %v1636 = vmul.f32 %v1591, %v1632
  %v1639 = vrot.slane %v1635, 3
  %v1640 = vrot.slane %v1636, 2
  %v1641 = vsel %vm166, %v1640, %v1639
  %1642 = vrot.lane.b32.xlu0 %v1641, 64
  %v1643 = vpop.permute.xlu0 %1642
  %v1645 = vmul.f32 %v1146, %v1643
  %v1646 = vmul.f32 %v1159, %v1329
  %v1647 = vadd.f32 %v1645, %v1646
  %v1650 = vrot.slane %v1623, 3
  %v1651 = vrot.slane %v1624, 2
  %v1652 = vsel %vm166, %v1651, %v1650
  %1653 = vrot.lane.b32.xlu0 %v1652, 96
  %v1654 = vpop.permute.xlu0 %1653
  %v1656 = vmul.f32 %v1146, %v1654
  %v1657 = vmul.f32 %v1159, %v1340
  %v1658 = vadd.f32 %v1656, %v1657
  %v1660 = vsel %vm30, %v1488, 0
  %1662 = vmatprep.subr.mxu0 0.0
  %1663 = vmatpush1.msra.mxu0 %v22
  %1664 = vmatprep.subr.mxu0 0.0
  %1665 = vmatpush1.msra.mxu0 %v23
  %1666 = vmatprep.subr.mxu0 0.0
  %1667 = vmatpush1.msra.mxu0 %v24
  %1668 = vmatprep.subr.mxu0 0.0
  %1669 = vmatpush1.msra.mxu0 %v25
  %1670 = vmatprep.subr.mxu0 0.0
  %1671 = vmatpush1.msra.mxu0 0.0
  %1672 = vmatprep.subr.mxu0 0.0
  %1673 = vmatpush1.msra.mxu0 0.0
  %1674 = vmatprep.subr.mxu0 0.0
  %1675 = vmatpush1.msra.mxu0 0.0
  %1676 = vmatprep.subr.mxu0 0.0
  %1677 = vmatpush1.msra.mxu0 0.0
  %1678 = vmatprep.subr.mxu0 0.0
  %1679 = vmatpush1.msra.mxu0 0.0
  %1680 = vmatprep.subr.mxu0 0.0
  %1681 = vmatpush1.msra.mxu0 0.0
  %1682 = vmatprep.subr.mxu0 0.0
  %1683 = vmatpush1.msra.mxu0 0.0
  %1684 = vmatprep.subr.mxu0 0.0
  %1685 = vmatpush1.msra.mxu0 0.0
  %1686 = vmatprep.subr.mxu0 0.0
  %1687 = vmatpush1.msra.mxu0 0.0
  %1688 = vmatprep.subr.mxu0 0.0
  %1689 = vmatpush1.msra.mxu0 0.0
  %1690 = vmatprep.subr.mxu0 0.0
  %1691 = vmatpush1.msra.mxu0 0.0
  %1692 = vmatprep.subr.mxu0 0.0
  %1693 = vmatpush1.msra.mxu0 0.0
  %1694 = vmatprep.subr.mxu0 0.0
  %1695 = vmatpush1.msra.mxu0 0.0
  %1696 = vmatprep.subr.mxu0 0.0
  %1697 = vmatpush1.msra.mxu0 0.0
  %1698 = vmatprep.subr.mxu0 0.0
  %1699 = vmatpush1.msra.mxu0 0.0
  %1700 = vmatprep.subr.mxu0 0.0
  %1701 = vmatpush1.msra.mxu0 0.0
  %1702 = vmatprep.subr.mxu0 0.0
  %1703 = vmatpush1.msra.mxu0 0.0
  %1704 = vmatprep.subr.mxu0 0.0
  %1705 = vmatpush1.msra.mxu0 0.0
  %1706 = vmatprep.subr.mxu0 0.0
  %1707 = vmatpush1.msra.mxu0 0.0
  %1708 = vmatprep.subr.mxu0 0.0
  %1709 = vmatpush1.msra.mxu0 0.0
  %1710 = vmatprep.subr.mxu0 0.0
  %1711 = vmatpush1.msra.mxu0 0.0
  %1712 = vmatprep.subr.mxu0 0.0
  %1713 = vmatpush1.msra.mxu0 0.0
  %1714 = vmatprep.subr.mxu0 0.0
  %1715 = vmatpush1.msra.mxu0 0.0
  %1716 = vmatprep.subr.mxu0 0.0
  %1717 = vmatpush1.msra.mxu0 0.0
  %1718 = vmatprep.subr.mxu0 0.0
  %1719 = vmatpush1.msra.mxu0 0.0
  %1720 = vmatprep.subr.mxu0 0.0
  %1721 = vmatpush1.msra.mxu0 0.0
  %1722 = vmatprep.subr.mxu0 0.0
  %1723 = vmatpush1.msra.mxu0 0.0
  %1724 = vmatprep.subr.mxu0 0.0
  %1725 = vmatpush1.msra.mxu0 0.0
  %1726 = vmatprep.mubr.f32.mxu0 0.0
  %1727 = vmatmul.mubr.f32.gmra.mrb[0].mxu0 %v1660
  %v1728 = vpop.f32.mrb[0].mxu0
  %v1729 = vadd.f32 0.0, %v1728
  %v1730 = vpop.f32.mrb[0].mxu0
  %1731 = vdwg.mxu0
  %v1733 = vrot.slane %v1729, 3
  %v1734 = vrot.slane %v1729, 4
  %v1737 = vadd.f32 %v17, %v1733
  %v1738 = vadd.f32 %v19, %v1734
  %v1739 = vxor.u32 %v1737, 2147483648
  %v1740 = vxor.u32 %v1738, 2147483648
  %v1741 = vmul.f32 %v1739, 1.442695
  %v1742 = vpow.pop %v1741
  %v1743 = vmul.f32 %v1740, 1.442695
  %v1744 = vpow.pop %v1743
  %v1745 = vadd.f32 %v1742, 1.0
  %v1746 = vadd.f32 %v1744, 1.0
  %v1747 = vrcp.pop %v1745
  %v1748 = vmul.f32 1.0, %v1747
  %v1749 = vrcp.pop %v1746
  %v1750 = vmul.f32 1.0, %v1749
  %v1751 = vtanh.pop %v1737
  %v1752 = vtanh.pop %v1738
  %v1754 = vrot.slane %v1499, 3
  %v1755 = vrot.slane %v1499, 4
  %1756 = vrot.lane.b32.xlu0 %v1754, 32
  %v1757 = vpop.permute.xlu0 %1756
  %1758 = vrot.lane.b32.xlu0 %v1755, 32
  %v1759 = vpop.permute.xlu0 %1758
  %v1762 = vmul.f32 %v1748, %v1757
  %v1763 = vmul.f32 %v1750, %v1759
  %1766 = vrot.lane.b32.xlu0 %v1751, 32
  %v1767 = vpop.permute.xlu0 %1766
  %1768 = vrot.lane.b32.xlu0 %v1752, 32
  %v1769 = vpop.permute.xlu0 %1768
  %v1772 = vmul.f32 %v1748, %v1767
  %v1773 = vmul.f32 %v1750, %v1769
  %1776 = vrot.lane.b32.xlu0 %v1772, 32
  %v1777 = vpop.permute.xlu0 %1776
  %1778 = vrot.lane.b32.xlu0 %v1773, 32
  %v1779 = vpop.permute.xlu0 %1778
  %v1782 = vadd.f32 %v1762, %v1777
  %v1783 = vadd.f32 %v1763, %v1779
  %v1784 = vtanh.pop %v1782
  %v1785 = vtanh.pop %v1783
  %1788 = vrot.lane.b32.xlu0 %v1784, 32
  %v1789 = vpop.permute.xlu0 %1788
  %1790 = vrot.lane.b32.xlu0 %v1785, 32
  %v1791 = vpop.permute.xlu0 %1790
  %v1794 = vmul.f32 %v1748, %v1789
  %v1795 = vmul.f32 %v1750, %v1791
  %v1798 = vrot.slane %v1794, 5
  %v1799 = vrot.slane %v1795, 4
  %v1800 = vsel %vm166, %v1799, %v1798
  %1801 = vrot.lane.b32.xlu0 %v1800, 64
  %v1802 = vpop.permute.xlu0 %1801
  %v1804 = vmul.f32 %v979, %v1802
  %v1805 = vmul.f32 %v992, %v1488
  %v1806 = vadd.f32 %v1804, %v1805
  %v1809 = vrot.slane %v1782, 5
  %v1810 = vrot.slane %v1783, 4
  %v1811 = vsel %vm166, %v1810, %v1809
  %1812 = vrot.lane.b32.xlu0 %v1811, 96
  %v1813 = vpop.permute.xlu0 %1812
  %v1815 = vmul.f32 %v979, %v1813
  %v1816 = vmul.f32 %v992, %v1499
  %v1817 = vadd.f32 %v1815, %v1816
  %v1819 = vsel %vm30, %v1647, 0
  %1821 = vmatprep.subr.mxu0 0.0
  %1822 = vmatpush1.msra.mxu0 %v26
  %1823 = vmatprep.subr.mxu0 0.0
  %1824 = vmatpush1.msra.mxu0 %v27
  %1825 = vmatprep.subr.mxu0 0.0
  %1826 = vmatpush1.msra.mxu0 %v28
  %1827 = vmatprep.subr.mxu0 0.0
  %1828 = vmatpush1.msra.mxu0 %v29
  %1829 = vmatprep.subr.mxu0 0.0
  %1830 = vmatpush1.msra.mxu0 0.0
  %1831 = vmatprep.subr.mxu0 0.0
  %1832 = vmatpush1.msra.mxu0 0.0
  %1833 = vmatprep.subr.mxu0 0.0
  %1834 = vmatpush1.msra.mxu0 0.0
  %1835 = vmatprep.subr.mxu0 0.0
  %1836 = vmatpush1.msra.mxu0 0.0
  %1837 = vmatprep.subr.mxu0 0.0
  %1838 = vmatpush1.msra.mxu0 0.0
  %1839 = vmatprep.subr.mxu0 0.0
  %1840 = vmatpush1.msra.mxu0 0.0
  %1841 = vmatprep.subr.mxu0 0.0
  %1842 = vmatpush1.msra.mxu0 0.0
  %1843 = vmatprep.subr.mxu0 0.0
  %1844 = vmatpush1.msra.mxu0 0.0
  %1845 = vmatprep.subr.mxu0 0.0
  %1846 = vmatpush1.msra.mxu0 0.0
  %1847 = vmatprep.subr.mxu0 0.0
  %1848 = vmatpush1.msra.mxu0 0.0
  %1849 = vmatprep.subr.mxu0 0.0
  %1850 = vmatpush1.msra.mxu0 0.0
  %1851 = vmatprep.subr.mxu0 0.0
  %1852 = vmatpush1.msra.mxu0 0.0
  %1853 = vmatprep.subr.mxu0 0.0
  %1854 = vmatpush1.msra.mxu0 0.0
  %1855 = vmatprep.subr.mxu0 0.0
  %1856 = vmatpush1.msra.mxu0 0.0
  %1857 = vmatprep.subr.mxu0 0.0
  %1858 = vmatpush1.msra.mxu0 0.0
  %1859 = vmatprep.subr.mxu0 0.0
  %1860 = vmatpush1.msra.mxu0 0.0
  %1861 = vmatprep.subr.mxu0 0.0
  %1862 = vmatpush1.msra.mxu0 0.0
  %1863 = vmatprep.subr.mxu0 0.0
  %1864 = vmatpush1.msra.mxu0 0.0
  %1865 = vmatprep.subr.mxu0 0.0
  %1866 = vmatpush1.msra.mxu0 0.0
  %1867 = vmatprep.subr.mxu0 0.0
  %1868 = vmatpush1.msra.mxu0 0.0
  %1869 = vmatprep.subr.mxu0 0.0
  %1870 = vmatpush1.msra.mxu0 0.0
  %1871 = vmatprep.subr.mxu0 0.0
  %1872 = vmatpush1.msra.mxu0 0.0
  %1873 = vmatprep.subr.mxu0 0.0
  %1874 = vmatpush1.msra.mxu0 0.0
  %1875 = vmatprep.subr.mxu0 0.0
  %1876 = vmatpush1.msra.mxu0 0.0
  %1877 = vmatprep.subr.mxu0 0.0
  %1878 = vmatpush1.msra.mxu0 0.0
  %1879 = vmatprep.subr.mxu0 0.0
  %1880 = vmatpush1.msra.mxu0 0.0
  %1881 = vmatprep.subr.mxu0 0.0
  %1882 = vmatpush1.msra.mxu0 0.0
  %1883 = vmatprep.subr.mxu0 0.0
  %1884 = vmatpush1.msra.mxu0 0.0
  %1885 = vmatprep.mubr.f32.mxu0 0.0
  %1886 = vmatmul.mubr.f32.gmra.mrb[0].mxu0 %v1819
  %v1887 = vpop.f32.mrb[0].mxu0
  %v1888 = vadd.f32 0.0, %v1887
  %v1889 = vpop.f32.mrb[0].mxu0
  %1890 = vdwg.mxu0
  %v1892 = vrot.slane %v1888, 6
  %v1893 = vrot.slane %v1888, 7
  %v1896 = vadd.f32 %v18, %v1892
  %v1897 = vadd.f32 %v20, %v1893
  %v1898 = vxor.u32 %v1896, 2147483648
  %v1899 = vxor.u32 %v1897, 2147483648
  %v1900 = vmul.f32 %v1898, 1.442695
  %v1901 = vpow.pop %v1900
  %v1902 = vmul.f32 %v1899, 1.442695
  %v1903 = vpow.pop %v1902
  %v1904 = vadd.f32 %v1901, 1.0
  %v1905 = vadd.f32 %v1903, 1.0
  %v1906 = vrcp.pop %v1904
  %v1907 = vmul.f32 1.0, %v1906
  %v1908 = vrcp.pop %v1905
  %v1909 = vmul.f32 1.0, %v1908
  %v1910 = vtanh.pop %v1896
  %v1911 = vtanh.pop %v1897
  %v1913 = vrot.slane %v1658, 6
  %v1914 = vrot.slane %v1658, 7
  %1915 = vrot.lane.b32.xlu0 %v1913, 32
  %v1916 = vpop.permute.xlu0 %1915
  %1917 = vrot.lane.b32.xlu0 %v1914, 32
  %v1918 = vpop.permute.xlu0 %1917
  %v1921 = vmul.f32 %v1907, %v1916
  %v1922 = vmul.f32 %v1909, %v1918
  %1925 = vrot.lane.b32.xlu0 %v1910, 32
  %v1926 = vpop.permute.xlu0 %1925
  %1927 = vrot.lane.b32.xlu0 %v1911, 32
  %v1928 = vpop.permute.xlu0 %1927
  %v1931 = vmul.f32 %v1907, %v1926
  %v1932 = vmul.f32 %v1909, %v1928
  %1935 = vrot.lane.b32.xlu0 %v1931, 32
  %v1936 = vpop.permute.xlu0 %1935
  %1937 = vrot.lane.b32.xlu0 %v1932, 32
  %v1938 = vpop.permute.xlu0 %1937
  %v1941 = vadd.f32 %v1921, %v1936
  %v1942 = vadd.f32 %v1922, %v1938
  %v1943 = vtanh.pop %v1941
  %v1944 = vtanh.pop %v1942
  %1947 = vrot.lane.b32.xlu0 %v1943, 32
  %v1948 = vpop.permute.xlu0 %1947
  %1949 = vrot.lane.b32.xlu0 %v1944, 32
  %v1950 = vpop.permute.xlu0 %1949
  %v1953 = vmul.f32 %v1907, %v1948
  %v1954 = vmul.f32 %v1909, %v1950
  %v1957 = vrot.slane %v1953, 2
  %v1958 = vrot.slane %v1954, 1
  %v1959 = vsel %vm166, %v1958, %v1957
  %1960 = vrot.lane.b32.xlu0 %v1959, 64
  %v1961 = vpop.permute.xlu0 %1960
  %v1963 = vmul.f32 %v812, %v1961
  %v1964 = vmul.f32 %v825, %v1647
  %v1965 = vadd.f32 %v1963, %v1964
  %v1968 = vrot.slane %v1941, 2
  %v1969 = vrot.slane %v1942, 1
  %v1970 = vsel %vm166, %v1969, %v1968
  %1971 = vrot.lane.b32.xlu0 %v1970, 96
  %v1972 = vpop.permute.xlu0 %1971
  %v1974 = vmul.f32 %v812, %v1972
  %v1975 = vmul.f32 %v825, %v1658
  %v1976 = vadd.f32 %v1974, %v1975
  %v1978 = vsel %vm30, %v1806, 0
  %1980 = vmatprep.subr.mxu0 0.0
  %1981 = vmatpush1.msra.mxu0 %v22
  %1982 = vmatprep.subr.mxu0 0.0
  %1983 = vmatpush1.msra.mxu0 %v23
  %1984 = vmatprep.subr.mxu0 0.0
  %1985 = vmatpush1.msra.mxu0 %v24
  %1986 = vmatprep.subr.mxu0 0.0
  %1987 = vmatpush1.msra.mxu0 %v25
  %1988 = vmatprep.subr.mxu0 0.0
  %1989 = vmatpush1.msra.mxu0 0.0
  %1990 = vmatprep.subr.mxu0 0.0
  %1991 = vmatpush1.msra.mxu0 0.0
  %1992 = vmatprep.subr.mxu0 0.0
  %1993 = vmatpush1.msra.mxu0 0.0
  %1994 = vmatprep.subr.mxu0 0.0
  %1995 = vmatpush1.msra.mxu0 0.0
  %1996 = vmatprep.subr.mxu0 0.0
  %1997 = vmatpush1.msra.mxu0 0.0
  %1998 = vmatprep.subr.mxu0 0.0
  %1999 = vmatpush1.msra.mxu0 0.0
  %2000 = vmatprep.subr.mxu0 0.0
  %2001 = vmatpush1.msra.mxu0 0.0
  %2002 = vmatprep.subr.mxu0 0.0
  %2003 = vmatpush1.msra.mxu0 0.0
  %2004 = vmatprep.subr.mxu0 0.0
  %2005 = vmatpush1.msra.mxu0 0.0
  %2006 = vmatprep.subr.mxu0 0.0
  %2007 = vmatpush1.msra.mxu0 0.0
  %2008 = vmatprep.subr.mxu0 0.0
  %2009 = vmatpush1.msra.mxu0 0.0
  %2010 = vmatprep.subr.mxu0 0.0
  %2011 = vmatpush1.msra.mxu0 0.0
  %2012 = vmatprep.subr.mxu0 0.0
  %2013 = vmatpush1.msra.mxu0 0.0
  %2014 = vmatprep.subr.mxu0 0.0
  %2015 = vmatpush1.msra.mxu0 0.0
  %2016 = vmatprep.subr.mxu0 0.0
  %2017 = vmatpush1.msra.mxu0 0.0
  %2018 = vmatprep.subr.mxu0 0.0
  %2019 = vmatpush1.msra.mxu0 0.0
  %2020 = vmatprep.subr.mxu0 0.0
  %2021 = vmatpush1.msra.mxu0 0.0
  %2022 = vmatprep.subr.mxu0 0.0
  %2023 = vmatpush1.msra.mxu0 0.0
  %2024 = vmatprep.subr.mxu0 0.0
  %2025 = vmatpush1.msra.mxu0 0.0
  %2026 = vmatprep.subr.mxu0 0.0
  %2027 = vmatpush1.msra.mxu0 0.0
  %2028 = vmatprep.subr.mxu0 0.0
  %2029 = vmatpush1.msra.mxu0 0.0
  %2030 = vmatprep.subr.mxu0 0.0
  %2031 = vmatpush1.msra.mxu0 0.0
  %2032 = vmatprep.subr.mxu0 0.0
  %2033 = vmatpush1.msra.mxu0 0.0
  %2034 = vmatprep.subr.mxu0 0.0
  %2035 = vmatpush1.msra.mxu0 0.0
  %2036 = vmatprep.subr.mxu0 0.0
  %2037 = vmatpush1.msra.mxu0 0.0
  %2038 = vmatprep.subr.mxu0 0.0
  %2039 = vmatpush1.msra.mxu0 0.0
  %2040 = vmatprep.subr.mxu0 0.0
  %2041 = vmatpush1.msra.mxu0 0.0
  %2042 = vmatprep.subr.mxu0 0.0
  %2043 = vmatpush1.msra.mxu0 0.0
  %2044 = vmatprep.mubr.f32.mxu0 0.0
  %2045 = vmatmul.mubr.f32.gmra.mrb[0].mxu0 %v1978
  %v2046 = vpop.f32.mrb[0].mxu0
  %v2047 = vadd.f32 0.0, %v2046
  %v2048 = vpop.f32.mrb[0].mxu0
  %2049 = vdwg.mxu0
  %v2051 = vrot.slane %v2047, 2
  %v2052 = vrot.slane %v2047, 3
  %v2055 = vadd.f32 %v17, %v2051
  %v2056 = vadd.f32 %v19, %v2052
  %v2057 = vxor.u32 %v2055, 2147483648
  %v2058 = vxor.u32 %v2056, 2147483648
  %v2059 = vmul.f32 %v2057, 1.442695
  %v2060 = vpow.pop %v2059
  %v2061 = vmul.f32 %v2058, 1.442695
  %v2062 = vpow.pop %v2061
  %v2063 = vadd.f32 %v2060, 1.0
  %v2064 = vadd.f32 %v2062, 1.0
  %v2065 = vrcp.pop %v2063
  %v2066 = vmul.f32 1.0, %v2065
  %v2067 = vrcp.pop %v2064
  %v2068 = vmul.f32 1.0, %v2067
  %v2069 = vtanh.pop %v2055
  %v2070 = vtanh.pop %v2056
  %v2072 = vrot.slane %v1817, 2
  %v2073 = vrot.slane %v1817, 3
  %2074 = vrot.lane.b32.xlu0 %v2072, 32
  %v2075 = vpop.permute.xlu0 %2074
  %2076 = vrot.lane.b32.xlu0 %v2073, 32
  %v2077 = vpop.permute.xlu0 %2076
  %v2080 = vmul.f32 %v2066, %v2075
  %v2081 = vmul.f32 %v2068, %v2077
  %2084 = vrot.lane.b32.xlu0 %v2069, 32
  %v2085 = vpop.permute.xlu0 %2084
  %2086 = vrot.lane.b32.xlu0 %v2070, 32
  %v2087 = vpop.permute.xlu0 %2086
  %v2090 = vmul.f32 %v2066, %v2085
  %v2091 = vmul.f32 %v2068, %v2087
  %2094 = vrot.lane.b32.xlu0 %v2090, 32
  %v2095 = vpop.permute.xlu0 %2094
  %2096 = vrot.lane.b32.xlu0 %v2091, 32
  %v2097 = vpop.permute.xlu0 %2096
  %v2100 = vadd.f32 %v2080, %v2095
  %v2101 = vadd.f32 %v2081, %v2097
  %v2102 = vtanh.pop %v2100
  %v2103 = vtanh.pop %v2101
  %2106 = vrot.lane.b32.xlu0 %v2102, 32
  %v2107 = vpop.permute.xlu0 %2106
  %2108 = vrot.lane.b32.xlu0 %v2103, 32
  %v2109 = vpop.permute.xlu0 %2108
  %v2112 = vmul.f32 %v2066, %v2107
  %v2113 = vmul.f32 %v2068, %v2109
  %v2116 = vrot.slane %v2112, 6
  %v2117 = vrot.slane %v2113, 5
  %v2118 = vsel %vm166, %v2117, %v2116
  %2119 = vrot.lane.b32.xlu0 %v2118, 64
  %v2120 = vpop.permute.xlu0 %2119
  %v2122 = vmul.f32 %v645, %v2120
  %v2123 = vmul.f32 %v658, %v1806
  %v2124 = vadd.f32 %v2122, %v2123
  %v2127 = vrot.slane %v2100, 6
  %v2128 = vrot.slane %v2101, 5
  %v2129 = vsel %vm166, %v2128, %v2127
  %2130 = vrot.lane.b32.xlu0 %v2129, 96
  %v2131 = vpop.permute.xlu0 %2130
  %v2133 = vmul.f32 %v645, %v2131
  %v2134 = vmul.f32 %v658, %v1817
  %v2135 = vadd.f32 %v2133, %v2134
  %v2137 = vsel %vm30, %v1965, 0
  %2139 = vmatprep.subr.mxu0 0.0
  %2140 = vmatpush1.msra.mxu0 %v26
  %2141 = vmatprep.subr.mxu0 0.0
  %2142 = vmatpush1.msra.mxu0 %v27
  %2143 = vmatprep.subr.mxu0 0.0
  %2144 = vmatpush1.msra.mxu0 %v28
  %2145 = vmatprep.subr.mxu0 0.0
  %2146 = vmatpush1.msra.mxu0 %v29
  %2147 = vmatprep.subr.mxu0 0.0
  %2148 = vmatpush1.msra.mxu0 0.0
  %2149 = vmatprep.subr.mxu0 0.0
  %2150 = vmatpush1.msra.mxu0 0.0
  %2151 = vmatprep.subr.mxu0 0.0
  %2152 = vmatpush1.msra.mxu0 0.0
  %2153 = vmatprep.subr.mxu0 0.0
  %2154 = vmatpush1.msra.mxu0 0.0
  %2155 = vmatprep.subr.mxu0 0.0
  %2156 = vmatpush1.msra.mxu0 0.0
  %2157 = vmatprep.subr.mxu0 0.0
  %2158 = vmatpush1.msra.mxu0 0.0
  %2159 = vmatprep.subr.mxu0 0.0
  %2160 = vmatpush1.msra.mxu0 0.0
  %2161 = vmatprep.subr.mxu0 0.0
  %2162 = vmatpush1.msra.mxu0 0.0
  %2163 = vmatprep.subr.mxu0 0.0
  %2164 = vmatpush1.msra.mxu0 0.0
  %2165 = vmatprep.subr.mxu0 0.0
  %2166 = vmatpush1.msra.mxu0 0.0
  %2167 = vmatprep.subr.mxu0 0.0
  %2168 = vmatpush1.msra.mxu0 0.0
  %2169 = vmatprep.subr.mxu0 0.0
  %2170 = vmatpush1.msra.mxu0 0.0
  %2171 = vmatprep.subr.mxu0 0.0
  %2172 = vmatpush1.msra.mxu0 0.0
  %2173 = vmatprep.subr.mxu0 0.0
  %2174 = vmatpush1.msra.mxu0 0.0
  %2175 = vmatprep.subr.mxu0 0.0
  %2176 = vmatpush1.msra.mxu0 0.0
  %2177 = vmatprep.subr.mxu0 0.0
  %2178 = vmatpush1.msra.mxu0 0.0
  %2179 = vmatprep.subr.mxu0 0.0
  %2180 = vmatpush1.msra.mxu0 0.0
  %2181 = vmatprep.subr.mxu0 0.0
  %2182 = vmatpush1.msra.mxu0 0.0
  %2183 = vmatprep.subr.mxu0 0.0
  %2184 = vmatpush1.msra.mxu0 0.0
  %2185 = vmatprep.subr.mxu0 0.0
  %2186 = vmatpush1.msra.mxu0 0.0
  %2187 = vmatprep.subr.mxu0 0.0
  %2188 = vmatpush1.msra.mxu0 0.0
  %2189 = vmatprep.subr.mxu0 0.0
  %2190 = vmatpush1.msra.mxu0 0.0
  %2191 = vmatprep.subr.mxu0 0.0
  %2192 = vmatpush1.msra.mxu0 0.0
  %2193 = vmatprep.subr.mxu0 0.0
  %2194 = vmatpush1.msra.mxu0 0.0
  %2195 = vmatprep.subr.mxu0 0.0
  %2196 = vmatpush1.msra.mxu0 0.0
  %2197 = vmatprep.subr.mxu0 0.0
  %2198 = vmatpush1.msra.mxu0 0.0
  %2199 = vmatprep.subr.mxu0 0.0
  %2200 = vmatpush1.msra.mxu0 0.0
  %2201 = vmatprep.subr.mxu0 0.0
  %2202 = vmatpush1.msra.mxu0 0.0
  %2203 = vmatprep.mubr.f32.mxu0 0.0
  %2204 = vmatmul.mubr.f32.gmra.mrb[0].mxu0 %v2137
  %v2205 = vpop.f32.mrb[0].mxu0
  %v2206 = vadd.f32 0.0, %v2205
  %v2207 = vpop.f32.mrb[0].mxu0
  %2208 = vdwg.mxu0
  %v2210 = vrot.slane %v2206, 7
  %v2213 = vadd.f32 %v18, %v2210
  %v2214 = vadd.f32 %v20, %v2206
  %v2215 = vxor.u32 %v2213, 2147483648
  %v2216 = vxor.u32 %v2214, 2147483648
  %v2217 = vmul.f32 %v2215, 1.442695
  %v2218 = vpow.pop %v2217
  %v2219 = vmul.f32 %v2216, 1.442695
  %v2220 = vpow.pop %v2219
  %v2221 = vadd.f32 %v2218, 1.0
  %v2222 = vadd.f32 %v2220, 1.0
  %v2223 = vrcp.pop %v2221
  %v2224 = vmul.f32 1.0, %v2223
  %v2225 = vrcp.pop %v2222
  %v2226 = vmul.f32 1.0, %v2225
  %v2227 = vtanh.pop %v2213
  %v2228 = vtanh.pop %v2214
  %v2230 = vrot.slane %v1976, 7
  %2231 = vrot.lane.b32.xlu0 %v2230, 32
  %v2232 = vpop.permute.xlu0 %2231
  %2233 = vrot.lane.b32.xlu0 %v1976, 32
  %v2234 = vpop.permute.xlu0 %2233
  %v2237 = vmul.f32 %v2224, %v2232
  %v2238 = vmul.f32 %v2226, %v2234
  %2241 = vrot.lane.b32.xlu0 %v2227, 32
  %v2242 = vpop.permute.xlu0 %2241
  %2243 = vrot.lane.b32.xlu0 %v2228, 32
  %v2244 = vpop.permute.xlu0 %2243
  %v2247 = vmul.f32 %v2224, %v2242
  %v2248 = vmul.f32 %v2226, %v2244
  %2251 = vrot.lane.b32.xlu0 %v2247, 32
  %v2252 = vpop.permute.xlu0 %2251
  %2253 = vrot.lane.b32.xlu0 %v2248, 32
  %v2254 = vpop.permute.xlu0 %2253
  %v2257 = vadd.f32 %v2237, %v2252
  %v2258 = vadd.f32 %v2238, %v2254
  %v2259 = vtanh.pop %v2257
  %v2260 = vtanh.pop %v2258
  %2263 = vrot.lane.b32.xlu0 %v2259, 32
  %v2264 = vpop.permute.xlu0 %2263
  %2265 = vrot.lane.b32.xlu0 %v2260, 32
  %v2266 = vpop.permute.xlu0 %2265
  %v2269 = vmul.f32 %v2224, %v2264
  %v2270 = vmul.f32 %v2226, %v2266
  %v2273 = vrot.slane %v2269, 1
  %v2274 = vsel %vm166, %v2270, %v2273
  %2275 = vrot.lane.b32.xlu0 %v2274, 64
  %v2276 = vpop.permute.xlu0 %2275
  %v2278 = vmul.f32 %v480, %v2276
  %v2279 = vmul.f32 %v492, %v1965
  %v2280 = vadd.f32 %v2278, %v2279
  %v2283 = vrot.slane %v2257, 1
  %v2284 = vsel %vm166, %v2258, %v2283
  %2285 = vrot.lane.b32.xlu0 %v2284, 96
  %v2286 = vpop.permute.xlu0 %2285
  %v2288 = vmul.f32 %v480, %v2286
  %v2289 = vmul.f32 %v492, %v1976
  %v2290 = vadd.f32 %v2288, %v2289
  %v2292 = vsel %vm30, %v2124, 0
  %2294 = vmatprep.subr.mxu0 0.0
  %2295 = vmatpush1.msra.mxu0 %v22
  %2296 = vmatprep.subr.mxu0 0.0
  %2297 = vmatpush1.msra.mxu0 %v23
  %2298 = vmatprep.subr.mxu0 0.0
  %2299 = vmatpush1.msra.mxu0 %v24
  %2300 = vmatprep.subr.mxu0 0.0
  %2301 = vmatpush1.msra.mxu0 %v25
  %2302 = vmatprep.subr.mxu0 0.0
  %2303 = vmatpush1.msra.mxu0 0.0
  %2304 = vmatprep.subr.mxu0 0.0
  %2305 = vmatpush1.msra.mxu0 0.0
  %2306 = vmatprep.subr.mxu0 0.0
  %2307 = vmatpush1.msra.mxu0 0.0
  %2308 = vmatprep.subr.mxu0 0.0
  %2309 = vmatpush1.msra.mxu0 0.0
  %2310 = vmatprep.subr.mxu0 0.0
  %2311 = vmatpush1.msra.mxu0 0.0
  %2312 = vmatprep.subr.mxu0 0.0
  %2313 = vmatpush1.msra.mxu0 0.0
  %2314 = vmatprep.subr.mxu0 0.0
  %2315 = vmatpush1.msra.mxu0 0.0
  %2316 = vmatprep.subr.mxu0 0.0
  %2317 = vmatpush1.msra.mxu0 0.0
  %2318 = vmatprep.subr.mxu0 0.0
  %2319 = vmatpush1.msra.mxu0 0.0
  %2320 = vmatprep.subr.mxu0 0.0
  %2321 = vmatpush1.msra.mxu0 0.0
  %2322 = vmatprep.subr.mxu0 0.0
  %2323 = vmatpush1.msra.mxu0 0.0
  %2324 = vmatprep.subr.mxu0 0.0
  %2325 = vmatpush1.msra.mxu0 0.0
  %2326 = vmatprep.subr.mxu0 0.0
  %2327 = vmatpush1.msra.mxu0 0.0
  %2328 = vmatprep.subr.mxu0 0.0
  %2329 = vmatpush1.msra.mxu0 0.0
  %2330 = vmatprep.subr.mxu0 0.0
  %2331 = vmatpush1.msra.mxu0 0.0
  %2332 = vmatprep.subr.mxu0 0.0
  %2333 = vmatpush1.msra.mxu0 0.0
  %2334 = vmatprep.subr.mxu0 0.0
  %2335 = vmatpush1.msra.mxu0 0.0
  %2336 = vmatprep.subr.mxu0 0.0
  %2337 = vmatpush1.msra.mxu0 0.0
  %2338 = vmatprep.subr.mxu0 0.0
  %2339 = vmatpush1.msra.mxu0 0.0
  %2340 = vmatprep.subr.mxu0 0.0
  %2341 = vmatpush1.msra.mxu0 0.0
  %2342 = vmatprep.subr.mxu0 0.0
  %2343 = vmatpush1.msra.mxu0 0.0
  %2344 = vmatprep.subr.mxu0 0.0
  %2345 = vmatpush1.msra.mxu0 0.0
  %2346 = vmatprep.subr.mxu0 0.0
  %2347 = vmatpush1.msra.mxu0 0.0
  %2348 = vmatprep.subr.mxu0 0.0
  %2349 = vmatpush1.msra.mxu0 0.0
  %2350 = vmatprep.subr.mxu0 0.0
  %2351 = vmatpush1.msra.mxu0 0.0
  %2352 = vmatprep.subr.mxu0 0.0
  %2353 = vmatpush1.msra.mxu0 0.0
  %2354 = vmatprep.subr.mxu0 0.0
  %2355 = vmatpush1.msra.mxu0 0.0
  %2356 = vmatprep.subr.mxu0 0.0
  %2357 = vmatpush1.msra.mxu0 0.0
  %2358 = vmatprep.mubr.f32.mxu0 0.0
  %2359 = vmatmul.mubr.f32.gmra.mrb[0].mxu0 %v2292
  %v2360 = vpop.f32.mrb[0].mxu0
  %v2361 = vadd.f32 0.0, %v2360
  %v2362 = vpop.f32.mrb[0].mxu0
  %2363 = vdwg.mxu0
  %v2365 = vrot.slane %v2361, 1
  %v2366 = vrot.slane %v2361, 2
  %v2369 = vadd.f32 %v17, %v2365
  %v2370 = vadd.f32 %v19, %v2366
  %v2371 = vxor.u32 %v2369, 2147483648
  %v2372 = vxor.u32 %v2370, 2147483648
  %v2373 = vmul.f32 %v2371, 1.442695
  %v2374 = vpow.pop %v2373
  %v2375 = vmul.f32 %v2372, 1.442695
  %v2376 = vpow.pop %v2375
  %v2377 = vadd.f32 %v2374, 1.0
  %v2378 = vadd.f32 %v2376, 1.0
  %v2379 = vrcp.pop %v2377
  %v2380 = vmul.f32 1.0, %v2379
  %v2381 = vrcp.pop %v2378
  %v2382 = vmul.f32 1.0, %v2381
  %v2383 = vtanh.pop %v2369
  %v2384 = vtanh.pop %v2370
  %v2386 = vrot.slane %v2135, 1
  %v2387 = vrot.slane %v2135, 2
  %2388 = vrot.lane.b32.xlu0 %v2386, 32
  %v2389 = vpop.permute.xlu0 %2388
  %2390 = vrot.lane.b32.xlu0 %v2387, 32
  %v2391 = vpop.permute.xlu0 %2390
  %v2394 = vmul.f32 %v2380, %v2389
  %v2395 = vmul.f32 %v2382, %v2391
  %2398 = vrot.lane.b32.xlu0 %v2383, 32
  %v2399 = vpop.permute.xlu0 %2398
  %2400 = vrot.lane.b32.xlu0 %v2384, 32
  %v2401 = vpop.permute.xlu0 %2400
  %v2404 = vmul.f32 %v2380, %v2399
  %v2405 = vmul.f32 %v2382, %v2401
  %2408 = vrot.lane.b32.xlu0 %v2404, 32
  %v2409 = vpop.permute.xlu0 %2408
  %2410 = vrot.lane.b32.xlu0 %v2405, 32
  %v2411 = vpop.permute.xlu0 %2410
  %v2414 = vadd.f32 %v2394, %v2409
  %v2415 = vadd.f32 %v2395, %v2411
  %v2416 = vtanh.pop %v2414
  %v2417 = vtanh.pop %v2415
  %2420 = vrot.lane.b32.xlu0 %v2416, 32
  %v2421 = vpop.permute.xlu0 %2420
  %2422 = vrot.lane.b32.xlu0 %v2417, 32
  %v2423 = vpop.permute.xlu0 %2422
  %v2426 = vmul.f32 %v2380, %v2421
  %v2427 = vmul.f32 %v2382, %v2423
  %v2430 = vrot.slane %v2426, 7
  %v2431 = vrot.slane %v2427, 6
  %v2432 = vsel %vm166, %v2431, %v2430
  %2433 = vrot.lane.b32.xlu0 %v2432, 64
  %v2434 = vpop.permute.xlu0 %2433
  %v2436 = vmul.f32 %v316, %v2434
  %v2438 = vsel %vm30, %v2280, 0
  %2440 = vmatprep.subr.mxu0 0.0
  %2441 = vmatpush1.msra.mxu0 %v26
  %2442 = vmatprep.subr.mxu0 0.0
  %2443 = vmatpush1.msra.mxu0 %v27
  %2444 = vmatprep.subr.mxu0 0.0
  %2445 = vmatpush1.msra.mxu0 %v28
  %2446 = vmatprep.subr.mxu0 0.0
  %2447 = vmatpush1.msra.mxu0 %v29
  %2448 = vmatprep.subr.mxu0 0.0
  %2449 = vmatpush1.msra.mxu0 0.0
  %2450 = vmatprep.subr.mxu0 0.0
  %2451 = vmatpush1.msra.mxu0 0.0
  %2452 = vmatprep.subr.mxu0 0.0
  %2453 = vmatpush1.msra.mxu0 0.0
  %2454 = vmatprep.subr.mxu0 0.0
  %2455 = vmatpush1.msra.mxu0 0.0
  %2456 = vmatprep.subr.mxu0 0.0
  %2457 = vmatpush1.msra.mxu0 0.0
  %2458 = vmatprep.subr.mxu0 0.0
  %2459 = vmatpush1.msra.mxu0 0.0
  %2460 = vmatprep.subr.mxu0 0.0
  %2461 = vmatpush1.msra.mxu0 0.0
  %2462 = vmatprep.subr.mxu0 0.0
  %2463 = vmatpush1.msra.mxu0 0.0
  %2464 = vmatprep.subr.mxu0 0.0
  %2465 = vmatpush1.msra.mxu0 0.0
  %2466 = vmatprep.subr.mxu0 0.0
  %2467 = vmatpush1.msra.mxu0 0.0
  %2468 = vmatprep.subr.mxu0 0.0
  %2469 = vmatpush1.msra.mxu0 0.0
  %2470 = vmatprep.subr.mxu0 0.0
  %2471 = vmatpush1.msra.mxu0 0.0
  %2472 = vmatprep.subr.mxu0 0.0
  %2473 = vmatpush1.msra.mxu0 0.0
  %2474 = vmatprep.subr.mxu0 0.0
  %2475 = vmatpush1.msra.mxu0 0.0
  %2476 = vmatprep.subr.mxu0 0.0
  %2477 = vmatpush1.msra.mxu0 0.0
  %2478 = vmatprep.subr.mxu0 0.0
  %2479 = vmatpush1.msra.mxu0 0.0
  %2480 = vmatprep.subr.mxu0 0.0
  %2481 = vmatpush1.msra.mxu0 0.0
  %2482 = vmatprep.subr.mxu0 0.0
  %2483 = vmatpush1.msra.mxu0 0.0
  %2484 = vmatprep.subr.mxu0 0.0
  %2485 = vmatpush1.msra.mxu0 0.0
  %2486 = vmatprep.subr.mxu0 0.0
  %2487 = vmatpush1.msra.mxu0 0.0
  %2488 = vmatprep.subr.mxu0 0.0
  %2489 = vmatpush1.msra.mxu0 0.0
  %2490 = vmatprep.subr.mxu0 0.0
  %2491 = vmatpush1.msra.mxu0 0.0
  %2492 = vmatprep.subr.mxu0 0.0
  %2493 = vmatpush1.msra.mxu0 0.0
  %2494 = vmatprep.subr.mxu0 0.0
  %2495 = vmatpush1.msra.mxu0 0.0
  %2496 = vmatprep.subr.mxu0 0.0
  %2497 = vmatpush1.msra.mxu0 0.0
  %2498 = vmatprep.subr.mxu0 0.0
  %2499 = vmatpush1.msra.mxu0 0.0
  %2500 = vmatprep.subr.mxu0 0.0
  %2501 = vmatpush1.msra.mxu0 0.0
  %2502 = vmatprep.subr.mxu0 0.0
  %2503 = vmatpush1.msra.mxu0 0.0
  %2504 = vmatprep.mubr.f32.mxu0 0.0
  %2505 = vmatmul.mubr.f32.gmra.mrb[0].mxu0 %v2438
  %v2506 = vpop.f32.mrb[0].mxu0
  %v2507 = vadd.f32 0.0, %v2506
  %v2508 = vpop.f32.mrb[0].mxu0
  %2509 = vdwg.mxu0
  %v2511 = vrot.slane %v2507, 1
  %v2514 = vadd.f32 %v18, %v2507
  %v2515 = vadd.f32 %v20, %v2511
  %v2516 = vxor.u32 %v2514, 2147483648
  %v2517 = vxor.u32 %v2515, 2147483648
  %v2518 = vmul.f32 %v2516, 1.442695
  %v2519 = vpow.pop %v2518
  %v2520 = vmul.f32 %v2517, 1.442695
  %v2521 = vpow.pop %v2520
  %v2522 = vadd.f32 %v2519, 1.0
  %v2523 = vadd.f32 %v2521, 1.0
  %v2524 = vrcp.pop %v2522
  %v2525 = vmul.f32 1.0, %v2524
  %v2526 = vrcp.pop %v2523
  %v2527 = vmul.f32 1.0, %v2526
  %v2528 = vtanh.pop %v2514
  %v2529 = vtanh.pop %v2515
  %v2531 = vrot.slane %v2290, 1
  %2532 = vrot.lane.b32.xlu0 %v2290, 32
  %v2533 = vpop.permute.xlu0 %2532
  %2534 = vrot.lane.b32.xlu0 %v2531, 32
  %v2535 = vpop.permute.xlu0 %2534
  %v2538 = vmul.f32 %v2525, %v2533
  %v2539 = vmul.f32 %v2527, %v2535
  %2542 = vrot.lane.b32.xlu0 %v2528, 32
  %v2543 = vpop.permute.xlu0 %2542
  %2544 = vrot.lane.b32.xlu0 %v2529, 32
  %v2545 = vpop.permute.xlu0 %2544
  %v2548 = vmul.f32 %v2525, %v2543
  %v2549 = vmul.f32 %v2527, %v2545
  %2552 = vrot.lane.b32.xlu0 %v2548, 32
  %v2553 = vpop.permute.xlu0 %2552
  %2554 = vrot.lane.b32.xlu0 %v2549, 32
  %v2555 = vpop.permute.xlu0 %2554
  %v2558 = vadd.f32 %v2538, %v2553
  %v2559 = vadd.f32 %v2539, %v2555
  %v2560 = vtanh.pop %v2558
  %v2561 = vtanh.pop %v2559
  %2564 = vrot.lane.b32.xlu0 %v2560, 32
  %v2565 = vpop.permute.xlu0 %2564
  %2566 = vrot.lane.b32.xlu0 %v2561, 32
  %v2567 = vpop.permute.xlu0 %2566
  %v2570 = vmul.f32 %v2525, %v2565
  %v2571 = vmul.f32 %v2527, %v2567
  %v2574 = vrot.slane %v2571, 7
  %v2575 = vsel %vm166, %v2574, %v2570
  %2576 = vrot.lane.b32.xlu0 %v2575, 64
  %v2577 = vpop.permute.xlu0 %2576
  %v2579 = vmul.f32 %v161, %v2577
  %v2582 = vunpack.c.l.s4 1966171168
  %v2583 = vunpack.c.0.s8 %v2582
  %v2584 = vlaneseq
  %v2585 = vshrl.u32 %v2584, 7
  %v2586 = vsub.s32 %v2583, %v2585
  %v2587 = vrot.slane %v171, %v2586
  %v2588 = vcombine.high %v2587, %v2587
  %v2590 = vunpack.c.l.s4 1966171168
  %v2591 = vunpack.c.0.s8 %v2590
  %v2592 = vlaneseq
  %v2593 = vshrl.u32 %v2592, 7
  %v2594 = vsub.s32 %v2591, %v2593
  %v2595 = vrot.slane %v2587, %v2594
  %v2597 = vunpack.c.l.s4 1966171168
  %v2598 = vunpack.c.0.s8 %v2597
  %v2599 = vlaneseq
  %v2600 = vshrl.u32 %v2599, 7
  %v2601 = vsub.s32 %v2598, %v2600
  %v2602 = vrot.slane %v2588, %v2601
  %v2607 = vunpack.c.l.s4 1966171168
  %v2608 = vunpack.c.0.s8 %v2607
  %v2609 = vlaneseq
  %v2610 = vshrl.u32 %v2609, 7
  %v2611 = vsub.s32 %v2608, %v2610
  %v2612 = vrot.slane %v489, %v2611
  %v2613 = vcombine.high %v2612, %v2612
  %v2615 = vunpack.c.l.s4 1966171168
  %v2616 = vunpack.c.0.s8 %v2615
  %v2617 = vlaneseq
  %v2618 = vshrl.u32 %v2617, 7
  %v2619 = vsub.s32 %v2616, %v2618
  %v2620 = vrot.slane %v2612, %v2619
  %v2622 = vunpack.c.l.s4 1966171168
  %v2623 = vunpack.c.0.s8 %v2622
  %v2624 = vlaneseq
  %v2625 = vshrl.u32 %v2624, 7
  %v2626 = vsub.s32 %v2623, %v2625
  %v2627 = vrot.slane %v2613, %v2626
  %v2630 = vunpack.c.l.s4 1966171168
  %v2631 = vunpack.c.0.s8 %v2630
  %v2632 = vlaneseq
  %v2633 = vshrl.u32 %v2632, 7
  %v2634 = vsub.s32 %v2631, %v2633
  %v2635 = vrot.slane %v822, %v2634
  %v2636 = vcombine.high %v2635, %v2635
  %v2638 = vunpack.c.l.s4 1966171168
  %v2639 = vunpack.c.0.s8 %v2638
  %v2640 = vlaneseq
  %v2641 = vshrl.u32 %v2640, 7
  %v2642 = vsub.s32 %v2639, %v2641
  %v2643 = vrot.slane %v2635, %v2642
  %v2645 = vunpack.c.l.s4 1966171168
  %v2646 = vunpack.c.0.s8 %v2645
  %v2647 = vlaneseq
  %v2648 = vshrl.u32 %v2647, 7
  %v2649 = vsub.s32 %v2646, %v2648
  %v2650 = vrot.slane %v2636, %v2649
  %v2653 = vunpack.c.l.s4 1966171168
  %v2654 = vunpack.c.0.s8 %v2653
  %v2655 = vlaneseq
  %v2656 = vshrl.u32 %v2655, 7
  %v2657 = vsub.s32 %v2654, %v2656
  %v2658 = vrot.slane %v1156, %v2657
  %v2659 = vcombine.high %v2658, %v2658
  %v2661 = vunpack.c.l.s4 1966171168
  %v2662 = vunpack.c.0.s8 %v2661
  %v2663 = vlaneseq
  %v2664 = vshrl.u32 %v2663, 7
  %v2665 = vsub.s32 %v2662, %v2664
  %v2666 = vrot.slane %v2658, %v2665
  %v2668 = vunpack.c.l.s4 1966171168
  %v2669 = vunpack.c.0.s8 %v2668
  %v2670 = vlaneseq
  %v2671 = vshrl.u32 %v2670, 7
  %v2672 = vsub.s32 %v2669, %v2671
  %v2673 = vrot.slane %v2659, %v2672
  %v2676 = vunpack.c.l.s4 1966171168
  %v2677 = vunpack.c.0.s8 %v2676
  %v2678 = vlaneseq
  %v2679 = vshrl.u32 %v2678, 7
  %v2680 = vsub.s32 %v2677, %v2679
  %v2681 = vrot.slane %v1486, %v2680
  %v2682 = vcombine.high %v2681, %v2681
  %v2684 = vunpack.c.l.s4 1966171168
  %v2685 = vunpack.c.0.s8 %v2684
  %v2686 = vlaneseq
  %v2687 = vshrl.u32 %v2686, 7
  %v2688 = vsub.s32 %v2685, %v2687
  %v2689 = vrot.slane %v2681, %v2688
  %v2691 = vunpack.c.l.s4 1966171168
  %v2692 = vunpack.c.0.s8 %v2691
  %v2693 = vlaneseq
  %v2694 = vshrl.u32 %v2693, 7
  %v2695 = vsub.s32 %v2692, %v2694
  %v2696 = vrot.slane %v2682, %v2695
  %v2699 = vunpack.c.l.s4 1966171168
  %v2700 = vunpack.c.0.s8 %v2699
  %v2701 = vlaneseq
  %v2702 = vshrl.u32 %v2701, 7
  %v2703 = vsub.s32 %v2700, %v2702
  %v2704 = vrot.slane %v1804, %v2703
  %v2705 = vcombine.high %v2704, %v2704
  %v2707 = vunpack.c.l.s4 1966171168
  %v2708 = vunpack.c.0.s8 %v2707
  %v2709 = vlaneseq
  %v2710 = vshrl.u32 %v2709, 7
  %v2711 = vsub.s32 %v2708, %v2710
  %v2712 = vrot.slane %v2704, %v2711
  %v2714 = vunpack.c.l.s4 1966171168
  %v2715 = vunpack.c.0.s8 %v2714
  %v2716 = vlaneseq
  %v2717 = vshrl.u32 %v2716, 7
  %v2718 = vsub.s32 %v2715, %v2717
  %v2719 = vrot.slane %v2705, %v2718
  %v2722 = vunpack.c.l.s4 1966171168
  %v2723 = vunpack.c.0.s8 %v2722
  %v2724 = vlaneseq
  %v2725 = vshrl.u32 %v2724, 7
  %v2726 = vsub.s32 %v2723, %v2725
  %v2727 = vrot.slane %v2122, %v2726
  %v2728 = vcombine.high %v2727, %v2727
  %v2730 = vunpack.c.l.s4 1966171168
  %v2731 = vunpack.c.0.s8 %v2730
  %v2732 = vlaneseq
  %v2733 = vshrl.u32 %v2732, 7
  %v2734 = vsub.s32 %v2731, %v2733
  %v2735 = vrot.slane %v2727, %v2734
  %v2737 = vunpack.c.l.s4 1966171168
  %v2738 = vunpack.c.0.s8 %v2737
  %v2739 = vlaneseq
  %v2740 = vshrl.u32 %v2739, 7
  %v2741 = vsub.s32 %v2738, %v2740
  %v2742 = vrot.slane %v2728, %v2741
  %v2745 = vunpack.c.l.s4 1966171168
  %v2746 = vunpack.c.0.s8 %v2745
  %v2747 = vlaneseq
  %v2748 = vshrl.u32 %v2747, 7
  %v2749 = vsub.s32 %v2746, %v2748
  %v2750 = vrot.slane %v2436, %v2749
  %v2751 = vcombine.high %v2750, %v2750
  %v2753 = vunpack.c.l.s4 1966171168
  %v2754 = vunpack.c.0.s8 %v2753
  %v2755 = vlaneseq
  %v2756 = vshrl.u32 %v2755, 7
  %v2757 = vsub.s32 %v2754, %v2756
  %v2758 = vrot.slane %v2750, %v2757
  %v2760 = vunpack.c.l.s4 1966171168
  %v2761 = vunpack.c.0.s8 %v2760
  %v2762 = vlaneseq
  %v2763 = vshrl.u32 %v2762, 7
  %v2764 = vsub.s32 %v2761, %v2763
  %v2765 = vrot.slane %v2751, %v2764
  %v2766 = vlaneseq
  %v2767 = vshrl.u32 %v2766, 7
  %v2768 = vsub.s32 0, %v2767
  %v2769 = vrot.slane %v2620, %v2768
  %v2770 = vlaneseq
  %v2771 = vshrl.u32 %v2770, 7
  %v2772 = vsub.s32 0, %v2771
  %v2773 = vrot.slane %v2627, %v2772
  %v2776 = vlaneseq
  %v2777 = vshrl.u32 %v2776, 7
  %v2778 = vsub.s32 0, %v2777
  %v2779 = vrot.slane %v2643, %v2778
  %v2780 = vlaneseq
  %v2781 = vshrl.u32 %v2780, 7
  %v2782 = vsub.s32 0, %v2781
  %v2783 = vrot.slane %v2650, %v2782
  %v2786 = vlaneseq
  %v2787 = vshrl.u32 %v2786, 7
  %v2788 = vsub.s32 0, %v2787
  %v2789 = vrot.slane %v2666, %v2788
  %v2790 = vlaneseq
  %v2791 = vshrl.u32 %v2790, 7
  %v2792 = vsub.s32 0, %v2791
  %v2793 = vrot.slane %v2673, %v2792
  %v2796 = vlaneseq
  %v2797 = vshrl.u32 %v2796, 7
  %v2798 = vsub.s32 0, %v2797
  %v2799 = vrot.slane %v2689, %v2798
  %v2800 = vlaneseq
  %v2801 = vshrl.u32 %v2800, 7
  %v2802 = vsub.s32 0, %v2801
  %v2803 = vrot.slane %v2696, %v2802
  %v2806 = vlaneseq
  %v2807 = vshrl.u32 %v2806, 7
  %v2808 = vsub.s32 0, %v2807
  %v2809 = vrot.slane %v2712, %v2808
  %v2810 = vlaneseq
  %v2811 = vshrl.u32 %v2810, 7
  %v2812 = vsub.s32 0, %v2811
  %v2813 = vrot.slane %v2719, %v2812
  %v2816 = vlaneseq
  %v2817 = vshrl.u32 %v2816, 7
  %v2818 = vsub.s32 0, %v2817
  %v2819 = vrot.slane %v2735, %v2818
  %v2820 = vlaneseq
  %v2821 = vshrl.u32 %v2820, 7
  %v2822 = vsub.s32 0, %v2821
  %v2823 = vrot.slane %v2742, %v2822
  %v2826 = vlaneseq
  %v2827 = vshrl.u32 %v2826, 7
  %v2828 = vsub.s32 0, %v2827
  %v2829 = vrot.slane %v2758, %v2828
  %v2830 = vlaneseq
  %v2831 = vshrl.u32 %v2830, 7
  %v2832 = vsub.s32 0, %v2831
  %v2833 = vrot.slane %v2765, %v2832
  %vm2836 = vcmask 1040384
  %v2837 = vsel %vm2836, %v2595, %v2769
  %v2838 = vsel %vm2836, %v2602, %v2773
  %vm2839 = vcmask 1041408
  %v2840 = vsel %vm2839, %v2837, %v2779
  %v2841 = vsel %vm2839, %v2838, %v2783
  %vm2842 = vcmask 1042432
  %v2843 = vsel %vm2842, %v2840, %v2789
  %v2844 = vsel %vm2842, %v2841, %v2793
  %vm2845 = vcmask 1043456
  %v2846 = vsel %vm2845, %v2843, %v2799
  %v2847 = vsel %vm2845, %v2844, %v2803
  %vm2848 = vcmask 1044480
  %v2849 = vsel %vm2848, %v2846, %v2809
  %v2850 = vsel %vm2848, %v2847, %v2813
  %vm2851 = vcmask 1045504
  %v2852 = vsel %vm2851, %v2849, %v2819
  %v2853 = vsel %vm2851, %v2850, %v2823
  %vm2854 = vcmask 1046528
  %v2855 = vsel %vm2854, %v2852, %v2829
  %v2856 = vsel %vm2854, %v2853, %v2833
  %v2859 = vunpack.c.l.s4 1966171168
  %v2860 = vunpack.c.0.s8 %v2859
  %v2861 = vlaneseq
  %v2862 = vshrl.u32 %v2861, 7
  %v2863 = vsub.s32 %v2860, %v2862
  %v2864 = vrot.slane %v2579, %v2863
  %v2865 = vcombine.high %v2864, %v2864
  %v2867 = vunpack.c.l.s4 1966171168
  %v2868 = vunpack.c.0.s8 %v2867
  %v2869 = vlaneseq
  %v2870 = vshrl.u32 %v2869, 7
  %v2871 = vsub.s32 %v2868, %v2870
  %v2872 = vrot.slane %v2864, %v2871
  %v2874 = vunpack.c.l.s4 1966171168
  %v2875 = vunpack.c.0.s8 %v2874
  %v2876 = vlaneseq
  %v2877 = vshrl.u32 %v2876, 7
  %v2878 = vsub.s32 %v2875, %v2877
  %v2879 = vrot.slane %v2865, %v2878
  %v2884 = vunpack.c.l.s4 1966171168
  %v2885 = vunpack.c.0.s8 %v2884
  %v2886 = vlaneseq
  %v2887 = vshrl.u32 %v2886, 7
  %v2888 = vsub.s32 %v2885, %v2887
  %v2889 = vrot.slane %v2278, %v2888
  %v2890 = vcombine.high %v2889, %v2889
  %v2892 = vunpack.c.l.s4 1966171168
  %v2893 = vunpack.c.0.s8 %v2892
  %v2894 = vlaneseq
  %v2895 = vshrl.u32 %v2894, 7
  %v2896 = vsub.s32 %v2893, %v2895
  %v2897 = vrot.slane %v2889, %v2896
  %v2899 = vunpack.c.l.s4 1966171168
  %v2900 = vunpack.c.0.s8 %v2899
  %v2901 = vlaneseq
  %v2902 = vshrl.u32 %v2901, 7
  %v2903 = vsub.s32 %v2900, %v2902
  %v2904 = vrot.slane %v2890, %v2903
  %v2907 = vunpack.c.l.s4 1966171168
  %v2908 = vunpack.c.0.s8 %v2907
  %v2909 = vlaneseq
  %v2910 = vshrl.u32 %v2909, 7
  %v2911 = vsub.s32 %v2908, %v2910
  %v2912 = vrot.slane %v1963, %v2911
  %v2913 = vcombine.high %v2912, %v2912
  %v2915 = vunpack.c.l.s4 1966171168
  %v2916 = vunpack.c.0.s8 %v2915
  %v2917 = vlaneseq
  %v2918 = vshrl.u32 %v2917, 7
  %v2919 = vsub.s32 %v2916, %v2918
  %v2920 = vrot.slane %v2912, %v2919
  %v2922 = vunpack.c.l.s4 1966171168
  %v2923 = vunpack.c.0.s8 %v2922
  %v2924 = vlaneseq
  %v2925 = vshrl.u32 %v2924, 7
  %v2926 = vsub.s32 %v2923, %v2925
  %v2927 = vrot.slane %v2913, %v2926
  %v2930 = vunpack.c.l.s4 1966171168
  %v2931 = vunpack.c.0.s8 %v2930
  %v2932 = vlaneseq
  %v2933 = vshrl.u32 %v2932, 7
  %v2934 = vsub.s32 %v2931, %v2933
  %v2935 = vrot.slane %v1645, %v2934
  %v2936 = vcombine.high %v2935, %v2935
  %v2938 = vunpack.c.l.s4 1966171168
  %v2939 = vunpack.c.0.s8 %v2938
  %v2940 = vlaneseq
  %v2941 = vshrl.u32 %v2940, 7
  %v2942 = vsub.s32 %v2939, %v2941
  %v2943 = vrot.slane %v2935, %v2942
  %v2945 = vunpack.c.l.s4 1966171168
  %v2946 = vunpack.c.0.s8 %v2945
  %v2947 = vlaneseq
  %v2948 = vshrl.u32 %v2947, 7
  %v2949 = vsub.s32 %v2946, %v2948
  %v2950 = vrot.slane %v2936, %v2949
  %v2953 = vunpack.c.l.s4 1966171168
  %v2954 = vunpack.c.0.s8 %v2953
  %v2955 = vlaneseq
  %v2956 = vshrl.u32 %v2955, 7
  %v2957 = vsub.s32 %v2954, %v2956
  %v2958 = vrot.slane %v1323, %v2957
  %v2959 = vcombine.high %v2958, %v2958
  %v2961 = vunpack.c.l.s4 1966171168
  %v2962 = vunpack.c.0.s8 %v2961
  %v2963 = vlaneseq
  %v2964 = vshrl.u32 %v2963, 7
  %v2965 = vsub.s32 %v2962, %v2964
  %v2966 = vrot.slane %v2958, %v2965
  %v2968 = vunpack.c.l.s4 1966171168
  %v2969 = vunpack.c.0.s8 %v2968
  %v2970 = vlaneseq
  %v2971 = vshrl.u32 %v2970, 7
  %v2972 = vsub.s32 %v2969, %v2971
  %v2973 = vrot.slane %v2959, %v2972
  %v2976 = vunpack.c.l.s4 1966171168
  %v2977 = vunpack.c.0.s8 %v2976
  %v2978 = vlaneseq
  %v2979 = vshrl.u32 %v2978, 7
  %v2980 = vsub.s32 %v2977, %v2979
  %v2981 = vrot.slane %v989, %v2980
  %v2982 = vcombine.high %v2981, %v2981
  %v2984 = vunpack.c.l.s4 1966171168
  %v2985 = vunpack.c.0.s8 %v2984
  %v2986 = vlaneseq
  %v2987 = vshrl.u32 %v2986, 7
  %v2988 = vsub.s32 %v2985, %v2987
  %v2989 = vrot.slane %v2981, %v2988
  %v2991 = vunpack.c.l.s4 1966171168
  %v2992 = vunpack.c.0.s8 %v2991
  %v2993 = vlaneseq
  %v2994 = vshrl.u32 %v2993, 7
  %v2995 = vsub.s32 %v2992, %v2994
  %v2996 = vrot.slane %v2982, %v2995
  %v2999 = vunpack.c.l.s4 1966171168
  %v3000 = vunpack.c.0.s8 %v2999
  %v3001 = vlaneseq
  %v3002 = vshrl.u32 %v3001, 7
  %v3003 = vsub.s32 %v3000, %v3002
  %v3004 = vrot.slane %v655, %v3003
  %v3005 = vcombine.high %v3004, %v3004
  %v3007 = vunpack.c.l.s4 1966171168
  %v3008 = vunpack.c.0.s8 %v3007
  %v3009 = vlaneseq
  %v3010 = vshrl.u32 %v3009, 7
  %v3011 = vsub.s32 %v3008, %v3010
  %v3012 = vrot.slane %v3004, %v3011
  %v3014 = vunpack.c.l.s4 1966171168
  %v3015 = vunpack.c.0.s8 %v3014
  %v3016 = vlaneseq
  %v3017 = vshrl.u32 %v3016, 7
  %v3018 = vsub.s32 %v3015, %v3017
  %v3019 = vrot.slane %v3005, %v3018
  %v3022 = vunpack.c.l.s4 1966171168
  %v3023 = vunpack.c.0.s8 %v3022
  %v3024 = vlaneseq
  %v3025 = vshrl.u32 %v3024, 7
  %v3026 = vsub.s32 %v3023, %v3025
  %v3027 = vrot.slane %v326, %v3026
  %v3028 = vcombine.high %v3027, %v3027
  %v3030 = vunpack.c.l.s4 1966171168
  %v3031 = vunpack.c.0.s8 %v3030
  %v3032 = vlaneseq
  %v3033 = vshrl.u32 %v3032, 7
  %v3034 = vsub.s32 %v3031, %v3033
  %v3035 = vrot.slane %v3027, %v3034
  %v3037 = vunpack.c.l.s4 1966171168
  %v3038 = vunpack.c.0.s8 %v3037
  %v3039 = vlaneseq
  %v3040 = vshrl.u32 %v3039, 7
  %v3041 = vsub.s32 %v3038, %v3040
  %v3042 = vrot.slane %v3028, %v3041
  %v3043 = vlaneseq
  %v3044 = vshrl.u32 %v3043, 7
  %v3045 = vsub.s32 0, %v3044
  %v3046 = vrot.slane %v2897, %v3045
  %v3047 = vlaneseq
  %v3048 = vshrl.u32 %v3047, 7
  %v3049 = vsub.s32 0, %v3048
  %v3050 = vrot.slane %v2904, %v3049
  %v3053 = vlaneseq
  %v3054 = vshrl.u32 %v3053, 7
  %v3055 = vsub.s32 0, %v3054
  %v3056 = vrot.slane %v2920, %v3055
  %v3057 = vlaneseq
  %v3058 = vshrl.u32 %v3057, 7
  %v3059 = vsub.s32 0, %v3058
  %v3060 = vrot.slane %v2927, %v3059
  %v3063 = vlaneseq
  %v3064 = vshrl.u32 %v3063, 7
  %v3065 = vsub.s32 0, %v3064
  %v3066 = vrot.slane %v2943, %v3065
  %v3067 = vlaneseq
  %v3068 = vshrl.u32 %v3067, 7
  %v3069 = vsub.s32 0, %v3068
  %v3070 = vrot.slane %v2950, %v3069
  %v3073 = vlaneseq
  %v3074 = vshrl.u32 %v3073, 7
  %v3075 = vsub.s32 0, %v3074
  %v3076 = vrot.slane %v2966, %v3075
  %v3077 = vlaneseq
  %v3078 = vshrl.u32 %v3077, 7
  %v3079 = vsub.s32 0, %v3078
  %v3080 = vrot.slane %v2973, %v3079
  %v3083 = vlaneseq
  %v3084 = vshrl.u32 %v3083, 7
  %v3085 = vsub.s32 0, %v3084
  %v3086 = vrot.slane %v2989, %v3085
  %v3087 = vlaneseq
  %v3088 = vshrl.u32 %v3087, 7
  %v3089 = vsub.s32 0, %v3088
  %v3090 = vrot.slane %v2996, %v3089
  %v3093 = vlaneseq
  %v3094 = vshrl.u32 %v3093, 7
  %v3095 = vsub.s32 0, %v3094
  %v3096 = vrot.slane %v3012, %v3095
  %v3097 = vlaneseq
  %v3098 = vshrl.u32 %v3097, 7
  %v3099 = vsub.s32 0, %v3098
  %v3100 = vrot.slane %v3019, %v3099
  %v3103 = vlaneseq
  %v3104 = vshrl.u32 %v3103, 7
  %v3105 = vsub.s32 0, %v3104
  %v3106 = vrot.slane %v3035, %v3105
  %v3107 = vlaneseq
  %v3108 = vshrl.u32 %v3107, 7
  %v3109 = vsub.s32 0, %v3108
  %v3110 = vrot.slane %v3042, %v3109
  %v3113 = vsel %vm2836, %v2872, %v3046
  %v3114 = vsel %vm2836, %v2879, %v3050
  %v3115 = vsel %vm2839, %v3113, %v3056
  %v3116 = vsel %vm2839, %v3114, %v3060
  %v3117 = vsel %vm2842, %v3115, %v3066
  %v3118 = vsel %vm2842, %v3116, %v3070
  %v3119 = vsel %vm2845, %v3117, %v3076
  %v3120 = vsel %vm2845, %v3118, %v3080
  %v3121 = vsel %vm2848, %v3119, %v3086
  %v3122 = vsel %vm2848, %v3120, %v3090
  %v3123 = vsel %vm2851, %v3121, %v3096
  %v3124 = vsel %vm2851, %v3122, %v3100
  %v3125 = vsel %vm2854, %v3123, %v3106
  %v3126 = vsel %vm2854, %v3124, %v3110
  %3129 = vrot.lane.b32.xlu0 %v3125, 32
  %v3130 = vpop.permute.xlu0 %3129
  %3131 = vrot.lane.b32.xlu0 %v3126, 32
  %v3132 = vpop.permute.xlu0 %3131
  %v3135 = vsel %vm30, %v2855, %v3130
  %v3136 = vsel %vm30, %v2856, %v3132
  %vm3137 = vcmask 523264
  %3138 = vst.msk [vmem:[%s4] sm:$0xff] %vm3137, %v3135
  %3139 = vst.msk [vmem:[%s4 + $0x8] sm:$0xff] %vm3137, %v3136
  // Predicated region
  $region18: #{nerbert_forward.5} parent=0 // pred_check
    _
  $region19: #{nerbert_forward.5} parent=0 // pred_check_branch
    %3141 = sbr.rel (0) target = $region21
  $region20: #{nerbert_forward.5} parent=0 // pred_region
    _
  $region21: #{nerbert_forward.5} parent=0 // pred_fallthru
    _
  // Predicated region
  $region22: #{nerbert_forward.5} parent=0 // pred_check
    _
  $region23: #{nerbert_forward.5} parent=0 // pred_check_branch
    %3143 = sbr.rel (0) target = $region25
  $region24: #{nerbert_forward.5} parent=0 // pred_region
    _
  $region25: #{nerbert_forward.5} parent=0 // pred_fallthru
    _

// kernel: nerbert_forward.4
$region0: #{nerbert_forward.4}
  #allocation0 [shape = 'u32[]', space=smem, size = 0x4, offset = 0x4, fixed_abs, tag = 'smem constant byte address 0x4 - core index']
  #allocation1 [shape = 'u32[144,128]{1,0:T(1,128)}', space=vmem, size = 0x12000, scoped, tag = 'internal scratch']
  %s0 = inlined_call_operand.vmem [shape: f32[16,32], index: 0, kind: input, shape index: {}]
  %s1 = inlined_call_operand.vmem [shape: f32[2,8], index: 1, kind: input, shape index: {}]
  %s2 = inlined_call_operand.vmem [shape: f32[32,96], index: 2, kind: input, shape index: {}]
  %s3 = inlined_call_operand.vmem [shape: f32[1,96], index: 3, kind: input, shape index: {}]
  %s4 = inlined_call_operand.vmem [shape: f32[32,32], index: 4, kind: input, shape index: {}]
  %s5 = inlined_call_operand.vmem [shape: f32[1,32], index: 5, kind: input, shape index: {}]
  %s6 = inlined_call_operand.vmem [shape: f32[1,32], index: 6, kind: input, shape index: {}]
  %s7 = inlined_call_operand.vmem [shape: f32[1,32], index: 7, kind: input, shape index: {}]
  %s8 = inlined_call_operand.vmem [shape: f32[32,64], index: 8, kind: input, shape index: {}]
  %s9 = inlined_call_operand.vmem [shape: f32[1,64], index: 9, kind: input, shape index: {}]
  %s10 = inlined_call_operand.vmem [shape: f32[64,32], index: 10, kind: input, shape index: {}]
  %s11 = inlined_call_operand.vmem [shape: f32[1,32], index: 11, kind: input, shape index: {}]
  %s12 = inlined_call_operand.vmem [shape: f32[1,32], index: 12, kind: input, shape index: {}]
  %s13 = inlined_call_operand.vmem [shape: f32[1,32], index: 13, kind: input, shape index: {}]
  %s14 = inlined_call_operand.vmem [shape: f32[32,256], index: 14, kind: input, shape index: {}]
  %s15 = inlined_call_operand.vmem [shape: f32[1,256], index: 15, kind: input, shape index: {}]
  %s16 = inlined_call_operand.vmem [shape: f32[16,256], index: 16, kind: output, shape index: {}]
  %s17 = sld [smem:[#allocation0]]
  $region74: #{nerbert_forward.4} parent=0
    _
  %s19 = ssub.s32 1, %s17
  %s20 = scalar_select 0, %s19, %s17
  // Predicated region
  $region2: #{nerbert_forward.4} parent=0 // pred_check
    _
  $region3: #{nerbert_forward.4} parent=0 // pred_check_branch
    %22 = sbr.rel (0) target = $region5
  $region4: #{nerbert_forward.4} parent=0 // pred_region
    _
  $region5: #{nerbert_forward.4} parent=0 // pred_fallthru
    _
  // Predicated region
  $region6: #{nerbert_forward.4} parent=0 // pred_check
    _
  $region7: #{nerbert_forward.4} parent=0 // pred_check_branch
    %24 = sbr.rel (0) target = $region9
  $region8: #{nerbert_forward.4} parent=0 // pred_region
    _
  $region9: #{nerbert_forward.4} parent=0 // pred_fallthru
    _
  // Predicated region
  $region10: #{nerbert_forward.4} parent=0 // pred_check
    _
  $region11: #{nerbert_forward.4} parent=0 // pred_check_branch
    %26 = sbr.rel (0) target = $region13
  $region12: #{nerbert_forward.4} parent=0 // pred_region
    _
  $region13: #{nerbert_forward.4} parent=0 // pred_fallthru
    _
  // Predicated region
  $region14: #{nerbert_forward.4} parent=0 // pred_check
    _
  $region15: #{nerbert_forward.4} parent=0 // pred_check_branch
    %28 = sbr.rel (0) target = $region17
  $region16: #{nerbert_forward.4} parent=0 // pred_region
    _
  $region17: #{nerbert_forward.4} parent=0 // pred_fallthru
    _
  // Predicated region
  $region18: #{nerbert_forward.4} parent=0 // pred_check
    _
  $region19: #{nerbert_forward.4} parent=0 // pred_check_branch
    %30 = sbr.rel (0) target = $region21
  $region20: #{nerbert_forward.4} parent=0 // pred_region
    _
  $region21: #{nerbert_forward.4} parent=0 // pred_fallthru
    _
  // Predicated region
  $region22: #{nerbert_forward.4} parent=0 // pred_check
    _
  $region23: #{nerbert_forward.4} parent=0 // pred_check_branch
    %32 = sbr.rel (0) target = $region25
  $region24: #{nerbert_forward.4} parent=0 // pred_region
    _
  $region25: #{nerbert_forward.4} parent=0 // pred_fallthru
    _
  // Predicated region
  $region26: #{nerbert_forward.4} parent=0 // pred_check
    _
  $region27: #{nerbert_forward.4} parent=0 // pred_check_branch
    %34 = sbr.rel (0) target = $region29
  $region28: #{nerbert_forward.4} parent=0 // pred_region
    _
  $region29: #{nerbert_forward.4} parent=0 // pred_fallthru
    _
  // Predicated region
  $region30: #{nerbert_forward.4} parent=0 // pred_check
    _
  $region31: #{nerbert_forward.4} parent=0 // pred_check_branch
    %36 = sbr.rel (0) target = $region33
  $region32: #{nerbert_forward.4} parent=0 // pred_region
    _
  $region33: #{nerbert_forward.4} parent=0 // pred_fallthru
    _
  // Predicated region
  $region34: #{nerbert_forward.4} parent=0 // pred_check
    _
  $region35: #{nerbert_forward.4} parent=0 // pred_check_branch
    %38 = sbr.rel (0) target = $region37
  $region36: #{nerbert_forward.4} parent=0 // pred_region
    _
  $region37: #{nerbert_forward.4} parent=0 // pred_fallthru
    _
  // Predicated region
  $region38: #{nerbert_forward.4} parent=0 // pred_check
    _
  $region39: #{nerbert_forward.4} parent=0 // pred_check_branch
    %40 = sbr.rel (0) target = $region41
  $region40: #{nerbert_forward.4} parent=0 // pred_region
    _
  $region41: #{nerbert_forward.4} parent=0 // pred_fallthru
    _
  // Predicated region
  $region42: #{nerbert_forward.4} parent=0 // pred_check
    _
  $region43: #{nerbert_forward.4} parent=0 // pred_check_branch
    %42 = sbr.rel (0) target = $region45
  $region44: #{nerbert_forward.4} parent=0 // pred_region
    _
  $region45: #{nerbert_forward.4} parent=0 // pred_fallthru
    _
  // Predicated region
  $region46: #{nerbert_forward.4} parent=0 // pred_check
    _
  $region47: #{nerbert_forward.4} parent=0 // pred_check_branch
    %44 = sbr.rel (0) target = $region49
  $region48: #{nerbert_forward.4} parent=0 // pred_region
    _
  $region49: #{nerbert_forward.4} parent=0 // pred_fallthru
    _
  // Predicated region
  $region50: #{nerbert_forward.4} parent=0 // pred_check
    _
  $region51: #{nerbert_forward.4} parent=0 // pred_check_branch
    %46 = sbr.rel (0) target = $region53
  $region52: #{nerbert_forward.4} parent=0 // pred_region
    _
  $region53: #{nerbert_forward.4} parent=0 // pred_fallthru
    _
  // Predicated region
  $region54: #{nerbert_forward.4} parent=0 // pred_check
    _
  $region55: #{nerbert_forward.4} parent=0 // pred_check_branch
    %48 = sbr.rel (0) target = $region57
  $region56: #{nerbert_forward.4} parent=0 // pred_region
    _
  $region57: #{nerbert_forward.4} parent=0 // pred_fallthru
    _
  // Predicated region
  $region58: #{nerbert_forward.4} parent=0 // pred_check
    _
  $region59: #{nerbert_forward.4} parent=0 // pred_check_branch
    %50 = sbr.rel (0) target = $region61
  $region60: #{nerbert_forward.4} parent=0 // pred_region
    _
  $region61: #{nerbert_forward.4} parent=0 // pred_fallthru
    _
  // Predicated region
  $region62: #{nerbert_forward.4} parent=0 // pred_check
    _
  $region63: #{nerbert_forward.4} parent=0 // pred_check_branch
    %52 = sbr.rel (0) target = $region65
  $region64: #{nerbert_forward.4} parent=0 // pred_region
    _
  $region65: #{nerbert_forward.4} parent=0 // pred_fallthru
    _
  %v53 = vld [vmem:[%s0] sm:$0xff]
  %v54 = vld [vmem:[%s0 + $0x8] sm:$0xff]
  %v55 = vld [vmem:[%s2] sm:$0xff]
  %v56 = vld [vmem:[%s2 + $0x8] sm:$0xff]
  %v57 = vld [vmem:[%s2 + $0x10] sm:$0xff]
  %v58 = vld [vmem:[%s2 + $0x18] sm:$0xff]
  %v59 = vld [vmem:[%s3] sm:$0x1]
  %v61 = vlaneseq
  %v62 = vshrl.u32 %v61, 7
  %v63 = vsub.s32 0, %v62
  %v64 = vrot.slane %v59, %v63
  %vm66 = vcmask 261120
  %v68 = vsel %vm66, %v53, 0
  %v71 = vsel %vm66, %v54, 0
  %73 = vmatprep.subr.mxu0 0.0
  %74 = vmatpush1.msra.mxu0 %v55
  %75 = vmatprep.subr.mxu0 0.0
  %76 = vmatpush1.msra.mxu0 %v56
  %77 = vmatprep.subr.mxu0 0.0
  %78 = vmatpush1.msra.mxu0 %v57
  %79 = vmatprep.subr.mxu0 0.0
  %80 = vmatpush1.msra.mxu0 %v58
  %81 = vmatprep.subr.mxu0 0.0
  %82 = vmatpush1.msra.mxu0 0.0
  %83 = vmatprep.subr.mxu0 0.0
  %84 = vmatpush1.msra.mxu0 0.0
  %85 = vmatprep.subr.mxu0 0.0
  %86 = vmatpush1.msra.mxu0 0.0
  %87 = vmatprep.subr.mxu0 0.0
  %88 = vmatpush1.msra.mxu0 0.0
  %89 = vmatprep.subr.mxu0 0.0
  %90 = vmatpush1.msra.mxu0 0.0
  %91 = vmatprep.subr.mxu0 0.0
  %92 = vmatpush1.msra.mxu0 0.0
  %93 = vmatprep.subr.mxu0 0.0
  %94 = vmatpush1.msra.mxu0 0.0
  %95 = vmatprep.subr.mxu0 0.0
  %96 = vmatpush1.msra.mxu0 0.0
  %97 = vmatprep.subr.mxu0 0.0
  %98 = vmatpush1.msra.mxu0 0.0
  %99 = vmatprep.subr.mxu0 0.0
  %100 = vmatpush1.msra.mxu0 0.0
  %101 = vmatprep.subr.mxu0 0.0
  %102 = vmatpush1.msra.mxu0 0.0
  %103 = vmatprep.subr.mxu0 0.0
  %104 = vmatpush1.msra.mxu0 0.0
  %105 = vmatprep.subr.mxu0 0.0
  %106 = vmatpush1.msra.mxu0 0.0
  %107 = vmatprep.subr.mxu0 0.0
  %108 = vmatpush1.msra.mxu0 0.0
  %109 = vmatprep.subr.mxu0 0.0
  %110 = vmatpush1.msra.mxu0 0.0
  %111 = vmatprep.subr.mxu0 0.0
  %112 = vmatpush1.msra.mxu0 0.0
  %113 = vmatprep.subr.mxu0 0.0
  %114 = vmatpush1.msra.mxu0 0.0
  %115 = vmatprep.subr.mxu0 0.0
  %116 = vmatpush1.msra.mxu0 0.0
  %117 = vmatprep.subr.mxu0 0.0
  %118 = vmatpush1.msra.mxu0 0.0
  %119 = vmatprep.subr.mxu0 0.0
  %120 = vmatpush1.msra.mxu0 0.0
  %121 = vmatprep.subr.mxu0 0.0
  %122 = vmatpush1.msra.mxu0 0.0
  %123 = vmatprep.subr.mxu0 0.0
  %124 = vmatpush1.msra.mxu0 0.0
  %125 = vmatprep.subr.mxu0 0.0
  %126 = vmatpush1.msra.mxu0 0.0
  %127 = vmatprep.subr.mxu0 0.0
  %128 = vmatpush1.msra.mxu0 0.0
  %129 = vmatprep.subr.mxu0 0.0
  %130 = vmatpush1.msra.mxu0 0.0
  %131 = vmatprep.subr.mxu0 0.0
  %132 = vmatpush1.msra.mxu0 0.0
  %133 = vmatprep.subr.mxu0 0.0
  %134 = vmatpush1.msra.mxu0 0.0
  %135 = vmatprep.subr.mxu0 0.0
  %136 = vmatpush1.msra.mxu0 0.0
  %137 = vmatprep.mubr.f32.mxu0 0.0
  %138 = vmatmul.mubr.f32.gmra.mrb[0].mxu0 %v68
  %v139 = vpop.f32.mrb[0].mxu0
  %v140 = vadd.f32 %v64, %v139
  %v141 = vpop.f32.mrb[0].mxu0
  %142 = vmatprep.mubr.f32.mxu0 0.0
  %143 = vmatmul.mubr.f32.gmra.mrb[0].mxu0 %v71
  %v144 = vpop.f32.mrb[0].mxu0
  %v145 = vadd.f32 %v64, %v144
  %v146 = vpop.f32.mrb[0].mxu0
  %147 = vdwg.mxu0
  %v148 = vld [vmem:[%s1] sm:$0x3]
  %v149 = vsub.f32 1.0, %v148
  %v150 = vmul.f32 %v149, -10000.0
  %v153 = vunpack.c.l.s4 1966171168
  %v154 = vunpack.c.0.s8 %v153
  %v155 = vlaneseq
  %v156 = vshrl.u32 %v155, 7
  %v157 = vsub.s32 %v154, %v156
  %v158 = vrot.slane %v150, %v157
  %v159 = vcombine.high %v158, %v158
  %v161 = vunpack.c.l.s4 1966171168
  %v162 = vunpack.c.0.s8 %v161
  %v163 = vlaneseq
  %v164 = vshrl.u32 %v163, 7
  %v165 = vsub.s32 %v162, %v164
  %v166 = vrot.slane %v158, %v165
  %v168 = vunpack.c.l.s4 1966171168
  %v169 = vunpack.c.0.s8 %v168
  %v170 = vlaneseq
  %v171 = vshrl.u32 %v170, 7
  %v172 = vsub.s32 %v169, %v171
  %v173 = vrot.slane %v159, %v172
  %175 = vrot.lane.b32.xlu0 %v140, 96
  %v176 = vpop.permute.xlu0 %175
  %vm177 = vcmask 64512
  %v178 = vsel %vm177, %v140, 0
  %v180 = vsel %vm177, %v176, 0
  %182 = vmatprep.subr.mxu0 0.0
  %183 = vmatpush1.xpose.msra.mxu0 %v180
  %184 = vmatprep.subr.mxu0 0.0
  %185 = vmatpush1.xpose.msra.mxu0 0.0
  %186 = vmatprep.subr.mxu0 0.0
  %187 = vmatpush1.xpose.msra.mxu0 0.0
  %188 = vmatprep.subr.mxu0 0.0
  %189 = vmatpush1.xpose.msra.mxu0 0.0
  %190 = vmatprep.subr.mxu0 0.0
  %191 = vmatpush1.xpose.msra.mxu0 0.0
  %192 = vmatprep.subr.mxu0 0.0
  %193 = vmatpush1.xpose.msra.mxu0 0.0
  %194 = vmatprep.subr.mxu0 0.0
  %195 = vmatpush1.xpose.msra.mxu0 0.0
  %196 = vmatprep.subr.mxu0 0.0
  %197 = vmatpush1.xpose.msra.mxu0 0.0
  %198 = vmatprep.subr.mxu0 0.0
  %199 = vmatpush1.xpose.msra.mxu0 0.0
  %200 = vmatprep.subr.mxu0 0.0
  %201 = vmatpush1.xpose.msra.mxu0 0.0
  %202 = vmatprep.subr.mxu0 0.0
  %203 = vmatpush1.xpose.msra.mxu0 0.0
  %204 = vmatprep.subr.mxu0 0.0
  %205 = vmatpush1.xpose.msra.mxu0 0.0
  %206 = vmatprep.subr.mxu0 0.0
  %207 = vmatpush1.xpose.msra.mxu0 0.0
  %208 = vmatprep.subr.mxu0 0.0
  %209 = vmatpush1.xpose.msra.mxu0 0.0
  %210 = vmatprep.subr.mxu0 0.0
  %211 = vmatpush1.xpose.msra.mxu0 0.0
  %212 = vmatprep.subr.mxu0 0.0
  %213 = vmatpush1.xpose.msra.mxu0 0.0
  %214 = vmatprep.subr.mxu0 0.0
  %215 = vmatpush1.xpose.msra.mxu0 0.0
  %216 = vmatprep.subr.mxu0 0.0
  %217 = vmatpush1.xpose.msra.mxu0 0.0
  %218 = vmatprep.subr.mxu0 0.0
  %219 = vmatpush1.xpose.msra.mxu0 0.0
  %220 = vmatprep.subr.mxu0 0.0
  %221 = vmatpush1.xpose.msra.mxu0 0.0
  %222 = vmatprep.subr.mxu0 0.0
  %223 = vmatpush1.xpose.msra.mxu0 0.0
  %224 = vmatprep.subr.mxu0 0.0
  %225 = vmatpush1.xpose.msra.mxu0 0.0
  %226 = vmatprep.subr.mxu0 0.0
  %227 = vmatpush1.xpose.msra.mxu0 0.0
  %228 = vmatprep.subr.mxu0 0.0
  %229 = vmatpush1.xpose.msra.mxu0 0.0
  %230 = vmatprep.subr.mxu0 0.0
  %231 = vmatpush1.xpose.msra.mxu0 0.0
  %232 = vmatprep.subr.mxu0 0.0
  %233 = vmatpush1.xpose.msra.mxu0 0.0
  %234 = vmatprep.subr.mxu0 0.0
  %235 = vmatpush1.xpose.msra.mxu0 0.0
  %236 = vmatprep.subr.mxu0 0.0
  %237 = vmatpush1.xpose.msra.mxu0 0.0
  %238 = vmatprep.subr.mxu0 0.0
  %239 = vmatpush1.xpose.msra.mxu0 0.0
  %240 = vmatprep.subr.mxu0 0.0
  %241 = vmatpush1.xpose.msra.mxu0 0.0
  %242 = vmatprep.subr.mxu0 0.0
  %243 = vmatpush1.xpose.msra.mxu0 0.0
  %244 = vmatprep.subr.mxu0 0.0
  %245 = vmatpush1.xpose.msra.mxu0 0.0
  %246 = vmatprep.mubr.f32.mxu0 0.0
  %247 = vmatmul.mubr.f32.gmra.mrb[0].mxu0 %v178
  %v248 = vpop.f32.mrb[0].mxu0
  %v249 = vadd.f32 0.0, %v248
  %v250 = vpop.f32.mrb[0].mxu0
  %251 = vdwg.mxu0
  %253 = vrot.lane.b32.xlu0 %v145, 96
  %v254 = vpop.permute.xlu0 %253
  %v255 = vsel %vm177, %v145, 0
  %v257 = vsel %vm177, %v254, 0
  %259 = vmatprep.subr.mxu0 0.0
  %260 = vmatpush1.xpose.msra.mxu0 %v257
  %261 = vmatprep.subr.mxu0 0.0
  %262 = vmatpush1.xpose.msra.mxu0 0.0
  %263 = vmatprep.subr.mxu0 0.0
  %264 = vmatpush1.xpose.msra.mxu0 0.0
  %265 = vmatprep.subr.mxu0 0.0
  %266 = vmatpush1.xpose.msra.mxu0 0.0
  %267 = vmatprep.subr.mxu0 0.0
  %268 = vmatpush1.xpose.msra.mxu0 0.0
  %269 = vmatprep.subr.mxu0 0.0
  %270 = vmatpush1.xpose.msra.mxu0 0.0
  %271 = vmatprep.subr.mxu0 0.0
  %272 = vmatpush1.xpose.msra.mxu0 0.0
  %273 = vmatprep.subr.mxu0 0.0
  %274 = vmatpush1.xpose.msra.mxu0 0.0
  %275 = vmatprep.subr.mxu0 0.0
  %276 = vmatpush1.xpose.msra.mxu0 0.0
  %277 = vmatprep.subr.mxu0 0.0
  %278 = vmatpush1.xpose.msra.mxu0 0.0
  %279 = vmatprep.subr.mxu0 0.0
  %280 = vmatpush1.xpose.msra.mxu0 0.0
  %281 = vmatprep.subr.mxu0 0.0
  %282 = vmatpush1.xpose.msra.mxu0 0.0
  %283 = vmatprep.subr.mxu0 0.0
  %284 = vmatpush1.xpose.msra.mxu0 0.0
  %285 = vmatprep.subr.mxu0 0.0
  %286 = vmatpush1.xpose.msra.mxu0 0.0
  %287 = vmatprep.subr.mxu0 0.0
  %288 = vmatpush1.xpose.msra.mxu0 0.0
  %289 = vmatprep.subr.mxu0 0.0
  %290 = vmatpush1.xpose.msra.mxu0 0.0
  %291 = vmatprep.subr.mxu0 0.0
  %292 = vmatpush1.xpose.msra.mxu0 0.0
  %293 = vmatprep.subr.mxu0 0.0
  %294 = vmatpush1.xpose.msra.mxu0 0.0
  %295 = vmatprep.subr.mxu0 0.0
  %296 = vmatpush1.xpose.msra.mxu0 0.0
  %297 = vmatprep.subr.mxu0 0.0
  %298 = vmatpush1.xpose.msra.mxu0 0.0
  %299 = vmatprep.subr.mxu0 0.0
  %300 = vmatpush1.xpose.msra.mxu0 0.0
  %301 = vmatprep.subr.mxu0 0.0
  %302 = vmatpush1.xpose.msra.mxu0 0.0
  %303 = vmatprep.subr.mxu0 0.0
  %304 = vmatpush1.xpose.msra.mxu0 0.0
  %305 = vmatprep.subr.mxu0 0.0
  %306 = vmatpush1.xpose.msra.mxu0 0.0
  %307 = vmatprep.subr.mxu0 0.0
  %308 = vmatpush1.xpose.msra.mxu0 0.0
  %309 = vmatprep.subr.mxu0 0.0
  %310 = vmatpush1.xpose.msra.mxu0 0.0
  %311 = vmatprep.subr.mxu0 0.0
  %312 = vmatpush1.xpose.msra.mxu0 0.0
  %313 = vmatprep.subr.mxu0 0.0
  %314 = vmatpush1.xpose.msra.mxu0 0.0
  %315 = vmatprep.subr.mxu0 0.0
  %316 = vmatpush1.xpose.msra.mxu0 0.0
  %317 = vmatprep.subr.mxu0 0.0
  %318 = vmatpush1.xpose.msra.mxu0 0.0
  %319 = vmatprep.subr.mxu0 0.0
  %320 = vmatpush1.xpose.msra.mxu0 0.0
  %321 = vmatprep.subr.mxu0 0.0
  %322 = vmatpush1.xpose.msra.mxu0 0.0
  %323 = vmatprep.mubr.f32.mxu0 0.0
  %324 = vmatmul.mubr.f32.gmra.mrb[0].mxu0 %v255
  %v325 = vpop.f32.mrb[0].mxu0
  %v326 = vadd.f32 0.0, %v325
  %v327 = vpop.f32.mrb[0].mxu0
  %328 = vdwg.mxu0
  %v329 = vmul.f32 %v249, 0.35355338
  %v330 = vmul.f32 %v326, 0.35355338
  %v331 = vlaneseq
  %v332 = vshrl.u32 %v331, 7
  %v333 = vsub.s32 0, %v332
  %v334 = vrot.slane %v166, %v333
  %v335 = vlaneseq
  %v336 = vshrl.u32 %v335, 7
  %v337 = vsub.s32 0, %v336
  %v338 = vrot.slane %v173, %v337
  %v341 = vadd.f32 %v329, %v334
  %v342 = vadd.f32 %v330, %v338
  %v343 = vsel %vm177, %v341, -inf
  %344 = vmax.xlane.f32.xlu0 %v343
  %v345 = vpop.xlane.xlu0 %344
  %v346 = vsel %vm177, %v342, -inf
  %347 = vmax.xlane.f32.xlu0 %v346
  %v348 = vpop.xlane.xlu0 %347
  %v349 = vsub.f32 %v341, %v345
  %v350 = vsub.f32 %v342, %v348
  %v351 = vmul.f32 %v349, 1.442695
  %v352 = vpow.pop %v351
  %v353 = vmul.f32 %v350, 1.442695
  %v354 = vpow.pop %v353
  %v355 = vsel %vm177, %v352, 0.0
  %356 = vadd.xlane.f32.xlu0 %v355
  %v357 = vpop.xlane.xlu0 %356
  %v358 = vsel %vm177, %v354, 0.0
  %359 = vadd.xlane.f32.xlu0 %v358
  %v360 = vpop.xlane.xlu0 %359
  %v361 = vrcp.pop %v357
  %v362 = vrcp.pop %v360
  %v363 = vmul.f32 %v352, %v361
  %v364 = vmul.f32 %v354, %v362
  %365 = vrot.lane.b32.xlu0 %v140, 64
  %v366 = vpop.permute.xlu0 %365
  %v369 = vsel %vm177, %v363, 0
  %371 = vmatprep.subr.mxu0 0.0
  %372 = vmatpush1.msra.mxu0 %v366
  %373 = vmatprep.subr.mxu0 0.0
  %374 = vmatpush1.msra.mxu0 0.0
  %375 = vmatprep.subr.mxu0 0.0
  %376 = vmatpush1.msra.mxu0 0.0
  %377 = vmatprep.subr.mxu0 0.0
  %378 = vmatpush1.msra.mxu0 0.0
  %379 = vmatprep.subr.mxu0 0.0
  %380 = vmatpush1.msra.mxu0 0.0
  %381 = vmatprep.subr.mxu0 0.0
  %382 = vmatpush1.msra.mxu0 0.0
  %383 = vmatprep.subr.mxu0 0.0
  %384 = vmatpush1.msra.mxu0 0.0
  %385 = vmatprep.subr.mxu0 0.0
  %386 = vmatpush1.msra.mxu0 0.0
  %387 = vmatprep.subr.mxu0 0.0
  %388 = vmatpush1.msra.mxu0 0.0
  %389 = vmatprep.subr.mxu0 0.0
  %390 = vmatpush1.msra.mxu0 0.0
  %391 = vmatprep.subr.mxu0 0.0
  %392 = vmatpush1.msra.mxu0 0.0
  %393 = vmatprep.subr.mxu0 0.0
  %394 = vmatpush1.msra.mxu0 0.0
  %395 = vmatprep.subr.mxu0 0.0
  %396 = vmatpush1.msra.mxu0 0.0
  %397 = vmatprep.subr.mxu0 0.0
  %398 = vmatpush1.msra.mxu0 0.0
  %399 = vmatprep.subr.mxu0 0.0
  %400 = vmatpush1.msra.mxu0 0.0
  %401 = vmatprep.subr.mxu0 0.0
  %402 = vmatpush1.msra.mxu0 0.0
  %403 = vmatprep.subr.mxu0 0.0
  %404 = vmatpush1.msra.mxu0 0.0
  %405 = vmatprep.subr.mxu0 0.0
  %406 = vmatpush1.msra.mxu0 0.0
  %407 = vmatprep.subr.mxu0 0.0
  %408 = vmatpush1.msra.mxu0 0.0
  %409 = vmatprep.subr.mxu0 0.0
  %410 = vmatpush1.msra.mxu0 0.0
  %411 = vmatprep.subr.mxu0 0.0
  %412 = vmatpush1.msra.mxu0 0.0
  %413 = vmatprep.subr.mxu0 0.0
  %414 = vmatpush1.msra.mxu0 0.0
  %415 = vmatprep.subr.mxu0 0.0
  %416 = vmatpush1.msra.mxu0 0.0
  %417 = vmatprep.subr.mxu0 0.0
  %418 = vmatpush1.msra.mxu0 0.0
  %419 = vmatprep.subr.mxu0 0.0
  %420 = vmatpush1.msra.mxu0 0.0
  %421 = vmatprep.subr.mxu0 0.0
  %422 = vmatpush1.msra.mxu0 0.0
  %423 = vmatprep.subr.mxu0 0.0
  %424 = vmatpush1.msra.mxu0 0.0
  %425 = vmatprep.subr.mxu0 0.0
  %426 = vmatpush1.msra.mxu0 0.0
  %427 = vmatprep.subr.mxu0 0.0
  %428 = vmatpush1.msra.mxu0 0.0
  %429 = vmatprep.subr.mxu0 0.0
  %430 = vmatpush1.msra.mxu0 0.0
  %431 = vmatprep.subr.mxu0 0.0
  %432 = vmatpush1.msra.mxu0 0.0
  %433 = vmatprep.subr.mxu0 0.0
  %434 = vmatpush1.msra.mxu0 0.0
  %435 = vmatprep.mubr.f32.mxu0 0.0
  %436 = vmatmul.mubr.f32.gmra.mrb[0].mxu0 %v369
  %v437 = vpop.f32.mrb[0].mxu0
  %v438 = vadd.f32 0.0, %v437
  %v439 = vpop.f32.mrb[0].mxu0
  %440 = vdwg.mxu0
  %441 = vrot.lane.b32.xlu0 %v145, 64
  %v442 = vpop.permute.xlu0 %441
  %v445 = vsel %vm177, %v364, 0
  %447 = vmatprep.subr.mxu0 0.0
  %448 = vmatpush1.msra.mxu0 %v442
  %449 = vmatprep.subr.mxu0 0.0
  %450 = vmatpush1.msra.mxu0 0.0
  %451 = vmatprep.subr.mxu0 0.0
  %452 = vmatpush1.msra.mxu0 0.0
  %453 = vmatprep.subr.mxu0 0.0
  %454 = vmatpush1.msra.mxu0 0.0
  %455 = vmatprep.subr.mxu0 0.0
  %456 = vmatpush1.msra.mxu0 0.0
  %457 = vmatprep.subr.mxu0 0.0
  %458 = vmatpush1.msra.mxu0 0.0
  %459 = vmatprep.subr.mxu0 0.0
  %460 = vmatpush1.msra.mxu0 0.0
  %461 = vmatprep.subr.mxu0 0.0
  %462 = vmatpush1.msra.mxu0 0.0
  %463 = vmatprep.subr.mxu0 0.0
  %464 = vmatpush1.msra.mxu0 0.0
  %465 = vmatprep.subr.mxu0 0.0
  %466 = vmatpush1.msra.mxu0 0.0
  %467 = vmatprep.subr.mxu0 0.0
  %468 = vmatpush1.msra.mxu0 0.0
  %469 = vmatprep.subr.mxu0 0.0
  %470 = vmatpush1.msra.mxu0 0.0
  %471 = vmatprep.subr.mxu0 0.0
  %472 = vmatpush1.msra.mxu0 0.0
  %473 = vmatprep.subr.mxu0 0.0
  %474 = vmatpush1.msra.mxu0 0.0
  %475 = vmatprep.subr.mxu0 0.0
  %476 = vmatpush1.msra.mxu0 0.0
  %477 = vmatprep.subr.mxu0 0.0
  %478 = vmatpush1.msra.mxu0 0.0
  %479 = vmatprep.subr.mxu0 0.0
  %480 = vmatpush1.msra.mxu0 0.0
  %481 = vmatprep.subr.mxu0 0.0
  %482 = vmatpush1.msra.mxu0 0.0
  %483 = vmatprep.subr.mxu0 0.0
  %484 = vmatpush1.msra.mxu0 0.0
  %485 = vmatprep.subr.mxu0 0.0
  %486 = vmatpush1.msra.mxu0 0.0
  %487 = vmatprep.subr.mxu0 0.0
  %488 = vmatpush1.msra.mxu0 0.0
  %489 = vmatprep.subr.mxu0 0.0
  %490 = vmatpush1.msra.mxu0 0.0
  %491 = vmatprep.subr.mxu0 0.0
  %492 = vmatpush1.msra.mxu0 0.0
  %493 = vmatprep.subr.mxu0 0.0
  %494 = vmatpush1.msra.mxu0 0.0
  %495 = vmatprep.subr.mxu0 0.0
  %496 = vmatpush1.msra.mxu0 0.0
  %497 = vmatprep.subr.mxu0 0.0
  %498 = vmatpush1.msra.mxu0 0.0
  %499 = vmatprep.subr.mxu0 0.0
  %500 = vmatpush1.msra.mxu0 0.0
  %501 = vmatprep.subr.mxu0 0.0
  %502 = vmatpush1.msra.mxu0 0.0
  %503 = vmatprep.subr.mxu0 0.0
  %504 = vmatpush1.msra.mxu0 0.0
  %505 = vmatprep.subr.mxu0 0.0
  %506 = vmatpush1.msra.mxu0 0.0
  %507 = vmatprep.subr.mxu0 0.0
  %508 = vmatpush1.msra.mxu0 0.0
  %509 = vmatprep.subr.mxu0 0.0
  %510 = vmatpush1.msra.mxu0 0.0
  %511 = vmatprep.mubr.f32.mxu0 0.0
  %512 = vmatmul.mubr.f32.gmra.mrb[0].mxu0 %v445
  %v513 = vpop.f32.mrb[0].mxu0
  %v514 = vadd.f32 0.0, %v513
  %v515 = vpop.f32.mrb[0].mxu0
  %516 = vdwg.mxu0
  %517 = vrot.lane.b32.xlu0 %v140, 120
  %v518 = vpop.permute.xlu0 %517
  %519 = vrot.lane.b32.xlu0 %v140, 88
  %v520 = vpop.permute.xlu0 %519
  %v521 = vsel %vm177, %v518, 0
  %v523 = vsel %vm177, %v520, 0
  %525 = vmatprep.subr.mxu0 0.0
  %526 = vmatpush1.xpose.msra.mxu0 %v523
  %527 = vmatprep.subr.mxu0 0.0
  %528 = vmatpush1.xpose.msra.mxu0 0.0
  %529 = vmatprep.subr.mxu0 0.0
  %530 = vmatpush1.xpose.msra.mxu0 0.0
  %531 = vmatprep.subr.mxu0 0.0
  %532 = vmatpush1.xpose.msra.mxu0 0.0
  %533 = vmatprep.subr.mxu0 0.0
  %534 = vmatpush1.xpose.msra.mxu0 0.0
  %535 = vmatprep.subr.mxu0 0.0
  %536 = vmatpush1.xpose.msra.mxu0 0.0
  %537 = vmatprep.subr.mxu0 0.0
  %538 = vmatpush1.xpose.msra.mxu0 0.0
  %539 = vmatprep.subr.mxu0 0.0
  %540 = vmatpush1.xpose.msra.mxu0 0.0
  %541 = vmatprep.subr.mxu0 0.0
  %542 = vmatpush1.xpose.msra.mxu0 0.0
  %543 = vmatprep.subr.mxu0 0.0
  %544 = vmatpush1.xpose.msra.mxu0 0.0
  %545 = vmatprep.subr.mxu0 0.0
  %546 = vmatpush1.xpose.msra.mxu0 0.0
  %547 = vmatprep.subr.mxu0 0.0
  %548 = vmatpush1.xpose.msra.mxu0 0.0
  %549 = vmatprep.subr.mxu0 0.0
  %550 = vmatpush1.xpose.msra.mxu0 0.0
  %551 = vmatprep.subr.mxu0 0.0
  %552 = vmatpush1.xpose.msra.mxu0 0.0
  %553 = vmatprep.subr.mxu0 0.0
  %554 = vmatpush1.xpose.msra.mxu0 0.0
  %555 = vmatprep.subr.mxu0 0.0
  %556 = vmatpush1.xpose.msra.mxu0 0.0
  %557 = vmatprep.subr.mxu0 0.0
  %558 = vmatpush1.xpose.msra.mxu0 0.0
  %559 = vmatprep.subr.mxu0 0.0
  %560 = vmatpush1.xpose.msra.mxu0 0.0
  %561 = vmatprep.subr.mxu0 0.0
  %562 = vmatpush1.xpose.msra.mxu0 0.0
  %563 = vmatprep.subr.mxu0 0.0
  %564 = vmatpush1.xpose.msra.mxu0 0.0
  %565 = vmatprep.subr.mxu0 0.0
  %566 = vmatpush1.xpose.msra.mxu0 0.0
  %567 = vmatprep.subr.mxu0 0.0
  %568 = vmatpush1.xpose.msra.mxu0 0.0
  %569 = vmatprep.subr.mxu0 0.0
  %570 = vmatpush1.xpose.msra.mxu0 0.0
  %571 = vmatprep.subr.mxu0 0.0
  %572 = vmatpush1.xpose.msra.mxu0 0.0
  %573 = vmatprep.subr.mxu0 0.0
  %574 = vmatpush1.xpose.msra.mxu0 0.0
  %575 = vmatprep.subr.mxu0 0.0
  %576 = vmatpush1.xpose.msra.mxu0 0.0
  %577 = vmatprep.subr.mxu0 0.0
  %578 = vmatpush1.xpose.msra.mxu0 0.0
  %579 = vmatprep.subr.mxu0 0.0
  %580 = vmatpush1.xpose.msra.mxu0 0.0
  %581 = vmatprep.subr.mxu0 0.0
  %582 = vmatpush1.xpose.msra.mxu0 0.0
  %583 = vmatprep.subr.mxu0 0.0
  %584 = vmatpush1.xpose.msra.mxu0 0.0
  %585 = vmatprep.subr.mxu0 0.0
  %586 = vmatpush1.xpose.msra.mxu0 0.0
  %587 = vmatprep.subr.mxu0 0.0
  %588 = vmatpush1.xpose.msra.mxu0 0.0
  %589 = vmatprep.mubr.f32.mxu0 0.0
  %590 = vmatmul.mubr.f32.gmra.mrb[0].mxu0 %v521
  %v591 = vpop.f32.mrb[0].mxu0
  %v592 = vadd.f32 0.0, %v591
  %v593 = vpop.f32.mrb[0].mxu0
  %594 = vdwg.mxu0
  %595 = vrot.lane.b32.xlu0 %v145, 120
  %v596 = vpop.permute.xlu0 %595
  %597 = vrot.lane.b32.xlu0 %v145, 88
  %v598 = vpop.permute.xlu0 %597
  %v599 = vsel %vm177, %v596, 0
  %v601 = vsel %vm177, %v598, 0
  %603 = vmatprep.subr.mxu0 0.0
  %604 = vmatpush1.xpose.msra.mxu0 %v601
  %605 = vmatprep.subr.mxu0 0.0
  %606 = vmatpush1.xpose.msra.mxu0 0.0
  %607 = vmatprep.subr.mxu0 0.0
  %608 = vmatpush1.xpose.msra.mxu0 0.0
  %609 = vmatprep.subr.mxu0 0.0
  %610 = vmatpush1.xpose.msra.mxu0 0.0
  %611 = vmatprep.subr.mxu0 0.0
  %612 = vmatpush1.xpose.msra.mxu0 0.0
  %613 = vmatprep.subr.mxu0 0.0
  %614 = vmatpush1.xpose.msra.mxu0 0.0
  %615 = vmatprep.subr.mxu0 0.0
  %616 = vmatpush1.xpose.msra.mxu0 0.0
  %617 = vmatprep.subr.mxu0 0.0
  %618 = vmatpush1.xpose.msra.mxu0 0.0
  %619 = vmatprep.subr.mxu0 0.0
  %620 = vmatpush1.xpose.msra.mxu0 0.0
  %621 = vmatprep.subr.mxu0 0.0
  %622 = vmatpush1.xpose.msra.mxu0 0.0
  %623 = vmatprep.subr.mxu0 0.0
  %624 = vmatpush1.xpose.msra.mxu0 0.0
  %625 = vmatprep.subr.mxu0 0.0
  %626 = vmatpush1.xpose.msra.mxu0 0.0
  %627 = vmatprep.subr.mxu0 0.0
  %628 = vmatpush1.xpose.msra.mxu0 0.0
  %629 = vmatprep.subr.mxu0 0.0
  %630 = vmatpush1.xpose.msra.mxu0 0.0
  %631 = vmatprep.subr.mxu0 0.0
  %632 = vmatpush1.xpose.msra.mxu0 0.0
  %633 = vmatprep.subr.mxu0 0.0
  %634 = vmatpush1.xpose.msra.mxu0 0.0
  %635 = vmatprep.subr.mxu0 0.0
  %636 = vmatpush1.xpose.msra.mxu0 0.0
  %637 = vmatprep.subr.mxu0 0.0
  %638 = vmatpush1.xpose.msra.mxu0 0.0
  %639 = vmatprep.subr.mxu0 0.0
  %640 = vmatpush1.xpose.msra.mxu0 0.0
  %641 = vmatprep.subr.mxu0 0.0
  %642 = vmatpush1.xpose.msra.mxu0 0.0
  %643 = vmatprep.subr.mxu0 0.0
  %644 = vmatpush1.xpose.msra.mxu0 0.0
  %645 = vmatprep.subr.mxu0 0.0
  %646 = vmatpush1.xpose.msra.mxu0 0.0
  %647 = vmatprep.subr.mxu0 0.0
  %648 = vmatpush1.xpose.msra.mxu0 0.0
  %649 = vmatprep.subr.mxu0 0.0
  %650 = vmatpush1.xpose.msra.mxu0 0.0
  %651 = vmatprep.subr.mxu0 0.0
  %652 = vmatpush1.xpose.msra.mxu0 0.0
  %653 = vmatprep.subr.mxu0 0.0
  %654 = vmatpush1.xpose.msra.mxu0 0.0
  %655 = vmatprep.subr.mxu0 0.0
  %656 = vmatpush1.xpose.msra.mxu0 0.0
  %657 = vmatprep.subr.mxu0 0.0
  %658 = vmatpush1.xpose.msra.mxu0 0.0
  %659 = vmatprep.subr.mxu0 0.0
  %660 = vmatpush1.xpose.msra.mxu0 0.0
  %661 = vmatprep.subr.mxu0 0.0
  %662 = vmatpush1.xpose.msra.mxu0 0.0
  %663 = vmatprep.subr.mxu0 0.0
  %664 = vmatpush1.xpose.msra.mxu0 0.0
  %665 = vmatprep.subr.mxu0 0.0
  %666 = vmatpush1.xpose.msra.mxu0 0.0
  %667 = vmatprep.mubr.f32.mxu0 0.0
  %668 = vmatmul.mubr.f32.gmra.mrb[0].mxu0 %v599
  %v669 = vpop.f32.mrb[0].mxu0
  %v670 = vadd.f32 0.0, %v669
  %v671 = vpop.f32.mrb[0].mxu0
  %672 = vdwg.mxu0
  %v673 = vmul.f32 %v592, 0.35355338
  %v674 = vmul.f32 %v670, 0.35355338
  %v675 = vadd.f32 %v673, %v334
  %v676 = vadd.f32 %v674, %v338
  %v677 = vsel %vm177, %v675, -inf
  %678 = vmax.xlane.f32.xlu0 %v677
  %v679 = vpop.xlane.xlu0 %678
  %v680 = vsel %vm177, %v676, -inf
  %681 = vmax.xlane.f32.xlu0 %v680
  %v682 = vpop.xlane.xlu0 %681
  %v683 = vsub.f32 %v675, %v679
  %v684 = vsub.f32 %v676, %v682
  %v685 = vmul.f32 %v683, 1.442695
  %v686 = vpow.pop %v685
  %v687 = vmul.f32 %v684, 1.442695
  %v688 = vpow.pop %v687
  %v689 = vsel %vm177, %v686, 0.0
  %690 = vadd.xlane.f32.xlu0 %v689
  %v691 = vpop.xlane.xlu0 %690
  %v692 = vsel %vm177, %v688, 0.0
  %693 = vadd.xlane.f32.xlu0 %v692
  %v694 = vpop.xlane.xlu0 %693
  %v695 = vrcp.pop %v691
  %v696 = vrcp.pop %v694
  %v697 = vmul.f32 %v686, %v695
  %v698 = vmul.f32 %v688, %v696
  %699 = vrot.lane.b32.xlu0 %v140, 56
  %v700 = vpop.permute.xlu0 %699
  %v703 = vsel %vm177, %v697, 0
  %705 = vmatprep.subr.mxu0 0.0
  %706 = vmatpush1.msra.mxu0 %v700
  %707 = vmatprep.subr.mxu0 0.0
  %708 = vmatpush1.msra.mxu0 0.0
  %709 = vmatprep.subr.mxu0 0.0
  %710 = vmatpush1.msra.mxu0 0.0
  %711 = vmatprep.subr.mxu0 0.0
  %712 = vmatpush1.msra.mxu0 0.0
  %713 = vmatprep.subr.mxu0 0.0
  %714 = vmatpush1.msra.mxu0 0.0
  %715 = vmatprep.subr.mxu0 0.0
  %716 = vmatpush1.msra.mxu0 0.0
  %717 = vmatprep.subr.mxu0 0.0
  %718 = vmatpush1.msra.mxu0 0.0
  %719 = vmatprep.subr.mxu0 0.0
  %720 = vmatpush1.msra.mxu0 0.0
  %721 = vmatprep.subr.mxu0 0.0
  %722 = vmatpush1.msra.mxu0 0.0
  %723 = vmatprep.subr.mxu0 0.0
  %724 = vmatpush1.msra.mxu0 0.0
  %725 = vmatprep.subr.mxu0 0.0
  %726 = vmatpush1.msra.mxu0 0.0
  %727 = vmatprep.subr.mxu0 0.0
  %728 = vmatpush1.msra.mxu0 0.0
  %729 = vmatprep.subr.mxu0 0.0
  %730 = vmatpush1.msra.mxu0 0.0
  %731 = vmatprep.subr.mxu0 0.0
  %732 = vmatpush1.msra.mxu0 0.0
  %733 = vmatprep.subr.mxu0 0.0
  %734 = vmatpush1.msra.mxu0 0.0
  %735 = vmatprep.subr.mxu0 0.0
  %736 = vmatpush1.msra.mxu0 0.0
  %737 = vmatprep.subr.mxu0 0.0
  %738 = vmatpush1.msra.mxu0 0.0
  %739 = vmatprep.subr.mxu0 0.0
  %740 = vmatpush1.msra.mxu0 0.0
  %741 = vmatprep.subr.mxu0 0.0
  %742 = vmatpush1.msra.mxu0 0.0
  %743 = vmatprep.subr.mxu0 0.0
  %744 = vmatpush1.msra.mxu0 0.0
  %745 = vmatprep.subr.mxu0 0.0
  %746 = vmatpush1.msra.mxu0 0.0
  %747 = vmatprep.subr.mxu0 0.0
  %748 = vmatpush1.msra.mxu0 0.0
  %749 = vmatprep.subr.mxu0 0.0
  %750 = vmatpush1.msra.mxu0 0.0
  %751 = vmatprep.subr.mxu0 0.0
  %752 = vmatpush1.msra.mxu0 0.0
  %753 = vmatprep.subr.mxu0 0.0
  %754 = vmatpush1.msra.mxu0 0.0
  %755 = vmatprep.subr.mxu0 0.0
  %756 = vmatpush1.msra.mxu0 0.0
  %757 = vmatprep.subr.mxu0 0.0
  %758 = vmatpush1.msra.mxu0 0.0
  %759 = vmatprep.subr.mxu0 0.0
  %760 = vmatpush1.msra.mxu0 0.0
  %761 = vmatprep.subr.mxu0 0.0
  %762 = vmatpush1.msra.mxu0 0.0
  %763 = vmatprep.subr.mxu0 0.0
  %764 = vmatpush1.msra.mxu0 0.0
  %765 = vmatprep.subr.mxu0 0.0
  %766 = vmatpush1.msra.mxu0 0.0
  %767 = vmatprep.subr.mxu0 0.0
  %768 = vmatpush1.msra.mxu0 0.0
  %769 = vmatprep.mubr.f32.mxu0 0.0
  %770 = vmatmul.mubr.f32.gmra.mrb[0].mxu0 %v703
  %v771 = vpop.f32.mrb[0].mxu0
  %v772 = vadd.f32 0.0, %v771
  %v773 = vpop.f32.mrb[0].mxu0
  %774 = vdwg.mxu0
  %775 = vrot.lane.b32.xlu0 %v145, 56
  %v776 = vpop.permute.xlu0 %775
  %v779 = vsel %vm177, %v698, 0
  %781 = vmatprep.subr.mxu0 0.0
  %782 = vmatpush1.msra.mxu0 %v776
  %783 = vmatprep.subr.mxu0 0.0
  %784 = vmatpush1.msra.mxu0 0.0
  %785 = vmatprep.subr.mxu0 0.0
  %786 = vmatpush1.msra.mxu0 0.0
  %787 = vmatprep.subr.mxu0 0.0
  %788 = vmatpush1.msra.mxu0 0.0
  %789 = vmatprep.subr.mxu0 0.0
  %790 = vmatpush1.msra.mxu0 0.0
  %791 = vmatprep.subr.mxu0 0.0
  %792 = vmatpush1.msra.mxu0 0.0
  %793 = vmatprep.subr.mxu0 0.0
  %794 = vmatpush1.msra.mxu0 0.0
  %795 = vmatprep.subr.mxu0 0.0
  %796 = vmatpush1.msra.mxu0 0.0
  %797 = vmatprep.subr.mxu0 0.0
  %798 = vmatpush1.msra.mxu0 0.0
  %799 = vmatprep.subr.mxu0 0.0
  %800 = vmatpush1.msra.mxu0 0.0
  %801 = vmatprep.subr.mxu0 0.0
  %802 = vmatpush1.msra.mxu0 0.0
  %803 = vmatprep.subr.mxu0 0.0
  %804 = vmatpush1.msra.mxu0 0.0
  %805 = vmatprep.subr.mxu0 0.0
  %806 = vmatpush1.msra.mxu0 0.0
  %807 = vmatprep.subr.mxu0 0.0
  %808 = vmatpush1.msra.mxu0 0.0
  %809 = vmatprep.subr.mxu0 0.0
  %810 = vmatpush1.msra.mxu0 0.0
  %811 = vmatprep.subr.mxu0 0.0
  %812 = vmatpush1.msra.mxu0 0.0
  %813 = vmatprep.subr.mxu0 0.0
  %814 = vmatpush1.msra.mxu0 0.0
  %815 = vmatprep.subr.mxu0 0.0
  %816 = vmatpush1.msra.mxu0 0.0
  %817 = vmatprep.subr.mxu0 0.0
  %818 = vmatpush1.msra.mxu0 0.0
  %819 = vmatprep.subr.mxu0 0.0
  %820 = vmatpush1.msra.mxu0 0.0
  %821 = vmatprep.subr.mxu0 0.0
  %822 = vmatpush1.msra.mxu0 0.0
  %823 = vmatprep.subr.mxu0 0.0
  %824 = vmatpush1.msra.mxu0 0.0
  %825 = vmatprep.subr.mxu0 0.0
  %826 = vmatpush1.msra.mxu0 0.0
  %827 = vmatprep.subr.mxu0 0.0
  %828 = vmatpush1.msra.mxu0 0.0
  %829 = vmatprep.subr.mxu0 0.0
  %830 = vmatpush1.msra.mxu0 0.0
  %831 = vmatprep.subr.mxu0 0.0
  %832 = vmatpush1.msra.mxu0 0.0
  %833 = vmatprep.subr.mxu0 0.0
  %834 = vmatpush1.msra.mxu0 0.0
  %835 = vmatprep.subr.mxu0 0.0
  %836 = vmatpush1.msra.mxu0 0.0
  %837 = vmatprep.subr.mxu0 0.0
  %838 = vmatpush1.msra.mxu0 0.0
  %839 = vmatprep.subr.mxu0 0.0
  %840 = vmatpush1.msra.mxu0 0.0
  %841 = vmatprep.subr.mxu0 0.0
  %842 = vmatpush1.msra.mxu0 0.0
  %843 = vmatprep.subr.mxu0 0.0
  %844 = vmatpush1.msra.mxu0 0.0
  %845 = vmatprep.mubr.f32.mxu0 0.0
  %846 = vmatmul.mubr.f32.gmra.mrb[0].mxu0 %v779
  %v847 = vpop.f32.mrb[0].mxu0
  %v848 = vadd.f32 0.0, %v847
  %v849 = vpop.f32.mrb[0].mxu0
  %850 = vdwg.mxu0
  %851 = vrot.lane.b32.xlu0 %v140, 112
  %v852 = vpop.permute.xlu0 %851
  %853 = vrot.lane.b32.xlu0 %v140, 80
  %v854 = vpop.permute.xlu0 %853
  %v855 = vsel %vm177, %v852, 0
  %v857 = vsel %vm177, %v854, 0
  %859 = vmatprep.subr.mxu0 0.0
  %860 = vmatpush1.xpose.msra.mxu0 %v857
  %861 = vmatprep.subr.mxu0 0.0
  %862 = vmatpush1.xpose.msra.mxu0 0.0
  %863 = vmatprep.subr.mxu0 0.0
  %864 = vmatpush1.xpose.msra.mxu0 0.0
  %865 = vmatprep.subr.mxu0 0.0
  %866 = vmatpush1.xpose.msra.mxu0 0.0
  %867 = vmatprep.subr.mxu0 0.0
  %868 = vmatpush1.xpose.msra.mxu0 0.0
  %869 = vmatprep.subr.mxu0 0.0
  %870 = vmatpush1.xpose.msra.mxu0 0.0
  %871 = vmatprep.subr.mxu0 0.0
  %872 = vmatpush1.xpose.msra.mxu0 0.0
  %873 = vmatprep.subr.mxu0 0.0
  %874 = vmatpush1.xpose.msra.mxu0 0.0
  %875 = vmatprep.subr.mxu0 0.0
  %876 = vmatpush1.xpose.msra.mxu0 0.0
  %877 = vmatprep.subr.mxu0 0.0
  %878 = vmatpush1.xpose.msra.mxu0 0.0
  %879 = vmatprep.subr.mxu0 0.0
  %880 = vmatpush1.xpose.msra.mxu0 0.0
  %881 = vmatprep.subr.mxu0 0.0
  %882 = vmatpush1.xpose.msra.mxu0 0.0
  %883 = vmatprep.subr.mxu0 0.0
  %884 = vmatpush1.xpose.msra.mxu0 0.0
  %885 = vmatprep.subr.mxu0 0.0
  %886 = vmatpush1.xpose.msra.mxu0 0.0
  %887 = vmatprep.subr.mxu0 0.0
  %888 = vmatpush1.xpose.msra.mxu0 0.0
  %889 = vmatprep.subr.mxu0 0.0
  %890 = vmatpush1.xpose.msra.mxu0 0.0
  %891 = vmatprep.subr.mxu0 0.0
  %892 = vmatpush1.xpose.msra.mxu0 0.0
  %893 = vmatprep.subr.mxu0 0.0
  %894 = vmatpush1.xpose.msra.mxu0 0.0
  %895 = vmatprep.subr.mxu0 0.0
  %896 = vmatpush1.xpose.msra.mxu0 0.0
  %897 = vmatprep.subr.mxu0 0.0
  %898 = vmatpush1.xpose.msra.mxu0 0.0
  %899 = vmatprep.subr.mxu0 0.0
  %900 = vmatpush1.xpose.msra.mxu0 0.0
  %901 = vmatprep.subr.mxu0 0.0
  %902 = vmatpush1.xpose.msra.mxu0 0.0
  %903 = vmatprep.subr.mxu0 0.0
  %904 = vmatpush1.xpose.msra.mxu0 0.0
  %905 = vmatprep.subr.mxu0 0.0
  %906 = vmatpush1.xpose.msra.mxu0 0.0
  %907 = vmatprep.subr.mxu0 0.0
  %908 = vmatpush1.xpose.msra.mxu0 0.0
  %909 = vmatprep.subr.mxu0 0.0
  %910 = vmatpush1.xpose.msra.mxu0 0.0
  %911 = vmatprep.subr.mxu0 0.0
  %912 = vmatpush1.xpose.msra.mxu0 0.0
  %913 = vmatprep.subr.mxu0 0.0
  %914 = vmatpush1.xpose.msra.mxu0 0.0
  %915 = vmatprep.subr.mxu0 0.0
  %916 = vmatpush1.xpose.msra.mxu0 0.0
  %917 = vmatprep.subr.mxu0 0.0
  %918 = vmatpush1.xpose.msra.mxu0 0.0
  %919 = vmatprep.subr.mxu0 0.0
  %920 = vmatpush1.xpose.msra.mxu0 0.0
  %921 = vmatprep.subr.mxu0 0.0
  %922 = vmatpush1.xpose.msra.mxu0 0.0
  %923 = vmatprep.mubr.f32.mxu0 0.0
  %924 = vmatmul.mubr.f32.gmra.mrb[0].mxu0 %v855
  %v925 = vpop.f32.mrb[0].mxu0
  %v926 = vadd.f32 0.0, %v925
  %v927 = vpop.f32.mrb[0].mxu0
  %928 = vdwg.mxu0
  %929 = vrot.lane.b32.xlu0 %v145, 112
  %v930 = vpop.permute.xlu0 %929
  %931 = vrot.lane.b32.xlu0 %v145, 80
  %v932 = vpop.permute.xlu0 %931
  %v933 = vsel %vm177, %v930, 0
  %v935 = vsel %vm177, %v932, 0
  %937 = vmatprep.subr.mxu0 0.0
  %938 = vmatpush1.xpose.msra.mxu0 %v935
  %939 = vmatprep.subr.mxu0 0.0
  %940 = vmatpush1.xpose.msra.mxu0 0.0
  %941 = vmatprep.subr.mxu0 0.0
  %942 = vmatpush1.xpose.msra.mxu0 0.0
  %943 = vmatprep.subr.mxu0 0.0
  %944 = vmatpush1.xpose.msra.mxu0 0.0
  %945 = vmatprep.subr.mxu0 0.0
  %946 = vmatpush1.xpose.msra.mxu0 0.0
  %947 = vmatprep.subr.mxu0 0.0
  %948 = vmatpush1.xpose.msra.mxu0 0.0
  %949 = vmatprep.subr.mxu0 0.0
  %950 = vmatpush1.xpose.msra.mxu0 0.0
  %951 = vmatprep.subr.mxu0 0.0
  %952 = vmatpush1.xpose.msra.mxu0 0.0
  %953 = vmatprep.subr.mxu0 0.0
  %954 = vmatpush1.xpose.msra.mxu0 0.0
  %955 = vmatprep.subr.mxu0 0.0
  %956 = vmatpush1.xpose.msra.mxu0 0.0
  %957 = vmatprep.subr.mxu0 0.0
  %958 = vmatpush1.xpose.msra.mxu0 0.0
  %959 = vmatprep.subr.mxu0 0.0
  %960 = vmatpush1.xpose.msra.mxu0 0.0
  %961 = vmatprep.subr.mxu0 0.0
  %962 = vmatpush1.xpose.msra.mxu0 0.0
  %963 = vmatprep.subr.mxu0 0.0
  %964 = vmatpush1.xpose.msra.mxu0 0.0
  %965 = vmatprep.subr.mxu0 0.0
  %966 = vmatpush1.xpose.msra.mxu0 0.0
  %967 = vmatprep.subr.mxu0 0.0
  %968 = vmatpush1.xpose.msra.mxu0 0.0
  %969 = vmatprep.subr.mxu0 0.0
  %970 = vmatpush1.xpose.msra.mxu0 0.0
  %971 = vmatprep.subr.mxu0 0.0
  %972 = vmatpush1.xpose.msra.mxu0 0.0
  %973 = vmatprep.subr.mxu0 0.0
  %974 = vmatpush1.xpose.msra.mxu0 0.0
  %975 = vmatprep.subr.mxu0 0.0
  %976 = vmatpush1.xpose.msra.mxu0 0.0
  %977 = vmatprep.subr.mxu0 0.0
  %978 = vmatpush1.xpose.msra.mxu0 0.0
  %979 = vmatprep.subr.mxu0 0.0
  %980 = vmatpush1.xpose.msra.mxu0 0.0
  %981 = vmatprep.subr.mxu0 0.0
  %982 = vmatpush1.xpose.msra.mxu0 0.0
  %983 = vmatprep.subr.mxu0 0.0
  %984 = vmatpush1.xpose.msra.mxu0 0.0
  %985 = vmatprep.subr.mxu0 0.0
  %986 = vmatpush1.xpose.msra.mxu0 0.0
  %987 = vmatprep.subr.mxu0 0.0
  %988 = vmatpush1.xpose.msra.mxu0 0.0
  %989 = vmatprep.subr.mxu0 0.0
  %990 = vmatpush1.xpose.msra.mxu0 0.0
  %991 = vmatprep.subr.mxu0 0.0
  %992 = vmatpush1.xpose.msra.mxu0 0.0
  %993 = vmatprep.subr.mxu0 0.0
  %994 = vmatpush1.xpose.msra.mxu0 0.0
  %995 = vmatprep.subr.mxu0 0.0
  %996 = vmatpush1.xpose.msra.mxu0 0.0
  %997 = vmatprep.subr.mxu0 0.0
  %998 = vmatpush1.xpose.msra.mxu0 0.0
  %999 = vmatprep.subr.mxu0 0.0
  %1000 = vmatpush1.xpose.msra.mxu0 0.0
  %1001 = vmatprep.mubr.f32.mxu0 0.0
  %1002 = vmatmul.mubr.f32.gmra.mrb[0].mxu0 %v933
  %v1003 = vpop.f32.mrb[0].mxu0
  %v1004 = vadd.f32 0.0, %v1003
  %v1005 = vpop.f32.mrb[0].mxu0
  %1006 = vdwg.mxu0
  %v1007 = vmul.f32 %v926, 0.35355338
  %v1008 = vmul.f32 %v1004, 0.35355338
  %v1009 = vadd.f32 %v1007, %v334
  %v1010 = vadd.f32 %v1008, %v338
  %v1011 = vsel %vm177, %v1009, -inf
  %1012 = vmax.xlane.f32.xlu0 %v1011
  %v1013 = vpop.xlane.xlu0 %1012
  %v1014 = vsel %vm177, %v1010, -inf
  %1015 = vmax.xlane.f32.xlu0 %v1014
  %v1016 = vpop.xlane.xlu0 %1015
  %v1017 = vsub.f32 %v1009, %v1013
  %v1018 = vsub.f32 %v1010, %v1016
  %v1019 = vmul.f32 %v1017, 1.442695
  %v1020 = vpow.pop %v1019
  %v1021 = vmul.f32 %v1018, 1.442695
  %v1022 = vpow.pop %v1021
  %v1023 = vsel %vm177, %v1020, 0.0
  %1024 = vadd.xlane.f32.xlu0 %v1023
  %v1025 = vpop.xlane.xlu0 %1024
  %v1026 = vsel %vm177, %v1022, 0.0
  %1027 = vadd.xlane.f32.xlu0 %v1026
  %v1028 = vpop.xlane.xlu0 %1027
  %v1029 = vrcp.pop %v1025
  %v1030 = vrcp.pop %v1028
  %v1031 = vmul.f32 %v1020, %v1029
  %v1032 = vmul.f32 %v1022, %v1030
  %1033 = vrot.lane.b32.xlu0 %v140, 48
  %v1034 = vpop.permute.xlu0 %1033
  %v1037 = vsel %vm177, %v1031, 0
  %1039 = vmatprep.subr.mxu0 0.0
  %1040 = vmatpush1.msra.mxu0 %v1034
  %1041 = vmatprep.subr.mxu0 0.0
  %1042 = vmatpush1.msra.mxu0 0.0
  %1043 = vmatprep.subr.mxu0 0.0
  %1044 = vmatpush1.msra.mxu0 0.0
  %1045 = vmatprep.subr.mxu0 0.0
  %1046 = vmatpush1.msra.mxu0 0.0
  %1047 = vmatprep.subr.mxu0 0.0
  %1048 = vmatpush1.msra.mxu0 0.0
  %1049 = vmatprep.subr.mxu0 0.0
  %1050 = vmatpush1.msra.mxu0 0.0
  %1051 = vmatprep.subr.mxu0 0.0
  %1052 = vmatpush1.msra.mxu0 0.0
  %1053 = vmatprep.subr.mxu0 0.0
  %1054 = vmatpush1.msra.mxu0 0.0
  %1055 = vmatprep.subr.mxu0 0.0
  %1056 = vmatpush1.msra.mxu0 0.0
  %1057 = vmatprep.subr.mxu0 0.0
  %1058 = vmatpush1.msra.mxu0 0.0
  %1059 = vmatprep.subr.mxu0 0.0
  %1060 = vmatpush1.msra.mxu0 0.0
  %1061 = vmatprep.subr.mxu0 0.0
  %1062 = vmatpush1.msra.mxu0 0.0
  %1063 = vmatprep.subr.mxu0 0.0
  %1064 = vmatpush1.msra.mxu0 0.0
  %1065 = vmatprep.subr.mxu0 0.0
  %1066 = vmatpush1.msra.mxu0 0.0
  %1067 = vmatprep.subr.mxu0 0.0
  %1068 = vmatpush1.msra.mxu0 0.0
  %1069 = vmatprep.subr.mxu0 0.0
  %1070 = vmatpush1.msra.mxu0 0.0
  %1071 = vmatprep.subr.mxu0 0.0
  %1072 = vmatpush1.msra.mxu0 0.0
  %1073 = vmatprep.subr.mxu0 0.0
  %1074 = vmatpush1.msra.mxu0 0.0
  %1075 = vmatprep.subr.mxu0 0.0
  %1076 = vmatpush1.msra.mxu0 0.0
  %1077 = vmatprep.subr.mxu0 0.0
  %1078 = vmatpush1.msra.mxu0 0.0
  %1079 = vmatprep.subr.mxu0 0.0
  %1080 = vmatpush1.msra.mxu0 0.0
  %1081 = vmatprep.subr.mxu0 0.0
  %1082 = vmatpush1.msra.mxu0 0.0
  %1083 = vmatprep.subr.mxu0 0.0
  %1084 = vmatpush1.msra.mxu0 0.0
  %1085 = vmatprep.subr.mxu0 0.0
  %1086 = vmatpush1.msra.mxu0 0.0
  %1087 = vmatprep.subr.mxu0 0.0
  %1088 = vmatpush1.msra.mxu0 0.0
  %1089 = vmatprep.subr.mxu0 0.0
  %1090 = vmatpush1.msra.mxu0 0.0
  %1091 = vmatprep.subr.mxu0 0.0
  %1092 = vmatpush1.msra.mxu0 0.0
  %1093 = vmatprep.subr.mxu0 0.0
  %1094 = vmatpush1.msra.mxu0 0.0
  %1095 = vmatprep.subr.mxu0 0.0
  %1096 = vmatpush1.msra.mxu0 0.0
  %1097 = vmatprep.subr.mxu0 0.0
  %1098 = vmatpush1.msra.mxu0 0.0
  %1099 = vmatprep.subr.mxu0 0.0
  %1100 = vmatpush1.msra.mxu0 0.0
  %1101 = vmatprep.subr.mxu0 0.0
  %1102 = vmatpush1.msra.mxu0 0.0
  %1103 = vmatprep.mubr.f32.mxu0 0.0
  %1104 = vmatmul.mubr.f32.gmra.mrb[0].mxu0 %v1037
  %v1105 = vpop.f32.mrb[0].mxu0
  %v1106 = vadd.f32 0.0, %v1105
  %v1107 = vpop.f32.mrb[0].mxu0
  %1108 = vdwg.mxu0
  %1109 = vrot.lane.b32.xlu0 %v145, 48
  %v1110 = vpop.permute.xlu0 %1109
  %v1113 = vsel %vm177, %v1032, 0
  %1115 = vmatprep.subr.mxu0 0.0
  %1116 = vmatpush1.msra.mxu0 %v1110
  %1117 = vmatprep.subr.mxu0 0.0
  %1118 = vmatpush1.msra.mxu0 0.0
  %1119 = vmatprep.subr.mxu0 0.0
  %1120 = vmatpush1.msra.mxu0 0.0
  %1121 = vmatprep.subr.mxu0 0.0
  %1122 = vmatpush1.msra.mxu0 0.0
  %1123 = vmatprep.subr.mxu0 0.0
  %1124 = vmatpush1.msra.mxu0 0.0
  %1125 = vmatprep.subr.mxu0 0.0
  %1126 = vmatpush1.msra.mxu0 0.0
  %1127 = vmatprep.subr.mxu0 0.0
  %1128 = vmatpush1.msra.mxu0 0.0
  %1129 = vmatprep.subr.mxu0 0.0
  %1130 = vmatpush1.msra.mxu0 0.0
  %1131 = vmatprep.subr.mxu0 0.0
  %1132 = vmatpush1.msra.mxu0 0.0
  %1133 = vmatprep.subr.mxu0 0.0
  %1134 = vmatpush1.msra.mxu0 0.0
  %1135 = vmatprep.subr.mxu0 0.0
  %1136 = vmatpush1.msra.mxu0 0.0
  %1137 = vmatprep.subr.mxu0 0.0
  %1138 = vmatpush1.msra.mxu0 0.0
  %1139 = vmatprep.subr.mxu0 0.0
  %1140 = vmatpush1.msra.mxu0 0.0
  %1141 = vmatprep.subr.mxu0 0.0
  %1142 = vmatpush1.msra.mxu0 0.0
  %1143 = vmatprep.subr.mxu0 0.0
  %1144 = vmatpush1.msra.mxu0 0.0
  %1145 = vmatprep.subr.mxu0 0.0
  %1146 = vmatpush1.msra.mxu0 0.0
  %1147 = vmatprep.subr.mxu0 0.0
  %1148 = vmatpush1.msra.mxu0 0.0
  %1149 = vmatprep.subr.mxu0 0.0
  %1150 = vmatpush1.msra.mxu0 0.0
  %1151 = vmatprep.subr.mxu0 0.0
  %1152 = vmatpush1.msra.mxu0 0.0
  %1153 = vmatprep.subr.mxu0 0.0
  %1154 = vmatpush1.msra.mxu0 0.0
  %1155 = vmatprep.subr.mxu0 0.0
  %1156 = vmatpush1.msra.mxu0 0.0
  %1157 = vmatprep.subr.mxu0 0.0
  %1158 = vmatpush1.msra.mxu0 0.0
  %1159 = vmatprep.subr.mxu0 0.0
  %1160 = vmatpush1.msra.mxu0 0.0
  %1161 = vmatprep.subr.mxu0 0.0
  %1162 = vmatpush1.msra.mxu0 0.0
  %1163 = vmatprep.subr.mxu0 0.0
  %1164 = vmatpush1.msra.mxu0 0.0
  %1165 = vmatprep.subr.mxu0 0.0
  %1166 = vmatpush1.msra.mxu0 0.0
  %1167 = vmatprep.subr.mxu0 0.0
  %1168 = vmatpush1.msra.mxu0 0.0
  %1169 = vmatprep.subr.mxu0 0.0
  %1170 = vmatpush1.msra.mxu0 0.0
  %1171 = vmatprep.subr.mxu0 0.0
  %1172 = vmatpush1.msra.mxu0 0.0
  %1173 = vmatprep.subr.mxu0 0.0
  %1174 = vmatpush1.msra.mxu0 0.0
  %1175 = vmatprep.subr.mxu0 0.0
  %1176 = vmatpush1.msra.mxu0 0.0
  %1177 = vmatprep.subr.mxu0 0.0
  %1178 = vmatpush1.msra.mxu0 0.0
  %1179 = vmatprep.mubr.f32.mxu0 0.0
  %1180 = vmatmul.mubr.f32.gmra.mrb[0].mxu0 %v1113
  %v1181 = vpop.f32.mrb[0].mxu0
  %v1182 = vadd.f32 0.0, %v1181
  %v1183 = vpop.f32.mrb[0].mxu0
  %1184 = vdwg.mxu0
  %1185 = vrot.lane.b32.xlu0 %v140, 104
  %v1186 = vpop.permute.xlu0 %1185
  %1187 = vrot.lane.b32.xlu0 %v140, 72
  %v1188 = vpop.permute.xlu0 %1187
  %v1189 = vsel %vm177, %v1186, 0
  %v1191 = vsel %vm177, %v1188, 0
  %1193 = vmatprep.subr.mxu0 0.0
  %1194 = vmatpush1.xpose.msra.mxu0 %v1191
  %1195 = vmatprep.subr.mxu0 0.0
  %1196 = vmatpush1.xpose.msra.mxu0 0.0
  %1197 = vmatprep.subr.mxu0 0.0
  %1198 = vmatpush1.xpose.msra.mxu0 0.0
  %1199 = vmatprep.subr.mxu0 0.0
  %1200 = vmatpush1.xpose.msra.mxu0 0.0
  %1201 = vmatprep.subr.mxu0 0.0
  %1202 = vmatpush1.xpose.msra.mxu0 0.0
  %1203 = vmatprep.subr.mxu0 0.0
  %1204 = vmatpush1.xpose.msra.mxu0 0.0
  %1205 = vmatprep.subr.mxu0 0.0
  %1206 = vmatpush1.xpose.msra.mxu0 0.0
  %1207 = vmatprep.subr.mxu0 0.0
  %1208 = vmatpush1.xpose.msra.mxu0 0.0
  %1209 = vmatprep.subr.mxu0 0.0
  %1210 = vmatpush1.xpose.msra.mxu0 0.0
  %1211 = vmatprep.subr.mxu0 0.0
  %1212 = vmatpush1.xpose.msra.mxu0 0.0
  %1213 = vmatprep.subr.mxu0 0.0
  %1214 = vmatpush1.xpose.msra.mxu0 0.0
  %1215 = vmatprep.subr.mxu0 0.0
  %1216 = vmatpush1.xpose.msra.mxu0 0.0
  %1217 = vmatprep.subr.mxu0 0.0
  %1218 = vmatpush1.xpose.msra.mxu0 0.0
  %1219 = vmatprep.subr.mxu0 0.0
  %1220 = vmatpush1.xpose.msra.mxu0 0.0
  %1221 = vmatprep.subr.mxu0 0.0
  %1222 = vmatpush1.xpose.msra.mxu0 0.0
  %1223 = vmatprep.subr.mxu0 0.0
  %1224 = vmatpush1.xpose.msra.mxu0 0.0
  %1225 = vmatprep.subr.mxu0 0.0
  %1226 = vmatpush1.xpose.msra.mxu0 0.0
  %1227 = vmatprep.subr.mxu0 0.0
  %1228 = vmatpush1.xpose.msra.mxu0 0.0
  %1229 = vmatprep.subr.mxu0 0.0
  %1230 = vmatpush1.xpose.msra.mxu0 0.0
  %1231 = vmatprep.subr.mxu0 0.0
  %1232 = vmatpush1.xpose.msra.mxu0 0.0
  %1233 = vmatprep.subr.mxu0 0.0
  %1234 = vmatpush1.xpose.msra.mxu0 0.0
  %1235 = vmatprep.subr.mxu0 0.0
  %1236 = vmatpush1.xpose.msra.mxu0 0.0
  %1237 = vmatprep.subr.mxu0 0.0
  %1238 = vmatpush1.xpose.msra.mxu0 0.0
  %1239 = vmatprep.subr.mxu0 0.0
  %1240 = vmatpush1.xpose.msra.mxu0 0.0
  %1241 = vmatprep.subr.mxu0 0.0
  %1242 = vmatpush1.xpose.msra.mxu0 0.0
  %1243 = vmatprep.subr.mxu0 0.0
  %1244 = vmatpush1.xpose.msra.mxu0 0.0
  %1245 = vmatprep.subr.mxu0 0.0
  %1246 = vmatpush1.xpose.msra.mxu0 0.0
  %1247 = vmatprep.subr.mxu0 0.0
  %1248 = vmatpush1.xpose.msra.mxu0 0.0
  %1249 = vmatprep.subr.mxu0 0.0
  %1250 = vmatpush1.xpose.msra.mxu0 0.0
  %1251 = vmatprep.subr.mxu0 0.0
  %1252 = vmatpush1.xpose.msra.mxu0 0.0
  %1253 = vmatprep.subr.mxu0 0.0
  %1254 = vmatpush1.xpose.msra.mxu0 0.0
  %1255 = vmatprep.subr.mxu0 0.0
  %1256 = vmatpush1.xpose.msra.mxu0 0.0
  %1257 = vmatprep.mubr.f32.mxu0 0.0
  %1258 = vmatmul.mubr.f32.gmra.mrb[0].mxu0 %v1189
  %v1259 = vpop.f32.mrb[0].mxu0
  %v1260 = vadd.f32 0.0, %v1259
  %v1261 = vpop.f32.mrb[0].mxu0
  %1262 = vdwg.mxu0
  %1263 = vrot.lane.b32.xlu0 %v145, 104
  %v1264 = vpop.permute.xlu0 %1263
  %1265 = vrot.lane.b32.xlu0 %v145, 72
  %v1266 = vpop.permute.xlu0 %1265
  %v1267 = vsel %vm177, %v1264, 0
  %v1269 = vsel %vm177, %v1266, 0
  %1271 = vmatprep.subr.mxu0 0.0
  %1272 = vmatpush1.xpose.msra.mxu0 %v1269
  %1273 = vmatprep.subr.mxu0 0.0
  %1274 = vmatpush1.xpose.msra.mxu0 0.0
  %1275 = vmatprep.subr.mxu0 0.0
  %1276 = vmatpush1.xpose.msra.mxu0 0.0
  %1277 = vmatprep.subr.mxu0 0.0
  %1278 = vmatpush1.xpose.msra.mxu0 0.0
  %1279 = vmatprep.subr.mxu0 0.0
  %1280 = vmatpush1.xpose.msra.mxu0 0.0
  %1281 = vmatprep.subr.mxu0 0.0
  %1282 = vmatpush1.xpose.msra.mxu0 0.0
  %1283 = vmatprep.subr.mxu0 0.0
  %1284 = vmatpush1.xpose.msra.mxu0 0.0
  %1285 = vmatprep.subr.mxu0 0.0
  %1286 = vmatpush1.xpose.msra.mxu0 0.0
  %1287 = vmatprep.subr.mxu0 0.0
  %1288 = vmatpush1.xpose.msra.mxu0 0.0
  %1289 = vmatprep.subr.mxu0 0.0
  %1290 = vmatpush1.xpose.msra.mxu0 0.0
  %1291 = vmatprep.subr.mxu0 0.0
  %1292 = vmatpush1.xpose.msra.mxu0 0.0
  %1293 = vmatprep.subr.mxu0 0.0
  %1294 = vmatpush1.xpose.msra.mxu0 0.0
  %1295 = vmatprep.subr.mxu0 0.0
  %1296 = vmatpush1.xpose.msra.mxu0 0.0
  %1297 = vmatprep.subr.mxu0 0.0
  %1298 = vmatpush1.xpose.msra.mxu0 0.0
  %1299 = vmatprep.subr.mxu0 0.0
  %1300 = vmatpush1.xpose.msra.mxu0 0.0
  %1301 = vmatprep.subr.mxu0 0.0
  %1302 = vmatpush1.xpose.msra.mxu0 0.0
  %1303 = vmatprep.subr.mxu0 0.0
  %1304 = vmatpush1.xpose.msra.mxu0 0.0
  %1305 = vmatprep.subr.mxu0 0.0
  %1306 = vmatpush1.xpose.msra.mxu0 0.0
  %1307 = vmatprep.subr.mxu0 0.0
  %1308 = vmatpush1.xpose.msra.mxu0 0.0
  %1309 = vmatprep.subr.mxu0 0.0
  %1310 = vmatpush1.xpose.msra.mxu0 0.0
  %1311 = vmatprep.subr.mxu0 0.0
  %1312 = vmatpush1.xpose.msra.mxu0 0.0
  %1313 = vmatprep.subr.mxu0 0.0
  %1314 = vmatpush1.xpose.msra.mxu0 0.0
  %1315 = vmatprep.subr.mxu0 0.0
  %1316 = vmatpush1.xpose.msra.mxu0 0.0
  %1317 = vmatprep.subr.mxu0 0.0
  %1318 = vmatpush1.xpose.msra.mxu0 0.0
  %1319 = vmatprep.subr.mxu0 0.0
  %1320 = vmatpush1.xpose.msra.mxu0 0.0
  %1321 = vmatprep.subr.mxu0 0.0
  %1322 = vmatpush1.xpose.msra.mxu0 0.0
  %1323 = vmatprep.subr.mxu0 0.0
  %1324 = vmatpush1.xpose.msra.mxu0 0.0
  %1325 = vmatprep.subr.mxu0 0.0
  %1326 = vmatpush1.xpose.msra.mxu0 0.0
  %1327 = vmatprep.subr.mxu0 0.0
  %1328 = vmatpush1.xpose.msra.mxu0 0.0
  %1329 = vmatprep.subr.mxu0 0.0
  %1330 = vmatpush1.xpose.msra.mxu0 0.0
  %1331 = vmatprep.subr.mxu0 0.0
  %1332 = vmatpush1.xpose.msra.mxu0 0.0
  %1333 = vmatprep.subr.mxu0 0.0
  %1334 = vmatpush1.xpose.msra.mxu0 0.0
  %1335 = vmatprep.mubr.f32.mxu0 0.0
  %1336 = vmatmul.mubr.f32.gmra.mrb[0].mxu0 %v1267
  %v1337 = vpop.f32.mrb[0].mxu0
  %v1338 = vadd.f32 0.0, %v1337
  %v1339 = vpop.f32.mrb[0].mxu0
  %1340 = vdwg.mxu0
  %v1341 = vmul.f32 %v1260, 0.35355338
  %v1342 = vmul.f32 %v1338, 0.35355338
  %v1343 = vadd.f32 %v1341, %v334
  %v1344 = vadd.f32 %v1342, %v338
  %v1345 = vsel %vm177, %v1343, -inf
  %1346 = vmax.xlane.f32.xlu0 %v1345
  %v1347 = vpop.xlane.xlu0 %1346
  %v1348 = vsel %vm177, %v1344, -inf
  %1349 = vmax.xlane.f32.xlu0 %v1348
  %v1350 = vpop.xlane.xlu0 %1349
  %v1351 = vsub.f32 %v1343, %v1347
  %v1352 = vsub.f32 %v1344, %v1350
  %v1353 = vmul.f32 %v1351, 1.442695
  %v1354 = vpow.pop %v1353
  %v1355 = vmul.f32 %v1352, 1.442695
  %v1356 = vpow.pop %v1355
  %v1357 = vsel %vm177, %v1354, 0.0
  %1358 = vadd.xlane.f32.xlu0 %v1357
  %v1359 = vpop.xlane.xlu0 %1358
  %v1360 = vsel %vm177, %v1356, 0.0
  %1361 = vadd.xlane.f32.xlu0 %v1360
  %v1362 = vpop.xlane.xlu0 %1361
  %v1363 = vrcp.pop %v1359
  %v1364 = vrcp.pop %v1362
  %v1365 = vmul.f32 %v1354, %v1363
  %v1366 = vmul.f32 %v1356, %v1364
  %1367 = vrot.lane.b32.xlu0 %v140, 40
  %v1368 = vpop.permute.xlu0 %1367
  %v1371 = vsel %vm177, %v1365, 0
  %1373 = vmatprep.subr.mxu0 0.0
  %1374 = vmatpush1.msra.mxu0 %v1368
  %1375 = vmatprep.subr.mxu0 0.0
  %1376 = vmatpush1.msra.mxu0 0.0
  %1377 = vmatprep.subr.mxu0 0.0
  %1378 = vmatpush1.msra.mxu0 0.0
  %1379 = vmatprep.subr.mxu0 0.0
  %1380 = vmatpush1.msra.mxu0 0.0
  %1381 = vmatprep.subr.mxu0 0.0
  %1382 = vmatpush1.msra.mxu0 0.0
  %1383 = vmatprep.subr.mxu0 0.0
  %1384 = vmatpush1.msra.mxu0 0.0
  %1385 = vmatprep.subr.mxu0 0.0
  %1386 = vmatpush1.msra.mxu0 0.0
  %1387 = vmatprep.subr.mxu0 0.0
  %1388 = vmatpush1.msra.mxu0 0.0
  %1389 = vmatprep.subr.mxu0 0.0
  %1390 = vmatpush1.msra.mxu0 0.0
  %1391 = vmatprep.subr.mxu0 0.0
  %1392 = vmatpush1.msra.mxu0 0.0
  %1393 = vmatprep.subr.mxu0 0.0
  %1394 = vmatpush1.msra.mxu0 0.0
  %1395 = vmatprep.subr.mxu0 0.0
  %1396 = vmatpush1.msra.mxu0 0.0
  %1397 = vmatprep.subr.mxu0 0.0
  %1398 = vmatpush1.msra.mxu0 0.0
  %1399 = vmatprep.subr.mxu0 0.0
  %1400 = vmatpush1.msra.mxu0 0.0
  %1401 = vmatprep.subr.mxu0 0.0
  %1402 = vmatpush1.msra.mxu0 0.0
  %1403 = vmatprep.subr.mxu0 0.0
  %1404 = vmatpush1.msra.mxu0 0.0
  %1405 = vmatprep.subr.mxu0 0.0
  %1406 = vmatpush1.msra.mxu0 0.0
  %1407 = vmatprep.subr.mxu0 0.0
  %1408 = vmatpush1.msra.mxu0 0.0
  %1409 = vmatprep.subr.mxu0 0.0
  %1410 = vmatpush1.msra.mxu0 0.0
  %1411 = vmatprep.subr.mxu0 0.0
  %1412 = vmatpush1.msra.mxu0 0.0
  %1413 = vmatprep.subr.mxu0 0.0
  %1414 = vmatpush1.msra.mxu0 0.0
  %1415 = vmatprep.subr.mxu0 0.0
  %1416 = vmatpush1.msra.mxu0 0.0
  %1417 = vmatprep.subr.mxu0 0.0
  %1418 = vmatpush1.msra.mxu0 0.0
  %1419 = vmatprep.subr.mxu0 0.0
  %1420 = vmatpush1.msra.mxu0 0.0
  %1421 = vmatprep.subr.mxu0 0.0
  %1422 = vmatpush1.msra.mxu0 0.0
  %1423 = vmatprep.subr.mxu0 0.0
  %1424 = vmatpush1.msra.mxu0 0.0
  %1425 = vmatprep.subr.mxu0 0.0
  %1426 = vmatpush1.msra.mxu0 0.0
  %1427 = vmatprep.subr.mxu0 0.0
  %1428 = vmatpush1.msra.mxu0 0.0
  %1429 = vmatprep.subr.mxu0 0.0
  %1430 = vmatpush1.msra.mxu0 0.0
  %1431 = vmatprep.subr.mxu0 0.0
  %1432 = vmatpush1.msra.mxu0 0.0
  %1433 = vmatprep.subr.mxu0 0.0
  %1434 = vmatpush1.msra.mxu0 0.0
  %1435 = vmatprep.subr.mxu0 0.0
  %1436 = vmatpush1.msra.mxu0 0.0
  %1437 = vmatprep.mubr.f32.mxu0 0.0
  %1438 = vmatmul.mubr.f32.gmra.mrb[0].mxu0 %v1371
  %v1439 = vpop.f32.mrb[0].mxu0
  %v1440 = vadd.f32 0.0, %v1439
  %v1441 = vpop.f32.mrb[0].mxu0
  %1442 = vdwg.mxu0
  %1443 = vrot.lane.b32.xlu0 %v145, 40
  %v1444 = vpop.permute.xlu0 %1443
  %v1447 = vsel %vm177, %v1366, 0
  %1449 = vmatprep.subr.mxu0 0.0
  %1450 = vmatpush1.msra.mxu0 %v1444
  %1451 = vmatprep.subr.mxu0 0.0
  %1452 = vmatpush1.msra.mxu0 0.0
  %1453 = vmatprep.subr.mxu0 0.0
  %1454 = vmatpush1.msra.mxu0 0.0
  %1455 = vmatprep.subr.mxu0 0.0
  %1456 = vmatpush1.msra.mxu0 0.0
  %1457 = vmatprep.subr.mxu0 0.0
  %1458 = vmatpush1.msra.mxu0 0.0
  %1459 = vmatprep.subr.mxu0 0.0
  %1460 = vmatpush1.msra.mxu0 0.0
  %1461 = vmatprep.subr.mxu0 0.0
  %1462 = vmatpush1.msra.mxu0 0.0
  %1463 = vmatprep.subr.mxu0 0.0
  %1464 = vmatpush1.msra.mxu0 0.0
  %1465 = vmatprep.subr.mxu0 0.0
  %1466 = vmatpush1.msra.mxu0 0.0
  %1467 = vmatprep.subr.mxu0 0.0
  %1468 = vmatpush1.msra.mxu0 0.0
  %1469 = vmatprep.subr.mxu0 0.0
  %1470 = vmatpush1.msra.mxu0 0.0
  %1471 = vmatprep.subr.mxu0 0.0
  %1472 = vmatpush1.msra.mxu0 0.0
  %1473 = vmatprep.subr.mxu0 0.0
  %1474 = vmatpush1.msra.mxu0 0.0
  %1475 = vmatprep.subr.mxu0 0.0
  %1476 = vmatpush1.msra.mxu0 0.0
  %1477 = vmatprep.subr.mxu0 0.0
  %1478 = vmatpush1.msra.mxu0 0.0
  %1479 = vmatprep.subr.mxu0 0.0
  %1480 = vmatpush1.msra.mxu0 0.0
  %1481 = vmatprep.subr.mxu0 0.0
  %1482 = vmatpush1.msra.mxu0 0.0
  %1483 = vmatprep.subr.mxu0 0.0
  %1484 = vmatpush1.msra.mxu0 0.0
  %1485 = vmatprep.subr.mxu0 0.0
  %1486 = vmatpush1.msra.mxu0 0.0
  %1487 = vmatprep.subr.mxu0 0.0
  %1488 = vmatpush1.msra.mxu0 0.0
  %1489 = vmatprep.subr.mxu0 0.0
  %1490 = vmatpush1.msra.mxu0 0.0
  %1491 = vmatprep.subr.mxu0 0.0
  %1492 = vmatpush1.msra.mxu0 0.0
  %1493 = vmatprep.subr.mxu0 0.0
  %1494 = vmatpush1.msra.mxu0 0.0
  %1495 = vmatprep.subr.mxu0 0.0
  %1496 = vmatpush1.msra.mxu0 0.0
  %1497 = vmatprep.subr.mxu0 0.0
  %1498 = vmatpush1.msra.mxu0 0.0
  %1499 = vmatprep.subr.mxu0 0.0
  %1500 = vmatpush1.msra.mxu0 0.0
  %1501 = vmatprep.subr.mxu0 0.0
  %1502 = vmatpush1.msra.mxu0 0.0
  %1503 = vmatprep.subr.mxu0 0.0
  %1504 = vmatpush1.msra.mxu0 0.0
  %1505 = vmatprep.subr.mxu0 0.0
  %1506 = vmatpush1.msra.mxu0 0.0
  %1507 = vmatprep.subr.mxu0 0.0
  %1508 = vmatpush1.msra.mxu0 0.0
  %1509 = vmatprep.subr.mxu0 0.0
  %1510 = vmatpush1.msra.mxu0 0.0
  %1511 = vmatprep.subr.mxu0 0.0
  %1512 = vmatpush1.msra.mxu0 0.0
  %1513 = vmatprep.mubr.f32.mxu0 0.0
  %1514 = vmatmul.mubr.f32.gmra.mrb[0].mxu0 %v1447
  %v1515 = vpop.f32.mrb[0].mxu0
  %v1516 = vadd.f32 0.0, %v1515
  %v1517 = vpop.f32.mrb[0].mxu0
  %1518 = vdwg.mxu0
  %1521 = vrot.lane.b32.xlu0 %v772, 8
  %v1522 = vpop.permute.xlu0 %1521
  %1523 = vrot.lane.b32.xlu0 %v848, 8
  %v1524 = vpop.permute.xlu0 %1523
  %1529 = vrot.lane.b32.xlu0 %v1106, 16
  %v1530 = vpop.permute.xlu0 %1529
  %1531 = vrot.lane.b32.xlu0 %v1182, 16
  %v1532 = vpop.permute.xlu0 %1531
  %1537 = vrot.lane.b32.xlu0 %v1440, 24
  %v1538 = vpop.permute.xlu0 %1537
  %1539 = vrot.lane.b32.xlu0 %v1516, 24
  %v1540 = vpop.permute.xlu0 %1539
  %v1543 = vsel %vm177, %v438, %v1522
  %v1544 = vsel %vm177, %v514, %v1524
  %vm1545 = vcmask 130048
  %v1546 = vsel %vm1545, %v1543, %v1530
  %v1547 = vsel %vm1545, %v1544, %v1532
  %vm1548 = vcmask 195584
  %v1549 = vsel %vm1548, %v1546, %v1538
  %v1550 = vsel %vm1548, %v1547, %v1540
  %v1551 = vld [vmem:[%s4] sm:$0xff]
  %v1552 = vld [vmem:[%s4 + $0x8] sm:$0xff]
  %v1553 = vld [vmem:[%s4 + $0x10] sm:$0xff]
  %v1554 = vld [vmem:[%s4 + $0x18] sm:$0xff]
  %v1555 = vld [vmem:[%s5] sm:$0x1]
  %v1557 = vlaneseq
  %v1558 = vshrl.u32 %v1557, 7
  %v1559 = vsub.s32 0, %v1558
  %v1560 = vrot.slane %v1555, %v1559
  %v1563 = vsel %vm66, %v1549, 0
  %v1566 = vsel %vm66, %v1550, 0
  %1568 = vmatprep.subr.mxu0 0.0
  %1569 = vmatpush1.msra.mxu0 %v1551
  %1570 = vmatprep.subr.mxu0 0.0
  %1571 = vmatpush1.msra.mxu0 %v1552
  %1572 = vmatprep.subr.mxu0 0.0
  %1573 = vmatpush1.msra.mxu0 %v1553
  %1574 = vmatprep.subr.mxu0 0.0
  %1575 = vmatpush1.msra.mxu0 %v1554
  %1576 = vmatprep.subr.mxu0 0.0
  %1577 = vmatpush1.msra.mxu0 0.0
  %1578 = vmatprep.subr.mxu0 0.0
  %1579 = vmatpush1.msra.mxu0 0.0
  %1580 = vmatprep.subr.mxu0 0.0
  %1581 = vmatpush1.msra.mxu0 0.0
  %1582 = vmatprep.subr.mxu0 0.0
  %1583 = vmatpush1.msra.mxu0 0.0
  %1584 = vmatprep.subr.mxu0 0.0
  %1585 = vmatpush1.msra.mxu0 0.0
  %1586 = vmatprep.subr.mxu0 0.0
  %1587 = vmatpush1.msra.mxu0 0.0
  %1588 = vmatprep.subr.mxu0 0.0
  %1589 = vmatpush1.msra.mxu0 0.0
  %1590 = vmatprep.subr.mxu0 0.0
  %1591 = vmatpush1.msra.mxu0 0.0
  %1592 = vmatprep.subr.mxu0 0.0
  %1593 = vmatpush1.msra.mxu0 0.0
  %1594 = vmatprep.subr.mxu0 0.0
  %1595 = vmatpush1.msra.mxu0 0.0
  %1596 = vmatprep.subr.mxu0 0.0
  %1597 = vmatpush1.msra.mxu0 0.0
  %1598 = vmatprep.subr.mxu0 0.0
  %1599 = vmatpush1.msra.mxu0 0.0
  %1600 = vmatprep.subr.mxu0 0.0
  %1601 = vmatpush1.msra.mxu0 0.0
  %1602 = vmatprep.subr.mxu0 0.0
  %1603 = vmatpush1.msra.mxu0 0.0
  %1604 = vmatprep.subr.mxu0 0.0
  %1605 = vmatpush1.msra.mxu0 0.0
  %1606 = vmatprep.subr.mxu0 0.0
  %1607 = vmatpush1.msra.mxu0 0.0
  %1608 = vmatprep.subr.mxu0 0.0
  %1609 = vmatpush1.msra.mxu0 0.0
  %1610 = vmatprep.subr.mxu0 0.0
  %1611 = vmatpush1.msra.mxu0 0.0
  %1612 = vmatprep.subr.mxu0 0.0
  %1613 = vmatpush1.msra.mxu0 0.0
  %1614 = vmatprep.subr.mxu0 0.0
  %1615 = vmatpush1.msra.mxu0 0.0
  %1616 = vmatprep.subr.mxu0 0.0
  %1617 = vmatpush1.msra.mxu0 0.0
  %1618 = vmatprep.subr.mxu0 0.0
  %1619 = vmatpush1.msra.mxu0 0.0
  %1620 = vmatprep.subr.mxu0 0.0
  %1621 = vmatpush1.msra.mxu0 0.0
  %1622 = vmatprep.subr.mxu0 0.0
  %1623 = vmatpush1.msra.mxu0 0.0
  %1624 = vmatprep.subr.mxu0 0.0
  %1625 = vmatpush1.msra.mxu0 0.0
  %1626 = vmatprep.subr.mxu0 0.0
  %1627 = vmatpush1.msra.mxu0 0.0
  %1628 = vmatprep.subr.mxu0 0.0
  %1629 = vmatpush1.msra.mxu0 0.0
  %1630 = vmatprep.subr.mxu0 0.0
  %1631 = vmatpush1.msra.mxu0 0.0
  %1632 = vmatprep.mubr.f32.mxu0 0.0
  %1633 = vmatmul.mubr.f32.gmra.mrb[0].mxu0 %v1563
  %v1634 = vpop.f32.mrb[0].mxu0
  %v1635 = vadd.f32 %v1560, %v1634
  %v1636 = vpop.f32.mrb[0].mxu0
  %1637 = vmatprep.mubr.f32.mxu0 0.0
  %1638 = vmatmul.mubr.f32.gmra.mrb[0].mxu0 %v1566
  %v1639 = vpop.f32.mrb[0].mxu0
  %v1640 = vadd.f32 %v1560, %v1639
  %v1641 = vpop.f32.mrb[0].mxu0
  %1642 = vdwg.mxu0
  %v1643 = vadd.f32 %v1635, %v53
  %v1644 = vadd.f32 %v1640, %v54
  %v1645 = vld [vmem:[%s6] sm:$0x1]
  %v1646 = vld [vmem:[%s7] sm:$0x1]
  %v1647 = vsel %vm66, %v1643, 0.0
  %1648 = vadd.xlane.f32.xlu0 %v1647
  %v1649 = vpop.xlane.xlu0 %1648
  %v1650 = vsel %vm66, %v1644, 0.0
  %1651 = vadd.xlane.f32.xlu0 %v1650
  %v1652 = vpop.xlane.xlu0 %1651
  %v1653 = vrcp.pop 32.0
  %v1654 = vmul.f32 %v1649, %v1653
  %v1655 = vmul.f32 %v1652, %v1653
  %v1656 = vsub.f32 %v1643, %v1654
  %v1657 = vsub.f32 %v1644, %v1655
  %v1658 = vmul.f32 %v1656, %v1656
  %v1659 = vmul.f32 %v1657, %v1657
  %v1660 = vsel %vm66, %v1658, 0.0
  %1661 = vadd.xlane.f32.xlu0 %v1660
  %v1662 = vpop.xlane.xlu0 %1661
  %v1663 = vsel %vm66, %v1659, 0.0
  %1664 = vadd.xlane.f32.xlu0 %v1663
  %v1665 = vpop.xlane.xlu0 %1664
  %v1666 = vmul.f32 %v1662, %v1653
  %v1667 = vmul.f32 %v1665, %v1653
  %v1668 = vadd.f32 %v1666, 1e-12
  %v1669 = vadd.f32 %v1667, 1e-12
  %v1670 = vrsqrt.pop %v1668
  %v1671 = vrsqrt.pop %v1669
  %v1672 = vmul.f32 %v1656, %v1670
  %v1673 = vmul.f32 %v1657, %v1671
  %v1675 = vlaneseq
  %v1676 = vshrl.u32 %v1675, 7
  %v1677 = vsub.s32 0, %v1676
  %v1678 = vrot.slane %v1645, %v1677
  %v1680 = vmul.f32 %v1672, %v1678
  %v1681 = vmul.f32 %v1673, %v1678
  %v1683 = vlaneseq
  %v1684 = vshrl.u32 %v1683, 7
  %v1685 = vsub.s32 0, %v1684
  %v1686 = vrot.slane %v1646, %v1685
  %v1688 = vadd.f32 %v1680, %v1686
  %v1689 = vadd.f32 %v1681, %v1686
  %v1690 = vld [vmem:[%s8] sm:$0xff]
  %v1691 = vld [vmem:[%s8 + $0x8] sm:$0xff]
  %v1692 = vld [vmem:[%s8 + $0x10] sm:$0xff]
  %v1693 = vld [vmem:[%s8 + $0x18] sm:$0xff]
  %v1694 = vld [vmem:[%s9] sm:$0x1]
  %v1696 = vlaneseq
  %v1697 = vshrl.u32 %v1696, 7
  %v1698 = vsub.s32 0, %v1697
  %v1699 = vrot.slane %v1694, %v1698
  %v1702 = vsel %vm66, %v1688, 0
  %v1705 = vsel %vm66, %v1689, 0
  %1707 = vmatprep.subr.mxu0 0.0
  %1708 = vmatpush1.msra.mxu0 %v1690
  %1709 = vmatprep.subr.mxu0 0.0
  %1710 = vmatpush1.msra.mxu0 %v1691
  %1711 = vmatprep.subr.mxu0 0.0
  %1712 = vmatpush1.msra.mxu0 %v1692
  %1713 = vmatprep.subr.mxu0 0.0
  %1714 = vmatpush1.msra.mxu0 %v1693
  %1715 = vmatprep.subr.mxu0 0.0
  %1716 = vmatpush1.msra.mxu0 0.0
  %1717 = vmatprep.subr.mxu0 0.0
  %1718 = vmatpush1.msra.mxu0 0.0
  %1719 = vmatprep.subr.mxu0 0.0
  %1720 = vmatpush1.msra.mxu0 0.0
  %1721 = vmatprep.subr.mxu0 0.0
  %1722 = vmatpush1.msra.mxu0 0.0
  %1723 = vmatprep.subr.mxu0 0.0
  %1724 = vmatpush1.msra.mxu0 0.0
  %1725 = vmatprep.subr.mxu0 0.0
  %1726 = vmatpush1.msra.mxu0 0.0
  %1727 = vmatprep.subr.mxu0 0.0
  %1728 = vmatpush1.msra.mxu0 0.0
  %1729 = vmatprep.subr.mxu0 0.0
  %1730 = vmatpush1.msra.mxu0 0.0
  %1731 = vmatprep.subr.mxu0 0.0
  %1732 = vmatpush1.msra.mxu0 0.0
  %1733 = vmatprep.subr.mxu0 0.0
  %1734 = vmatpush1.msra.mxu0 0.0
  %1735 = vmatprep.subr.mxu0 0.0
  %1736 = vmatpush1.msra.mxu0 0.0
  %1737 = vmatprep.subr.mxu0 0.0
  %1738 = vmatpush1.msra.mxu0 0.0
  %1739 = vmatprep.subr.mxu0 0.0
  %1740 = vmatpush1.msra.mxu0 0.0
  %1741 = vmatprep.subr.mxu0 0.0
  %1742 = vmatpush1.msra.mxu0 0.0
  %1743 = vmatprep.subr.mxu0 0.0
  %1744 = vmatpush1.msra.mxu0 0.0
  %1745 = vmatprep.subr.mxu0 0.0
  %1746 = vmatpush1.msra.mxu0 0.0
  %1747 = vmatprep.subr.mxu0 0.0
  %1748 = vmatpush1.msra.mxu0 0.0
  %1749 = vmatprep.subr.mxu0 0.0
  %1750 = vmatpush1.msra.mxu0 0.0
  %1751 = vmatprep.subr.mxu0 0.0
  %1752 = vmatpush1.msra.mxu0 0.0
  %1753 = vmatprep.subr.mxu0 0.0
  %1754 = vmatpush1.msra.mxu0 0.0
  %1755 = vmatprep.subr.mxu0 0.0
  %1756 = vmatpush1.msra.mxu0 0.0
  %1757 = vmatprep.subr.mxu0 0.0
  %1758 = vmatpush1.msra.mxu0 0.0
  %1759 = vmatprep.subr.mxu0 0.0
  %1760 = vmatpush1.msra.mxu0 0.0
  %1761 = vmatprep.subr.mxu0 0.0
  %1762 = vmatpush1.msra.mxu0 0.0
  %1763 = vmatprep.subr.mxu0 0.0
  %1764 = vmatpush1.msra.mxu0 0.0
  %1765 = vmatprep.subr.mxu0 0.0
  %1766 = vmatpush1.msra.mxu0 0.0
  %1767 = vmatprep.subr.mxu0 0.0
  %1768 = vmatpush1.msra.mxu0 0.0
  %1769 = vmatprep.subr.mxu0 0.0
  %1770 = vmatpush1.msra.mxu0 0.0
  %1771 = vmatprep.mubr.f32.mxu0 0.0
  %1772 = vmatmul.mubr.f32.gmra.mrb[0].mxu0 %v1702
  %v1773 = vpop.f32.mrb[0].mxu0
  %v1774 = vadd.f32 %v1699, %v1773
  %v1775 = vpop.f32.mrb[0].mxu0
  %1776 = vmatprep.mubr.f32.mxu0 0.0
  %1777 = vmatmul.mubr.f32.gmra.mrb[0].mxu0 %v1705
  %v1778 = vpop.f32.mrb[0].mxu0
  %v1779 = vadd.f32 %v1699, %v1778
  %v1780 = vpop.f32.mrb[0].mxu0
  %1781 = vdwg.mxu0
  %v1782 = vmul.f32 %v1774, %v1774
  %v1783 = vmul.f32 %v1779, %v1779
  %v1784 = vmul.f32 %v1774, %v1782
  %v1785 = vmul.f32 %v1779, %v1783
  %v1786 = vmul.f32 %v1784, 0.044715
  %v1787 = vmul.f32 %v1785, 0.044715
  %v1788 = vadd.f32 %v1774, %v1786
  %v1789 = vadd.f32 %v1779, %v1787
  %v1790 = vmul.f32 %v1788, 0.7978846
  %v1791 = vmul.f32 %v1789, 0.7978846
  %v1792 = vtanh.pop %v1790
  %v1793 = vtanh.pop %v1791
  %v1794 = vadd.f32 %v1792, 1.0
  %v1795 = vadd.f32 %v1793, 1.0
  %v1796 = vmul.f32 %v1794, 0.5
  %v1797 = vmul.f32 %v1795, 0.5
  %v1798 = vmul.f32 %v1774, %v1796
  %v1799 = vmul.f32 %v1779, %v1797
  %v1800 = vld [vmem:[%s10] sm:$0xff]
  %v1801 = vld [vmem:[%s10 + $0x8] sm:$0xff]
  %v1802 = vld [vmem:[%s10 + $0x10] sm:$0xff]
  %v1803 = vld [vmem:[%s10 + $0x18] sm:$0xff]
  %v1804 = vld [vmem:[%s10 + $0x20] sm:$0xff]
  %v1805 = vld [vmem:[%s10 + $0x28] sm:$0xff]
  %v1806 = vld [vmem:[%s10 + $0x30] sm:$0xff]
  %v1807 = vld [vmem:[%s10 + $0x38] sm:$0xff]
  %v1808 = vld [vmem:[%s11] sm:$0x1]
  %v1810 = vlaneseq
  %v1811 = vshrl.u32 %v1810, 7
  %v1812 = vsub.s32 0, %v1811
  %v1813 = vrot.slane %v1808, %v1812
  %vm1815 = vcmask 523264
  %v1817 = vsel %vm1815, %v1798, 0
  %v1820 = vsel %vm1815, %v1799, 0
  %1822 = vmatprep.subr.mxu0 0.0
  %1823 = vmatpush1.msra.mxu0 %v1800
  %1824 = vmatprep.subr.mxu0 0.0
  %1825 = vmatpush1.msra.mxu0 %v1801
  %1826 = vmatprep.subr.mxu0 0.0
  %1827 = vmatpush1.msra.mxu0 %v1802
  %1828 = vmatprep.subr.mxu0 0.0
  %1829 = vmatpush1.msra.mxu0 %v1803
  %1830 = vmatprep.subr.mxu0 0.0
  %1831 = vmatpush1.msra.mxu0 %v1804
  %1832 = vmatprep.subr.mxu0 0.0
  %1833 = vmatpush1.msra.mxu0 %v1805
  %1834 = vmatprep.subr.mxu0 0.0
  %1835 = vmatpush1.msra.mxu0 %v1806
  %1836 = vmatprep.subr.mxu0 0.0
  %1837 = vmatpush1.msra.mxu0 %v1807
  %1838 = vmatprep.subr.mxu0 0.0
  %1839 = vmatpush1.msra.mxu0 0.0
  %1840 = vmatprep.subr.mxu0 0.0
  %1841 = vmatpush1.msra.mxu0 0.0
  %1842 = vmatprep.subr.mxu0 0.0
  %1843 = vmatpush1.msra.mxu0 0.0
  %1844 = vmatprep.subr.mxu0 0.0
  %1845 = vmatpush1.msra.mxu0 0.0
  %1846 = vmatprep.subr.mxu0 0.0
  %1847 = vmatpush1.msra.mxu0 0.0
  %1848 = vmatprep.subr.mxu0 0.0
  %1849 = vmatpush1.msra.mxu0 0.0
  %1850 = vmatprep.subr.mxu0 0.0
  %1851 = vmatpush1.msra.mxu0 0.0
  %1852 = vmatprep.subr.mxu0 0.0
  %1853 = vmatpush1.msra.mxu0 0.0
  %1854 = vmatprep.subr.mxu0 0.0
  %1855 = vmatpush1.msra.mxu0 0.0
  %1856 = vmatprep.subr.mxu0 0.0
  %1857 = vmatpush1.msra.mxu0 0.0
  %1858 = vmatprep.subr.mxu0 0.0
  %1859 = vmatpush1.msra.mxu0 0.0
  %1860 = vmatprep.subr.mxu0 0.0
  %1861 = vmatpush1.msra.mxu0 0.0
  %1862 = vmatprep.subr.mxu0 0.0
  %1863 = vmatpush1.msra.mxu0 0.0
  %1864 = vmatprep.subr.mxu0 0.0
  %1865 = vmatpush1.msra.mxu0 0.0
  %1866 = vmatprep.subr.mxu0 0.0
  %1867 = vmatpush1.msra.mxu0 0.0
  %1868 = vmatprep.subr.mxu0 0.0
  %1869 = vmatpush1.msra.mxu0 0.0
  %1870 = vmatprep.subr.mxu0 0.0
  %1871 = vmatpush1.msra.mxu0 0.0
  %1872 = vmatprep.subr.mxu0 0.0
  %1873 = vmatpush1.msra.mxu0 0.0
  %1874 = vmatprep.subr.mxu0 0.0
  %1875 = vmatpush1.msra.mxu0 0.0
  %1876 = vmatprep.subr.mxu0 0.0
  %1877 = vmatpush1.msra.mxu0 0.0
  %1878 = vmatprep.subr.mxu0 0.0
  %1879 = vmatpush1.msra.mxu0 0.0
  %1880 = vmatprep.subr.mxu0 0.0
  %1881 = vmatpush1.msra.mxu0 0.0
  %1882 = vmatprep.subr.mxu0 0.0
  %1883 = vmatpush1.msra.mxu0 0.0
  %1884 = vmatprep.subr.mxu0 0.0
  %1885 = vmatpush1.msra.mxu0 0.0
  %1886 = vmatprep.mubr.f32.mxu0 0.0
  %1887 = vmatmul.mubr.f32.gmra.mrb[0].mxu0 %v1817
  %v1888 = vpop.f32.mrb[0].mxu0
  %v1889 = vadd.f32 %v1813, %v1888
  %v1890 = vpop.f32.mrb[0].mxu0
  %1891 = vmatprep.mubr.f32.mxu0 0.0
  %1892 = vmatmul.mubr.f32.gmra.mrb[0].mxu0 %v1820
  %v1893 = vpop.f32.mrb[0].mxu0
  %v1894 = vadd.f32 %v1813, %v1893
  %v1895 = vpop.f32.mrb[0].mxu0
  %1896 = vdwg.mxu0
  %v1897 = vadd.f32 %v1889, %v1688
  %v1898 = vadd.f32 %v1894, %v1689
  %v1899 = vld [vmem:[%s12] sm:$0x1]
  %v1900 = vld [vmem:[%s13] sm:$0x1]
  %v1901 = vsel %vm66, %v1897, 0.0
  %1902 = vadd.xlane.f32.xlu0 %v1901
  %v1903 = vpop.xlane.xlu0 %1902
  %v1904 = vsel %vm66, %v1898, 0.0
  %1905 = vadd.xlane.f32.xlu0 %v1904
  %v1906 = vpop.xlane.xlu0 %1905
  %v1907 = vmul.f32 %v1903, %v1653
  %v1908 = vmul.f32 %v1906, %v1653
  %v1909 = vsub.f32 %v1897, %v1907
  %v1910 = vsub.f32 %v1898, %v1908
  %v1911 = vmul.f32 %v1909, %v1909
  %v1912 = vmul.f32 %v1910, %v1910
  %v1913 = vsel %vm66, %v1911, 0.0
  %1914 = vadd.xlane.f32.xlu0 %v1913
  %v1915 = vpop.xlane.xlu0 %1914
  %v1916 = vsel %vm66, %v1912, 0.0
  %1917 = vadd.xlane.f32.xlu0 %v1916
  %v1918 = vpop.xlane.xlu0 %1917
  %v1919 = vmul.f32 %v1915, %v1653
  %v1920 = vmul.f32 %v1918, %v1653
  %v1921 = vadd.f32 %v1919, 1e-12
  %v1922 = vadd.f32 %v1920, 1e-12
  %v1923 = vrsqrt.pop %v1921
  %v1924 = vrsqrt.pop %v1922
  %v1925 = vmul.f32 %v1909, %v1923
  %v1926 = vmul.f32 %v1910, %v1924
  %v1928 = vlaneseq
  %v1929 = vshrl.u32 %v1928, 7
  %v1930 = vsub.s32 0, %v1929
  %v1931 = vrot.slane %v1899, %v1930
  %v1933 = vmul.f32 %v1925, %v1931
  %v1934 = vmul.f32 %v1926, %v1931
  %v1936 = vlaneseq
  %v1937 = vshrl.u32 %v1936, 7
  %v1938 = vsub.s32 0, %v1937
  %v1939 = vrot.slane %v1900, %v1938
  %v1941 = vadd.f32 %v1933, %v1939
  %v1942 = vadd.f32 %v1934, %v1939
  %v1943 = vld [vmem:[%s14] sm:$0xff]
  %v1944 = vld [vmem:[%s14 + $0x8] sm:$0xff]
  %v1945 = vld [vmem:[%s14 + $0x10] sm:$0xff]
  %v1946 = vld [vmem:[%s14 + $0x18] sm:$0xff]
  %v1947 = vld [vmem:[%s14 + $0x20] sm:$0xff]
  %v1948 = vld [vmem:[%s14 + $0x28] sm:$0xff]
  %v1949 = vld [vmem:[%s14 + $0x30] sm:$0xff]
  %v1950 = vld [vmem:[%s14 + $0x38] sm:$0xff]
  %v1951 = vld [vmem:[%s15] sm:$0x3]
  %v1953 = vlaneseq
  %v1954 = vshrl.u32 %v1953, 7
  %v1955 = vsub.s32 0, %v1954
  %v1956 = vrot.slane %v1951, %v1955
  %v1957 = vlaneseq
  %v1958 = vshrl.u32 %v1957, 7
  %v1959 = vsub.s32 1, %v1958
  %v1960 = vrot.slane %v1951, %v1959
  %v1964 = vsel %vm66, %v1941, 0
  %v1967 = vsel %vm66, %v1942, 0
  %1969 = vmatprep.subr.mxu0 %v1944
  %1970 = vmatpush1.msra.mxu0 %v1943
  %1971 = vmatprep.subr.mxu0 %v1946
  %1972 = vmatpush1.msra.mxu0 %v1945
  %1973 = vmatprep.subr.mxu0 %v1948
  %1974 = vmatpush1.msra.mxu0 %v1947
  %1975 = vmatprep.subr.mxu0 %v1950
  %1976 = vmatpush1.msra.mxu0 %v1949
  %1977 = vmatprep.subr.mxu0 0.0
  %1978 = vmatpush1.msra.mxu0 0.0
  %1979 = vmatprep.subr.mxu0 0.0
  %1980 = vmatpush1.msra.mxu0 0.0
  %1981 = vmatprep.subr.mxu0 0.0
  %1982 = vmatpush1.msra.mxu0 0.0
  %1983 = vmatprep.subr.mxu0 0.0
  %1984 = vmatpush1.msra.mxu0 0.0
  %1985 = vmatprep.subr.mxu0 0.0
  %1986 = vmatpush1.msra.mxu0 0.0
  %1987 = vmatprep.subr.mxu0 0.0
  %1988 = vmatpush1.msra.mxu0 0.0
  %1989 = vmatprep.subr.mxu0 0.0
  %1990 = vmatpush1.msra.mxu0 0.0
  %1991 = vmatprep.subr.mxu0 0.0
  %1992 = vmatpush1.msra.mxu0 0.0
  %1993 = vmatprep.subr.mxu0 0.0
  %1994 = vmatpush1.msra.mxu0 0.0
  %1995 = vmatprep.subr.mxu0 0.0
  %1996 = vmatpush1.msra.mxu0 0.0
  %1997 = vmatprep.subr.mxu0 0.0
  %1998 = vmatpush1.msra.mxu0 0.0
  %1999 = vmatprep.subr.mxu0 0.0
  %2000 = vmatpush1.msra.mxu0 0.0
  %2001 = vmatprep.subr.mxu0 0.0
  %2002 = vmatpush1.msra.mxu0 0.0
  %2003 = vmatprep.subr.mxu0 0.0
  %2004 = vmatpush1.msra.mxu0 0.0
  %2005 = vmatprep.subr.mxu0 0.0
  %2006 = vmatpush1.msra.mxu0 0.0
  %2007 = vmatprep.subr.mxu0 0.0
  %2008 = vmatpush1.msra.mxu0 0.0
  %2009 = vmatprep.subr.mxu0 0.0
  %2010 = vmatpush1.msra.mxu0 0.0
  %2011 = vmatprep.subr.mxu0 0.0
  %2012 = vmatpush1.msra.mxu0 0.0
  %2013 = vmatprep.subr.mxu0 0.0
  %2014 = vmatpush1.msra.mxu0 0.0
  %2015 = vmatprep.subr.mxu0 0.0
  %2016 = vmatpush1.msra.mxu0 0.0
  %2017 = vmatprep.subr.mxu0 0.0
  %2018 = vmatpush1.msra.mxu0 0.0
  %2019 = vmatprep.subr.mxu0 0.0
  %2020 = vmatpush1.msra.mxu0 0.0
  %2021 = vmatprep.subr.mxu0 0.0
  %2022 = vmatpush1.msra.mxu0 0.0
  %2023 = vmatprep.subr.mxu0 0.0
  %2024 = vmatpush1.msra.mxu0 0.0
  %2025 = vmatprep.subr.mxu0 0.0
  %2026 = vmatpush1.msra.mxu0 0.0
  %2027 = vmatprep.subr.mxu0 0.0
  %2028 = vmatpush1.msra.mxu0 0.0
  %2029 = vmatprep.subr.mxu0 0.0
  %2030 = vmatpush1.msra.mxu0 0.0
  %2031 = vmatprep.subr.mxu0 0.0
  %2032 = vmatpush1.msra.mxu0 0.0
  %2033 = vmatprep.mubr.f32.mxu0 0.0
  %2034 = vmatmul.mubr.f32.gmra.mrb[0].mxu0 %v1964
  %v2035 = vpop.f32.mrb[0].mxu0
  %v2036 = vadd.f32 %v1956, %v2035
  %v2037 = vpop.f32.mrb[0].mxu0
  %v2038 = vadd.f32 %v1960, %v2037
  %2039 = vmatprep.mubr.f32.mxu0 0.0
  %2040 = vmatmul.mubr.f32.gmra.mrb[0].mxu0 %v1967
  %v2041 = vpop.f32.mrb[0].mxu0
  %v2042 = vadd.f32 %v1956, %v2041
  %v2043 = vpop.f32.mrb[0].mxu0
  %v2044 = vadd.f32 %v1960, %v2043
  %2045 = vdwg.mxu0
  %2046 = vst [vmem:[%s16] sm:$0xff] %v2036
  %2047 = vst [vmem:[%s16 + $0x8] sm:$0xff] %v2038
  %2048 = vst [vmem:[%s16 + $0x10] sm:$0xff] %v2042
  %2049 = vst [vmem:[%s16 + $0x18] sm:$0xff] %v2044
  // Predicated region
  $region66: #{nerbert_forward.4} parent=0 // pred_check
    _
  $region67: #{nerbert_forward.4} parent=0 // pred_check_branch
    %2051 = sbr.rel (0) target = $region69
  $region68: #{nerbert_forward.4} parent=0 // pred_region
    _
  $region69: #{nerbert_forward.4} parent=0 // pred_fallthru
    _
  // Predicated region
  $region70: #{nerbert_forward.4} parent=0 // pred_check
    _
  $region71: #{nerbert_forward.4} parent=0 // pred_check_branch
    %2053 = sbr.rel (0) target = $region73
  $region72: #{nerbert_forward.4} parent=0 // pred_region
    _
  $region73: #{nerbert_forward.4} parent=0 // pred_fallthru
    _

</llo_original>
